<compile_context>
chip_gen: v5e
topology: v5e:2x2
jax: 0.10.0
libtpu: 0.0.40
codegen_flags: <defaults>
</compile_context>

<pallas_src>
import jax
import jax.numpy as jnp
from jax.experimental import pallas as pl
from jax.experimental.pallas import tpu as pltpu

BN_EPS = 1e-5


# ----------------------------------------------------------------------------
# In-kernel helpers
# ----------------------------------------------------------------------------
def _conv_accumulate(taps, w_ref, b_ref, th, wsp):
    """taps: 3 bf16 arrays [TH, W+2, Cin] (dy = 0,1,2).  w_ref: [9, Cin, TC]."""
    tc = w_ref.shape[-1]
    acc = jnp.zeros((th * wsp, tc), jnp.float32)
    for dy in range(3):
        for dx in range(3):
            tap = taps[dy][:, dx:dx + wsp, :].reshape(th * wsp, -1)
            acc = acc + jnp.dot(tap, w_ref[dy * 3 + dx],
                                preferred_element_type=jnp.float32)
    return acc + b_ref[...].astype(jnp.float32)


def _emit_outputs(y, y_ref, s_ref, ss_ref, th, wsp):
    tc = y.shape[-1]
    y_ref[...] = y.reshape(1, th, wsp, tc)
    s = jnp.sum(y, axis=0).reshape(1, 1, tc)
    ss = jnp.sum(y * y, axis=0).reshape(1, 1, tc)
    s_ref[...] = jnp.broadcast_to(s, (1, 8, tc))
    ss_ref[...] = jnp.broadcast_to(ss, (1, 8, tc))


# ----------------------------------------------------------------------------
# Pallas kernels
# ----------------------------------------------------------------------------
def conv_bias_stats_kernel(x0, x1, x2, w_ref, b_ref, y_ref, s_ref, ss_ref):
    """conv3x3 + bias; also emits per-tile per-channel sum / sumsq."""
    th, wsp = y_ref.shape[1], y_ref.shape[2]
    taps = [x0[0], x1[0], x2[0]]                      # bf16 [TH, W+2, Cin]
    y = _conv_accumulate(taps, w_ref, b_ref, th, wsp)
    _emit_outputs(y, y_ref, s_ref, ss_ref, th, wsp)


def bn_relu_conv_bias_stats_kernel(x0, x1, x2, sc_ref, sh_ref, w_ref, b_ref,
                                   y_ref, s_ref, ss_ref):
    """relu(x*scale+shift) of the previous stage fused into conv3x3 + bias.

    Inputs x0/x1/x2 are row-shifted copies of the zero-padded *pre-BN* previous
    conv output; the padding positions are re-zeroed after the affine+ReLU via
    an iota mask so zero-padding semantics are preserved.
    """
    th, wsp = y_ref.shape[1], y_ref.shape[2]
    h_idx = pl.program_id(1)
    h_tot = pl.num_programs(1) * th
    sc = sc_ref[...].reshape(1, 1, -1)
    sh = sh_ref[...].reshape(1, 1, -1)
    taps = []
    for dy, xr in enumerate((x0, x1, x2)):
        a = xr[0]                                     # f32 [TH, W+2, Cin]
        a = jnp.maximum(a * sc + sh, 0.0)
        col = jax.lax.broadcasted_iota(jnp.int32, a.shape, 1)
        row = h_idx * th + dy + jax.lax.broadcasted_iota(jnp.int32, a.shape, 0)
        valid = (col >= 1) & (col <= wsp) & (row >= 1) & (row <= h_tot)
        taps.append(jnp.where(valid, a, 0.0).astype(jnp.bfloat16))
    y = _conv_accumulate(taps, w_ref, b_ref, th, wsp)
    _emit_outputs(y, y_ref, s_ref, ss_ref, th, wsp)


def bn_relu_kernel(y_ref, sc_ref, sh_ref, o_ref):
    """Final normalize + ReLU: out = max(y*scale + shift, 0)  (one FMA)."""
    sc = sc_ref[...].reshape(1, 1, 1, -1)
    sh = sh_ref[...].reshape(1, 1, 1, -1)
    o_ref[...] = jnp.maximum(y_ref[...] * sc + sh, 0.0)


# ----------------------------------------------------------------------------
# Tiling helpers
# ----------------------------------------------------------------------------
def _pick_tile_h(h, w, target_rows=1024):
    best = 1
    for th in range(1, h + 1):
        if h % th == 0 and th * w <= target_rows:
            best = th
    return best


def _pick_tile_c(c):
    if c > 128 and c % 128 == 0:
        return 128
    return c


# ----------------------------------------------------------------------------
# pallas_call wrappers
# ----------------------------------------------------------------------------
def _conv3x3_stage(x, w, b, scale=None, shift=None):
    """3x3 'SAME' conv + bias on NHWC `x`, returning (y_pre_bn, ch_sum, ch_sumsq).

    If scale/shift are given, `x` is the previous stage's *pre-BN* output and
    relu(x*scale+shift) (with correct zero padding) is fed to the conv — i.e.
    the previous BN+ReLU is fused into this kernel.
    """
    n, h, wsp, cin = x.shape
    cout = w.shape[-1]
    th = _pick_tile_h(h, wsp)
    tc = _pick_tile_c(cout)
    nht, nct = h // th, cout // tc

    fused = scale is not None
    xp = jnp.pad(x, ((0, 0), (1, 1), (1, 1), (0, 0)))
    cp_dtype = jnp.float32 if fused else jnp.bfloat16
    copies = [xp[:, dy:dy + h, :, :].astype(cp_dtype) for dy in range(3)]

    wmat = w.reshape(9, cin, cout).astype(jnp.bfloat16)
    bias = b.reshape(1, cout).astype(jnp.float32)

    x_spec = pl.BlockSpec((1, th, wsp + 2, cin), lambda ni, hi, ci: (ni, hi, 0, 0))
    w_spec = pl.BlockSpec((9, cin, tc), lambda ni, hi, ci: (0, 0, ci))
    b_spec = pl.BlockSpec((1, tc), lambda ni, hi, ci: (0, ci))
    y_spec = pl.BlockSpec((1, th, wsp, tc), lambda ni, hi, ci: (ni, hi, 0, ci))
    st_spec = pl.BlockSpec((1, 8, tc), lambda ni, hi, ci: (ni * nht + hi, 0, ci))

    out_shape = (jax.ShapeDtypeStruct((n, h, wsp, cout), jnp.float32),
                 jax.ShapeDtypeStruct((n * nht, 8, cout), jnp.float32),
                 jax.ShapeDtypeStruct((n * nht, 8, cout), jnp.float32))

    if fused:
        kernel = bn_relu_conv_bias_stats_kernel
        vec_spec = pl.BlockSpec((1, cin), lambda ni, hi, ci: (0, 0))
        in_specs = [x_spec] * 3 + [vec_spec, vec_spec, w_spec, b_spec]
        args = (*copies,
                scale.reshape(1, cin).astype(jnp.float32),
                shift.reshape(1, cin).astype(jnp.float32),
                wmat, bias)
    else:
        kernel = conv_bias_stats_kernel
        in_specs = [x_spec] * 3 + [w_spec, b_spec]
        args = (*copies, wmat, bias)

    y, s, ss = pl.pallas_call(
        kernel,
        out_shape=out_shape,
        grid=(n, nht, nct),
        in_specs=in_specs,
        out_specs=(y_spec, st_spec, st_spec),
        compiler_params=pltpu.CompilerParams(
            dimension_semantics=("parallel", "parallel", "parallel")),
    )(*args)
    return y, jnp.sum(s[:, 0, :], axis=0), jnp.sum(ss[:, 0, :], axis=0)


def _bn_relu_apply(y, scale, shift):
    n, h, wsp, c = y.shape
    th = _pick_tile_h(h, wsp)
    tc = _pick_tile_c(c)
    blk = pl.BlockSpec((1, th, wsp, tc), lambda ni, hi, ci: (ni, hi, 0, ci))
    vec = pl.BlockSpec((1, tc), lambda ni, hi, ci: (0, ci))
    return pl.pallas_call(
        bn_relu_kernel,
        out_shape=jax.ShapeDtypeStruct(y.shape, jnp.float32),
        grid=(n, h // th, c // tc),
        in_specs=[blk, vec, vec],
        out_specs=blk,
        compiler_params=pltpu.CompilerParams(
            dimension_semantics=("parallel", "parallel", "parallel")),
    )(y, scale.reshape(1, c).astype(jnp.float32),
      shift.reshape(1, c).astype(jnp.float32))


def _bn_scale_shift(ch_sum, ch_sumsq, count, gamma, beta):
    mean = ch_sum / count
    var = jnp.maximum(ch_sumsq / count - mean * mean, 0.0)   # biased (train mode)
    scale = gamma * jax.lax.rsqrt(var + BN_EPS)
    shift = beta - mean * scale
    return scale, shift


# ----------------------------------------------------------------------------
# VGGBlock forward (NCHW in / NCHW out, matching the torch module)
# ----------------------------------------------------------------------------
def vgg_block_forward(x_nchw, p):
    x = jnp.transpose(x_nchw, (0, 2, 3, 1)).astype(jnp.float32)   # -> NHWC
    n, h, w, _ = x.shape
    count = jnp.float32(n * h * w)

    # stage 1: conv1 + bias, per-channel partial stats
    y1, s1, ss1 = _conv3x3_stage(x, p["w1"], p["b1"])
    scale1, shift1 = _bn_scale_shift(s1, ss1, count, p["g1"], p["be1"])

    # stage 2: BN1+ReLU fused into conv2 + bias, partial stats
    y2, s2, ss2 = _conv3x3_stage(y1, p["w2"], p["b2"],
                                 scale=scale1, shift=shift1)
    scale2, shift2 = _bn_scale_shift(s2, ss2, count, p["g2"], p["be2"])

    out = _bn_relu_apply(y2, scale2, shift2)
    return jnp.transpose(out, (0, 3, 1, 2))                      # -> NCHW


# ----------------------------------------------------------------------------
# Parameters (PyTorch-default-like init) and a pure-JAX reference
# ----------------------------------------------------------------------------
def make_params(key, cin, cmid, cout):
    ks = jax.random.split(key, 4)
    lim1 = 1.0 / (cin * 9) ** 0.5
    lim2 = 1.0 / (cmid * 9) ** 0.5
    return {
        "w1": jax.random.uniform(ks[0], (3, 3, cin, cmid), jnp.float32, -lim1, lim1),
        "b1": jax.random.uniform(ks[1], (cmid,), jnp.float32, -lim1, lim1),
        "g1": jnp.ones((cmid,), jnp.float32),
        "be1": jnp.zeros((cmid,), jnp.float32),
        "w2": jax.random.uniform(ks[2], (3, 3, cmid, cout), jnp.float32, -lim2, lim2),
        "b2": jax.random.uniform(ks[3], (cout,), jnp.float32, -lim2, lim2),
        "g2": jnp.ones((cout,), jnp.float32),
        "be2": jnp.zeros((cout,), jnp.float32),
    }


def _q(a):  # mirror the kernel's bf16 MXU-operand quantization
    return a.astype(jnp.bfloat16).astype(jnp.float32)


def _ref_conv3x3(x, w, b):
    y = jax.lax.conv_general_dilated(
        x, w, window_strides=(1, 1), padding="SAME",
        dimension_numbers=("NHWC", "HWIO", "NHWC"),
        precision=jax.lax.Precision.HIGHEST)
    return y + b.reshape(1, 1, 1, -1)


def ref_vgg_block(x_nchw, p):
    x = jnp.transpose(x_nchw, (0, 2, 3, 1)).astype(jnp.float32)
    y1 = _ref_conv3x3(_q(x), _q(p["w1"]), p["b1"])
    m1 = jnp.mean(y1, axis=(0, 1, 2)); v1 = jnp.var(y1, axis=(0, 1, 2))
    a1 = jnp.maximum((y1 - m1) * jax.lax.rsqrt(v1 + BN_EPS) * p["g1"] + p["be1"], 0.0)
    y2 = _ref_conv3x3(_q(a1), _q(p["w2"]), p["b2"])
    m2 = jnp.mean(y2, axis=(0, 1, 2)); v2 = jnp.var(y2, axis=(0, 1, 2))
    out = jnp.maximum((y2 - m2) * jax.lax.rsqrt(v2 + BN_EPS) * p["g2"] + p["be2"], 0.0)
    return jnp.transpose(out, (0, 3, 1, 2))


# ----------------------------------------------------------------------------
if __name__ == "__main__":
    key = jax.random.PRNGKey(0)
    k_x, k_p = jax.random.split(key)

    N, C_IN, H, W = 2, 4, 16, 16
    C_MID, C_OUT = 32, 32

    x = jax.random.normal(k_x, (N, C_IN, H, W), jnp.float32)
    params = make_params(k_p, C_IN, C_MID, C_OUT)

    out = jax.jit(vgg_block_forward)(x, params)
    out = jax.block_until_ready(out)

    assert out.shape == (N, C_OUT, H, W), out.shape
    assert bool(jnp.all(jnp.isfinite(out)))
    assert bool(jnp.all(out >= 0.0))                      # ReLU range

    ref = ref_vgg_block(x, params)
    err = float(jnp.max(jnp.abs(out - ref)))
    assert err < 5e-2, f"max abs err vs reference: {err}"

    print("KERNEL_OK")
</pallas_src>

<mosaic_0001>
module attributes {stable_mosaic.version = 11 : i64} {
  func.func @conv_bias_stats_kernel(%arg0: i32, %arg1: i32, %arg2: i32, %arg3: memref<1x16x18x4xbf16, #tpu.memory_space<vmem>>, %arg4: memref<1x16x18x4xbf16, #tpu.memory_space<vmem>>, %arg5: memref<1x16x18x4xbf16, #tpu.memory_space<vmem>>, %arg6: memref<9x4x32xbf16, #tpu.memory_space<vmem>>, %arg7: memref<1x32xf32, #tpu.memory_space<vmem>>, %arg8: memref<1x16x16x32xf32, #tpu.memory_space<vmem>>, %arg9: memref<1x8x32xf32, #tpu.memory_space<vmem>>, %arg10: memref<1x8x32xf32, #tpu.memory_space<vmem>>) attributes {dimension_semantics = [#tpu.dimension_semantics<parallel>, #tpu.dimension_semantics<parallel>, #tpu.dimension_semantics<parallel>], iteration_bounds = array<i64: 2, 1, 1>, scalar_prefetch = 0 : i64, scratch_operands = 0 : i64, tpu.core_type = #tpu.core_type<tc>, window_params = [{transform_indices = @transform_0, window_bounds = array<i64: 1, 16, 18, 4>}, {transform_indices = @transform_1, window_bounds = array<i64: 1, 16, 18, 4>}, {transform_indices = @transform_2, window_bounds = array<i64: 1, 16, 18, 4>}, {transform_indices = @transform_3, window_bounds = array<i64: 9, 4, 32>}, {transform_indices = @transform_4, window_bounds = array<i64: 1, 32>}, {transform_indices = @transform_5, window_bounds = array<i64: 1, 16, 16, 32>}, {transform_indices = @transform_6, window_bounds = array<i64: 1, 8, 32>}, {transform_indices = @transform_7, window_bounds = array<i64: 1, 8, 32>}]} {
    %c0 = arith.constant 0 : index
    %c0_0 = arith.constant 0 : index
    %c0_1 = arith.constant 0 : index
    %c0_2 = arith.constant 0 : index
    %0 = vector.load %arg3[%c0, %c0_0, %c0_1, %c0_2] : memref<1x16x18x4xbf16, #tpu.memory_space<vmem>>, vector<1x16x18x4xbf16>
    %1 = vector.shape_cast %0 : vector<1x16x18x4xbf16> to vector<16x18x4xbf16>
    %c0_3 = arith.constant 0 : index
    %c0_4 = arith.constant 0 : index
    %c0_5 = arith.constant 0 : index
    %c0_6 = arith.constant 0 : index
    %2 = vector.load %arg4[%c0_3, %c0_4, %c0_5, %c0_6] : memref<1x16x18x4xbf16, #tpu.memory_space<vmem>>, vector<1x16x18x4xbf16>
    %3 = vector.shape_cast %2 : vector<1x16x18x4xbf16> to vector<16x18x4xbf16>
    %c0_7 = arith.constant 0 : index
    %c0_8 = arith.constant 0 : index
    %c0_9 = arith.constant 0 : index
    %c0_10 = arith.constant 0 : index
    %4 = vector.load %arg5[%c0_7, %c0_8, %c0_9, %c0_10] : memref<1x16x18x4xbf16, #tpu.memory_space<vmem>>, vector<1x16x18x4xbf16>
    %5 = vector.shape_cast %4 : vector<1x16x18x4xbf16> to vector<16x18x4xbf16>
    %cst = arith.constant 0.000000e+00 : f32
    %6 = vector.broadcast %cst : f32 to vector<256x32xf32>
    %7 = vector.extract_strided_slice %1 {offsets = [0, 0, 0], sizes = [16, 16, 4], strides = [1, 1, 1]} : vector<16x18x4xbf16> to vector<16x16x4xbf16>
    %8 = vector.shape_cast %7 : vector<16x16x4xbf16> to vector<256x4xbf16>
    %c0_11 = arith.constant 0 : index
    %c0_12 = arith.constant 0 : index
    %c0_13 = arith.constant 0 : index
    %9 = vector.load %arg6[%c0_11, %c0_12, %c0_13] : memref<9x4x32xbf16, #tpu.memory_space<vmem>>, vector<1x4x32xbf16>
    %10 = vector.shape_cast %9 : vector<1x4x32xbf16> to vector<4x32xbf16>
    %cst_14 = arith.constant dense<0.000000e+00> : vector<256x32xf32>
    %11 = tpu.matmul %8, %10, %cst_14 {dimension_numbers = #tpu.dot_dimension_numbers<[1], [0], [0], [1], [0, 0, 1, 1], [], []>} : vector<256x4xbf16>, vector<4x32xbf16>, vector<256x32xf32> -> vector<256x32xf32>
    %12 = arith.addf %6, %11 : vector<256x32xf32>
    %13 = vector.extract_strided_slice %1 {offsets = [0, 1, 0], sizes = [16, 16, 4], strides = [1, 1, 1]} : vector<16x18x4xbf16> to vector<16x16x4xbf16>
    %14 = vector.shape_cast %13 : vector<16x16x4xbf16> to vector<256x4xbf16>
    %c1 = arith.constant 1 : index
    %c0_15 = arith.constant 0 : index
    %c0_16 = arith.constant 0 : index
    %15 = vector.load %arg6[%c1, %c0_15, %c0_16] : memref<9x4x32xbf16, #tpu.memory_space<vmem>>, vector<1x4x32xbf16>
    %16 = vector.shape_cast %15 : vector<1x4x32xbf16> to vector<4x32xbf16>
    %cst_17 = arith.constant dense<0.000000e+00> : vector<256x32xf32>
    %17 = tpu.matmul %14, %16, %cst_17 {dimension_numbers = #tpu.dot_dimension_numbers<[1], [0], [0], [1], [0, 0, 1, 1], [], []>} : vector<256x4xbf16>, vector<4x32xbf16>, vector<256x32xf32> -> vector<256x32xf32>
    %18 = arith.addf %12, %17 : vector<256x32xf32>
    %19 = vector.extract_strided_slice %1 {offsets = [0, 2, 0], sizes = [16, 16, 4], strides = [1, 1, 1]} : vector<16x18x4xbf16> to vector<16x16x4xbf16>
    %20 = vector.shape_cast %19 : vector<16x16x4xbf16> to vector<256x4xbf16>
    %c2 = arith.constant 2 : index
    %c0_18 = arith.constant 0 : index
    %c0_19 = arith.constant 0 : index
    %21 = vector.load %arg6[%c2, %c0_18, %c0_19] : memref<9x4x32xbf16, #tpu.memory_space<vmem>>, vector<1x4x32xbf16>
    %22 = vector.shape_cast %21 : vector<1x4x32xbf16> to vector<4x32xbf16>
    %cst_20 = arith.constant dense<0.000000e+00> : vector<256x32xf32>
    %23 = tpu.matmul %20, %22, %cst_20 {dimension_numbers = #tpu.dot_dimension_numbers<[1], [0], [0], [1], [0, 0, 1, 1], [], []>} : vector<256x4xbf16>, vector<4x32xbf16>, vector<256x32xf32> -> vector<256x32xf32>
    %24 = arith.addf %18, %23 : vector<256x32xf32>
    %25 = vector.extract_strided_slice %3 {offsets = [0, 0, 0], sizes = [16, 16, 4], strides = [1, 1, 1]} : vector<16x18x4xbf16> to vector<16x16x4xbf16>
    %26 = vector.shape_cast %25 : vector<16x16x4xbf16> to vector<256x4xbf16>
    %c3 = arith.constant 3 : index
    %c0_21 = arith.constant 0 : index
    %c0_22 = arith.constant 0 : index
    %27 = vector.load %arg6[%c3, %c0_21, %c0_22] : memref<9x4x32xbf16, #tpu.memory_space<vmem>>, vector<1x4x32xbf16>
    %28 = vector.shape_cast %27 : vector<1x4x32xbf16> to vector<4x32xbf16>
    %cst_23 = arith.constant dense<0.000000e+00> : vector<256x32xf32>
    %29 = tpu.matmul %26, %28, %cst_23 {dimension_numbers = #tpu.dot_dimension_numbers<[1], [0], [0], [1], [0, 0, 1, 1], [], []>} : vector<256x4xbf16>, vector<4x32xbf16>, vector<256x32xf32> -> vector<256x32xf32>
    %30 = arith.addf %24, %29 : vector<256x32xf32>
    %31 = vector.extract_strided_slice %3 {offsets = [0, 1, 0], sizes = [16, 16, 4], strides = [1, 1, 1]} : vector<16x18x4xbf16> to vector<16x16x4xbf16>
    %32 = vector.shape_cast %31 : vector<16x16x4xbf16> to vector<256x4xbf16>
    %c4 = arith.constant 4 : index
    %c0_24 = arith.constant 0 : index
    %c0_25 = arith.constant 0 : index
    %33 = vector.load %arg6[%c4, %c0_24, %c0_25] : memref<9x4x32xbf16, #tpu.memory_space<vmem>>, vector<1x4x32xbf16>
    %34 = vector.shape_cast %33 : vector<1x4x32xbf16> to vector<4x32xbf16>
    %cst_26 = arith.constant dense<0.000000e+00> : vector<256x32xf32>
    %35 = tpu.matmul %32, %34, %cst_26 {dimension_numbers = #tpu.dot_dimension_numbers<[1], [0], [0], [1], [0, 0, 1, 1], [], []>} : vector<256x4xbf16>, vector<4x32xbf16>, vector<256x32xf32> -> vector<256x32xf32>
    %36 = arith.addf %30, %35 : vector<256x32xf32>
    %37 = vector.extract_strided_slice %3 {offsets = [0, 2, 0], sizes = [16, 16, 4], strides = [1, 1, 1]} : vector<16x18x4xbf16> to vector<16x16x4xbf16>
    %38 = vector.shape_cast %37 : vector<16x16x4xbf16> to vector<256x4xbf16>
    %c5 = arith.constant 5 : index
    %c0_27 = arith.constant 0 : index
    %c0_28 = arith.constant 0 : index
    %39 = vector.load %arg6[%c5, %c0_27, %c0_28] : memref<9x4x32xbf16, #tpu.memory_space<vmem>>, vector<1x4x32xbf16>
    %40 = vector.shape_cast %39 : vector<1x4x32xbf16> to vector<4x32xbf16>
    %cst_29 = arith.constant dense<0.000000e+00> : vector<256x32xf32>
    %41 = tpu.matmul %38, %40, %cst_29 {dimension_numbers = #tpu.dot_dimension_numbers<[1], [0], [0], [1], [0, 0, 1, 1], [], []>} : vector<256x4xbf16>, vector<4x32xbf16>, vector<256x32xf32> -> vector<256x32xf32>
    %42 = arith.addf %36, %41 : vector<256x32xf32>
    %43 = vector.extract_strided_slice %5 {offsets = [0, 0, 0], sizes = [16, 16, 4], strides = [1, 1, 1]} : vector<16x18x4xbf16> to vector<16x16x4xbf16>
    %44 = vector.shape_cast %43 : vector<16x16x4xbf16> to vector<256x4xbf16>
    %c6 = arith.constant 6 : index
    %c0_30 = arith.constant 0 : index
    %c0_31 = arith.constant 0 : index
    %45 = vector.load %arg6[%c6, %c0_30, %c0_31] : memref<9x4x32xbf16, #tpu.memory_space<vmem>>, vector<1x4x32xbf16>
    %46 = vector.shape_cast %45 : vector<1x4x32xbf16> to vector<4x32xbf16>
    %cst_32 = arith.constant dense<0.000000e+00> : vector<256x32xf32>
    %47 = tpu.matmul %44, %46, %cst_32 {dimension_numbers = #tpu.dot_dimension_numbers<[1], [0], [0], [1], [0, 0, 1, 1], [], []>} : vector<256x4xbf16>, vector<4x32xbf16>, vector<256x32xf32> -> vector<256x32xf32>
    %48 = arith.addf %42, %47 : vector<256x32xf32>
    %49 = vector.extract_strided_slice %5 {offsets = [0, 1, 0], sizes = [16, 16, 4], strides = [1, 1, 1]} : vector<16x18x4xbf16> to vector<16x16x4xbf16>
    %50 = vector.shape_cast %49 : vector<16x16x4xbf16> to vector<256x4xbf16>
    %c7 = arith.constant 7 : index
    %c0_33 = arith.constant 0 : index
    %c0_34 = arith.constant 0 : index
    %51 = vector.load %arg6[%c7, %c0_33, %c0_34] : memref<9x4x32xbf16, #tpu.memory_space<vmem>>, vector<1x4x32xbf16>
    %52 = vector.shape_cast %51 : vector<1x4x32xbf16> to vector<4x32xbf16>
    %cst_35 = arith.constant dense<0.000000e+00> : vector<256x32xf32>
    %53 = tpu.matmul %50, %52, %cst_35 {dimension_numbers = #tpu.dot_dimension_numbers<[1], [0], [0], [1], [0, 0, 1, 1], [], []>} : vector<256x4xbf16>, vector<4x32xbf16>, vector<256x32xf32> -> vector<256x32xf32>
    %54 = arith.addf %48, %53 : vector<256x32xf32>
    %55 = vector.extract_strided_slice %5 {offsets = [0, 2, 0], sizes = [16, 16, 4], strides = [1, 1, 1]} : vector<16x18x4xbf16> to vector<16x16x4xbf16>
    %56 = vector.shape_cast %55 : vector<16x16x4xbf16> to vector<256x4xbf16>
    %c8 = arith.constant 8 : index
    %c0_36 = arith.constant 0 : index
    %c0_37 = arith.constant 0 : index
    %57 = vector.load %arg6[%c8, %c0_36, %c0_37] : memref<9x4x32xbf16, #tpu.memory_space<vmem>>, vector<1x4x32xbf16>
    %58 = vector.shape_cast %57 : vector<1x4x32xbf16> to vector<4x32xbf16>
    %cst_38 = arith.constant dense<0.000000e+00> : vector<256x32xf32>
    %59 = tpu.matmul %56, %58, %cst_38 {dimension_numbers = #tpu.dot_dimension_numbers<[1], [0], [0], [1], [0, 0, 1, 1], [], []>} : vector<256x4xbf16>, vector<4x32xbf16>, vector<256x32xf32> -> vector<256x32xf32>
    %60 = arith.addf %54, %59 : vector<256x32xf32>
    %c0_39 = arith.constant 0 : index
    %c0_40 = arith.constant 0 : index
    %61 = vector.load %arg7[%c0_39, %c0_40] : memref<1x32xf32, #tpu.memory_space<vmem>>, vector<1x32xf32>
    %62 = vector.broadcast %61 : vector<1x32xf32> to vector<256x32xf32>
    %63 = arith.addf %60, %62 : vector<256x32xf32>
    %64 = vector.shape_cast %63 : vector<256x32xf32> to vector<1x16x16x32xf32>
    %c0_41 = arith.constant 0 : index
    %c0_42 = arith.constant 0 : index
    %c0_43 = arith.constant 0 : index
    %c0_44 = arith.constant 0 : index
    %65 = vector.load %arg8[%c0_41, %c0_42, %c0_43, %c0_44] : memref<1x16x16x32xf32, #tpu.memory_space<vmem>>, vector<1x16x16x32xf32>
    tpu.vector_store %arg8[%c0_41, %c0_42, %c0_43, %c0_44], %64 {strides = array<i32>} : memref<1x16x16x32xf32, #tpu.memory_space<vmem>>, vector<1x16x16x32xf32>,
    %cst_45 = arith.constant dense<0.000000e+00> : vector<32xf32>
    %66 = vector.multi_reduction <add>, %63, %cst_45 [0] : vector<256x32xf32> to vector<32xf32>
    %67 = vector.shape_cast %66 : vector<32xf32> to vector<1x1x32xf32>
    %68 = arith.mulf %63, %63 : vector<256x32xf32>
    %cst_46 = arith.constant dense<0.000000e+00> : vector<32xf32>
    %69 = vector.multi_reduction <add>, %68, %cst_46 [0] : vector<256x32xf32> to vector<32xf32>
    %70 = vector.shape_cast %69 : vector<32xf32> to vector<1x1x32xf32>
    %71 = vector.shape_cast %67 : vector<1x1x32xf32> to vector<1x1x32xf32>
    %72 = vector.broadcast %71 : vector<1x1x32xf32> to vector<1x8x32xf32>
    %c0_47 = arith.constant 0 : index
    %c0_48 = arith.constant 0 : index
    %c0_49 = arith.constant 0 : index
    %73 = vector.load %arg9[%c0_47, %c0_48, %c0_49] : memref<1x8x32xf32, #tpu.memory_space<vmem>>, vector<1x8x32xf32>
    tpu.vector_store %arg9[%c0_47, %c0_48, %c0_49], %72 {strides = array<i32>} : memref<1x8x32xf32, #tpu.memory_space<vmem>>, vector<1x8x32xf32>,
    %74 = vector.shape_cast %70 : vector<1x1x32xf32> to vector<1x1x32xf32>
    %75 = vector.broadcast %74 : vector<1x1x32xf32> to vector<1x8x32xf32>
    %c0_50 = arith.constant 0 : index
    %c0_51 = arith.constant 0 : index
    %c0_52 = arith.constant 0 : index
    %76 = vector.load %arg10[%c0_50, %c0_51, %c0_52] : memref<1x8x32xf32, #tpu.memory_space<vmem>>, vector<1x8x32xf32>
    tpu.vector_store %arg10[%c0_50, %c0_51, %c0_52], %75 {strides = array<i32>} : memref<1x8x32xf32, #tpu.memory_space<vmem>>, vector<1x8x32xf32>,
    return
  }
  func.func @transform_0(%arg0: i32, %arg1: i32, %arg2: i32) -> (i32, i32, i32, i32) {
    %c0_i32 = arith.constant 0 : i32
    %c0_i32_0 = arith.constant 0 : i32
    %c0_i32_1 = arith.constant 0 : i32
    return %arg0, %arg1, %c0_i32, %c0_i32_0 : i32, i32, i32, i32
  }
  func.func @transform_1(%arg0: i32, %arg1: i32, %arg2: i32) -> (i32, i32, i32, i32) {
    %c0_i32 = arith.constant 0 : i32
    %c0_i32_0 = arith.constant 0 : i32
    %c0_i32_1 = arith.constant 0 : i32
    return %arg0, %arg1, %c0_i32, %c0_i32_0 : i32, i32, i32, i32
  }
  func.func @transform_2(%arg0: i32, %arg1: i32, %arg2: i32) -> (i32, i32, i32, i32) {
    %c0_i32 = arith.constant 0 : i32
    %c0_i32_0 = arith.constant 0 : i32
    %c0_i32_1 = arith.constant 0 : i32
    return %arg0, %arg1, %c0_i32, %c0_i32_0 : i32, i32, i32, i32
  }
  func.func @transform_3(%arg0: i32, %arg1: i32, %arg2: i32) -> (i32, i32, i32) {
    %c0_i32 = arith.constant 0 : i32
    %c0_i32_0 = arith.constant 0 : i32
    %c0_i32_1 = arith.constant 0 : i32
    return %c0_i32, %c0_i32_0, %arg2 : i32, i32, i32
  }
  func.func @transform_4(%arg0: i32, %arg1: i32, %arg2: i32) -> (i32, i32) {
    %c0_i32 = arith.constant 0 : i32
    %c0_i32_0 = arith.constant 0 : i32
    return %c0_i32, %arg2 : i32, i32
  }
  func.func @transform_5(%arg0: i32, %arg1: i32, %arg2: i32) -> (i32, i32, i32, i32) {
    %c0_i32 = arith.constant 0 : i32
    %c0_i32_0 = arith.constant 0 : i32
    return %arg0, %arg1, %c0_i32, %arg2 : i32, i32, i32, i32
  }
  func.func @transform_6(%arg0: i32, %arg1: i32, %arg2: i32) -> (i32, i32, i32) {
    %c1_i32 = arith.constant 1 : i32
    %0 = arith.muli %arg0, %c1_i32 : i32
    %1 = arith.addi %0, %arg1 : i32
    %c0_i32 = arith.constant 0 : i32
    %c0_i32_0 = arith.constant 0 : i32
    return %1, %c0_i32, %arg2 : i32, i32, i32
  }
  func.func @transform_7(%arg0: i32, %arg1: i32, %arg2: i32) -> (i32, i32, i32) {
    %c1_i32 = arith.constant 1 : i32
    %0 = arith.muli %arg0, %c1_i32 : i32
    %1 = arith.addi %0, %arg1 : i32
    %c0_i32 = arith.constant 0 : i32
    %c0_i32_0 = arith.constant 0 : i32
    return %1, %c0_i32, %arg2 : i32, i32, i32
  }
}

module attributes {stable_mosaic.version = 11 : i64} {
  func.func @bn_relu_conv_bias_stats_kernel(%arg0: i32, %arg1: i32, %arg2: i32, %arg3: memref<1x16x18x32xf32, #tpu.memory_space<vmem>>, %arg4: memref<1x16x18x32xf32, #tpu.memory_space<vmem>>, %arg5: memref<1x16x18x32xf32, #tpu.memory_space<vmem>>, %arg6: memref<1x32xf32, #tpu.memory_space<vmem>>, %arg7: memref<1x32xf32, #tpu.memory_space<vmem>>, %arg8: memref<9x32x32xbf16, #tpu.memory_space<vmem>>, %arg9: memref<1x32xf32, #tpu.memory_space<vmem>>, %arg10: memref<1x16x16x32xf32, #tpu.memory_space<vmem>>, %arg11: memref<1x8x32xf32, #tpu.memory_space<vmem>>, %arg12: memref<1x8x32xf32, #tpu.memory_space<vmem>>) attributes {dimension_semantics = [#tpu.dimension_semantics<parallel>, #tpu.dimension_semantics<parallel>, #tpu.dimension_semantics<parallel>], iteration_bounds = array<i64: 2, 1, 1>, scalar_prefetch = 0 : i64, scratch_operands = 0 : i64, tpu.core_type = #tpu.core_type<tc>, window_params = [{transform_indices = @transform_0, window_bounds = array<i64: 1, 16, 18, 32>}, {transform_indices = @transform_1, window_bounds = array<i64: 1, 16, 18, 32>}, {transform_indices = @transform_2, window_bounds = array<i64: 1, 16, 18, 32>}, {pipeline_mode = #tpu.pipeline_mode<synchronous>, transform_indices = @transform_3, window_bounds = array<i64: 1, 32>}, {pipeline_mode = #tpu.pipeline_mode<synchronous>, transform_indices = @transform_4, window_bounds = array<i64: 1, 32>}, {transform_indices = @transform_5, window_bounds = array<i64: 9, 32, 32>}, {transform_indices = @transform_6, window_bounds = array<i64: 1, 32>}, {transform_indices = @transform_7, window_bounds = array<i64: 1, 16, 16, 32>}, {transform_indices = @transform_8, window_bounds = array<i64: 1, 8, 32>}, {transform_indices = @transform_9, window_bounds = array<i64: 1, 8, 32>}]} {
    %c0 = arith.constant 0 : index
    %c0_0 = arith.constant 0 : index
    %0 = vector.load %arg6[%c0, %c0_0] : memref<1x32xf32, #tpu.memory_space<vmem>>, vector<1x32xf32>
    %1 = vector.shape_cast %0 : vector<1x32xf32> to vector<1x1x32xf32>
    %c0_1 = arith.constant 0 : index
    %c0_2 = arith.constant 0 : index
    %2 = vector.load %arg7[%c0_1, %c0_2] : memref<1x32xf32, #tpu.memory_space<vmem>>, vector<1x32xf32>
    %3 = vector.shape_cast %2 : vector<1x32xf32> to vector<1x1x32xf32>
    %c0_3 = arith.constant 0 : index
    %c0_4 = arith.constant 0 : index
    %c0_5 = arith.constant 0 : index
    %c0_6 = arith.constant 0 : index
    %4 = vector.load %arg3[%c0_3, %c0_4, %c0_5, %c0_6] : memref<1x16x18x32xf32, #tpu.memory_space<vmem>>, vector<1x16x18x32xf32>
    %5 = vector.shape_cast %4 : vector<1x16x18x32xf32> to vector<16x18x32xf32>
    %6 = vector.broadcast %1 : vector<1x1x32xf32> to vector<16x18x32xf32>
    %7 = arith.mulf %5, %6 : vector<16x18x32xf32>
    %8 = vector.broadcast %3 : vector<1x1x32xf32> to vector<16x18x32xf32>
    %9 = arith.addf %7, %8 : vector<16x18x32xf32>
    %cst = arith.constant 0.000000e+00 : f32
    %10 = vector.broadcast %cst : f32 to vector<16x18x32xf32>
    %11 = arith.maximumf %9, %10 : vector<16x18x32xf32>
    %12 = tpu.iota {dimensions = array<i32: 1>} : vector<16x18x32xi32>
    %c16_i32 = arith.constant 16 : i32
    %13 = arith.muli %arg1, %c16_i32 : i32
    %c0_i32 = arith.constant 0 : i32
    %14 = arith.addi %13, %c0_i32 : i32
    %15 = tpu.iota {dimensions = array<i32: 0>} : vector<16x18x32xi32>
    %16 = vector.broadcast %14 : i32 to vector<16x18x32xi32>
    %17 = arith.addi %16, %15 : vector<16x18x32xi32>
    %c1_i32 = arith.constant 1 : i32
    %18 = vector.broadcast %c1_i32 : i32 to vector<16x18x32xi32>
    %19 = arith.cmpi sge, %12, %18 : vector<16x18x32xi32>
    %c16_i32_7 = arith.constant 16 : i32
    %20 = vector.broadcast %c16_i32_7 : i32 to vector<16x18x32xi32>
    %21 = arith.cmpi sle, %12, %20 : vector<16x18x32xi32>
    %22 = arith.andi %19, %21 : vector<16x18x32xi1>
    %c1_i32_8 = arith.constant 1 : i32
    %23 = vector.broadcast %c1_i32_8 : i32 to vector<16x18x32xi32>
    %24 = arith.cmpi sge, %17, %23 : vector<16x18x32xi32>
    %25 = arith.andi %22, %24 : vector<16x18x32xi1>
    %c16_i32_9 = arith.constant 16 : i32
    %26 = vector.broadcast %c16_i32_9 : i32 to vector<16x18x32xi32>
    %27 = arith.cmpi sle, %17, %26 : vector<16x18x32xi32>
    %28 = arith.andi %25, %27 : vector<16x18x32xi1>
    %cst_10 = arith.constant 0.000000e+00 : f32
    %29 = vector.broadcast %cst_10 : f32 to vector<16x18x32xf32>
    %30 = arith.select %28, %11, %29 : vector<16x18x32xi1>, vector<16x18x32xf32>
    %31 = arith.truncf %30 : vector<16x18x32xf32> to vector<16x18x32xbf16>
    %c0_11 = arith.constant 0 : index
    %c0_12 = arith.constant 0 : index
    %c0_13 = arith.constant 0 : index
    %c0_14 = arith.constant 0 : index
    %32 = vector.load %arg4[%c0_11, %c0_12, %c0_13, %c0_14] : memref<1x16x18x32xf32, #tpu.memory_space<vmem>>, vector<1x16x18x32xf32>
    %33 = vector.shape_cast %32 : vector<1x16x18x32xf32> to vector<16x18x32xf32>
    %34 = vector.broadcast %1 : vector<1x1x32xf32> to vector<16x18x32xf32>
    %35 = arith.mulf %33, %34 : vector<16x18x32xf32>
    %36 = vector.broadcast %3 : vector<1x1x32xf32> to vector<16x18x32xf32>
    %37 = arith.addf %35, %36 : vector<16x18x32xf32>
    %cst_15 = arith.constant 0.000000e+00 : f32
    %38 = vector.broadcast %cst_15 : f32 to vector<16x18x32xf32>
    %39 = arith.maximumf %37, %38 : vector<16x18x32xf32>
    %40 = tpu.iota {dimensions = array<i32: 1>} : vector<16x18x32xi32>
    %c16_i32_16 = arith.constant 16 : i32
    %41 = arith.muli %arg1, %c16_i32_16 : i32
    %c1_i32_17 = arith.constant 1 : i32
    %42 = arith.addi %41, %c1_i32_17 : i32
    %43 = tpu.iota {dimensions = array<i32: 0>} : vector<16x18x32xi32>
    %44 = vector.broadcast %42 : i32 to vector<16x18x32xi32>
    %45 = arith.addi %44, %43 : vector<16x18x32xi32>
    %c1_i32_18 = arith.constant 1 : i32
    %46 = vector.broadcast %c1_i32_18 : i32 to vector<16x18x32xi32>
    %47 = arith.cmpi sge, %40, %46 : vector<16x18x32xi32>
    %c16_i32_19 = arith.constant 16 : i32
    %48 = vector.broadcast %c16_i32_19 : i32 to vector<16x18x32xi32>
    %49 = arith.cmpi sle, %40, %48 : vector<16x18x32xi32>
    %50 = arith.andi %47, %49 : vector<16x18x32xi1>
    %c1_i32_20 = arith.constant 1 : i32
    %51 = vector.broadcast %c1_i32_20 : i32 to vector<16x18x32xi32>
    %52 = arith.cmpi sge, %45, %51 : vector<16x18x32xi32>
    %53 = arith.andi %50, %52 : vector<16x18x32xi1>
    %c16_i32_21 = arith.constant 16 : i32
    %54 = vector.broadcast %c16_i32_21 : i32 to vector<16x18x32xi32>
    %55 = arith.cmpi sle, %45, %54 : vector<16x18x32xi32>
    %56 = arith.andi %53, %55 : vector<16x18x32xi1>
    %cst_22 = arith.constant 0.000000e+00 : f32
    %57 = vector.broadcast %cst_22 : f32 to vector<16x18x32xf32>
    %58 = arith.select %56, %39, %57 : vector<16x18x32xi1>, vector<16x18x32xf32>
    %59 = arith.truncf %58 : vector<16x18x32xf32> to vector<16x18x32xbf16>
    %c0_23 = arith.constant 0 : index
    %c0_24 = arith.constant 0 : index
    %c0_25 = arith.constant 0 : index
    %c0_26 = arith.constant 0 : index
    %60 = vector.load %arg5[%c0_23, %c0_24, %c0_25, %c0_26] : memref<1x16x18x32xf32, #tpu.memory_space<vmem>>, vector<1x16x18x32xf32>
    %61 = vector.shape_cast %60 : vector<1x16x18x32xf32> to vector<16x18x32xf32>
    %62 = vector.broadcast %1 : vector<1x1x32xf32> to vector<16x18x32xf32>
    %63 = arith.mulf %61, %62 : vector<16x18x32xf32>
    %64 = vector.broadcast %3 : vector<1x1x32xf32> to vector<16x18x32xf32>
    %65 = arith.addf %63, %64 : vector<16x18x32xf32>
    %cst_27 = arith.constant 0.000000e+00 : f32
    %66 = vector.broadcast %cst_27 : f32 to vector<16x18x32xf32>
    %67 = arith.maximumf %65, %66 : vector<16x18x32xf32>
    %68 = tpu.iota {dimensions = array<i32: 1>} : vector<16x18x32xi32>
    %c16_i32_28 = arith.constant 16 : i32
    %69 = arith.muli %arg1, %c16_i32_28 : i32
    %c2_i32 = arith.constant 2 : i32
    %70 = arith.addi %69, %c2_i32 : i32
    %71 = tpu.iota {dimensions = array<i32: 0>} : vector<16x18x32xi32>
    %72 = vector.broadcast %70 : i32 to vector<16x18x32xi32>
    %73 = arith.addi %72, %71 : vector<16x18x32xi32>
    %c1_i32_29 = arith.constant 1 : i32
    %74 = vector.broadcast %c1_i32_29 : i32 to vector<16x18x32xi32>
    %75 = arith.cmpi sge, %68, %74 : vector<16x18x32xi32>
    %c16_i32_30 = arith.constant 16 : i32
    %76 = vector.broadcast %c16_i32_30 : i32 to vector<16x18x32xi32>
    %77 = arith.cmpi sle, %68, %76 : vector<16x18x32xi32>
    %78 = arith.andi %75, %77 : vector<16x18x32xi1>
    %c1_i32_31 = arith.constant 1 : i32
    %79 = vector.broadcast %c1_i32_31 : i32 to vector<16x18x32xi32>
    %80 = arith.cmpi sge, %73, %79 : vector<16x18x32xi32>
    %81 = arith.andi %78, %80 : vector<16x18x32xi1>
    %c16_i32_32 = arith.constant 16 : i32
    %82 = vector.broadcast %c16_i32_32 : i32 to vector<16x18x32xi32>
    %83 = arith.cmpi sle, %73, %82 : vector<16x18x32xi32>
    %84 = arith.andi %81, %83 : vector<16x18x32xi1>
    %cst_33 = arith.constant 0.000000e+00 : f32
    %85 = vector.broadcast %cst_33 : f32 to vector<16x18x32xf32>
    %86 = arith.select %84, %67, %85 : vector<16x18x32xi1>, vector<16x18x32xf32>
    %87 = arith.truncf %86 : vector<16x18x32xf32> to vector<16x18x32xbf16>
    %cst_34 = arith.constant 0.000000e+00 : f32
    %88 = vector.broadcast %cst_34 : f32 to vector<256x32xf32>
    %89 = vector.extract_strided_slice %31 {offsets = [0, 0, 0], sizes = [16, 16, 32], strides = [1, 1, 1]} : vector<16x18x32xbf16> to vector<16x16x32xbf16>
    %90 = vector.shape_cast %89 : vector<16x16x32xbf16> to vector<256x32xbf16>
    %c0_35 = arith.constant 0 : index
    %c0_36 = arith.constant 0 : index
    %c0_37 = arith.constant 0 : index
    %91 = vector.load %arg8[%c0_35, %c0_36, %c0_37] : memref<9x32x32xbf16, #tpu.memory_space<vmem>>, vector<1x32x32xbf16>
    %92 = vector.shape_cast %91 : vector<1x32x32xbf16> to vector<32x32xbf16>
    %cst_38 = arith.constant dense<0.000000e+00> : vector<256x32xf32>
    %93 = tpu.matmul %90, %92, %cst_38 {dimension_numbers = #tpu.dot_dimension_numbers<[1], [0], [0], [1], [0, 0, 1, 1], [], []>} : vector<256x32xbf16>, vector<32x32xbf16>, vector<256x32xf32> -> vector<256x32xf32>
    %94 = arith.addf %88, %93 : vector<256x32xf32>
    %95 = vector.extract_strided_slice %31 {offsets = [0, 1, 0], sizes = [16, 16, 32], strides = [1, 1, 1]} : vector<16x18x32xbf16> to vector<16x16x32xbf16>
    %96 = vector.shape_cast %95 : vector<16x16x32xbf16> to vector<256x32xbf16>
    %c1 = arith.constant 1 : index
    %c0_39 = arith.constant 0 : index
    %c0_40 = arith.constant 0 : index
    %97 = vector.load %arg8[%c1, %c0_39, %c0_40] : memref<9x32x32xbf16, #tpu.memory_space<vmem>>, vector<1x32x32xbf16>
    %98 = vector.shape_cast %97 : vector<1x32x32xbf16> to vector<32x32xbf16>
    %cst_41 = arith.constant dense<0.000000e+00> : vector<256x32xf32>
    %99 = tpu.matmul %96, %98, %cst_41 {dimension_numbers = #tpu.dot_dimension_numbers<[1], [0], [0], [1], [0, 0, 1, 1], [], []>} : vector<256x32xbf16>, vector<32x32xbf16>, vector<256x32xf32> -> vector<256x32xf32>
    %100 = arith.addf %94, %99 : vector<256x32xf32>
    %101 = vector.extract_strided_slice %31 {offsets = [0, 2, 0], sizes = [16, 16, 32], strides = [1, 1, 1]} : vector<16x18x32xbf16> to vector<16x16x32xbf16>
    %102 = vector.shape_cast %101 : vector<16x16x32xbf16> to vector<256x32xbf16>
    %c2 = arith.constant 2 : index
    %c0_42 = arith.constant 0 : index
    %c0_43 = arith.constant 0 : index
    %103 = vector.load %arg8[%c2, %c0_42, %c0_43] : memref<9x32x32xbf16, #tpu.memory_space<vmem>>, vector<1x32x32xbf16>
    %104 = vector.shape_cast %103 : vector<1x32x32xbf16> to vector<32x32xbf16>
    %cst_44 = arith.constant dense<0.000000e+00> : vector<256x32xf32>
    %105 = tpu.matmul %102, %104, %cst_44 {dimension_numbers = #tpu.dot_dimension_numbers<[1], [0], [0], [1], [0, 0, 1, 1], [], []>} : vector<256x32xbf16>, vector<32x32xbf16>, vector<256x32xf32> -> vector<256x32xf32>
    %106 = arith.addf %100, %105 : vector<256x32xf32>
    %107 = vector.extract_strided_slice %59 {offsets = [0, 0, 0], sizes = [16, 16, 32], strides = [1, 1, 1]} : vector<16x18x32xbf16> to vector<16x16x32xbf16>
    %108 = vector.shape_cast %107 : vector<16x16x32xbf16> to vector<256x32xbf16>
    %c3 = arith.constant 3 : index
    %c0_45 = arith.constant 0 : index
    %c0_46 = arith.constant 0 : index
    %109 = vector.load %arg8[%c3, %c0_45, %c0_46] : memref<9x32x32xbf16, #tpu.memory_space<vmem>>, vector<1x32x32xbf16>
    %110 = vector.shape_cast %109 : vector<1x32x32xbf16> to vector<32x32xbf16>
    %cst_47 = arith.constant dense<0.000000e+00> : vector<256x32xf32>
    %111 = tpu.matmul %108, %110, %cst_47 {dimension_numbers = #tpu.dot_dimension_numbers<[1], [0], [0], [1], [0, 0, 1, 1], [], []>} : vector<256x32xbf16>, vector<32x32xbf16>, vector<256x32xf32> -> vector<256x32xf32>
    %112 = arith.addf %106, %111 : vector<256x32xf32>
    %113 = vector.extract_strided_slice %59 {offsets = [0, 1, 0], sizes = [16, 16, 32], strides = [1, 1, 1]} : vector<16x18x32xbf16> to vector<16x16x32xbf16>
    %114 = vector.shape_cast %113 : vector<16x16x32xbf16> to vector<256x32xbf16>
    %c4 = arith.constant 4 : index
    %c0_48 = arith.constant 0 : index
    %c0_49 = arith.constant 0 : index
    %115 = vector.load %arg8[%c4, %c0_48, %c0_49] : memref<9x32x32xbf16, #tpu.memory_space<vmem>>, vector<1x32x32xbf16>
    %116 = vector.shape_cast %115 : vector<1x32x32xbf16> to vector<32x32xbf16>
    %cst_50 = arith.constant dense<0.000000e+00> : vector<256x32xf32>
    %117 = tpu.matmul %114, %116, %cst_50 {dimension_numbers = #tpu.dot_dimension_numbers<[1], [0], [0], [1], [0, 0, 1, 1], [], []>} : vector<256x32xbf16>, vector<32x32xbf16>, vector<256x32xf32> -> vector<256x32xf32>
    %118 = arith.addf %112, %117 : vector<256x32xf32>
    %119 = vector.extract_strided_slice %59 {offsets = [0, 2, 0], sizes = [16, 16, 32], strides = [1, 1, 1]} : vector<16x18x32xbf16> to vector<16x16x32xbf16>
    %120 = vector.shape_cast %119 : vector<16x16x32xbf16> to vector<256x32xbf16>
    %c5 = arith.constant 5 : index
    %c0_51 = arith.constant 0 : index
    %c0_52 = arith.constant 0 : index
    %121 = vector.load %arg8[%c5, %c0_51, %c0_52] : memref<9x32x32xbf16, #tpu.memory_space<vmem>>, vector<1x32x32xbf16>
    %122 = vector.shape_cast %121 : vector<1x32x32xbf16> to vector<32x32xbf16>
    %cst_53 = arith.constant dense<0.000000e+00> : vector<256x32xf32>
    %123 = tpu.matmul %120, %122, %cst_53 {dimension_numbers = #tpu.dot_dimension_numbers<[1], [0], [0], [1], [0, 0, 1, 1], [], []>} : vector<256x32xbf16>, vector<32x32xbf16>, vector<256x32xf32> -> vector<256x32xf32>
    %124 = arith.addf %118, %123 : vector<256x32xf32>
    %125 = vector.extract_strided_slice %87 {offsets = [0, 0, 0], sizes = [16, 16, 32], strides = [1, 1, 1]} : vector<16x18x32xbf16> to vector<16x16x32xbf16>
    %126 = vector.shape_cast %125 : vector<16x16x32xbf16> to vector<256x32xbf16>
    %c6 = arith.constant 6 : index
    %c0_54 = arith.constant 0 : index
    %c0_55 = arith.constant 0 : index
    %127 = vector.load %arg8[%c6, %c0_54, %c0_55] : memref<9x32x32xbf16, #tpu.memory_space<vmem>>, vector<1x32x32xbf16>
    %128 = vector.shape_cast %127 : vector<1x32x32xbf16> to vector<32x32xbf16>
    %cst_56 = arith.constant dense<0.000000e+00> : vector<256x32xf32>
    %129 = tpu.matmul %126, %128, %cst_56 {dimension_numbers = #tpu.dot_dimension_numbers<[1], [0], [0], [1], [0, 0, 1, 1], [], []>} : vector<256x32xbf16>, vector<32x32xbf16>, vector<256x32xf32> -> vector<256x32xf32>
    %130 = arith.addf %124, %129 : vector<256x32xf32>
    %131 = vector.extract_strided_slice %87 {offsets = [0, 1, 0], sizes = [16, 16, 32], strides = [1, 1, 1]} : vector<16x18x32xbf16> to vector<16x16x32xbf16>
    %132 = vector.shape_cast %131 : vector<16x16x32xbf16> to vector<256x32xbf16>
    %c7 = arith.constant 7 : index
    %c0_57 = arith.constant 0 : index
    %c0_58 = arith.constant 0 : index
    %133 = vector.load %arg8[%c7, %c0_57, %c0_58] : memref<9x32x32xbf16, #tpu.memory_space<vmem>>, vector<1x32x32xbf16>
    %134 = vector.shape_cast %133 : vector<1x32x32xbf16> to vector<32x32xbf16>
    %cst_59 = arith.constant dense<0.000000e+00> : vector<256x32xf32>
    %135 = tpu.matmul %132, %134, %cst_59 {dimension_numbers = #tpu.dot_dimension_numbers<[1], [0], [0], [1], [0, 0, 1, 1], [], []>} : vector<256x32xbf16>, vector<32x32xbf16>, vector<256x32xf32> -> vector<256x32xf32>
    %136 = arith.addf %130, %135 : vector<256x32xf32>
    %137 = vector.extract_strided_slice %87 {offsets = [0, 2, 0], sizes = [16, 16, 32], strides = [1, 1, 1]} : vector<16x18x32xbf16> to vector<16x16x32xbf16>
    %138 = vector.shape_cast %137 : vector<16x16x32xbf16> to vector<256x32xbf16>
    %c8 = arith.constant 8 : index
    %c0_60 = arith.constant 0 : index
    %c0_61 = arith.constant 0 : index
    %139 = vector.load %arg8[%c8, %c0_60, %c0_61] : memref<9x32x32xbf16, #tpu.memory_space<vmem>>, vector<1x32x32xbf16>
    %140 = vector.shape_cast %139 : vector<1x32x32xbf16> to vector<32x32xbf16>
    %cst_62 = arith.constant dense<0.000000e+00> : vector<256x32xf32>
    %141 = tpu.matmul %138, %140, %cst_62 {dimension_numbers = #tpu.dot_dimension_numbers<[1], [0], [0], [1], [0, 0, 1, 1], [], []>} : vector<256x32xbf16>, vector<32x32xbf16>, vector<256x32xf32> -> vector<256x32xf32>
    %142 = arith.addf %136, %141 : vector<256x32xf32>
    %c0_63 = arith.constant 0 : index
    %c0_64 = arith.constant 0 : index
    %143 = vector.load %arg9[%c0_63, %c0_64] : memref<1x32xf32, #tpu.memory_space<vmem>>, vector<1x32xf32>
    %144 = vector.broadcast %143 : vector<1x32xf32> to vector<256x32xf32>
    %145 = arith.addf %142, %144 : vector<256x32xf32>
    %146 = vector.shape_cast %145 : vector<256x32xf32> to vector<1x16x16x32xf32>
    %c0_65 = arith.constant 0 : index
    %c0_66 = arith.constant 0 : index
    %c0_67 = arith.constant 0 : index
    %c0_68 = arith.constant 0 : index
    %147 = vector.load %arg10[%c0_65, %c0_66, %c0_67, %c0_68] : memref<1x16x16x32xf32, #tpu.memory_space<vmem>>, vector<1x16x16x32xf32>
    tpu.vector_store %arg10[%c0_65, %c0_66, %c0_67, %c0_68], %146 {strides = array<i32>} : memref<1x16x16x32xf32, #tpu.memory_space<vmem>>, vector<1x16x16x32xf32>,
    %cst_69 = arith.constant dense<0.000000e+00> : vector<32xf32>
    %148 = vector.multi_reduction <add>, %145, %cst_69 [0] : vector<256x32xf32> to vector<32xf32>
    %149 = vector.shape_cast %148 : vector<32xf32> to vector<1x1x32xf32>
    %150 = arith.mulf %145, %145 : vector<256x32xf32>
    %cst_70 = arith.constant dense<0.000000e+00> : vector<32xf32>
    %151 = vector.multi_reduction <add>, %150, %cst_70 [0] : vector<256x32xf32> to vector<32xf32>
    %152 = vector.shape_cast %151 : vector<32xf32> to vector<1x1x32xf32>
    %153 = vector.shape_cast %149 : vector<1x1x32xf32> to vector<1x1x32xf32>
    %154 = vector.broadcast %153 : vector<1x1x32xf32> to vector<1x8x32xf32>
    %c0_71 = arith.constant 0 : index
    %c0_72 = arith.constant 0 : index
    %c0_73 = arith.constant 0 : index
    %155 = vector.load %arg11[%c0_71, %c0_72, %c0_73] : memref<1x8x32xf32, #tpu.memory_space<vmem>>, vector<1x8x32xf32>
    tpu.vector_store %arg11[%c0_71, %c0_72, %c0_73], %154 {strides = array<i32>} : memref<1x8x32xf32, #tpu.memory_space<vmem>>, vector<1x8x32xf32>,
    %156 = vector.shape_cast %152 : vector<1x1x32xf32> to vector<1x1x32xf32>
    %157 = vector.broadcast %156 : vector<1x1x32xf32> to vector<1x8x32xf32>
    %c0_74 = arith.constant 0 : index
    %c0_75 = arith.constant 0 : index
    %c0_76 = arith.constant 0 : index
    %158 = vector.load %arg12[%c0_74, %c0_75, %c0_76] : memref<1x8x32xf32, #tpu.memory_space<vmem>>, vector<1x8x32xf32>
    tpu.vector_store %arg12[%c0_74, %c0_75, %c0_76], %157 {strides = array<i32>} : memref<1x8x32xf32, #tpu.memory_space<vmem>>, vector<1x8x32xf32>,
    return
  }
  func.func @transform_0(%arg0: i32, %arg1: i32, %arg2: i32) -> (i32, i32, i32, i32) {
    %c0_i32 = arith.constant 0 : i32
    %c0_i32_0 = arith.constant 0 : i32
    %c0_i32_1 = arith.constant 0 : i32
    return %arg0, %arg1, %c0_i32, %c0_i32_0 : i32, i32, i32, i32
  }
  func.func @transform_1(%arg0: i32, %arg1: i32, %arg2: i32) -> (i32, i32, i32, i32) {
    %c0_i32 = arith.constant 0 : i32
    %c0_i32_0 = arith.constant 0 : i32
    %c0_i32_1 = arith.constant 0 : i32
    return %arg0, %arg1, %c0_i32, %c0_i32_0 : i32, i32, i32, i32
  }
  func.func @transform_2(%arg0: i32, %arg1: i32, %arg2: i32) -> (i32, i32, i32, i32) {
    %c0_i32 = arith.constant 0 : i32
    %c0_i32_0 = arith.constant 0 : i32
    %c0_i32_1 = arith.constant 0 : i32
    return %arg0, %arg1, %c0_i32, %c0_i32_0 : i32, i32, i32, i32
  }
  func.func @transform_3(%arg0: i32, %arg1: i32, %arg2: i32) -> (i32, i32) {
    %c0_i32 = arith.constant 0 : i32
    %c0_i32_0 = arith.constant 0 : i32
    %c0_i32_1 = arith.constant 0 : i32
    return %c0_i32, %c0_i32_0 : i32, i32
  }
  func.func @transform_4(%arg0: i32, %arg1: i32, %arg2: i32) -> (i32, i32) {
    %c0_i32 = arith.constant 0 : i32
    %c0_i32_0 = arith.constant 0 : i32
    %c0_i32_1 = arith.constant 0 : i32
    return %c0_i32, %c0_i32_0 : i32, i32
  }
  func.func @transform_5(%arg0: i32, %arg1: i32, %arg2: i32) -> (i32, i32, i32) {
    %c0_i32 = arith.constant 0 : i32
    %c0_i32_0 = arith.constant 0 : i32
    %c0_i32_1 = arith.constant 0 : i32
    return %c0_i32, %c0_i32_0, %arg2 : i32, i32, i32
  }
  func.func @transform_6(%arg0: i32, %arg1: i32, %arg2: i32) -> (i32, i32) {
    %c0_i32 = arith.constant 0 : i32
    %c0_i32_0 = arith.constant 0 : i32
    return %c0_i32, %arg2 : i32, i32
  }
  func.func @transform_7(%arg0: i32, %arg1: i32, %arg2: i32) -> (i32, i32, i32, i32) {
    %c0_i32 = arith.constant 0 : i32
    %c0_i32_0 = arith.constant 0 : i32
    return %arg0, %arg1, %c0_i32, %arg2 : i32, i32, i32, i32
  }
  func.func @transform_8(%arg0: i32, %arg1: i32, %arg2: i32) -> (i32, i32, i32) {
    %c1_i32 = arith.constant 1 : i32
    %0 = arith.muli %arg0, %c1_i32 : i32
    %1 = arith.addi %0, %arg1 : i32
    %c0_i32 = arith.constant 0 : i32
    %c0_i32_0 = arith.constant 0 : i32
    return %1, %c0_i32, %arg2 : i32, i32, i32
  }
  func.func @transform_9(%arg0: i32, %arg1: i32, %arg2: i32) -> (i32, i32, i32) {
    %c1_i32 = arith.constant 1 : i32
    %0 = arith.muli %arg0, %c1_i32 : i32
    %1 = arith.addi %0, %arg1 : i32
    %c0_i32 = arith.constant 0 : i32
    %c0_i32_0 = arith.constant 0 : i32
    return %1, %c0_i32, %arg2 : i32, i32, i32
  }
}

module attributes {stable_mosaic.version = 11 : i64} {
  func.func @bn_relu_kernel(%arg0: i32, %arg1: i32, %arg2: i32, %arg3: memref<1x16x16x32xf32, #tpu.memory_space<vmem>>, %arg4: memref<1x32xf32, #tpu.memory_space<vmem>>, %arg5: memref<1x32xf32, #tpu.memory_space<vmem>>, %arg6: memref<1x16x16x32xf32, #tpu.memory_space<vmem>>) attributes {dimension_semantics = [#tpu.dimension_semantics<parallel>, #tpu.dimension_semantics<parallel>, #tpu.dimension_semantics<parallel>], iteration_bounds = array<i64: 2, 1, 1>, scalar_prefetch = 0 : i64, scratch_operands = 0 : i64, tpu.core_type = #tpu.core_type<tc>, window_params = [{transform_indices = @transform_0, window_bounds = array<i64: 1, 16, 16, 32>}, {transform_indices = @transform_1, window_bounds = array<i64: 1, 32>}, {transform_indices = @transform_2, window_bounds = array<i64: 1, 32>}, {transform_indices = @transform_3, window_bounds = array<i64: 1, 16, 16, 32>}]} {
    %c0 = arith.constant 0 : index
    %c0_0 = arith.constant 0 : index
    %0 = vector.load %arg4[%c0, %c0_0] : memref<1x32xf32, #tpu.memory_space<vmem>>, vector<1x32xf32>
    %1 = vector.shape_cast %0 : vector<1x32xf32> to vector<1x1x1x32xf32>
    %c0_1 = arith.constant 0 : index
    %c0_2 = arith.constant 0 : index
    %2 = vector.load %arg5[%c0_1, %c0_2] : memref<1x32xf32, #tpu.memory_space<vmem>>, vector<1x32xf32>
    %3 = vector.shape_cast %2 : vector<1x32xf32> to vector<1x1x1x32xf32>
    %c0_3 = arith.constant 0 : index
    %c0_4 = arith.constant 0 : index
    %c0_5 = arith.constant 0 : index
    %c0_6 = arith.constant 0 : index
    %4 = vector.load %arg3[%c0_3, %c0_4, %c0_5, %c0_6] : memref<1x16x16x32xf32, #tpu.memory_space<vmem>>, vector<1x16x16x32xf32>
    %5 = vector.broadcast %1 : vector<1x1x1x32xf32> to vector<1x16x16x32xf32>
    %6 = arith.mulf %4, %5 : vector<1x16x16x32xf32>
    %7 = vector.broadcast %3 : vector<1x1x1x32xf32> to vector<1x16x16x32xf32>
    %8 = arith.addf %6, %7 : vector<1x16x16x32xf32>
    %cst = arith.constant 0.000000e+00 : f32
    %9 = vector.broadcast %cst : f32 to vector<1x16x16x32xf32>
    %10 = arith.maximumf %8, %9 : vector<1x16x16x32xf32>
    %c0_7 = arith.constant 0 : index
    %c0_8 = arith.constant 0 : index
    %c0_9 = arith.constant 0 : index
    %c0_10 = arith.constant 0 : index
    %11 = vector.load %arg6[%c0_7, %c0_8, %c0_9, %c0_10] : memref<1x16x16x32xf32, #tpu.memory_space<vmem>>, vector<1x16x16x32xf32>
    tpu.vector_store %arg6[%c0_7, %c0_8, %c0_9, %c0_10], %10 {strides = array<i32>} : memref<1x16x16x32xf32, #tpu.memory_space<vmem>>, vector<1x16x16x32xf32>,
    return
  }
  func.func @transform_0(%arg0: i32, %arg1: i32, %arg2: i32) -> (i32, i32, i32, i32) {
    %c0_i32 = arith.constant 0 : i32
    %c0_i32_0 = arith.constant 0 : i32
    return %arg0, %arg1, %c0_i32, %arg2 : i32, i32, i32, i32
  }
  func.func @transform_1(%arg0: i32, %arg1: i32, %arg2: i32) -> (i32, i32) {
    %c0_i32 = arith.constant 0 : i32
    %c0_i32_0 = arith.constant 0 : i32
    return %c0_i32, %arg2 : i32, i32
  }
  func.func @transform_2(%arg0: i32, %arg1: i32, %arg2: i32) -> (i32, i32) {
    %c0_i32 = arith.constant 0 : i32
    %c0_i32_0 = arith.constant 0 : i32
    return %c0_i32, %arg2 : i32, i32
  }
  func.func @transform_3(%arg0: i32, %arg1: i32, %arg2: i32) -> (i32, i32, i32, i32) {
    %c0_i32 = arith.constant 0 : i32
    %c0_i32_0 = arith.constant 0 : i32
    return %arg0, %arg1, %c0_i32, %arg2 : i32, i32, i32, i32
  }
}

</mosaic_0001>

<llo_original>
// kernel: vgg_block_forward.5
$region0: #{vgg_block_forward.5}
  #allocation0 [shape = 'u32[]', space=smem, size = 0x4, offset = 0x4, fixed_abs, tag = 'smem constant byte address 0x4 - core index']
  #allocation1 [shape = 'u32[72,128]{1,0:T(1,128)}', space=vmem, size = 0x9000, scoped, tag = 'internal scratch']
  %s0 = inlined_call_operand.vmem [shape: f32[2,16,16,32], index: 0, kind: input, shape index: {}]
  %s1 = inlined_call_operand.vmem [shape: f32[1,32], index: 1, kind: input, shape index: {}]
  %s2 = inlined_call_operand.vmem [shape: f32[1,32], index: 2, kind: input, shape index: {}]
  %s3 = inlined_call_operand.hbm [shape: f32[2,16,16,32], index: 3, kind: output, shape index: {}]
  %s4 = sld [smem:[#allocation0]]
  $region45: #{vgg_block_forward.5} parent=0
    _
  %s6 = ssub.s32 1, %s4
  %s7 = scalar_select 0, %s6, %s4
  $region1: #{vgg_block_forward.5} parent=0
    #allocation2 [shape = 'u8[262144]{0}', space=vmem, size = 0x40000, scoped, tag = 'output window, operand 0']
    #allocation3 [shape = 's32[2]{0}', space=sflag, size = 0x8, scoped, tag = 'scoped memory for vgg_block_forward.5']
    %8 = vsyncpa [#allocation3], 0
    %s9 = scalar_lea.sflag [#allocation3], 1
    %10 = vsyncpa %s9, 0
    loop: start=0, step=1, limit=4
    $region2: #{vgg_block_forward.5} parent=1 // loop_pre_header
      _
    $region3: #{vgg_block_forward.5} parent=1 // loop_header
      %s12 = sphi 0, %s16
      %p13 = scmp.ge.s32.totalorder %s12, 4
      %s19 = sphi 0, %s38
      %s20 = sphi 0, %s34
      %s21 = sphi 0, %s30
      %s22 = sphi 0, %s19
      %s23 = sphi 0, %s20
      %s24 = sphi 0, %s21
      %s25 = sphi 0, %s22
      %s26 = sphi 0, %s23
      %s27 = sphi 0, %s24
      %s45 = sphi 0, %s47
      %s48 = sphi 0, %s45
      %s49 = sphi 0, %s48
      %s65 = sphi 0, %s49
      %s71 = sphi 0, %s73
      %s74 = sphi 0, %s71
      %s75 = sphi 0, %s74
      %s91 = sphi 0, %s75
      %s97 = sphi 0, %s99
      %s100 = sphi 0, %s97
      %s101 = sphi 0, %s100
      %s117 = sphi 0, %s101
      %s127 = sphi 0, %s129
      %s130 = sphi 0, %s127
      %s131 = sphi 0, %s130
      %s147 = sphi 0, %s131
    $region4: #{vgg_block_forward.5} parent=1 // loop_header_branch
      %15 = sbr.rel (%p13) target = $region8
    $region5: #{vgg_block_forward.5} parent=1 // loop_body
      %s17 = ssub.s32 %s12, 1
      %s18 = ssub.s32 %s12, 2
      %s28 = sadd.s32 1, %s21
      %p29 = scmp.ge.s32.totalorder %s28, 1
      %s30 = scalar_select %p29, 0, %s28
      %s31 = sadd.s32 1, %s20
      %s32 = scalar_select %p29, %s31, %s20
      %p33 = scmp.ge.s32.totalorder %s32, 1
      %s34 = scalar_select %p33, 0, %s32
      %s35 = sadd.s32 1, %s19
      %s36 = scalar_select %p33, %s35, %s19
      %p37 = scmp.ge.s32.totalorder %s36, 2
      %s38 = scalar_select %p37, 0, %s36
      %s39 = ssub.s32 %s19, %s38
      %s40 = ssub.s32 %s20, %s34
      %s41 = sor.u32 %s39, %s40
      %s42 = ssub.s32 %s21, %s30
      %s43 = sor.u32 %s41, %s42
      %p44 = scmp.eq.s32.totalorder %s43, 0
      %s46 = sadd.s32 %s45, 1
      %s47 = scalar_select %p44, %s45, %s46
      %p50 = pneg %p44
      %p51 = scmp.eq.s32.totalorder %s12, 1
      %p52 = por %p50, %p51
      %p53 = scmp.ne.s32.totalorder %s45, %s48
      %p54 = scmp.eq.s32.totalorder %s12, 0
      %p55 = por %p53, %p54
      %p56 = scmp.ne.s32.totalorder %s45, %s48
      %p57 = scmp.eq.s32.totalorder %s17, 1
      %p58 = por %p56, %p57
      %p59 = scmp.ne.s32.totalorder %s48, %s49
      %p60 = scmp.eq.s32.totalorder %s17, 0
      %p61 = por %p59, %p60
      %p62 = scmp.ne.s32.totalorder %s48, %s49
      %p63 = scmp.eq.s32.totalorder %s18, 1
      %p64 = por %p62, %p63
      %p66 = scmp.ne.s32.totalorder %s49, %s65
      %p67 = scmp.eq.s32.totalorder %s18, 0
      %p68 = por %p66, %p67
      %s69 = ssub.s32 %s21, %s30
      %p70 = scmp.eq.s32.totalorder %s69, 0
      %s72 = sadd.s32 %s71, 1
      %s73 = scalar_select %p70, %s71, %s72
      %p76 = pneg %p70
      %p77 = scmp.eq.s32.totalorder %s12, 1
      %p78 = por %p76, %p77
      %p79 = scmp.ne.s32.totalorder %s71, %s74
      %p80 = scmp.eq.s32.totalorder %s12, 0
      %p81 = por %p79, %p80
      %p82 = scmp.ne.s32.totalorder %s71, %s74
      %p83 = scmp.eq.s32.totalorder %s17, 1
      %p84 = por %p82, %p83
      %p85 = scmp.ne.s32.totalorder %s74, %s75
      %p86 = scmp.eq.s32.totalorder %s17, 0
      %p87 = por %p85, %p86
      %p88 = scmp.ne.s32.totalorder %s74, %s75
      %p89 = scmp.eq.s32.totalorder %s18, 1
      %p90 = por %p88, %p89
      %p92 = scmp.ne.s32.totalorder %s75, %s91
      %p93 = scmp.eq.s32.totalorder %s18, 0
      %p94 = por %p92, %p93
      %s95 = ssub.s32 %s21, %s30
      %p96 = scmp.eq.s32.totalorder %s95, 0
      %s98 = sadd.s32 %s97, 1
      %s99 = scalar_select %p96, %s97, %s98
      %p102 = pneg %p96
      %p103 = scmp.eq.s32.totalorder %s12, 1
      %p104 = por %p102, %p103
      %p105 = scmp.ne.s32.totalorder %s97, %s100
      %p106 = scmp.eq.s32.totalorder %s12, 0
      %p107 = por %p105, %p106
      %p108 = scmp.ne.s32.totalorder %s97, %s100
      %p109 = scmp.eq.s32.totalorder %s17, 1
      %p110 = por %p108, %p109
      %p111 = scmp.ne.s32.totalorder %s100, %s101
      %p112 = scmp.eq.s32.totalorder %s17, 0
      %p113 = por %p111, %p112
      %p114 = scmp.ne.s32.totalorder %s100, %s101
      %p115 = scmp.eq.s32.totalorder %s18, 1
      %p116 = por %p114, %p115
      %p118 = scmp.ne.s32.totalorder %s101, %s117
      %p119 = scmp.eq.s32.totalorder %s18, 0
      %p120 = por %p118, %p119
      %s121 = ssub.s32 %s19, %s38
      %s122 = ssub.s32 %s20, %s34
      %s123 = sor.u32 %s121, %s122
      %s124 = ssub.s32 %s21, %s30
      %s125 = sor.u32 %s123, %s124
      %p126 = scmp.eq.s32.totalorder %s125, 0
      %s128 = sadd.s32 %s127, 1
      %s129 = scalar_select %p126, %s127, %s128
      %p132 = pneg %p126
      %p133 = scmp.eq.s32.totalorder %s12, 1
      %p134 = por %p132, %p133
      %p135 = scmp.ne.s32.totalorder %s127, %s130
      %p136 = scmp.eq.s32.totalorder %s12, 0
      %p137 = por %p135, %p136
      %p138 = scmp.ne.s32.totalorder %s127, %s130
      %p139 = scmp.eq.s32.totalorder %s17, 1
      %p140 = por %p138, %p139
      %p141 = scmp.ne.s32.totalorder %s130, %s131
      %p142 = scmp.eq.s32.totalorder %s17, 0
      %p143 = por %p141, %p142
      %p144 = scmp.ne.s32.totalorder %s130, %s131
      %p145 = scmp.eq.s32.totalorder %s18, 1
      %p146 = por %p144, %p145
      %p148 = scmp.ne.s32.totalorder %s131, %s147
      %p149 = scmp.eq.s32.totalorder %s18, 0
      %p150 = por %p148, %p149
      %p151 = scmp.le.s32.totalorder 1, %s12
      %p152 = scmp.lt.s32.totalorder %s12, 3
      %p153 = pnand %p151, %p152
      %p154 = pneg %p153
      // Predicated region
      $region9: #{vgg_block_forward.5} parent=5 // pred_check
        _
      $region10: #{vgg_block_forward.5} parent=5 // pred_check_branch
        %156 = sbr.rel (%p153) target = $region12
      $region11: #{vgg_block_forward.5} parent=5 // pred_region
        %s157 = ssub.s32 %s12, 1
        // Predicated region
        $region13: #{vgg_block_forward.5} parent=11 // pred_check
          %p158 = pneg %p87
        $region14: #{vgg_block_forward.5} parent=11 // pred_check_branch
          %160 = sbr.rel (%p158) target = $region16
        $region15: #{vgg_block_forward.5} parent=11 // pred_region
          %p161 = scmp.lt.s32.totalorder %s24, 0
          %s162 = scalar_select %p161, %s24, 0
          %s163 = scalar_lea.vmem %s1, %s162
        $region16: #{vgg_block_forward.5} parent=11 // pred_fallthru
          _
        // Predicated region
        $region17: #{vgg_block_forward.5} parent=11 // pred_check
          %p164 = pneg %p113
        $region18: #{vgg_block_forward.5} parent=11 // pred_check_branch
          %166 = sbr.rel (%p164) target = $region20
        $region19: #{vgg_block_forward.5} parent=11 // pred_region
          %p167 = scmp.lt.s32.totalorder %s24, 0
          %s168 = scalar_select %p167, %s24, 0
          %s169 = scalar_lea.vmem %s2, %s168
        $region20: #{vgg_block_forward.5} parent=11 // pred_fallthru
          _
      $region12: #{vgg_block_forward.5} parent=5 // pred_fallthru
        _
      %p170 = scmp.lt.s32.totalorder %s12, 2
      // Predicated region
      $region21: #{vgg_block_forward.5} parent=5 // pred_check
        %p171 = pneg %p170
      $region22: #{vgg_block_forward.5} parent=5 // pred_check_branch
        %173 = sbr.rel (%p171) target = $region24
      $region23: #{vgg_block_forward.5} parent=5 // pred_region
        // Predicated region
        $region25: #{vgg_block_forward.5} parent=23 // pred_check
          %p174 = pneg %p55
        $region26: #{vgg_block_forward.5} parent=23 // pred_check_branch
          %176 = sbr.rel (%p174) target = $region28
        $region27: #{vgg_block_forward.5} parent=23 // pred_region
          %s177 = smul.u32 16, %s20
          %p178 = scmp.lt.s32.totalorder %s19, 1
          %s179 = scalar_select %p178, %s19, 1
          %p180 = scmp.lt.s32.totalorder %s177, 15
          %s181 = scalar_select %p180, %s177, 15
          %p182 = scmp.lt.s32.totalorder %s21, 0
          %s183 = scalar_select %p182, %s21, 0
          %s184 = smul.addr %s181, 2
          %s185 = sadd.s32 %s183, %s184
          %s186 = smul.addr %s179, 32
          %s187 = sadd.s32 %s185, %s186
          %s188 = smul.addr %s187, 8
          %s189 = scalar_lea.vmem %s0, %s188
          %s190 = smul.u32 16, %s20
        $region28: #{vgg_block_forward.5} parent=23 // pred_fallthru
          _
      $region24: #{vgg_block_forward.5} parent=5 // pred_fallthru
        _
      %p191 = scmp.le.s32.totalorder 1, %s12
      %p192 = scmp.lt.s32.totalorder %s12, 3
      %p193 = pnand %p191, %p192
      %p194 = pneg %p193
      // Predicated region
      $region29: #{vgg_block_forward.5} parent=5 // pred_check
        _
      $region30: #{vgg_block_forward.5} parent=5 // pred_check_branch
        %196 = sbr.rel (%p193) target = $region32
      $region31: #{vgg_block_forward.5} parent=5 // pred_region
        %s197 = ssub.s32 %s12, 1
        %s198 = smul.u32 16, %s23
        %p199 = scmp.lt.s32.totalorder %s22, 1
        %s200 = scalar_select %p199, %s22, 1
        %p201 = scmp.lt.s32.totalorder %s198, 15
        %s202 = scalar_select %p201, %s198, 15
        %p203 = scmp.lt.s32.totalorder %s24, 0
        %s204 = scalar_select %p203, %s24, 0
        %s205 = smul.addr %s202, 2
        %s206 = sadd.s32 %s204, %s205
        %s207 = smul.addr %s200, 32
        %s208 = sadd.s32 %s206, %s207
        %s209 = smul.addr %s208, 8
        %s210 = scalar_lea.vmem %s0, %s209
        %p211 = pneg %p61
        %p212 = pneg %p58
        %p213 = scmp.lt.s32.totalorder %s24, 0
        %s214 = scalar_select %p213, %s24, 0
        %s215 = scalar_lea.vmem %s1, %s214
        %p216 = pneg %p87
        %p217 = pneg %p84
        %p218 = scmp.lt.s32.totalorder %s24, 0
        %s219 = scalar_select %p218, %s24, 0
        %s220 = scalar_lea.vmem %s2, %s219
        %p221 = pneg %p113
        %p222 = pneg %p110
        %p223 = pneg %p143
        %p224 = pneg %p140
        %s225 = sand.u32 %s130, 1
        %s226 = scalar_lea.sflag [#allocation3], %s225
        %s227 = sand.u32 %s130, 1
        %s228 = smul.addr %s227, 256
        %s229 = scalar_lea.vmem [#allocation2], %s228
        %s230 = smul.u32 16, %s23
        %p231 = scmp.lt.s32.totalorder %s22, 1
        %s232 = scalar_select %p231, %s22, 1
        %p233 = scmp.lt.s32.totalorder %s230, 15
        %s234 = scalar_select %p233, %s230, 15
        %p235 = scmp.lt.s32.totalorder %s24, 0
        %s236 = scalar_select %p235, %s24, 0
        %s237 = smul.addr %s234, 2
        %s238 = sadd.s32 %s236, %s237
        %s239 = smul.addr %s232, 32
        %s240 = sadd.s32 %s238, %s239
        %s241 = smul.addr %s240, 8
        %s242 = scalar_lea.vmem %s0, %s241
        %s243 = smul.u32 16, %s23
        %p244 = scmp.lt.s32.totalorder %s24, 0
        %s245 = scalar_select %p244, %s24, 0
        %s246 = scalar_lea.vmem %s1, %s245
        %p247 = scmp.lt.s32.totalorder %s24, 0
        %s248 = scalar_select %p247, %s24, 0
        %s249 = scalar_lea.vmem %s2, %s248
        %s250 = smul.u32 16, %s23
        %v251 = vld [vmem:[%s246] sm:$0x1]
        %v252 = vld [vmem:[%s249] sm:$0x1]
        %v253 = vld [vmem:[%s242] sm:$0xff]
        %v254 = vld [vmem:[%s242 + $0x8] sm:$0xff]
        %v255 = vld [vmem:[%s242 + $0x10] sm:$0xff]
        %v256 = vld [vmem:[%s242 + $0x18] sm:$0xff]
        %v257 = vld [vmem:[%s242 + $0x20] sm:$0xff]
        %v258 = vld [vmem:[%s242 + $0x28] sm:$0xff]
        %v259 = vld [vmem:[%s242 + $0x30] sm:$0xff]
        %v260 = vld [vmem:[%s242 + $0x38] sm:$0xff]
        %v261 = vld [vmem:[%s242 + $0x40] sm:$0xff]
        %v262 = vld [vmem:[%s242 + $0x48] sm:$0xff]
        %v263 = vld [vmem:[%s242 + $0x50] sm:$0xff]
        %v264 = vld [vmem:[%s242 + $0x58] sm:$0xff]
        %v265 = vld [vmem:[%s242 + $0x60] sm:$0xff]
        %v266 = vld [vmem:[%s242 + $0x68] sm:$0xff]
        %v267 = vld [vmem:[%s242 + $0x70] sm:$0xff]
        %v268 = vld [vmem:[%s242 + $0x78] sm:$0xff]
        %v269 = vld [vmem:[%s242 + $0x80] sm:$0xff]
        %v270 = vld [vmem:[%s242 + $0x88] sm:$0xff]
        %v271 = vld [vmem:[%s242 + $0x90] sm:$0xff]
        %v272 = vld [vmem:[%s242 + $0x98] sm:$0xff]
        %v273 = vld [vmem:[%s242 + $0xa0] sm:$0xff]
        %v274 = vld [vmem:[%s242 + $0xa8] sm:$0xff]
        %v275 = vld [vmem:[%s242 + $0xb0] sm:$0xff]
        %v276 = vld [vmem:[%s242 + $0xb8] sm:$0xff]
        %v277 = vld [vmem:[%s242 + $0xc0] sm:$0xff]
        %v278 = vld [vmem:[%s242 + $0xc8] sm:$0xff]
        %v279 = vld [vmem:[%s242 + $0xd0] sm:$0xff]
        %v280 = vld [vmem:[%s242 + $0xd8] sm:$0xff]
        %v281 = vld [vmem:[%s242 + $0xe0] sm:$0xff]
        %v282 = vld [vmem:[%s242 + $0xe8] sm:$0xff]
        %v283 = vld [vmem:[%s242 + $0xf0] sm:$0xff]
        %v284 = vld [vmem:[%s242 + $0xf8] sm:$0xff]
        %v286 = vperm.slane %v251, 0
        %v288 = vmul.f32 %v253, %v286
        %v289 = vmul.f32 %v254, %v286
        %v290 = vmul.f32 %v255, %v286
        %v291 = vmul.f32 %v256, %v286
        %v292 = vmul.f32 %v257, %v286
        %v293 = vmul.f32 %v258, %v286
        %v294 = vmul.f32 %v259, %v286
        %v295 = vmul.f32 %v260, %v286
        %v296 = vmul.f32 %v261, %v286
        %v297 = vmul.f32 %v262, %v286
        %v298 = vmul.f32 %v263, %v286
        %v299 = vmul.f32 %v264, %v286
        %v300 = vmul.f32 %v265, %v286
        %v301 = vmul.f32 %v266, %v286
        %v302 = vmul.f32 %v267, %v286
        %v303 = vmul.f32 %v268, %v286
        %v304 = vmul.f32 %v269, %v286
        %v305 = vmul.f32 %v270, %v286
        %v306 = vmul.f32 %v271, %v286
        %v307 = vmul.f32 %v272, %v286
        %v308 = vmul.f32 %v273, %v286
        %v309 = vmul.f32 %v274, %v286
        %v310 = vmul.f32 %v275, %v286
        %v311 = vmul.f32 %v276, %v286
        %v312 = vmul.f32 %v277, %v286
        %v313 = vmul.f32 %v278, %v286
        %v314 = vmul.f32 %v279, %v286
        %v315 = vmul.f32 %v280, %v286
        %v316 = vmul.f32 %v281, %v286
        %v317 = vmul.f32 %v282, %v286
        %v318 = vmul.f32 %v283, %v286
        %v319 = vmul.f32 %v284, %v286
        %v321 = vperm.slane %v252, 0
        %v323 = vadd.f32 %v288, %v321
        %v324 = vadd.f32 %v289, %v321
        %v325 = vadd.f32 %v290, %v321
        %v326 = vadd.f32 %v291, %v321
        %v327 = vadd.f32 %v292, %v321
        %v328 = vadd.f32 %v293, %v321
        %v329 = vadd.f32 %v294, %v321
        %v330 = vadd.f32 %v295, %v321
        %v331 = vadd.f32 %v296, %v321
        %v332 = vadd.f32 %v297, %v321
        %v333 = vadd.f32 %v298, %v321
        %v334 = vadd.f32 %v299, %v321
        %v335 = vadd.f32 %v300, %v321
        %v336 = vadd.f32 %v301, %v321
        %v337 = vadd.f32 %v302, %v321
        %v338 = vadd.f32 %v303, %v321
        %v339 = vadd.f32 %v304, %v321
        %v340 = vadd.f32 %v305, %v321
        %v341 = vadd.f32 %v306, %v321
        %v342 = vadd.f32 %v307, %v321
        %v343 = vadd.f32 %v308, %v321
        %v344 = vadd.f32 %v309, %v321
        %v345 = vadd.f32 %v310, %v321
        %v346 = vadd.f32 %v311, %v321
        %v347 = vadd.f32 %v312, %v321
        %v348 = vadd.f32 %v313, %v321
        %v349 = vadd.f32 %v314, %v321
        %v350 = vadd.f32 %v315, %v321
        %v351 = vadd.f32 %v316, %v321
        %v352 = vadd.f32 %v317, %v321
        %v353 = vadd.f32 %v318, %v321
        %v354 = vadd.f32 %v319, %v321
        %v355 = vmax.f32 %v323, 0.0
        %v356 = vmax.f32 %v324, 0.0
        %v357 = vmax.f32 %v325, 0.0
        %v358 = vmax.f32 %v326, 0.0
        %v359 = vmax.f32 %v327, 0.0
        %v360 = vmax.f32 %v328, 0.0
        %v361 = vmax.f32 %v329, 0.0
        %v362 = vmax.f32 %v330, 0.0
        %v363 = vmax.f32 %v331, 0.0
        %v364 = vmax.f32 %v332, 0.0
        %v365 = vmax.f32 %v333, 0.0
        %v366 = vmax.f32 %v334, 0.0
        %v367 = vmax.f32 %v335, 0.0
        %v368 = vmax.f32 %v336, 0.0
        %v369 = vmax.f32 %v337, 0.0
        %v370 = vmax.f32 %v338, 0.0
        %v371 = vmax.f32 %v339, 0.0
        %v372 = vmax.f32 %v340, 0.0
        %v373 = vmax.f32 %v341, 0.0
        %v374 = vmax.f32 %v342, 0.0
        %v375 = vmax.f32 %v343, 0.0
        %v376 = vmax.f32 %v344, 0.0
        %v377 = vmax.f32 %v345, 0.0
        %v378 = vmax.f32 %v346, 0.0
        %v379 = vmax.f32 %v347, 0.0
        %v380 = vmax.f32 %v348, 0.0
        %v381 = vmax.f32 %v349, 0.0
        %v382 = vmax.f32 %v350, 0.0
        %v383 = vmax.f32 %v351, 0.0
        %v384 = vmax.f32 %v352, 0.0
        %v385 = vmax.f32 %v353, 0.0
        %v386 = vmax.f32 %v354, 0.0
        %vm387 = vcmask 261120
        %388 = vst.msk [vmem:[%s229] sm:$0xff] %vm387, %v355
        %389 = vst.msk [vmem:[%s229 + $0x8] sm:$0xff] %vm387, %v356
        %390 = vst.msk [vmem:[%s229 + $0x10] sm:$0xff] %vm387, %v357
        %391 = vst.msk [vmem:[%s229 + $0x18] sm:$0xff] %vm387, %v358
        %392 = vst.msk [vmem:[%s229 + $0x20] sm:$0xff] %vm387, %v359
        %393 = vst.msk [vmem:[%s229 + $0x28] sm:$0xff] %vm387, %v360
        %394 = vst.msk [vmem:[%s229 + $0x30] sm:$0xff] %vm387, %v361
        %395 = vst.msk [vmem:[%s229 + $0x38] sm:$0xff] %vm387, %v362
        %396 = vst.msk [vmem:[%s229 + $0x40] sm:$0xff] %vm387, %v363
        %397 = vst.msk [vmem:[%s229 + $0x48] sm:$0xff] %vm387, %v364
        %398 = vst.msk [vmem:[%s229 + $0x50] sm:$0xff] %vm387, %v365
        %399 = vst.msk [vmem:[%s229 + $0x58] sm:$0xff] %vm387, %v366
        %400 = vst.msk [vmem:[%s229 + $0x60] sm:$0xff] %vm387, %v367
        %401 = vst.msk [vmem:[%s229 + $0x68] sm:$0xff] %vm387, %v368
        %402 = vst.msk [vmem:[%s229 + $0x70] sm:$0xff] %vm387, %v369
        %403 = vst.msk [vmem:[%s229 + $0x78] sm:$0xff] %vm387, %v370
        %404 = vst.msk [vmem:[%s229 + $0x80] sm:$0xff] %vm387, %v371
        %405 = vst.msk [vmem:[%s229 + $0x88] sm:$0xff] %vm387, %v372
        %406 = vst.msk [vmem:[%s229 + $0x90] sm:$0xff] %vm387, %v373
        %407 = vst.msk [vmem:[%s229 + $0x98] sm:$0xff] %vm387, %v374
        %408 = vst.msk [vmem:[%s229 + $0xa0] sm:$0xff] %vm387, %v375
        %409 = vst.msk [vmem:[%s229 + $0xa8] sm:$0xff] %vm387, %v376
        %410 = vst.msk [vmem:[%s229 + $0xb0] sm:$0xff] %vm387, %v377
        %411 = vst.msk [vmem:[%s229 + $0xb8] sm:$0xff] %vm387, %v378
        %412 = vst.msk [vmem:[%s229 + $0xc0] sm:$0xff] %vm387, %v379
        %413 = vst.msk [vmem:[%s229 + $0xc8] sm:$0xff] %vm387, %v380
        %414 = vst.msk [vmem:[%s229 + $0xd0] sm:$0xff] %vm387, %v381
        %415 = vst.msk [vmem:[%s229 + $0xd8] sm:$0xff] %vm387, %v382
        %416 = vst.msk [vmem:[%s229 + $0xe0] sm:$0xff] %vm387, %v383
        %417 = vst.msk [vmem:[%s229 + $0xe8] sm:$0xff] %vm387, %v384
        %418 = vst.msk [vmem:[%s229 + $0xf0] sm:$0xff] %vm387, %v385
        %419 = vst.msk [vmem:[%s229 + $0xf8] sm:$0xff] %vm387, %v386
        %s420 = sand.u32 %s130, 1
        %s421 = scalar_lea.sflag [#allocation3], %s420
        %s422 = sand.u32 %s130, 1
        %s423 = smul.addr %s422, 256
        %s424 = scalar_lea.vmem [#allocation2], %s423
        // Predicated region
        $region33: #{vgg_block_forward.5} parent=31 // pred_check
          %p425 = pneg %p140
        $region34: #{vgg_block_forward.5} parent=31 // pred_check_branch
          %427 = sbr.rel (%p425) target = $region36
        $region35: #{vgg_block_forward.5} parent=31 // pred_region
          %s428 = smul.u32 16, %s23
          %430 = vsyncadd %s421, 0
          %s431 = smul.addr %s428, 2
          %s432 = sadd.s32 %s24, %s431
          %s433 = smul.addr %s22, 32
          %s434 = sadd.s32 %s432, %s433
          %s435 = smul.addr %s434, 8
          %s436 = scalar_lea.hbm %s3, %s435
          %s437 = sshll.u32 %s424, 4
          %s438 = int_to_ptr.vmem [resolvable:$true] %s437
          %s439 = sshll.u32 %s436, 4
          %s440 = int_to_ptr.hbm [resolvable:$true] %s439
          %445 = dma.vmem_to_hbm [thread:$0]  %s438, 4096, %s440, %s421, 128, 128, 8
        $region36: #{vgg_block_forward.5} parent=31 // pred_fallthru
          _
      $region32: #{vgg_block_forward.5} parent=5 // pred_fallthru
        _
      %p446 = scmp.le.s32.totalorder 2, %s12
      // Predicated region
      $region37: #{vgg_block_forward.5} parent=5 // pred_check
        %p447 = pneg %p446
      $region38: #{vgg_block_forward.5} parent=5 // pred_check_branch
        %449 = sbr.rel (%p447) target = $region40
      $region39: #{vgg_block_forward.5} parent=5 // pred_region
        %s450 = ssub.s32 %s12, 2
        // Predicated region
        $region41: #{vgg_block_forward.5} parent=39 // pred_check
          %p451 = pneg %p146
        $region42: #{vgg_block_forward.5} parent=39 // pred_check_branch
          %453 = sbr.rel (%p451) target = $region44
        $region43: #{vgg_block_forward.5} parent=39 // pred_region
          %s454 = sand.u32 %s131, 1
          %s455 = scalar_lea.sflag [#allocation3], %s454
          %s456 = sand.u32 %s131, 1
          %s457 = smul.addr %s456, 256
          %s458 = scalar_lea.vmem [#allocation2], %s457
          %460 = dma.done %s455, 4096
        $region44: #{vgg_block_forward.5} parent=39 // pred_fallthru
          _
      $region40: #{vgg_block_forward.5} parent=5 // pred_fallthru
        _
    $region6: #{vgg_block_forward.5} parent=1 // loop_footer
      %s16 = sadd.s32 1, %s12
    $region7: #{vgg_block_forward.5} parent=1 // loop_footer_branch
      %11 = sbr.rel target = $region3
    $region8: #{vgg_block_forward.5} parent=1 // loop_exit
      _
    %461 = vsyncpa [#allocation3], 1
    %s462 = scalar_lea.sflag [#allocation3], 1
    %463 = vsyncpa %s462, 1

// kernel: vgg_block_forward.3
$region0: #{vgg_block_forward.3}
  #allocation0 [shape = 'u32[]', space=smem, size = 0x4, offset = 0x4, fixed_abs, tag = 'smem constant byte address 0x4 - core index']
  #allocation1 [shape = 'u32[72,128]{1,0:T(1,128)}', space=vmem, size = 0x9000, scoped, tag = 'internal scratch']
  %s0 = inlined_call_operand.vmem [shape: bf16[2,16,18,4], index: 0, kind: input, shape index: {}]
  %s1 = inlined_call_operand.vmem [shape: bf16[2,16,18,4], index: 1, kind: input, shape index: {}]
  %s2 = inlined_call_operand.vmem [shape: bf16[2,16,18,4], index: 2, kind: input, shape index: {}]
  %s3 = inlined_call_operand.vmem [shape: bf16[9,4,32], index: 3, kind: input, shape index: {}]
  %s4 = inlined_call_operand.vmem [shape: f32[1,32], index: 4, kind: input, shape index: {}]
  %s5 = inlined_call_operand.vmem [shape: f32[2,16,16,32], index: 5, kind: output, shape index: {0}]
  %s6 = inlined_call_operand.vmem [shape: f32[2,8,32], index: 6, kind: output, shape index: {1}]
  %s7 = inlined_call_operand.vmem [shape: f32[2,8,32], index: 7, kind: output, shape index: {2}]
  %8 = xla_tuple %s5, %s6, %s7
  %s9 = sld [smem:[#allocation0]]
  $region69: #{vgg_block_forward.3} parent=0
    _
  %s11 = ssub.s32 1, %s9
  %s12 = scalar_select 0, %s11, %s9
  loop: start=0, step=1, limit=4
  $region2: #{vgg_block_forward.3} parent=0 // loop_pre_header
    _
  $region3: #{vgg_block_forward.3} parent=0 // loop_header
    %s14 = sphi 0, %s18
    %p15 = scmp.ge.s32.totalorder %s14, 4
    %s21 = sphi 0, %s40
    %s22 = sphi 0, %s36
    %s23 = sphi 0, %s32
    %s24 = sphi 0, %s21
    %s25 = sphi 0, %s22
    %s26 = sphi 0, %s23
    %s27 = sphi 0, %s24
    %s28 = sphi 0, %s25
    %s29 = sphi 0, %s26
    %s45 = sphi 0, %s47
    %s48 = sphi 0, %s45
    %s49 = sphi 0, %s48
    %s65 = sphi 0, %s49
    %s73 = sphi 0, %s75
    %s76 = sphi 0, %s73
    %s77 = sphi 0, %s76
    %s93 = sphi 0, %s77
    %s101 = sphi 0, %s103
    %s104 = sphi 0, %s101
    %s105 = sphi 0, %s104
    %s121 = sphi 0, %s105
    %s127 = sphi 0, %s129
    %s130 = sphi 0, %s127
    %s131 = sphi 0, %s130
    %s147 = sphi 0, %s131
    %s153 = sphi 0, %s155
    %s156 = sphi 0, %s153
    %s157 = sphi 0, %s156
    %s173 = sphi 0, %s157
    %s183 = sphi 0, %s185
    %s186 = sphi 0, %s183
    %s187 = sphi 0, %s186
    %s203 = sphi 0, %s187
    %s213 = sphi 0, %s215
    %s216 = sphi 0, %s213
    %s217 = sphi 0, %s216
    %s233 = sphi 0, %s217
    %s243 = sphi 0, %s245
    %s246 = sphi 0, %s243
    %s247 = sphi 0, %s246
    %s263 = sphi 0, %s247
  $region4: #{vgg_block_forward.3} parent=0 // loop_header_branch
    %17 = sbr.rel (%p15) target = $region8
  $region5: #{vgg_block_forward.3} parent=0 // loop_body
    %s19 = ssub.s32 %s14, 1
    %s20 = ssub.s32 %s14, 2
    %s30 = sadd.s32 1, %s23
    %p31 = scmp.ge.s32.totalorder %s30, 1
    %s32 = scalar_select %p31, 0, %s30
    %s33 = sadd.s32 1, %s22
    %s34 = scalar_select %p31, %s33, %s22
    %p35 = scmp.ge.s32.totalorder %s34, 1
    %s36 = scalar_select %p35, 0, %s34
    %s37 = sadd.s32 1, %s21
    %s38 = scalar_select %p35, %s37, %s21
    %p39 = scmp.ge.s32.totalorder %s38, 2
    %s40 = scalar_select %p39, 0, %s38
    %s41 = ssub.s32 %s21, %s40
    %s42 = ssub.s32 %s22, %s36
    %s43 = sor.u32 %s41, %s42
    %p44 = scmp.eq.s32.totalorder %s43, 0
    %s46 = sadd.s32 %s45, 1
    %s47 = scalar_select %p44, %s45, %s46
    %p50 = pneg %p44
    %p51 = scmp.eq.s32.totalorder %s14, 1
    %p52 = por %p50, %p51
    %p53 = scmp.ne.s32.totalorder %s45, %s48
    %p54 = scmp.eq.s32.totalorder %s14, 0
    %p55 = por %p53, %p54
    %p56 = scmp.ne.s32.totalorder %s45, %s48
    %p57 = scmp.eq.s32.totalorder %s19, 1
    %p58 = por %p56, %p57
    %p59 = scmp.ne.s32.totalorder %s48, %s49
    %p60 = scmp.eq.s32.totalorder %s19, 0
    %p61 = por %p59, %p60
    %p62 = scmp.ne.s32.totalorder %s48, %s49
    %p63 = scmp.eq.s32.totalorder %s20, 1
    %p64 = por %p62, %p63
    %p66 = scmp.ne.s32.totalorder %s49, %s65
    %p67 = scmp.eq.s32.totalorder %s20, 0
    %p68 = por %p66, %p67
    %s69 = ssub.s32 %s21, %s40
    %s70 = ssub.s32 %s22, %s36
    %s71 = sor.u32 %s69, %s70
    %p72 = scmp.eq.s32.totalorder %s71, 0
    %s74 = sadd.s32 %s73, 1
    %s75 = scalar_select %p72, %s73, %s74
    %p78 = pneg %p72
    %p79 = scmp.eq.s32.totalorder %s14, 1
    %p80 = por %p78, %p79
    %p81 = scmp.ne.s32.totalorder %s73, %s76
    %p82 = scmp.eq.s32.totalorder %s14, 0
    %p83 = por %p81, %p82
    %p84 = scmp.ne.s32.totalorder %s73, %s76
    %p85 = scmp.eq.s32.totalorder %s19, 1
    %p86 = por %p84, %p85
    %p87 = scmp.ne.s32.totalorder %s76, %s77
    %p88 = scmp.eq.s32.totalorder %s19, 0
    %p89 = por %p87, %p88
    %p90 = scmp.ne.s32.totalorder %s76, %s77
    %p91 = scmp.eq.s32.totalorder %s20, 1
    %p92 = por %p90, %p91
    %p94 = scmp.ne.s32.totalorder %s77, %s93
    %p95 = scmp.eq.s32.totalorder %s20, 0
    %p96 = por %p94, %p95
    %s97 = ssub.s32 %s21, %s40
    %s98 = ssub.s32 %s22, %s36
    %s99 = sor.u32 %s97, %s98
    %p100 = scmp.eq.s32.totalorder %s99, 0
    %s102 = sadd.s32 %s101, 1
    %s103 = scalar_select %p100, %s101, %s102
    %p106 = pneg %p100
    %p107 = scmp.eq.s32.totalorder %s14, 1
    %p108 = por %p106, %p107
    %p109 = scmp.ne.s32.totalorder %s101, %s104
    %p110 = scmp.eq.s32.totalorder %s14, 0
    %p111 = por %p109, %p110
    %p112 = scmp.ne.s32.totalorder %s101, %s104
    %p113 = scmp.eq.s32.totalorder %s19, 1
    %p114 = por %p112, %p113
    %p115 = scmp.ne.s32.totalorder %s104, %s105
    %p116 = scmp.eq.s32.totalorder %s19, 0
    %p117 = por %p115, %p116
    %p118 = scmp.ne.s32.totalorder %s104, %s105
    %p119 = scmp.eq.s32.totalorder %s20, 1
    %p120 = por %p118, %p119
    %p122 = scmp.ne.s32.totalorder %s105, %s121
    %p123 = scmp.eq.s32.totalorder %s20, 0
    %p124 = por %p122, %p123
    %s125 = ssub.s32 %s23, %s32
    %p126 = scmp.eq.s32.totalorder %s125, 0
    %s128 = sadd.s32 %s127, 1
    %s129 = scalar_select %p126, %s127, %s128
    %p132 = pneg %p126
    %p133 = scmp.eq.s32.totalorder %s14, 1
    %p134 = por %p132, %p133
    %p135 = scmp.ne.s32.totalorder %s127, %s130
    %p136 = scmp.eq.s32.totalorder %s14, 0
    %p137 = por %p135, %p136
    %p138 = scmp.ne.s32.totalorder %s127, %s130
    %p139 = scmp.eq.s32.totalorder %s19, 1
    %p140 = por %p138, %p139
    %p141 = scmp.ne.s32.totalorder %s130, %s131
    %p142 = scmp.eq.s32.totalorder %s19, 0
    %p143 = por %p141, %p142
    %p144 = scmp.ne.s32.totalorder %s130, %s131
    %p145 = scmp.eq.s32.totalorder %s20, 1
    %p146 = por %p144, %p145
    %p148 = scmp.ne.s32.totalorder %s131, %s147
    %p149 = scmp.eq.s32.totalorder %s20, 0
    %p150 = por %p148, %p149
    %s151 = ssub.s32 %s23, %s32
    %p152 = scmp.eq.s32.totalorder %s151, 0
    %s154 = sadd.s32 %s153, 1
    %s155 = scalar_select %p152, %s153, %s154
    %p158 = pneg %p152
    %p159 = scmp.eq.s32.totalorder %s14, 1
    %p160 = por %p158, %p159
    %p161 = scmp.ne.s32.totalorder %s153, %s156
    %p162 = scmp.eq.s32.totalorder %s14, 0
    %p163 = por %p161, %p162
    %p164 = scmp.ne.s32.totalorder %s153, %s156
    %p165 = scmp.eq.s32.totalorder %s19, 1
    %p166 = por %p164, %p165
    %p167 = scmp.ne.s32.totalorder %s156, %s157
    %p168 = scmp.eq.s32.totalorder %s19, 0
    %p169 = por %p167, %p168
    %p170 = scmp.ne.s32.totalorder %s156, %s157
    %p171 = scmp.eq.s32.totalorder %s20, 1
    %p172 = por %p170, %p171
    %p174 = scmp.ne.s32.totalorder %s157, %s173
    %p175 = scmp.eq.s32.totalorder %s20, 0
    %p176 = por %p174, %p175
    %s177 = ssub.s32 %s21, %s40
    %s178 = ssub.s32 %s22, %s36
    %s179 = sor.u32 %s177, %s178
    %s180 = ssub.s32 %s23, %s32
    %s181 = sor.u32 %s179, %s180
    %p182 = scmp.eq.s32.totalorder %s181, 0
    %s184 = sadd.s32 %s183, 1
    %s185 = scalar_select %p182, %s183, %s184
    %p188 = pneg %p182
    %p189 = scmp.eq.s32.totalorder %s14, 1
    %p190 = por %p188, %p189
    %p191 = scmp.ne.s32.totalorder %s183, %s186
    %p192 = scmp.eq.s32.totalorder %s14, 0
    %p193 = por %p191, %p192
    %p194 = scmp.ne.s32.totalorder %s183, %s186
    %p195 = scmp.eq.s32.totalorder %s19, 1
    %p196 = por %p194, %p195
    %p197 = scmp.ne.s32.totalorder %s186, %s187
    %p198 = scmp.eq.s32.totalorder %s19, 0
    %p199 = por %p197, %p198
    %p200 = scmp.ne.s32.totalorder %s186, %s187
    %p201 = scmp.eq.s32.totalorder %s20, 1
    %p202 = por %p200, %p201
    %p204 = scmp.ne.s32.totalorder %s187, %s203
    %p205 = scmp.eq.s32.totalorder %s20, 0
    %p206 = por %p204, %p205
    %s207 = sadd.s32 %s21, %s22
    %s208 = sadd.s32 %s40, %s36
    %s209 = ssub.s32 %s207, %s208
    %s210 = ssub.s32 %s23, %s32
    %s211 = sor.u32 %s209, %s210
    %p212 = scmp.eq.s32.totalorder %s211, 0
    %s214 = sadd.s32 %s213, 1
    %s215 = scalar_select %p212, %s213, %s214
    %p218 = pneg %p212
    %p219 = scmp.eq.s32.totalorder %s14, 1
    %p220 = por %p218, %p219
    %p221 = scmp.ne.s32.totalorder %s213, %s216
    %p222 = scmp.eq.s32.totalorder %s14, 0
    %p223 = por %p221, %p222
    %p224 = scmp.ne.s32.totalorder %s213, %s216
    %p225 = scmp.eq.s32.totalorder %s19, 1
    %p226 = por %p224, %p225
    %p227 = scmp.ne.s32.totalorder %s216, %s217
    %p228 = scmp.eq.s32.totalorder %s19, 0
    %p229 = por %p227, %p228
    %p230 = scmp.ne.s32.totalorder %s216, %s217
    %p231 = scmp.eq.s32.totalorder %s20, 1
    %p232 = por %p230, %p231
    %p234 = scmp.ne.s32.totalorder %s217, %s233
    %p235 = scmp.eq.s32.totalorder %s20, 0
    %p236 = por %p234, %p235
    %s237 = sadd.s32 %s21, %s22
    %s238 = sadd.s32 %s40, %s36
    %s239 = ssub.s32 %s237, %s238
    %s240 = ssub.s32 %s23, %s32
    %s241 = sor.u32 %s239, %s240
    %p242 = scmp.eq.s32.totalorder %s241, 0
    %s244 = sadd.s32 %s243, 1
    %s245 = scalar_select %p242, %s243, %s244
    %p248 = pneg %p242
    %p249 = scmp.eq.s32.totalorder %s14, 1
    %p250 = por %p248, %p249
    %p251 = scmp.ne.s32.totalorder %s243, %s246
    %p252 = scmp.eq.s32.totalorder %s14, 0
    %p253 = por %p251, %p252
    %p254 = scmp.ne.s32.totalorder %s243, %s246
    %p255 = scmp.eq.s32.totalorder %s19, 1
    %p256 = por %p254, %p255
    %p257 = scmp.ne.s32.totalorder %s246, %s247
    %p258 = scmp.eq.s32.totalorder %s19, 0
    %p259 = por %p257, %p258
    %p260 = scmp.ne.s32.totalorder %s246, %s247
    %p261 = scmp.eq.s32.totalorder %s20, 1
    %p262 = por %p260, %p261
    %p264 = scmp.ne.s32.totalorder %s247, %s263
    %p265 = scmp.eq.s32.totalorder %s20, 0
    %p266 = por %p264, %p265
    %p267 = scmp.le.s32.totalorder 1, %s14
    %p268 = scmp.lt.s32.totalorder %s14, 3
    %p269 = pnand %p267, %p268
    %p270 = pneg %p269
    // Predicated region
    $region9: #{vgg_block_forward.3} parent=5 // pred_check
      _
    $region10: #{vgg_block_forward.3} parent=5 // pred_check_branch
      %272 = sbr.rel (%p269) target = $region12
    $region11: #{vgg_block_forward.3} parent=5 // pred_region
      %s273 = ssub.s32 %s14, 1
      // Predicated region
      $region13: #{vgg_block_forward.3} parent=11 // pred_check
        %p274 = pneg %p143
      $region14: #{vgg_block_forward.3} parent=11 // pred_check_branch
        %276 = sbr.rel (%p274) target = $region16
      $region15: #{vgg_block_forward.3} parent=11 // pred_region
        %p277 = scmp.lt.s32.totalorder %s26, 0
        %s278 = scalar_select %p277, %s26, 0
        %s279 = smul.addr %s278, 2
        %s280 = scalar_lea.vmem %s3, %s279
      $region16: #{vgg_block_forward.3} parent=11 // pred_fallthru
        _
      // Predicated region
      $region17: #{vgg_block_forward.3} parent=11 // pred_check
        %p281 = pneg %p169
      $region18: #{vgg_block_forward.3} parent=11 // pred_check_branch
        %283 = sbr.rel (%p281) target = $region20
      $region19: #{vgg_block_forward.3} parent=11 // pred_region
        %p284 = scmp.lt.s32.totalorder %s26, 0
        %s285 = scalar_select %p284, %s26, 0
        %s286 = scalar_lea.vmem %s4, %s285
      $region20: #{vgg_block_forward.3} parent=11 // pred_fallthru
        _
    $region12: #{vgg_block_forward.3} parent=5 // pred_fallthru
      _
    %p287 = scmp.lt.s32.totalorder %s14, 2
    // Predicated region
    $region21: #{vgg_block_forward.3} parent=5 // pred_check
      %p288 = pneg %p287
    $region22: #{vgg_block_forward.3} parent=5 // pred_check_branch
      %290 = sbr.rel (%p288) target = $region24
    $region23: #{vgg_block_forward.3} parent=5 // pred_region
      // Predicated region
      $region25: #{vgg_block_forward.3} parent=23 // pred_check
        %p291 = pneg %p55
      $region26: #{vgg_block_forward.3} parent=23 // pred_check_branch
        %293 = sbr.rel (%p291) target = $region28
      $region27: #{vgg_block_forward.3} parent=23 // pred_region
        %s294 = smul.u32 16, %s22
        %p295 = scmp.lt.s32.totalorder %s21, 1
        %s296 = scalar_select %p295, %s21, 1
        %p297 = scmp.lt.s32.totalorder %s294, 15
        %s298 = scalar_select %p297, %s294, 15
        %s299 = smul.addr %s298, 3
        %s300 = smul.addr %s296, 48
        %s301 = sadd.s32 %s299, %s300
        %s302 = smul.addr %s301, 4
        %s303 = scalar_lea.vmem %s0, %s302
        %s304 = smul.u32 16, %s22
      $region28: #{vgg_block_forward.3} parent=23 // pred_fallthru
        _
      // Predicated region
      $region29: #{vgg_block_forward.3} parent=23 // pred_check
        %p305 = pneg %p83
      $region30: #{vgg_block_forward.3} parent=23 // pred_check_branch
        %307 = sbr.rel (%p305) target = $region32
      $region31: #{vgg_block_forward.3} parent=23 // pred_region
        %s308 = smul.u32 16, %s22
        %p309 = scmp.lt.s32.totalorder %s21, 1
        %s310 = scalar_select %p309, %s21, 1
        %p311 = scmp.lt.s32.totalorder %s308, 15
        %s312 = scalar_select %p311, %s308, 15
        %s313 = smul.addr %s312, 3
        %s314 = smul.addr %s310, 48
        %s315 = sadd.s32 %s313, %s314
        %s316 = smul.addr %s315, 4
        %s317 = scalar_lea.vmem %s1, %s316
        %s318 = smul.u32 16, %s22
      $region32: #{vgg_block_forward.3} parent=23 // pred_fallthru
        _
      // Predicated region
      $region33: #{vgg_block_forward.3} parent=23 // pred_check
        %p319 = pneg %p111
      $region34: #{vgg_block_forward.3} parent=23 // pred_check_branch
        %321 = sbr.rel (%p319) target = $region36
      $region35: #{vgg_block_forward.3} parent=23 // pred_region
        %s322 = smul.u32 16, %s22
        %p323 = scmp.lt.s32.totalorder %s21, 1
        %s324 = scalar_select %p323, %s21, 1
        %p325 = scmp.lt.s32.totalorder %s322, 15
        %s326 = scalar_select %p325, %s322, 15
        %s327 = smul.addr %s326, 3
        %s328 = smul.addr %s324, 48
        %s329 = sadd.s32 %s327, %s328
        %s330 = smul.addr %s329, 4
        %s331 = scalar_lea.vmem %s2, %s330
        %s332 = smul.u32 16, %s22
      $region36: #{vgg_block_forward.3} parent=23 // pred_fallthru
        _
    $region24: #{vgg_block_forward.3} parent=5 // pred_fallthru
      _
    %p333 = scmp.le.s32.totalorder 1, %s14
    %p334 = scmp.lt.s32.totalorder %s14, 3
    %p335 = pnand %p333, %p334
    %p336 = pneg %p335
    // Predicated region
    $region37: #{vgg_block_forward.3} parent=5 // pred_check
      _
    $region38: #{vgg_block_forward.3} parent=5 // pred_check_branch
      %338 = sbr.rel (%p335) target = $region40
    $region39: #{vgg_block_forward.3} parent=5 // pred_region
      %s339 = ssub.s32 %s14, 1
      %s340 = smul.u32 16, %s25
      %p341 = scmp.lt.s32.totalorder %s24, 1
      %s342 = scalar_select %p341, %s24, 1
      %p343 = scmp.lt.s32.totalorder %s340, 15
      %s344 = scalar_select %p343, %s340, 15
      %s345 = smul.addr %s344, 3
      %s346 = smul.addr %s342, 48
      %s347 = sadd.s32 %s345, %s346
      %s348 = smul.addr %s347, 4
      %s349 = scalar_lea.vmem %s0, %s348
      %p350 = pneg %p61
      %p351 = pneg %p58
      %s352 = smul.u32 16, %s25
      %p353 = scmp.lt.s32.totalorder %s24, 1
      %s354 = scalar_select %p353, %s24, 1
      %p355 = scmp.lt.s32.totalorder %s352, 15
      %s356 = scalar_select %p355, %s352, 15
      %s357 = smul.addr %s356, 3
      %s358 = smul.addr %s354, 48
      %s359 = sadd.s32 %s357, %s358
      %s360 = smul.addr %s359, 4
      %s361 = scalar_lea.vmem %s1, %s360
      %p362 = pneg %p89
      %p363 = pneg %p86
      %s364 = smul.u32 16, %s25
      %p365 = scmp.lt.s32.totalorder %s24, 1
      %s366 = scalar_select %p365, %s24, 1
      %p367 = scmp.lt.s32.totalorder %s364, 15
      %s368 = scalar_select %p367, %s364, 15
      %s369 = smul.addr %s368, 3
      %s370 = smul.addr %s366, 48
      %s371 = sadd.s32 %s369, %s370
      %s372 = smul.addr %s371, 4
      %s373 = scalar_lea.vmem %s2, %s372
      %p374 = pneg %p117
      %p375 = pneg %p114
      %p376 = scmp.lt.s32.totalorder %s26, 0
      %s377 = scalar_select %p376, %s26, 0
      %s378 = smul.addr %s377, 2
      %s379 = scalar_lea.vmem %s3, %s378
      %p380 = pneg %p143
      %p381 = pneg %p140
      %p382 = scmp.lt.s32.totalorder %s26, 0
      %s383 = scalar_select %p382, %s26, 0
      %s384 = scalar_lea.vmem %s4, %s383
      %p385 = pneg %p169
      %p386 = pneg %p166
      %p387 = pneg %p199
      %p388 = pneg %p196
      %s389 = smul.u32 16, %s25
      %p390 = scmp.lt.s32.totalorder %s24, 1
      %s391 = scalar_select %p390, %s24, 1
      %p392 = scmp.lt.s32.totalorder %s389, 15
      %s393 = scalar_select %p392, %s389, 15
      %p394 = scmp.lt.s32.totalorder %s26, 0
      %s395 = scalar_select %p394, %s26, 0
      %s396 = smul.addr %s393, 2
      %s397 = sadd.s32 %s395, %s396
      %s398 = smul.addr %s391, 32
      %s399 = sadd.s32 %s397, %s398
      %s400 = smul.addr %s399, 8
      %s401 = scalar_lea.vmem %s5, %s400
      %p402 = pneg %p229
      %p403 = pneg %p226
      %s404 = sadd.s32 %s24, %s25
      %p405 = scmp.lt.s32.totalorder %s404, 1
      %s406 = scalar_select %p405, %s404, 1
      %p407 = scmp.lt.s32.totalorder %s26, 0
      %s408 = scalar_select %p407, %s26, 0
      %s409 = sadd.s32 %s408, %s406
      %s410 = smul.addr %s409, 8
      %s411 = scalar_lea.vmem %s6, %s410
      %p412 = pneg %p259
      %p413 = pneg %p256
      %s414 = sadd.s32 %s24, %s25
      %p415 = scmp.lt.s32.totalorder %s414, 1
      %s416 = scalar_select %p415, %s414, 1
      %p417 = scmp.lt.s32.totalorder %s26, 0
      %s418 = scalar_select %p417, %s26, 0
      %s419 = sadd.s32 %s418, %s416
      %s420 = smul.addr %s419, 8
      %s421 = scalar_lea.vmem %s7, %s420
      %s422 = smul.u32 16, %s25
      %p423 = scmp.lt.s32.totalorder %s24, 1
      %s424 = scalar_select %p423, %s24, 1
      %p425 = scmp.lt.s32.totalorder %s422, 15
      %s426 = scalar_select %p425, %s422, 15
      %s427 = smul.addr %s426, 3
      %s428 = smul.addr %s424, 48
      %s429 = sadd.s32 %s427, %s428
      %s430 = smul.addr %s429, 4
      %s431 = scalar_lea.vmem %s0, %s430
      %s432 = smul.u32 16, %s25
      %s433 = smul.u32 16, %s25
      %p434 = scmp.lt.s32.totalorder %s24, 1
      %s435 = scalar_select %p434, %s24, 1
      %p436 = scmp.lt.s32.totalorder %s433, 15
      %s437 = scalar_select %p436, %s433, 15
      %s438 = smul.addr %s437, 3
      %s439 = smul.addr %s435, 48
      %s440 = sadd.s32 %s438, %s439
      %s441 = smul.addr %s440, 4
      %s442 = scalar_lea.vmem %s1, %s441
      %s443 = smul.u32 16, %s25
      %s444 = smul.u32 16, %s25
      %p445 = scmp.lt.s32.totalorder %s24, 1
      %s446 = scalar_select %p445, %s24, 1
      %p447 = scmp.lt.s32.totalorder %s444, 15
      %s448 = scalar_select %p447, %s444, 15
      %s449 = smul.addr %s448, 3
      %s450 = smul.addr %s446, 48
      %s451 = sadd.s32 %s449, %s450
      %s452 = smul.addr %s451, 4
      %s453 = scalar_lea.vmem %s2, %s452
      %s454 = smul.u32 16, %s25
      %p455 = scmp.lt.s32.totalorder %s26, 0
      %s456 = scalar_select %p455, %s26, 0
      %s457 = smul.addr %s456, 2
      %s458 = scalar_lea.vmem %s3, %s457
      %p459 = scmp.lt.s32.totalorder %s26, 0
      %s460 = scalar_select %p459, %s26, 0
      %s461 = scalar_lea.vmem %s4, %s460
      %s462 = smul.u32 16, %s25
      %p463 = scmp.lt.s32.totalorder %s24, 1
      %s464 = scalar_select %p463, %s24, 1
      %p465 = scmp.lt.s32.totalorder %s462, 15
      %s466 = scalar_select %p465, %s462, 15
      %p467 = scmp.lt.s32.totalorder %s26, 0
      %s468 = scalar_select %p467, %s26, 0
      %s469 = smul.addr %s466, 2
      %s470 = sadd.s32 %s468, %s469
      %s471 = smul.addr %s464, 32
      %s472 = sadd.s32 %s470, %s471
      %s473 = smul.addr %s472, 8
      %s474 = scalar_lea.vmem %s5, %s473
      %s475 = smul.u32 16, %s25
      %s476 = sadd.s32 %s24, %s25
      %p477 = scmp.lt.s32.totalorder %s476, 1
      %s478 = scalar_select %p477, %s476, 1
      %p479 = scmp.lt.s32.totalorder %s26, 0
      %s480 = scalar_select %p479, %s26, 0
      %s481 = sadd.s32 %s480, %s478
      %s482 = smul.addr %s481, 8
      %s483 = scalar_lea.vmem %s6, %s482
      %s484 = sadd.s32 %s24, %s25
      %s485 = sadd.s32 %s24, %s25
      %p486 = scmp.lt.s32.totalorder %s485, 1
      %s487 = scalar_select %p486, %s485, 1
      %p488 = scmp.lt.s32.totalorder %s26, 0
      %s489 = scalar_select %p488, %s26, 0
      %s490 = sadd.s32 %s489, %s487
      %s491 = smul.addr %s490, 8
      %s492 = scalar_lea.vmem %s7, %s491
      %s493 = sadd.s32 %s24, %s25
      %v495 = vld [vmem:[%s431] sm:$0xf]
      %v496 = vld [vmem:[%s431 + $0x4] sm:$0xf]
      %v497 = vld [vmem:[%s431 + $0x8] sm:$0x1]
      %v498 = vld [vmem:[%s431 + $0xc] sm:$0xf]
      %v499 = vld [vmem:[%s431 + $0x10] sm:$0xf]
      %v500 = vld [vmem:[%s431 + $0x14] sm:$0x1]
      %v501 = vld [vmem:[%s431 + $0x18] sm:$0xf]
      %v502 = vld [vmem:[%s431 + $0x1c] sm:$0xf]
      %v503 = vld [vmem:[%s431 + $0x20] sm:$0x1]
      %v504 = vld [vmem:[%s431 + $0x24] sm:$0xf]
      %v505 = vld [vmem:[%s431 + $0x28] sm:$0xf]
      %v506 = vld [vmem:[%s431 + $0x2c] sm:$0x1]
      %v507 = vld [vmem:[%s431 + $0x30] sm:$0xf]
      %v508 = vld [vmem:[%s431 + $0x34] sm:$0xf]
      %v509 = vld [vmem:[%s431 + $0x38] sm:$0x1]
      %v510 = vld [vmem:[%s431 + $0x3c] sm:$0xf]
      %v511 = vld [vmem:[%s431 + $0x40] sm:$0xf]
      %v512 = vld [vmem:[%s431 + $0x44] sm:$0x1]
      %v513 = vld [vmem:[%s431 + $0x48] sm:$0xf]
      %v514 = vld [vmem:[%s431 + $0x4c] sm:$0xf]
      %v515 = vld [vmem:[%s431 + $0x50] sm:$0x1]
      %v516 = vld [vmem:[%s431 + $0x54] sm:$0xf]
      %v517 = vld [vmem:[%s431 + $0x58] sm:$0xf]
      %v518 = vld [vmem:[%s431 + $0x5c] sm:$0x1]
      %v519 = vld [vmem:[%s431 + $0x60] sm:$0xf]
      %v520 = vld [vmem:[%s431 + $0x64] sm:$0xf]
      %v521 = vld [vmem:[%s431 + $0x68] sm:$0x1]
      %v522 = vld [vmem:[%s431 + $0x6c] sm:$0xf]
      %v523 = vld [vmem:[%s431 + $0x70] sm:$0xf]
      %v524 = vld [vmem:[%s431 + $0x74] sm:$0x1]
      %v525 = vld [vmem:[%s431 + $0x78] sm:$0xf]
      %v526 = vld [vmem:[%s431 + $0x7c] sm:$0xf]
      %v527 = vld [vmem:[%s431 + $0x80] sm:$0x1]
      %v528 = vld [vmem:[%s431 + $0x84] sm:$0xf]
      %v529 = vld [vmem:[%s431 + $0x88] sm:$0xf]
      %v530 = vld [vmem:[%s431 + $0x8c] sm:$0x1]
      %v531 = vld [vmem:[%s431 + $0x90] sm:$0xf]
      %v532 = vld [vmem:[%s431 + $0x94] sm:$0xf]
      %v533 = vld [vmem:[%s431 + $0x98] sm:$0x1]
      %v534 = vld [vmem:[%s431 + $0x9c] sm:$0xf]
      %v535 = vld [vmem:[%s431 + $0xa0] sm:$0xf]
      %v536 = vld [vmem:[%s431 + $0xa4] sm:$0x1]
      %v537 = vld [vmem:[%s431 + $0xa8] sm:$0xf]
      %v538 = vld [vmem:[%s431 + $0xac] sm:$0xf]
      %v539 = vld [vmem:[%s431 + $0xb0] sm:$0x1]
      %v540 = vld [vmem:[%s431 + $0xb4] sm:$0xf]
      %v541 = vld [vmem:[%s431 + $0xb8] sm:$0xf]
      %v542 = vld [vmem:[%s431 + $0xbc] sm:$0x1]
      %v543 = vld [vmem:[%s442] sm:$0xf]
      %v544 = vld [vmem:[%s442 + $0x4] sm:$0xf]
      %v545 = vld [vmem:[%s442 + $0x8] sm:$0x1]
      %v546 = vld [vmem:[%s442 + $0xc] sm:$0xf]
      %v547 = vld [vmem:[%s442 + $0x10] sm:$0xf]
      %v548 = vld [vmem:[%s442 + $0x14] sm:$0x1]
      %v549 = vld [vmem:[%s442 + $0x18] sm:$0xf]
      %v550 = vld [vmem:[%s442 + $0x1c] sm:$0xf]
      %v551 = vld [vmem:[%s442 + $0x20] sm:$0x1]
      %v552 = vld [vmem:[%s442 + $0x24] sm:$0xf]
      %v553 = vld [vmem:[%s442 + $0x28] sm:$0xf]
      %v554 = vld [vmem:[%s442 + $0x2c] sm:$0x1]
      %v555 = vld [vmem:[%s442 + $0x30] sm:$0xf]
      %v556 = vld [vmem:[%s442 + $0x34] sm:$0xf]
      %v557 = vld [vmem:[%s442 + $0x38] sm:$0x1]
      %v558 = vld [vmem:[%s442 + $0x3c] sm:$0xf]
      %v559 = vld [vmem:[%s442 + $0x40] sm:$0xf]
      %v560 = vld [vmem:[%s442 + $0x44] sm:$0x1]
      %v561 = vld [vmem:[%s442 + $0x48] sm:$0xf]
      %v562 = vld [vmem:[%s442 + $0x4c] sm:$0xf]
      %v563 = vld [vmem:[%s442 + $0x50] sm:$0x1]
      %v564 = vld [vmem:[%s442 + $0x54] sm:$0xf]
      %v565 = vld [vmem:[%s442 + $0x58] sm:$0xf]
      %v566 = vld [vmem:[%s442 + $0x5c] sm:$0x1]
      %v567 = vld [vmem:[%s442 + $0x60] sm:$0xf]
      %v568 = vld [vmem:[%s442 + $0x64] sm:$0xf]
      %v569 = vld [vmem:[%s442 + $0x68] sm:$0x1]
      %v570 = vld [vmem:[%s442 + $0x6c] sm:$0xf]
      %v571 = vld [vmem:[%s442 + $0x70] sm:$0xf]
      %v572 = vld [vmem:[%s442 + $0x74] sm:$0x1]
      %v573 = vld [vmem:[%s442 + $0x78] sm:$0xf]
      %v574 = vld [vmem:[%s442 + $0x7c] sm:$0xf]
      %v575 = vld [vmem:[%s442 + $0x80] sm:$0x1]
      %v576 = vld [vmem:[%s442 + $0x84] sm:$0xf]
      %v577 = vld [vmem:[%s442 + $0x88] sm:$0xf]
      %v578 = vld [vmem:[%s442 + $0x8c] sm:$0x1]
      %v579 = vld [vmem:[%s442 + $0x90] sm:$0xf]
      %v580 = vld [vmem:[%s442 + $0x94] sm:$0xf]
      %v581 = vld [vmem:[%s442 + $0x98] sm:$0x1]
      %v582 = vld [vmem:[%s442 + $0x9c] sm:$0xf]
      %v583 = vld [vmem:[%s442 + $0xa0] sm:$0xf]
      %v584 = vld [vmem:[%s442 + $0xa4] sm:$0x1]
      %v585 = vld [vmem:[%s442 + $0xa8] sm:$0xf]
      %v586 = vld [vmem:[%s442 + $0xac] sm:$0xf]
      %v587 = vld [vmem:[%s442 + $0xb0] sm:$0x1]
      %v588 = vld [vmem:[%s442 + $0xb4] sm:$0xf]
      %v589 = vld [vmem:[%s442 + $0xb8] sm:$0xf]
      %v590 = vld [vmem:[%s442 + $0xbc] sm:$0x1]
      %v591 = vld [vmem:[%s453] sm:$0xf]
      %v592 = vld [vmem:[%s453 + $0x4] sm:$0xf]
      %v593 = vld [vmem:[%s453 + $0x8] sm:$0x1]
      %v594 = vld [vmem:[%s453 + $0xc] sm:$0xf]
      %v595 = vld [vmem:[%s453 + $0x10] sm:$0xf]
      %v596 = vld [vmem:[%s453 + $0x14] sm:$0x1]
      %v597 = vld [vmem:[%s453 + $0x18] sm:$0xf]
      %v598 = vld [vmem:[%s453 + $0x1c] sm:$0xf]
      %v599 = vld [vmem:[%s453 + $0x20] sm:$0x1]
      %v600 = vld [vmem:[%s453 + $0x24] sm:$0xf]
      %v601 = vld [vmem:[%s453 + $0x28] sm:$0xf]
      %v602 = vld [vmem:[%s453 + $0x2c] sm:$0x1]
      %v603 = vld [vmem:[%s453 + $0x30] sm:$0xf]
      %v604 = vld [vmem:[%s453 + $0x34] sm:$0xf]
      %v605 = vld [vmem:[%s453 + $0x38] sm:$0x1]
      %v606 = vld [vmem:[%s453 + $0x3c] sm:$0xf]
      %v607 = vld [vmem:[%s453 + $0x40] sm:$0xf]
      %v608 = vld [vmem:[%s453 + $0x44] sm:$0x1]
      %v609 = vld [vmem:[%s453 + $0x48] sm:$0xf]
      %v610 = vld [vmem:[%s453 + $0x4c] sm:$0xf]
      %v611 = vld [vmem:[%s453 + $0x50] sm:$0x1]
      %v612 = vld [vmem:[%s453 + $0x54] sm:$0xf]
      %v613 = vld [vmem:[%s453 + $0x58] sm:$0xf]
      %v614 = vld [vmem:[%s453 + $0x5c] sm:$0x1]
      %v615 = vld [vmem:[%s453 + $0x60] sm:$0xf]
      %v616 = vld [vmem:[%s453 + $0x64] sm:$0xf]
      %v617 = vld [vmem:[%s453 + $0x68] sm:$0x1]
      %v618 = vld [vmem:[%s453 + $0x6c] sm:$0xf]
      %v619 = vld [vmem:[%s453 + $0x70] sm:$0xf]
      %v620 = vld [vmem:[%s453 + $0x74] sm:$0x1]
      %v621 = vld [vmem:[%s453 + $0x78] sm:$0xf]
      %v622 = vld [vmem:[%s453 + $0x7c] sm:$0xf]
      %v623 = vld [vmem:[%s453 + $0x80] sm:$0x1]
      %v624 = vld [vmem:[%s453 + $0x84] sm:$0xf]
      %v625 = vld [vmem:[%s453 + $0x88] sm:$0xf]
      %v626 = vld [vmem:[%s453 + $0x8c] sm:$0x1]
      %v627 = vld [vmem:[%s453 + $0x90] sm:$0xf]
      %v628 = vld [vmem:[%s453 + $0x94] sm:$0xf]
      %v629 = vld [vmem:[%s453 + $0x98] sm:$0x1]
      %v630 = vld [vmem:[%s453 + $0x9c] sm:$0xf]
      %v631 = vld [vmem:[%s453 + $0xa0] sm:$0xf]
      %v632 = vld [vmem:[%s453 + $0xa4] sm:$0x1]
      %v633 = vld [vmem:[%s453 + $0xa8] sm:$0xf]
      %v634 = vld [vmem:[%s453 + $0xac] sm:$0xf]
      %v635 = vld [vmem:[%s453 + $0xb0] sm:$0x1]
      %v636 = vld [vmem:[%s453 + $0xb4] sm:$0xf]
      %v637 = vld [vmem:[%s453 + $0xb8] sm:$0xf]
      %v638 = vld [vmem:[%s453 + $0xbc] sm:$0x1]
      %v639 = vld [vmem:[%s458] sm:$0x3]
      %vm640 = vsmask.f32 3328
      %vm641 = vsmask.f32 7440
      %vm642 = vmor %vm640, %vm641
      %v644 = vshrl.u32 %v495, 16
      %v646 = vrot.slane %v644, 4
      %v647 = vshll.u32 %v495, 16
      %v649 = vrot.slane %v647, 5
      %v650 = vor.u32 %v646, %v649
      %v651 = vrot.slane %v650, 4
      %v653 = vshll.u32 %v496, 16
      %v655 = vrot.slane %v653, 5
      %v656 = vsel %vm642, %v651, %v655
      %v657 = vshrl.u32 %v496, 16
      %v659 = vrot.slane %v657, 4
      %v660 = vor.u32 %v659, %v655
      %v661 = vrot.slane %v660, 4
      %v663 = vshll.u32 %v497, 16
      %v665 = vrot.slane %v663, 5
      %v666 = vsel %vm642, %v661, %v665
      %v668 = vshrl.u32 %v498, 16
      %v670 = vrot.slane %v668, 4
      %v671 = vshll.u32 %v498, 16
      %v673 = vrot.slane %v671, 5
      %v674 = vor.u32 %v670, %v673
      %v675 = vrot.slane %v674, 4
      %v677 = vshll.u32 %v499, 16
      %v679 = vrot.slane %v677, 5
      %v680 = vsel %vm642, %v675, %v679
      %v681 = vshrl.u32 %v499, 16
      %v683 = vrot.slane %v681, 4
      %v684 = vor.u32 %v683, %v679
      %v685 = vrot.slane %v684, 4
      %v687 = vshll.u32 %v500, 16
      %v689 = vrot.slane %v687, 5
      %v690 = vsel %vm642, %v685, %v689
      %v692 = vshrl.u32 %v501, 16
      %v694 = vrot.slane %v692, 4
      %v695 = vshll.u32 %v501, 16
      %v697 = vrot.slane %v695, 5
      %v698 = vor.u32 %v694, %v697
      %v699 = vrot.slane %v698, 4
      %v701 = vshll.u32 %v502, 16
      %v703 = vrot.slane %v701, 5
      %v704 = vsel %vm642, %v699, %v703
      %v705 = vshrl.u32 %v502, 16
      %v707 = vrot.slane %v705, 4
      %v708 = vor.u32 %v707, %v703
      %v709 = vrot.slane %v708, 4
      %v711 = vshll.u32 %v503, 16
      %v713 = vrot.slane %v711, 5
      %v714 = vsel %vm642, %v709, %v713
      %v716 = vshrl.u32 %v504, 16
      %v718 = vrot.slane %v716, 4
      %v719 = vshll.u32 %v504, 16
      %v721 = vrot.slane %v719, 5
      %v722 = vor.u32 %v718, %v721
      %v723 = vrot.slane %v722, 4
      %v725 = vshll.u32 %v505, 16
      %v727 = vrot.slane %v725, 5
      %v728 = vsel %vm642, %v723, %v727
      %v729 = vshrl.u32 %v505, 16
      %v731 = vrot.slane %v729, 4
      %v732 = vor.u32 %v731, %v727
      %v733 = vrot.slane %v732, 4
      %v735 = vshll.u32 %v506, 16
      %v737 = vrot.slane %v735, 5
      %v738 = vsel %vm642, %v733, %v737
      %v740 = vshrl.u32 %v507, 16
      %v742 = vrot.slane %v740, 4
      %v743 = vshll.u32 %v507, 16
      %v745 = vrot.slane %v743, 5
      %v746 = vor.u32 %v742, %v745
      %v747 = vrot.slane %v746, 4
      %v749 = vshll.u32 %v508, 16
      %v751 = vrot.slane %v749, 5
      %v752 = vsel %vm642, %v747, %v751
      %v753 = vshrl.u32 %v508, 16
      %v755 = vrot.slane %v753, 4
      %v756 = vor.u32 %v755, %v751
      %v757 = vrot.slane %v756, 4
      %v759 = vshll.u32 %v509, 16
      %v761 = vrot.slane %v759, 5
      %v762 = vsel %vm642, %v757, %v761
      %v764 = vshrl.u32 %v510, 16
      %v766 = vrot.slane %v764, 4
      %v767 = vshll.u32 %v510, 16
      %v769 = vrot.slane %v767, 5
      %v770 = vor.u32 %v766, %v769
      %v771 = vrot.slane %v770, 4
      %v773 = vshll.u32 %v511, 16
      %v775 = vrot.slane %v773, 5
      %v776 = vsel %vm642, %v771, %v775
      %v777 = vshrl.u32 %v511, 16
      %v779 = vrot.slane %v777, 4
      %v780 = vor.u32 %v779, %v775
      %v781 = vrot.slane %v780, 4
      %v783 = vshll.u32 %v512, 16
      %v785 = vrot.slane %v783, 5
      %v786 = vsel %vm642, %v781, %v785
      %v788 = vshrl.u32 %v513, 16
      %v790 = vrot.slane %v788, 4
      %v791 = vshll.u32 %v513, 16
      %v793 = vrot.slane %v791, 5
      %v794 = vor.u32 %v790, %v793
      %v795 = vrot.slane %v794, 4
      %v797 = vshll.u32 %v514, 16
      %v799 = vrot.slane %v797, 5
      %v800 = vsel %vm642, %v795, %v799
      %v801 = vshrl.u32 %v514, 16
      %v803 = vrot.slane %v801, 4
      %v804 = vor.u32 %v803, %v799
      %v805 = vrot.slane %v804, 4
      %v807 = vshll.u32 %v515, 16
      %v809 = vrot.slane %v807, 5
      %v810 = vsel %vm642, %v805, %v809
      %v812 = vshrl.u32 %v516, 16
      %v814 = vrot.slane %v812, 4
      %v815 = vshll.u32 %v516, 16
      %v817 = vrot.slane %v815, 5
      %v818 = vor.u32 %v814, %v817
      %v819 = vrot.slane %v818, 4
      %v821 = vshll.u32 %v517, 16
      %v823 = vrot.slane %v821, 5
      %v824 = vsel %vm642, %v819, %v823
      %v825 = vshrl.u32 %v517, 16
      %v827 = vrot.slane %v825, 4
      %v828 = vor.u32 %v827, %v823
      %v829 = vrot.slane %v828, 4
      %v831 = vshll.u32 %v518, 16
      %v833 = vrot.slane %v831, 5
      %v834 = vsel %vm642, %v829, %v833
      %v836 = vshrl.u32 %v519, 16
      %v838 = vrot.slane %v836, 4
      %v839 = vshll.u32 %v519, 16
      %v841 = vrot.slane %v839, 5
      %v842 = vor.u32 %v838, %v841
      %v843 = vrot.slane %v842, 4
      %v845 = vshll.u32 %v520, 16
      %v847 = vrot.slane %v845, 5
      %v848 = vsel %vm642, %v843, %v847
      %v849 = vshrl.u32 %v520, 16
      %v851 = vrot.slane %v849, 4
      %v852 = vor.u32 %v851, %v847
      %v853 = vrot.slane %v852, 4
      %v855 = vshll.u32 %v521, 16
      %v857 = vrot.slane %v855, 5
      %v858 = vsel %vm642, %v853, %v857
      %v860 = vshrl.u32 %v522, 16
      %v862 = vrot.slane %v860, 4
      %v863 = vshll.u32 %v522, 16
      %v865 = vrot.slane %v863, 5
      %v866 = vor.u32 %v862, %v865
      %v867 = vrot.slane %v866, 4
      %v869 = vshll.u32 %v523, 16
      %v871 = vrot.slane %v869, 5
      %v872 = vsel %vm642, %v867, %v871
      %v873 = vshrl.u32 %v523, 16
      %v875 = vrot.slane %v873, 4
      %v876 = vor.u32 %v875, %v871
      %v877 = vrot.slane %v876, 4
      %v879 = vshll.u32 %v524, 16
      %v881 = vrot.slane %v879, 5
      %v882 = vsel %vm642, %v877, %v881
      %v884 = vshrl.u32 %v525, 16
      %v886 = vrot.slane %v884, 4
      %v887 = vshll.u32 %v525, 16
      %v889 = vrot.slane %v887, 5
      %v890 = vor.u32 %v886, %v889
      %v891 = vrot.slane %v890, 4
      %v893 = vshll.u32 %v526, 16
      %v895 = vrot.slane %v893, 5
      %v896 = vsel %vm642, %v891, %v895
      %v897 = vshrl.u32 %v526, 16
      %v899 = vrot.slane %v897, 4
      %v900 = vor.u32 %v899, %v895
      %v901 = vrot.slane %v900, 4
      %v903 = vshll.u32 %v527, 16
      %v905 = vrot.slane %v903, 5
      %v906 = vsel %vm642, %v901, %v905
      %v908 = vshrl.u32 %v528, 16
      %v910 = vrot.slane %v908, 4
      %v911 = vshll.u32 %v528, 16
      %v913 = vrot.slane %v911, 5
      %v914 = vor.u32 %v910, %v913
      %v915 = vrot.slane %v914, 4
      %v917 = vshll.u32 %v529, 16
      %v919 = vrot.slane %v917, 5
      %v920 = vsel %vm642, %v915, %v919
      %v921 = vshrl.u32 %v529, 16
      %v923 = vrot.slane %v921, 4
      %v924 = vor.u32 %v923, %v919
      %v925 = vrot.slane %v924, 4
      %v927 = vshll.u32 %v530, 16
      %v929 = vrot.slane %v927, 5
      %v930 = vsel %vm642, %v925, %v929
      %v932 = vshrl.u32 %v531, 16
      %v934 = vrot.slane %v932, 4
      %v935 = vshll.u32 %v531, 16
      %v937 = vrot.slane %v935, 5
      %v938 = vor.u32 %v934, %v937
      %v939 = vrot.slane %v938, 4
      %v941 = vshll.u32 %v532, 16
      %v943 = vrot.slane %v941, 5
      %v944 = vsel %vm642, %v939, %v943
      %v945 = vshrl.u32 %v532, 16
      %v947 = vrot.slane %v945, 4
      %v948 = vor.u32 %v947, %v943
      %v949 = vrot.slane %v948, 4
      %v951 = vshll.u32 %v533, 16
      %v953 = vrot.slane %v951, 5
      %v954 = vsel %vm642, %v949, %v953
      %v956 = vshrl.u32 %v534, 16
      %v958 = vrot.slane %v956, 4
      %v959 = vshll.u32 %v534, 16
      %v961 = vrot.slane %v959, 5
      %v962 = vor.u32 %v958, %v961
      %v963 = vrot.slane %v962, 4
      %v965 = vshll.u32 %v535, 16
      %v967 = vrot.slane %v965, 5
      %v968 = vsel %vm642, %v963, %v967
      %v969 = vshrl.u32 %v535, 16
      %v971 = vrot.slane %v969, 4
      %v972 = vor.u32 %v971, %v967
      %v973 = vrot.slane %v972, 4
      %v975 = vshll.u32 %v536, 16
      %v977 = vrot.slane %v975, 5
      %v978 = vsel %vm642, %v973, %v977
      %v980 = vshrl.u32 %v537, 16
      %v982 = vrot.slane %v980, 4
      %v983 = vshll.u32 %v537, 16
      %v985 = vrot.slane %v983, 5
      %v986 = vor.u32 %v982, %v985
      %v987 = vrot.slane %v986, 4
      %v989 = vshll.u32 %v538, 16
      %v991 = vrot.slane %v989, 5
      %v992 = vsel %vm642, %v987, %v991
      %v993 = vshrl.u32 %v538, 16
      %v995 = vrot.slane %v993, 4
      %v996 = vor.u32 %v995, %v991
      %v997 = vrot.slane %v996, 4
      %v999 = vshll.u32 %v539, 16
      %v1001 = vrot.slane %v999, 5
      %v1002 = vsel %vm642, %v997, %v1001
      %v1004 = vshrl.u32 %v540, 16
      %v1006 = vrot.slane %v1004, 4
      %v1007 = vshll.u32 %v540, 16
      %v1009 = vrot.slane %v1007, 5
      %v1010 = vor.u32 %v1006, %v1009
      %v1011 = vrot.slane %v1010, 4
      %v1013 = vshll.u32 %v541, 16
      %v1015 = vrot.slane %v1013, 5
      %v1016 = vsel %vm642, %v1011, %v1015
      %v1017 = vshrl.u32 %v541, 16
      %v1019 = vrot.slane %v1017, 4
      %v1020 = vor.u32 %v1019, %v1015
      %v1021 = vrot.slane %v1020, 4
      %v1023 = vshll.u32 %v542, 16
      %v1025 = vrot.slane %v1023, 5
      %v1026 = vsel %vm642, %v1021, %v1025
      %s1027 = scalar_lea.vmem %s458, 2
      %v1028 = vld [vmem:[%s1027] sm:$0x3]
      %v1029 = vunpack.c.l.b16 %v656
      %v1030 = vunpack.c.l.b16 %v666
      %v1031 = vunpack.c.l.b16 %v680
      %v1032 = vunpack.c.l.b16 %v690
      %v1033 = vunpack.c.l.b16 %v704
      %v1034 = vunpack.c.l.b16 %v714
      %v1035 = vunpack.c.l.b16 %v728
      %v1036 = vunpack.c.l.b16 %v738
      %v1037 = vunpack.c.l.b16 %v752
      %v1038 = vunpack.c.l.b16 %v762
      %v1039 = vunpack.c.l.b16 %v776
      %v1040 = vunpack.c.l.b16 %v786
      %v1041 = vunpack.c.l.b16 %v800
      %v1042 = vunpack.c.l.b16 %v810
      %v1043 = vunpack.c.l.b16 %v824
      %v1044 = vunpack.c.l.b16 %v834
      %v1045 = vunpack.c.l.b16 %v848
      %v1046 = vunpack.c.l.b16 %v858
      %v1047 = vunpack.c.l.b16 %v872
      %v1048 = vunpack.c.l.b16 %v882
      %v1049 = vunpack.c.l.b16 %v896
      %v1050 = vunpack.c.l.b16 %v906
      %v1051 = vunpack.c.l.b16 %v920
      %v1052 = vunpack.c.l.b16 %v930
      %v1053 = vunpack.c.l.b16 %v944
      %v1054 = vunpack.c.l.b16 %v954
      %v1055 = vunpack.c.l.b16 %v968
      %v1056 = vunpack.c.l.b16 %v978
      %v1057 = vunpack.c.l.b16 %v992
      %v1058 = vunpack.c.l.b16 %v1002
      %v1059 = vunpack.c.l.b16 %v1016
      %v1060 = vunpack.c.l.b16 %v1026
      %v1061 = vpack.c.b16 %v1030, %v1029
      %v1062 = vpack.c.b16 %v1032, %v1031
      %v1063 = vpack.c.b16 %v1034, %v1033
      %v1064 = vpack.c.b16 %v1036, %v1035
      %v1065 = vpack.c.b16 %v1038, %v1037
      %v1066 = vpack.c.b16 %v1040, %v1039
      %v1067 = vpack.c.b16 %v1042, %v1041
      %v1068 = vpack.c.b16 %v1044, %v1043
      %v1069 = vpack.c.b16 %v1046, %v1045
      %v1070 = vpack.c.b16 %v1048, %v1047
      %v1071 = vpack.c.b16 %v1050, %v1049
      %v1072 = vpack.c.b16 %v1052, %v1051
      %v1073 = vpack.c.b16 %v1054, %v1053
      %v1074 = vpack.c.b16 %v1056, %v1055
      %v1075 = vpack.c.b16 %v1058, %v1057
      %v1076 = vpack.c.b16 %v1060, %v1059
      %vm1077 = vcmask 31744
      %v1079 = vsel %vm1077, %v1061, 0
      %v1082 = vsel %vm1077, %v1062, 0
      %v1085 = vsel %vm1077, %v1063, 0
      %v1088 = vsel %vm1077, %v1064, 0
      %v1091 = vsel %vm1077, %v1065, 0
      %v1094 = vsel %vm1077, %v1066, 0
      %v1097 = vsel %vm1077, %v1067, 0
      %v1100 = vsel %vm1077, %v1068, 0
      %v1103 = vsel %vm1077, %v1069, 0
      %v1106 = vsel %vm1077, %v1070, 0
      %v1109 = vsel %vm1077, %v1071, 0
      %v1112 = vsel %vm1077, %v1072, 0
      %v1115 = vsel %vm1077, %v1073, 0
      %v1118 = vsel %vm1077, %v1074, 0
      %v1121 = vsel %vm1077, %v1075, 0
      %v1124 = vsel %vm1077, %v1076, 0
      %vm1126 = vcmask 1041408
      %v1128 = vsel %vm1126, %v1028, 0
      %1130 = vmatpush.bf16.msra.mxu0 0
      %1131 = vmatpush.bf16.msra.mxu0 0
      %1132 = vmatpush.bf16.msra.mxu0 0
      %1133 = vmatpush.bf16.msra.mxu0 0
      %1134 = vmatpush.bf16.msra.mxu0 0
      %1135 = vmatpush.bf16.msra.mxu0 0
      %1136 = vmatpush.bf16.msra.mxu0 0
      %1137 = vmatpush.bf16.msra.mxu0 %v1128
      %1138 = vmatmul.bf16.gmra.mxu0 %v1079
      %v1139 = vpop.f32.mrf.mxu0
      %v1140 = vadd.f32 0.0, %v1139
      %v1141 = vpop.f32.mrf.mxu0
      %v1142 = vadd.f32 0.0, %v1141
      %1143 = vmatmul.bf16.gmra.mxu0 %v1082
      %v1144 = vpop.f32.mrf.mxu0
      %v1145 = vadd.f32 0.0, %v1144
      %v1146 = vpop.f32.mrf.mxu0
      %v1147 = vadd.f32 0.0, %v1146
      %1148 = vmatmul.bf16.gmra.mxu0 %v1085
      %v1149 = vpop.f32.mrf.mxu0
      %v1150 = vadd.f32 0.0, %v1149
      %v1151 = vpop.f32.mrf.mxu0
      %v1152 = vadd.f32 0.0, %v1151
      %1153 = vmatmul.bf16.gmra.mxu0 %v1088
      %v1154 = vpop.f32.mrf.mxu0
      %v1155 = vadd.f32 0.0, %v1154
      %v1156 = vpop.f32.mrf.mxu0
      %v1157 = vadd.f32 0.0, %v1156
      %1158 = vmatmul.bf16.gmra.mxu0 %v1091
      %v1159 = vpop.f32.mrf.mxu0
      %v1160 = vadd.f32 0.0, %v1159
      %v1161 = vpop.f32.mrf.mxu0
      %v1162 = vadd.f32 0.0, %v1161
      %1163 = vmatmul.bf16.gmra.mxu0 %v1094
      %v1164 = vpop.f32.mrf.mxu0
      %v1165 = vadd.f32 0.0, %v1164
      %v1166 = vpop.f32.mrf.mxu0
      %v1167 = vadd.f32 0.0, %v1166
      %1168 = vmatmul.bf16.gmra.mxu0 %v1097
      %v1169 = vpop.f32.mrf.mxu0
      %v1170 = vadd.f32 0.0, %v1169
      %v1171 = vpop.f32.mrf.mxu0
      %v1172 = vadd.f32 0.0, %v1171
      %1173 = vmatmul.bf16.gmra.mxu0 %v1100
      %v1174 = vpop.f32.mrf.mxu0
      %v1175 = vadd.f32 0.0, %v1174
      %v1176 = vpop.f32.mrf.mxu0
      %v1177 = vadd.f32 0.0, %v1176
      %1178 = vmatmul.bf16.gmra.mxu0 %v1103
      %v1179 = vpop.f32.mrf.mxu0
      %v1180 = vadd.f32 0.0, %v1179
      %v1181 = vpop.f32.mrf.mxu0
      %v1182 = vadd.f32 0.0, %v1181
      %1183 = vmatmul.bf16.gmra.mxu0 %v1106
      %v1184 = vpop.f32.mrf.mxu0
      %v1185 = vadd.f32 0.0, %v1184
      %v1186 = vpop.f32.mrf.mxu0
      %v1187 = vadd.f32 0.0, %v1186
      %1188 = vmatmul.bf16.gmra.mxu0 %v1109
      %v1189 = vpop.f32.mrf.mxu0
      %v1190 = vadd.f32 0.0, %v1189
      %v1191 = vpop.f32.mrf.mxu0
      %v1192 = vadd.f32 0.0, %v1191
      %1193 = vmatmul.bf16.gmra.mxu0 %v1112
      %v1194 = vpop.f32.mrf.mxu0
      %v1195 = vadd.f32 0.0, %v1194
      %v1196 = vpop.f32.mrf.mxu0
      %v1197 = vadd.f32 0.0, %v1196
      %1198 = vmatmul.bf16.gmra.mxu0 %v1115
      %v1199 = vpop.f32.mrf.mxu0
      %v1200 = vadd.f32 0.0, %v1199
      %v1201 = vpop.f32.mrf.mxu0
      %v1202 = vadd.f32 0.0, %v1201
      %1203 = vmatmul.bf16.gmra.mxu0 %v1118
      %v1204 = vpop.f32.mrf.mxu0
      %v1205 = vadd.f32 0.0, %v1204
      %v1206 = vpop.f32.mrf.mxu0
      %v1207 = vadd.f32 0.0, %v1206
      %1208 = vmatmul.bf16.gmra.mxu0 %v1121
      %v1209 = vpop.f32.mrf.mxu0
      %v1210 = vadd.f32 0.0, %v1209
      %v1211 = vpop.f32.mrf.mxu0
      %v1212 = vadd.f32 0.0, %v1211
      %1213 = vmatmul.bf16.gmra.mxu0 %v1124
      %v1214 = vpop.f32.mrf.mxu0
      %v1215 = vadd.f32 0.0, %v1214
      %v1216 = vpop.f32.mrf.mxu0
      %v1217 = vadd.f32 0.0, %v1216
      %1218 = vdwg.mxu0
      %v1251 = vunpack.c.l.b16 %v495
      %v1252 = vunpack.c.l.b16 %v496
      %v1253 = vunpack.c.l.b16 %v498
      %v1254 = vunpack.c.l.b16 %v499
      %v1255 = vunpack.c.l.b16 %v501
      %v1256 = vunpack.c.l.b16 %v502
      %v1257 = vunpack.c.l.b16 %v504
      %v1258 = vunpack.c.l.b16 %v505
      %v1259 = vunpack.c.l.b16 %v507
      %v1260 = vunpack.c.l.b16 %v508
      %v1261 = vunpack.c.l.b16 %v510
      %v1262 = vunpack.c.l.b16 %v511
      %v1263 = vunpack.c.l.b16 %v513
      %v1264 = vunpack.c.l.b16 %v514
      %v1265 = vunpack.c.l.b16 %v516
      %v1266 = vunpack.c.l.b16 %v517
      %v1267 = vunpack.c.l.b16 %v519
      %v1268 = vunpack.c.l.b16 %v520
      %v1269 = vunpack.c.l.b16 %v522
      %v1270 = vunpack.c.l.b16 %v523
      %v1271 = vunpack.c.l.b16 %v525
      %v1272 = vunpack.c.l.b16 %v526
      %v1273 = vunpack.c.l.b16 %v528
      %v1274 = vunpack.c.l.b16 %v529
      %v1275 = vunpack.c.l.b16 %v531
      %v1276 = vunpack.c.l.b16 %v532
      %v1277 = vunpack.c.l.b16 %v534
      %v1278 = vunpack.c.l.b16 %v535
      %v1279 = vunpack.c.l.b16 %v537
      %v1280 = vunpack.c.l.b16 %v538
      %v1281 = vunpack.c.l.b16 %v540
      %v1282 = vunpack.c.l.b16 %v541
      %v1283 = vpack.c.b16 %v1252, %v1251
      %v1284 = vpack.c.b16 %v1254, %v1253
      %v1285 = vpack.c.b16 %v1256, %v1255
      %v1286 = vpack.c.b16 %v1258, %v1257
      %v1287 = vpack.c.b16 %v1260, %v1259
      %v1288 = vpack.c.b16 %v1262, %v1261
      %v1289 = vpack.c.b16 %v1264, %v1263
      %v1290 = vpack.c.b16 %v1266, %v1265
      %v1291 = vpack.c.b16 %v1268, %v1267
      %v1292 = vpack.c.b16 %v1270, %v1269
      %v1293 = vpack.c.b16 %v1272, %v1271
      %v1294 = vpack.c.b16 %v1274, %v1273
      %v1295 = vpack.c.b16 %v1276, %v1275
      %v1296 = vpack.c.b16 %v1278, %v1277
      %v1297 = vpack.c.b16 %v1280, %v1279
      %v1298 = vpack.c.b16 %v1282, %v1281
      %v1300 = vsel %vm1077, %v1283, 0
      %v1303 = vsel %vm1077, %v1284, 0
      %v1306 = vsel %vm1077, %v1285, 0
      %v1309 = vsel %vm1077, %v1286, 0
      %v1312 = vsel %vm1077, %v1287, 0
      %v1315 = vsel %vm1077, %v1288, 0
      %v1318 = vsel %vm1077, %v1289, 0
      %v1321 = vsel %vm1077, %v1290, 0
      %v1324 = vsel %vm1077, %v1291, 0
      %v1327 = vsel %vm1077, %v1292, 0
      %v1330 = vsel %vm1077, %v1293, 0
      %v1333 = vsel %vm1077, %v1294, 0
      %v1336 = vsel %vm1077, %v1295, 0
      %v1339 = vsel %vm1077, %v1296, 0
      %v1342 = vsel %vm1077, %v1297, 0
      %v1345 = vsel %vm1077, %v1298, 0
      %v1348 = vsel %vm1126, %v639, 0
      %1350 = vmatpush.bf16.msra.mxu0 0
      %1351 = vmatpush.bf16.msra.mxu0 0
      %1352 = vmatpush.bf16.msra.mxu0 0
      %1353 = vmatpush.bf16.msra.mxu0 0
      %1354 = vmatpush.bf16.msra.mxu0 0
      %1355 = vmatpush.bf16.msra.mxu0 0
      %1356 = vmatpush.bf16.msra.mxu0 0
      %1357 = vmatpush.bf16.msra.mxu0 %v1348
      %1358 = vmatmul.bf16.gmra.mxu0 %v1300
      %v1359 = vpop.f32.mrf.mxu0
      %v1360 = vadd.f32 %v1140, %v1359
      %v1361 = vpop.f32.mrf.mxu0
      %v1362 = vadd.f32 %v1142, %v1361
      %1363 = vmatmul.bf16.gmra.mxu0 %v1303
      %v1364 = vpop.f32.mrf.mxu0
      %v1365 = vadd.f32 %v1145, %v1364
      %v1366 = vpop.f32.mrf.mxu0
      %v1367 = vadd.f32 %v1147, %v1366
      %1368 = vmatmul.bf16.gmra.mxu0 %v1306
      %v1369 = vpop.f32.mrf.mxu0
      %v1370 = vadd.f32 %v1150, %v1369
      %v1371 = vpop.f32.mrf.mxu0
      %v1372 = vadd.f32 %v1152, %v1371
      %1373 = vmatmul.bf16.gmra.mxu0 %v1309
      %v1374 = vpop.f32.mrf.mxu0
      %v1375 = vadd.f32 %v1155, %v1374
      %v1376 = vpop.f32.mrf.mxu0
      %v1377 = vadd.f32 %v1157, %v1376
      %1378 = vmatmul.bf16.gmra.mxu0 %v1312
      %v1379 = vpop.f32.mrf.mxu0
      %v1380 = vadd.f32 %v1160, %v1379
      %v1381 = vpop.f32.mrf.mxu0
      %v1382 = vadd.f32 %v1162, %v1381
      %1383 = vmatmul.bf16.gmra.mxu0 %v1315
      %v1384 = vpop.f32.mrf.mxu0
      %v1385 = vadd.f32 %v1165, %v1384
      %v1386 = vpop.f32.mrf.mxu0
      %v1387 = vadd.f32 %v1167, %v1386
      %1388 = vmatmul.bf16.gmra.mxu0 %v1318
      %v1389 = vpop.f32.mrf.mxu0
      %v1390 = vadd.f32 %v1170, %v1389
      %v1391 = vpop.f32.mrf.mxu0
      %v1392 = vadd.f32 %v1172, %v1391
      %1393 = vmatmul.bf16.gmra.mxu0 %v1321
      %v1394 = vpop.f32.mrf.mxu0
      %v1395 = vadd.f32 %v1175, %v1394
      %v1396 = vpop.f32.mrf.mxu0
      %v1397 = vadd.f32 %v1177, %v1396
      %1398 = vmatmul.bf16.gmra.mxu0 %v1324
      %v1399 = vpop.f32.mrf.mxu0
      %v1400 = vadd.f32 %v1180, %v1399
      %v1401 = vpop.f32.mrf.mxu0
      %v1402 = vadd.f32 %v1182, %v1401
      %1403 = vmatmul.bf16.gmra.mxu0 %v1327
      %v1404 = vpop.f32.mrf.mxu0
      %v1405 = vadd.f32 %v1185, %v1404
      %v1406 = vpop.f32.mrf.mxu0
      %v1407 = vadd.f32 %v1187, %v1406
      %1408 = vmatmul.bf16.gmra.mxu0 %v1330
      %v1409 = vpop.f32.mrf.mxu0
      %v1410 = vadd.f32 %v1190, %v1409
      %v1411 = vpop.f32.mrf.mxu0
      %v1412 = vadd.f32 %v1192, %v1411
      %1413 = vmatmul.bf16.gmra.mxu0 %v1333
      %v1414 = vpop.f32.mrf.mxu0
      %v1415 = vadd.f32 %v1195, %v1414
      %v1416 = vpop.f32.mrf.mxu0
      %v1417 = vadd.f32 %v1197, %v1416
      %1418 = vmatmul.bf16.gmra.mxu0 %v1336
      %v1419 = vpop.f32.mrf.mxu0
      %v1420 = vadd.f32 %v1200, %v1419
      %v1421 = vpop.f32.mrf.mxu0
      %v1422 = vadd.f32 %v1202, %v1421
      %1423 = vmatmul.bf16.gmra.mxu0 %v1339
      %v1424 = vpop.f32.mrf.mxu0
      %v1425 = vadd.f32 %v1205, %v1424
      %v1426 = vpop.f32.mrf.mxu0
      %v1427 = vadd.f32 %v1207, %v1426
      %1428 = vmatmul.bf16.gmra.mxu0 %v1342
      %v1429 = vpop.f32.mrf.mxu0
      %v1430 = vadd.f32 %v1210, %v1429
      %v1431 = vpop.f32.mrf.mxu0
      %v1432 = vadd.f32 %v1212, %v1431
      %1433 = vmatmul.bf16.gmra.mxu0 %v1345
      %v1434 = vpop.f32.mrf.mxu0
      %v1435 = vadd.f32 %v1215, %v1434
      %v1436 = vpop.f32.mrf.mxu0
      %v1437 = vadd.f32 %v1217, %v1436
      %1438 = vdwg.mxu0
      %vm1455 = vcmask 1042432
      %vm1456 = vcmask 1046532
      %vm1457 = vmor %vm1455, %vm1456
      %v1458 = vrot.slane %v495, 5
      %v1459 = vrot.slane %v1458, 4
      %v1460 = vrot.slane %v496, 5
      %v1461 = vsel %vm1457, %v1459, %v1460
      %v1462 = vrot.slane %v1460, 4
      %v1463 = vrot.slane %v497, 5
      %v1464 = vsel %vm1457, %v1462, %v1463
      %v1465 = vrot.slane %v498, 5
      %v1466 = vrot.slane %v1465, 4
      %v1467 = vrot.slane %v499, 5
      %v1468 = vsel %vm1457, %v1466, %v1467
      %v1469 = vrot.slane %v1467, 4
      %v1470 = vrot.slane %v500, 5
      %v1471 = vsel %vm1457, %v1469, %v1470
      %v1472 = vrot.slane %v501, 5
      %v1473 = vrot.slane %v1472, 4
      %v1474 = vrot.slane %v502, 5
      %v1475 = vsel %vm1457, %v1473, %v1474
      %v1476 = vrot.slane %v1474, 4
      %v1477 = vrot.slane %v503, 5
      %v1478 = vsel %vm1457, %v1476, %v1477
      %v1479 = vrot.slane %v504, 5
      %v1480 = vrot.slane %v1479, 4
      %v1481 = vrot.slane %v505, 5
      %v1482 = vsel %vm1457, %v1480, %v1481
      %v1483 = vrot.slane %v1481, 4
      %v1484 = vrot.slane %v506, 5
      %v1485 = vsel %vm1457, %v1483, %v1484
      %v1486 = vrot.slane %v507, 5
      %v1487 = vrot.slane %v1486, 4
      %v1488 = vrot.slane %v508, 5
      %v1489 = vsel %vm1457, %v1487, %v1488
      %v1490 = vrot.slane %v1488, 4
      %v1491 = vrot.slane %v509, 5
      %v1492 = vsel %vm1457, %v1490, %v1491
      %v1493 = vrot.slane %v510, 5
      %v1494 = vrot.slane %v1493, 4
      %v1495 = vrot.slane %v511, 5
      %v1496 = vsel %vm1457, %v1494, %v1495
      %v1497 = vrot.slane %v1495, 4
      %v1498 = vrot.slane %v512, 5
      %v1499 = vsel %vm1457, %v1497, %v1498
      %v1500 = vrot.slane %v513, 5
      %v1501 = vrot.slane %v1500, 4
      %v1502 = vrot.slane %v514, 5
      %v1503 = vsel %vm1457, %v1501, %v1502
      %v1504 = vrot.slane %v1502, 4
      %v1505 = vrot.slane %v515, 5
      %v1506 = vsel %vm1457, %v1504, %v1505
      %v1507 = vrot.slane %v516, 5
      %v1508 = vrot.slane %v1507, 4
      %v1509 = vrot.slane %v517, 5
      %v1510 = vsel %vm1457, %v1508, %v1509
      %v1511 = vrot.slane %v1509, 4
      %v1512 = vrot.slane %v518, 5
      %v1513 = vsel %vm1457, %v1511, %v1512
      %v1514 = vrot.slane %v519, 5
      %v1515 = vrot.slane %v1514, 4
      %v1516 = vrot.slane %v520, 5
      %v1517 = vsel %vm1457, %v1515, %v1516
      %v1518 = vrot.slane %v1516, 4
      %v1519 = vrot.slane %v521, 5
      %v1520 = vsel %vm1457, %v1518, %v1519
      %v1521 = vrot.slane %v522, 5
      %v1522 = vrot.slane %v1521, 4
      %v1523 = vrot.slane %v523, 5
      %v1524 = vsel %vm1457, %v1522, %v1523
      %v1525 = vrot.slane %v1523, 4
      %v1526 = vrot.slane %v524, 5
      %v1527 = vsel %vm1457, %v1525, %v1526
      %v1528 = vrot.slane %v525, 5
      %v1529 = vrot.slane %v1528, 4
      %v1530 = vrot.slane %v526, 5
      %v1531 = vsel %vm1457, %v1529, %v1530
      %v1532 = vrot.slane %v1530, 4
      %v1533 = vrot.slane %v527, 5
      %v1534 = vsel %vm1457, %v1532, %v1533
      %v1535 = vrot.slane %v528, 5
      %v1536 = vrot.slane %v1535, 4
      %v1537 = vrot.slane %v529, 5
      %v1538 = vsel %vm1457, %v1536, %v1537
      %v1539 = vrot.slane %v1537, 4
      %v1540 = vrot.slane %v530, 5
      %v1541 = vsel %vm1457, %v1539, %v1540
      %v1542 = vrot.slane %v531, 5
      %v1543 = vrot.slane %v1542, 4
      %v1544 = vrot.slane %v532, 5
      %v1545 = vsel %vm1457, %v1543, %v1544
      %v1546 = vrot.slane %v1544, 4
      %v1547 = vrot.slane %v533, 5
      %v1548 = vsel %vm1457, %v1546, %v1547
      %v1549 = vrot.slane %v534, 5
      %v1550 = vrot.slane %v1549, 4
      %v1551 = vrot.slane %v535, 5
      %v1552 = vsel %vm1457, %v1550, %v1551
      %v1553 = vrot.slane %v1551, 4
      %v1554 = vrot.slane %v536, 5
      %v1555 = vsel %vm1457, %v1553, %v1554
      %v1556 = vrot.slane %v537, 5
      %v1557 = vrot.slane %v1556, 4
      %v1558 = vrot.slane %v538, 5
      %v1559 = vsel %vm1457, %v1557, %v1558
      %v1560 = vrot.slane %v1558, 4
      %v1561 = vrot.slane %v539, 5
      %v1562 = vsel %vm1457, %v1560, %v1561
      %v1563 = vrot.slane %v540, 5
      %v1564 = vrot.slane %v1563, 4
      %v1565 = vrot.slane %v541, 5
      %v1566 = vsel %vm1457, %v1564, %v1565
      %v1567 = vrot.slane %v1565, 4
      %v1568 = vrot.slane %v542, 5
      %v1569 = vsel %vm1457, %v1567, %v1568
      %s1570 = scalar_lea.vmem %s458, 4
      %v1571 = vld [vmem:[%s1570] sm:$0x3]
      %v1572 = vunpack.c.l.b16 %v1461
      %v1573 = vunpack.c.l.b16 %v1464
      %v1574 = vunpack.c.l.b16 %v1468
      %v1575 = vunpack.c.l.b16 %v1471
      %v1576 = vunpack.c.l.b16 %v1475
      %v1577 = vunpack.c.l.b16 %v1478
      %v1578 = vunpack.c.l.b16 %v1482
      %v1579 = vunpack.c.l.b16 %v1485
      %v1580 = vunpack.c.l.b16 %v1489
      %v1581 = vunpack.c.l.b16 %v1492
      %v1582 = vunpack.c.l.b16 %v1496
      %v1583 = vunpack.c.l.b16 %v1499
      %v1584 = vunpack.c.l.b16 %v1503
      %v1585 = vunpack.c.l.b16 %v1506
      %v1586 = vunpack.c.l.b16 %v1510
      %v1587 = vunpack.c.l.b16 %v1513
      %v1588 = vunpack.c.l.b16 %v1517
      %v1589 = vunpack.c.l.b16 %v1520
      %v1590 = vunpack.c.l.b16 %v1524
      %v1591 = vunpack.c.l.b16 %v1527
      %v1592 = vunpack.c.l.b16 %v1531
      %v1593 = vunpack.c.l.b16 %v1534
      %v1594 = vunpack.c.l.b16 %v1538
      %v1595 = vunpack.c.l.b16 %v1541
      %v1596 = vunpack.c.l.b16 %v1545
      %v1597 = vunpack.c.l.b16 %v1548
      %v1598 = vunpack.c.l.b16 %v1552
      %v1599 = vunpack.c.l.b16 %v1555
      %v1600 = vunpack.c.l.b16 %v1559
      %v1601 = vunpack.c.l.b16 %v1562
      %v1602 = vunpack.c.l.b16 %v1566
      %v1603 = vunpack.c.l.b16 %v1569
      %v1604 = vpack.c.b16 %v1573, %v1572
      %v1605 = vpack.c.b16 %v1575, %v1574
      %v1606 = vpack.c.b16 %v1577, %v1576
      %v1607 = vpack.c.b16 %v1579, %v1578
      %v1608 = vpack.c.b16 %v1581, %v1580
      %v1609 = vpack.c.b16 %v1583, %v1582
      %v1610 = vpack.c.b16 %v1585, %v1584
      %v1611 = vpack.c.b16 %v1587, %v1586
      %v1612 = vpack.c.b16 %v1589, %v1588
      %v1613 = vpack.c.b16 %v1591, %v1590
      %v1614 = vpack.c.b16 %v1593, %v1592
      %v1615 = vpack.c.b16 %v1595, %v1594
      %v1616 = vpack.c.b16 %v1597, %v1596
      %v1617 = vpack.c.b16 %v1599, %v1598
      %v1618 = vpack.c.b16 %v1601, %v1600
      %v1619 = vpack.c.b16 %v1603, %v1602
      %v1621 = vsel %vm1077, %v1604, 0
      %v1624 = vsel %vm1077, %v1605, 0
      %v1627 = vsel %vm1077, %v1606, 0
      %v1630 = vsel %vm1077, %v1607, 0
      %v1633 = vsel %vm1077, %v1608, 0
      %v1636 = vsel %vm1077, %v1609, 0
      %v1639 = vsel %vm1077, %v1610, 0
      %v1642 = vsel %vm1077, %v1611, 0
      %v1645 = vsel %vm1077, %v1612, 0
      %v1648 = vsel %vm1077, %v1613, 0
      %v1651 = vsel %vm1077, %v1614, 0
      %v1654 = vsel %vm1077, %v1615, 0
      %v1657 = vsel %vm1077, %v1616, 0
      %v1660 = vsel %vm1077, %v1617, 0
      %v1663 = vsel %vm1077, %v1618, 0
      %v1666 = vsel %vm1077, %v1619, 0
      %v1669 = vsel %vm1126, %v1571, 0
      %1671 = vmatpush.bf16.msra.mxu0 0
      %1672 = vmatpush.bf16.msra.mxu0 0
      %1673 = vmatpush.bf16.msra.mxu0 0
      %1674 = vmatpush.bf16.msra.mxu0 0
      %1675 = vmatpush.bf16.msra.mxu0 0
      %1676 = vmatpush.bf16.msra.mxu0 0
      %1677 = vmatpush.bf16.msra.mxu0 0
      %1678 = vmatpush.bf16.msra.mxu0 %v1669
      %1679 = vmatmul.bf16.gmra.mxu0 %v1621
      %v1680 = vpop.f32.mrf.mxu0
      %v1681 = vadd.f32 0.0, %v1680
      %v1682 = vpop.f32.mrf.mxu0
      %v1683 = vadd.f32 0.0, %v1682
      %1684 = vmatmul.bf16.gmra.mxu0 %v1624
      %v1685 = vpop.f32.mrf.mxu0
      %v1686 = vadd.f32 0.0, %v1685
      %v1687 = vpop.f32.mrf.mxu0
      %v1688 = vadd.f32 0.0, %v1687
      %1689 = vmatmul.bf16.gmra.mxu0 %v1627
      %v1690 = vpop.f32.mrf.mxu0
      %v1691 = vadd.f32 0.0, %v1690
      %v1692 = vpop.f32.mrf.mxu0
      %v1693 = vadd.f32 0.0, %v1692
      %1694 = vmatmul.bf16.gmra.mxu0 %v1630
      %v1695 = vpop.f32.mrf.mxu0
      %v1696 = vadd.f32 0.0, %v1695
      %v1697 = vpop.f32.mrf.mxu0
      %v1698 = vadd.f32 0.0, %v1697
      %1699 = vmatmul.bf16.gmra.mxu0 %v1633
      %v1700 = vpop.f32.mrf.mxu0
      %v1701 = vadd.f32 0.0, %v1700
      %v1702 = vpop.f32.mrf.mxu0
      %v1703 = vadd.f32 0.0, %v1702
      %1704 = vmatmul.bf16.gmra.mxu0 %v1636
      %v1705 = vpop.f32.mrf.mxu0
      %v1706 = vadd.f32 0.0, %v1705
      %v1707 = vpop.f32.mrf.mxu0
      %v1708 = vadd.f32 0.0, %v1707
      %1709 = vmatmul.bf16.gmra.mxu0 %v1639
      %v1710 = vpop.f32.mrf.mxu0
      %v1711 = vadd.f32 0.0, %v1710
      %v1712 = vpop.f32.mrf.mxu0
      %v1713 = vadd.f32 0.0, %v1712
      %1714 = vmatmul.bf16.gmra.mxu0 %v1642
      %v1715 = vpop.f32.mrf.mxu0
      %v1716 = vadd.f32 0.0, %v1715
      %v1717 = vpop.f32.mrf.mxu0
      %v1718 = vadd.f32 0.0, %v1717
      %1719 = vmatmul.bf16.gmra.mxu0 %v1645
      %v1720 = vpop.f32.mrf.mxu0
      %v1721 = vadd.f32 0.0, %v1720
      %v1722 = vpop.f32.mrf.mxu0
      %v1723 = vadd.f32 0.0, %v1722
      %1724 = vmatmul.bf16.gmra.mxu0 %v1648
      %v1725 = vpop.f32.mrf.mxu0
      %v1726 = vadd.f32 0.0, %v1725
      %v1727 = vpop.f32.mrf.mxu0
      %v1728 = vadd.f32 0.0, %v1727
      %1729 = vmatmul.bf16.gmra.mxu0 %v1651
      %v1730 = vpop.f32.mrf.mxu0
      %v1731 = vadd.f32 0.0, %v1730
      %v1732 = vpop.f32.mrf.mxu0
      %v1733 = vadd.f32 0.0, %v1732
      %1734 = vmatmul.bf16.gmra.mxu0 %v1654
      %v1735 = vpop.f32.mrf.mxu0
      %v1736 = vadd.f32 0.0, %v1735
      %v1737 = vpop.f32.mrf.mxu0
      %v1738 = vadd.f32 0.0, %v1737
      %1739 = vmatmul.bf16.gmra.mxu0 %v1657
      %v1740 = vpop.f32.mrf.mxu0
      %v1741 = vadd.f32 0.0, %v1740
      %v1742 = vpop.f32.mrf.mxu0
      %v1743 = vadd.f32 0.0, %v1742
      %1744 = vmatmul.bf16.gmra.mxu0 %v1660
      %v1745 = vpop.f32.mrf.mxu0
      %v1746 = vadd.f32 0.0, %v1745
      %v1747 = vpop.f32.mrf.mxu0
      %v1748 = vadd.f32 0.0, %v1747
      %1749 = vmatmul.bf16.gmra.mxu0 %v1663
      %v1750 = vpop.f32.mrf.mxu0
      %v1751 = vadd.f32 0.0, %v1750
      %v1752 = vpop.f32.mrf.mxu0
      %v1753 = vadd.f32 0.0, %v1752
      %1754 = vmatmul.bf16.gmra.mxu0 %v1666
      %v1755 = vpop.f32.mrf.mxu0
      %v1756 = vadd.f32 0.0, %v1755
      %v1757 = vpop.f32.mrf.mxu0
      %v1758 = vadd.f32 0.0, %v1757
      %1759 = vdwg.mxu0
      %v1760 = vadd.f32 %v1360, %v1681
      %v1761 = vadd.f32 %v1362, %v1683
      %v1762 = vadd.f32 %v1365, %v1686
      %v1763 = vadd.f32 %v1367, %v1688
      %v1764 = vadd.f32 %v1370, %v1691
      %v1765 = vadd.f32 %v1372, %v1693
      %v1766 = vadd.f32 %v1375, %v1696
      %v1767 = vadd.f32 %v1377, %v1698
      %v1768 = vadd.f32 %v1380, %v1701
      %v1769 = vadd.f32 %v1382, %v1703
      %v1770 = vadd.f32 %v1385, %v1706
      %v1771 = vadd.f32 %v1387, %v1708
      %v1772 = vadd.f32 %v1390, %v1711
      %v1773 = vadd.f32 %v1392, %v1713
      %v1774 = vadd.f32 %v1395, %v1716
      %v1775 = vadd.f32 %v1397, %v1718
      %v1776 = vadd.f32 %v1400, %v1721
      %v1777 = vadd.f32 %v1402, %v1723
      %v1778 = vadd.f32 %v1405, %v1726
      %v1779 = vadd.f32 %v1407, %v1728
      %v1780 = vadd.f32 %v1410, %v1731
      %v1781 = vadd.f32 %v1412, %v1733
      %v1782 = vadd.f32 %v1415, %v1736
      %v1783 = vadd.f32 %v1417, %v1738
      %v1784 = vadd.f32 %v1420, %v1741
      %v1785 = vadd.f32 %v1422, %v1743
      %v1786 = vadd.f32 %v1425, %v1746
      %v1787 = vadd.f32 %v1427, %v1748
      %v1788 = vadd.f32 %v1430, %v1751
      %v1789 = vadd.f32 %v1432, %v1753
      %v1790 = vadd.f32 %v1435, %v1756
      %v1791 = vadd.f32 %v1437, %v1758
      %s1792 = scalar_lea.vmem %s458, 6
      %v1793 = vld [vmem:[%s1792] sm:$0x3]
      %v1826 = vunpack.c.l.b16 %v543
      %v1827 = vunpack.c.l.b16 %v544
      %v1828 = vunpack.c.l.b16 %v546
      %v1829 = vunpack.c.l.b16 %v547
      %v1830 = vunpack.c.l.b16 %v549
      %v1831 = vunpack.c.l.b16 %v550
      %v1832 = vunpack.c.l.b16 %v552
      %v1833 = vunpack.c.l.b16 %v553
      %v1834 = vunpack.c.l.b16 %v555
      %v1835 = vunpack.c.l.b16 %v556
      %v1836 = vunpack.c.l.b16 %v558
      %v1837 = vunpack.c.l.b16 %v559
      %v1838 = vunpack.c.l.b16 %v561
      %v1839 = vunpack.c.l.b16 %v562
      %v1840 = vunpack.c.l.b16 %v564
      %v1841 = vunpack.c.l.b16 %v565
      %v1842 = vunpack.c.l.b16 %v567
      %v1843 = vunpack.c.l.b16 %v568
      %v1844 = vunpack.c.l.b16 %v570
      %v1845 = vunpack.c.l.b16 %v571
      %v1846 = vunpack.c.l.b16 %v573
      %v1847 = vunpack.c.l.b16 %v574
      %v1848 = vunpack.c.l.b16 %v576
      %v1849 = vunpack.c.l.b16 %v577
      %v1850 = vunpack.c.l.b16 %v579
      %v1851 = vunpack.c.l.b16 %v580
      %v1852 = vunpack.c.l.b16 %v582
      %v1853 = vunpack.c.l.b16 %v583
      %v1854 = vunpack.c.l.b16 %v585
      %v1855 = vunpack.c.l.b16 %v586
      %v1856 = vunpack.c.l.b16 %v588
      %v1857 = vunpack.c.l.b16 %v589
      %v1858 = vpack.c.b16 %v1827, %v1826
      %v1859 = vpack.c.b16 %v1829, %v1828
      %v1860 = vpack.c.b16 %v1831, %v1830
      %v1861 = vpack.c.b16 %v1833, %v1832
      %v1862 = vpack.c.b16 %v1835, %v1834
      %v1863 = vpack.c.b16 %v1837, %v1836
      %v1864 = vpack.c.b16 %v1839, %v1838
      %v1865 = vpack.c.b16 %v1841, %v1840
      %v1866 = vpack.c.b16 %v1843, %v1842
      %v1867 = vpack.c.b16 %v1845, %v1844
      %v1868 = vpack.c.b16 %v1847, %v1846
      %v1869 = vpack.c.b16 %v1849, %v1848
      %v1870 = vpack.c.b16 %v1851, %v1850
      %v1871 = vpack.c.b16 %v1853, %v1852
      %v1872 = vpack.c.b16 %v1855, %v1854
      %v1873 = vpack.c.b16 %v1857, %v1856
      %v1875 = vsel %vm1077, %v1858, 0
      %v1878 = vsel %vm1077, %v1859, 0
      %v1881 = vsel %vm1077, %v1860, 0
      %v1884 = vsel %vm1077, %v1861, 0
      %v1887 = vsel %vm1077, %v1862, 0
      %v1890 = vsel %vm1077, %v1863, 0
      %v1893 = vsel %vm1077, %v1864, 0
      %v1896 = vsel %vm1077, %v1865, 0
      %v1899 = vsel %vm1077, %v1866, 0
      %v1902 = vsel %vm1077, %v1867, 0
      %v1905 = vsel %vm1077, %v1868, 0
      %v1908 = vsel %vm1077, %v1869, 0
      %v1911 = vsel %vm1077, %v1870, 0
      %v1914 = vsel %vm1077, %v1871, 0
      %v1917 = vsel %vm1077, %v1872, 0
      %v1920 = vsel %vm1077, %v1873, 0
      %v1923 = vsel %vm1126, %v1793, 0
      %1925 = vmatpush.bf16.msra.mxu0 0
      %1926 = vmatpush.bf16.msra.mxu0 0
      %1927 = vmatpush.bf16.msra.mxu0 0
      %1928 = vmatpush.bf16.msra.mxu0 0
      %1929 = vmatpush.bf16.msra.mxu0 0
      %1930 = vmatpush.bf16.msra.mxu0 0
      %1931 = vmatpush.bf16.msra.mxu0 0
      %1932 = vmatpush.bf16.msra.mxu0 %v1923
      %1933 = vmatmul.bf16.gmra.mxu0 %v1875
      %v1934 = vpop.f32.mrf.mxu0
      %v1935 = vadd.f32 0.0, %v1934
      %v1936 = vpop.f32.mrf.mxu0
      %v1937 = vadd.f32 0.0, %v1936
      %1938 = vmatmul.bf16.gmra.mxu0 %v1878
      %v1939 = vpop.f32.mrf.mxu0
      %v1940 = vadd.f32 0.0, %v1939
      %v1941 = vpop.f32.mrf.mxu0
      %v1942 = vadd.f32 0.0, %v1941
      %1943 = vmatmul.bf16.gmra.mxu0 %v1881
      %v1944 = vpop.f32.mrf.mxu0
      %v1945 = vadd.f32 0.0, %v1944
      %v1946 = vpop.f32.mrf.mxu0
      %v1947 = vadd.f32 0.0, %v1946
      %1948 = vmatmul.bf16.gmra.mxu0 %v1884
      %v1949 = vpop.f32.mrf.mxu0
      %v1950 = vadd.f32 0.0, %v1949
      %v1951 = vpop.f32.mrf.mxu0
      %v1952 = vadd.f32 0.0, %v1951
      %1953 = vmatmul.bf16.gmra.mxu0 %v1887
      %v1954 = vpop.f32.mrf.mxu0
      %v1955 = vadd.f32 0.0, %v1954
      %v1956 = vpop.f32.mrf.mxu0
      %v1957 = vadd.f32 0.0, %v1956
      %1958 = vmatmul.bf16.gmra.mxu0 %v1890
      %v1959 = vpop.f32.mrf.mxu0
      %v1960 = vadd.f32 0.0, %v1959
      %v1961 = vpop.f32.mrf.mxu0
      %v1962 = vadd.f32 0.0, %v1961
      %1963 = vmatmul.bf16.gmra.mxu0 %v1893
      %v1964 = vpop.f32.mrf.mxu0
      %v1965 = vadd.f32 0.0, %v1964
      %v1966 = vpop.f32.mrf.mxu0
      %v1967 = vadd.f32 0.0, %v1966
      %1968 = vmatmul.bf16.gmra.mxu0 %v1896
      %v1969 = vpop.f32.mrf.mxu0
      %v1970 = vadd.f32 0.0, %v1969
      %v1971 = vpop.f32.mrf.mxu0
      %v1972 = vadd.f32 0.0, %v1971
      %1973 = vmatmul.bf16.gmra.mxu0 %v1899
      %v1974 = vpop.f32.mrf.mxu0
      %v1975 = vadd.f32 0.0, %v1974
      %v1976 = vpop.f32.mrf.mxu0
      %v1977 = vadd.f32 0.0, %v1976
      %1978 = vmatmul.bf16.gmra.mxu0 %v1902
      %v1979 = vpop.f32.mrf.mxu0
      %v1980 = vadd.f32 0.0, %v1979
      %v1981 = vpop.f32.mrf.mxu0
      %v1982 = vadd.f32 0.0, %v1981
      %1983 = vmatmul.bf16.gmra.mxu0 %v1905
      %v1984 = vpop.f32.mrf.mxu0
      %v1985 = vadd.f32 0.0, %v1984
      %v1986 = vpop.f32.mrf.mxu0
      %v1987 = vadd.f32 0.0, %v1986
      %1988 = vmatmul.bf16.gmra.mxu0 %v1908
      %v1989 = vpop.f32.mrf.mxu0
      %v1990 = vadd.f32 0.0, %v1989
      %v1991 = vpop.f32.mrf.mxu0
      %v1992 = vadd.f32 0.0, %v1991
      %1993 = vmatmul.bf16.gmra.mxu0 %v1911
      %v1994 = vpop.f32.mrf.mxu0
      %v1995 = vadd.f32 0.0, %v1994
      %v1996 = vpop.f32.mrf.mxu0
      %v1997 = vadd.f32 0.0, %v1996
      %1998 = vmatmul.bf16.gmra.mxu0 %v1914
      %v1999 = vpop.f32.mrf.mxu0
      %v2000 = vadd.f32 0.0, %v1999
      %v2001 = vpop.f32.mrf.mxu0
      %v2002 = vadd.f32 0.0, %v2001
      %2003 = vmatmul.bf16.gmra.mxu0 %v1917
      %v2004 = vpop.f32.mrf.mxu0
      %v2005 = vadd.f32 0.0, %v2004
      %v2006 = vpop.f32.mrf.mxu0
      %v2007 = vadd.f32 0.0, %v2006
      %2008 = vmatmul.bf16.gmra.mxu0 %v1920
      %v2009 = vpop.f32.mrf.mxu0
      %v2010 = vadd.f32 0.0, %v2009
      %v2011 = vpop.f32.mrf.mxu0
      %v2012 = vadd.f32 0.0, %v2011
      %2013 = vdwg.mxu0
      %v2014 = vadd.f32 %v1760, %v1935
      %v2015 = vadd.f32 %v1761, %v1937
      %v2016 = vadd.f32 %v1762, %v1940
      %v2017 = vadd.f32 %v1763, %v1942
      %v2018 = vadd.f32 %v1764, %v1945
      %v2019 = vadd.f32 %v1765, %v1947
      %v2020 = vadd.f32 %v1766, %v1950
      %v2021 = vadd.f32 %v1767, %v1952
      %v2022 = vadd.f32 %v1768, %v1955
      %v2023 = vadd.f32 %v1769, %v1957
      %v2024 = vadd.f32 %v1770, %v1960
      %v2025 = vadd.f32 %v1771, %v1962
      %v2026 = vadd.f32 %v1772, %v1965
      %v2027 = vadd.f32 %v1773, %v1967
      %v2028 = vadd.f32 %v1774, %v1970
      %v2029 = vadd.f32 %v1775, %v1972
      %v2030 = vadd.f32 %v1776, %v1975
      %v2031 = vadd.f32 %v1777, %v1977
      %v2032 = vadd.f32 %v1778, %v1980
      %v2033 = vadd.f32 %v1779, %v1982
      %v2034 = vadd.f32 %v1780, %v1985
      %v2035 = vadd.f32 %v1781, %v1987
      %v2036 = vadd.f32 %v1782, %v1990
      %v2037 = vadd.f32 %v1783, %v1992
      %v2038 = vadd.f32 %v1784, %v1995
      %v2039 = vadd.f32 %v1785, %v1997
      %v2040 = vadd.f32 %v1786, %v2000
      %v2041 = vadd.f32 %v1787, %v2002
      %v2042 = vadd.f32 %v1788, %v2005
      %v2043 = vadd.f32 %v1789, %v2007
      %v2044 = vadd.f32 %v1790, %v2010
      %v2045 = vadd.f32 %v1791, %v2012
      %v2047 = vshrl.u32 %v543, 16
      %v2049 = vrot.slane %v2047, 4
      %v2050 = vshll.u32 %v543, 16
      %v2052 = vrot.slane %v2050, 5
      %v2053 = vor.u32 %v2049, %v2052
      %v2054 = vrot.slane %v2053, 4
      %v2056 = vshll.u32 %v544, 16
      %v2058 = vrot.slane %v2056, 5
      %v2059 = vsel %vm642, %v2054, %v2058
      %v2060 = vshrl.u32 %v544, 16
      %v2062 = vrot.slane %v2060, 4
      %v2063 = vor.u32 %v2062, %v2058
      %v2064 = vrot.slane %v2063, 4
      %v2066 = vshll.u32 %v545, 16
      %v2068 = vrot.slane %v2066, 5
      %v2069 = vsel %vm642, %v2064, %v2068
      %v2071 = vshrl.u32 %v546, 16
      %v2073 = vrot.slane %v2071, 4
      %v2074 = vshll.u32 %v546, 16
      %v2076 = vrot.slane %v2074, 5
      %v2077 = vor.u32 %v2073, %v2076
      %v2078 = vrot.slane %v2077, 4
      %v2080 = vshll.u32 %v547, 16
      %v2082 = vrot.slane %v2080, 5
      %v2083 = vsel %vm642, %v2078, %v2082
      %v2084 = vshrl.u32 %v547, 16
      %v2086 = vrot.slane %v2084, 4
      %v2087 = vor.u32 %v2086, %v2082
      %v2088 = vrot.slane %v2087, 4
      %v2090 = vshll.u32 %v548, 16
      %v2092 = vrot.slane %v2090, 5
      %v2093 = vsel %vm642, %v2088, %v2092
      %v2095 = vshrl.u32 %v549, 16
      %v2097 = vrot.slane %v2095, 4
      %v2098 = vshll.u32 %v549, 16
      %v2100 = vrot.slane %v2098, 5
      %v2101 = vor.u32 %v2097, %v2100
      %v2102 = vrot.slane %v2101, 4
      %v2104 = vshll.u32 %v550, 16
      %v2106 = vrot.slane %v2104, 5
      %v2107 = vsel %vm642, %v2102, %v2106
      %v2108 = vshrl.u32 %v550, 16
      %v2110 = vrot.slane %v2108, 4
      %v2111 = vor.u32 %v2110, %v2106
      %v2112 = vrot.slane %v2111, 4
      %v2114 = vshll.u32 %v551, 16
      %v2116 = vrot.slane %v2114, 5
      %v2117 = vsel %vm642, %v2112, %v2116
      %v2119 = vshrl.u32 %v552, 16
      %v2121 = vrot.slane %v2119, 4
      %v2122 = vshll.u32 %v552, 16
      %v2124 = vrot.slane %v2122, 5
      %v2125 = vor.u32 %v2121, %v2124
      %v2126 = vrot.slane %v2125, 4
      %v2128 = vshll.u32 %v553, 16
      %v2130 = vrot.slane %v2128, 5
      %v2131 = vsel %vm642, %v2126, %v2130
      %v2132 = vshrl.u32 %v553, 16
      %v2134 = vrot.slane %v2132, 4
      %v2135 = vor.u32 %v2134, %v2130
      %v2136 = vrot.slane %v2135, 4
      %v2138 = vshll.u32 %v554, 16
      %v2140 = vrot.slane %v2138, 5
      %v2141 = vsel %vm642, %v2136, %v2140
      %v2143 = vshrl.u32 %v555, 16
      %v2145 = vrot.slane %v2143, 4
      %v2146 = vshll.u32 %v555, 16
      %v2148 = vrot.slane %v2146, 5
      %v2149 = vor.u32 %v2145, %v2148
      %v2150 = vrot.slane %v2149, 4
      %v2152 = vshll.u32 %v556, 16
      %v2154 = vrot.slane %v2152, 5
      %v2155 = vsel %vm642, %v2150, %v2154
      %v2156 = vshrl.u32 %v556, 16
      %v2158 = vrot.slane %v2156, 4
      %v2159 = vor.u32 %v2158, %v2154
      %v2160 = vrot.slane %v2159, 4
      %v2162 = vshll.u32 %v557, 16
      %v2164 = vrot.slane %v2162, 5
      %v2165 = vsel %vm642, %v2160, %v2164
      %v2167 = vshrl.u32 %v558, 16
      %v2169 = vrot.slane %v2167, 4
      %v2170 = vshll.u32 %v558, 16
      %v2172 = vrot.slane %v2170, 5
      %v2173 = vor.u32 %v2169, %v2172
      %v2174 = vrot.slane %v2173, 4
      %v2176 = vshll.u32 %v559, 16
      %v2178 = vrot.slane %v2176, 5
      %v2179 = vsel %vm642, %v2174, %v2178
      %v2180 = vshrl.u32 %v559, 16
      %v2182 = vrot.slane %v2180, 4
      %v2183 = vor.u32 %v2182, %v2178
      %v2184 = vrot.slane %v2183, 4
      %v2186 = vshll.u32 %v560, 16
      %v2188 = vrot.slane %v2186, 5
      %v2189 = vsel %vm642, %v2184, %v2188
      %v2191 = vshrl.u32 %v561, 16
      %v2193 = vrot.slane %v2191, 4
      %v2194 = vshll.u32 %v561, 16
      %v2196 = vrot.slane %v2194, 5
      %v2197 = vor.u32 %v2193, %v2196
      %v2198 = vrot.slane %v2197, 4
      %v2200 = vshll.u32 %v562, 16
      %v2202 = vrot.slane %v2200, 5
      %v2203 = vsel %vm642, %v2198, %v2202
      %v2204 = vshrl.u32 %v562, 16
      %v2206 = vrot.slane %v2204, 4
      %v2207 = vor.u32 %v2206, %v2202
      %v2208 = vrot.slane %v2207, 4
      %v2210 = vshll.u32 %v563, 16
      %v2212 = vrot.slane %v2210, 5
      %v2213 = vsel %vm642, %v2208, %v2212
      %v2215 = vshrl.u32 %v564, 16
      %v2217 = vrot.slane %v2215, 4
      %v2218 = vshll.u32 %v564, 16
      %v2220 = vrot.slane %v2218, 5
      %v2221 = vor.u32 %v2217, %v2220
      %v2222 = vrot.slane %v2221, 4
      %v2224 = vshll.u32 %v565, 16
      %v2226 = vrot.slane %v2224, 5
      %v2227 = vsel %vm642, %v2222, %v2226
      %v2228 = vshrl.u32 %v565, 16
      %v2230 = vrot.slane %v2228, 4
      %v2231 = vor.u32 %v2230, %v2226
      %v2232 = vrot.slane %v2231, 4
      %v2234 = vshll.u32 %v566, 16
      %v2236 = vrot.slane %v2234, 5
      %v2237 = vsel %vm642, %v2232, %v2236
      %v2239 = vshrl.u32 %v567, 16
      %v2241 = vrot.slane %v2239, 4
      %v2242 = vshll.u32 %v567, 16
      %v2244 = vrot.slane %v2242, 5
      %v2245 = vor.u32 %v2241, %v2244
      %v2246 = vrot.slane %v2245, 4
      %v2248 = vshll.u32 %v568, 16
      %v2250 = vrot.slane %v2248, 5
      %v2251 = vsel %vm642, %v2246, %v2250
      %v2252 = vshrl.u32 %v568, 16
      %v2254 = vrot.slane %v2252, 4
      %v2255 = vor.u32 %v2254, %v2250
      %v2256 = vrot.slane %v2255, 4
      %v2258 = vshll.u32 %v569, 16
      %v2260 = vrot.slane %v2258, 5
      %v2261 = vsel %vm642, %v2256, %v2260
      %v2263 = vshrl.u32 %v570, 16
      %v2265 = vrot.slane %v2263, 4
      %v2266 = vshll.u32 %v570, 16
      %v2268 = vrot.slane %v2266, 5
      %v2269 = vor.u32 %v2265, %v2268
      %v2270 = vrot.slane %v2269, 4
      %v2272 = vshll.u32 %v571, 16
      %v2274 = vrot.slane %v2272, 5
      %v2275 = vsel %vm642, %v2270, %v2274
      %v2276 = vshrl.u32 %v571, 16
      %v2278 = vrot.slane %v2276, 4
      %v2279 = vor.u32 %v2278, %v2274
      %v2280 = vrot.slane %v2279, 4
      %v2282 = vshll.u32 %v572, 16
      %v2284 = vrot.slane %v2282, 5
      %v2285 = vsel %vm642, %v2280, %v2284
      %v2287 = vshrl.u32 %v573, 16
      %v2289 = vrot.slane %v2287, 4
      %v2290 = vshll.u32 %v573, 16
      %v2292 = vrot.slane %v2290, 5
      %v2293 = vor.u32 %v2289, %v2292
      %v2294 = vrot.slane %v2293, 4
      %v2296 = vshll.u32 %v574, 16
      %v2298 = vrot.slane %v2296, 5
      %v2299 = vsel %vm642, %v2294, %v2298
      %v2300 = vshrl.u32 %v574, 16
      %v2302 = vrot.slane %v2300, 4
      %v2303 = vor.u32 %v2302, %v2298
      %v2304 = vrot.slane %v2303, 4
      %v2306 = vshll.u32 %v575, 16
      %v2308 = vrot.slane %v2306, 5
      %v2309 = vsel %vm642, %v2304, %v2308
      %v2311 = vshrl.u32 %v576, 16
      %v2313 = vrot.slane %v2311, 4
      %v2314 = vshll.u32 %v576, 16
      %v2316 = vrot.slane %v2314, 5
      %v2317 = vor.u32 %v2313, %v2316
      %v2318 = vrot.slane %v2317, 4
      %v2320 = vshll.u32 %v577, 16
      %v2322 = vrot.slane %v2320, 5
      %v2323 = vsel %vm642, %v2318, %v2322
      %v2324 = vshrl.u32 %v577, 16
      %v2326 = vrot.slane %v2324, 4
      %v2327 = vor.u32 %v2326, %v2322
      %v2328 = vrot.slane %v2327, 4
      %v2330 = vshll.u32 %v578, 16
      %v2332 = vrot.slane %v2330, 5
      %v2333 = vsel %vm642, %v2328, %v2332
      %v2335 = vshrl.u32 %v579, 16
      %v2337 = vrot.slane %v2335, 4
      %v2338 = vshll.u32 %v579, 16
      %v2340 = vrot.slane %v2338, 5
      %v2341 = vor.u32 %v2337, %v2340
      %v2342 = vrot.slane %v2341, 4
      %v2344 = vshll.u32 %v580, 16
      %v2346 = vrot.slane %v2344, 5
      %v2347 = vsel %vm642, %v2342, %v2346
      %v2348 = vshrl.u32 %v580, 16
      %v2350 = vrot.slane %v2348, 4
      %v2351 = vor.u32 %v2350, %v2346
      %v2352 = vrot.slane %v2351, 4
      %v2354 = vshll.u32 %v581, 16
      %v2356 = vrot.slane %v2354, 5
      %v2357 = vsel %vm642, %v2352, %v2356
      %v2359 = vshrl.u32 %v582, 16
      %v2361 = vrot.slane %v2359, 4
      %v2362 = vshll.u32 %v582, 16
      %v2364 = vrot.slane %v2362, 5
      %v2365 = vor.u32 %v2361, %v2364
      %v2366 = vrot.slane %v2365, 4
      %v2368 = vshll.u32 %v583, 16
      %v2370 = vrot.slane %v2368, 5
      %v2371 = vsel %vm642, %v2366, %v2370
      %v2372 = vshrl.u32 %v583, 16
      %v2374 = vrot.slane %v2372, 4
      %v2375 = vor.u32 %v2374, %v2370
      %v2376 = vrot.slane %v2375, 4
      %v2378 = vshll.u32 %v584, 16
      %v2380 = vrot.slane %v2378, 5
      %v2381 = vsel %vm642, %v2376, %v2380
      %v2383 = vshrl.u32 %v585, 16
      %v2385 = vrot.slane %v2383, 4
      %v2386 = vshll.u32 %v585, 16
      %v2388 = vrot.slane %v2386, 5
      %v2389 = vor.u32 %v2385, %v2388
      %v2390 = vrot.slane %v2389, 4
      %v2392 = vshll.u32 %v586, 16
      %v2394 = vrot.slane %v2392, 5
      %v2395 = vsel %vm642, %v2390, %v2394
      %v2396 = vshrl.u32 %v586, 16
      %v2398 = vrot.slane %v2396, 4
      %v2399 = vor.u32 %v2398, %v2394
      %v2400 = vrot.slane %v2399, 4
      %v2402 = vshll.u32 %v587, 16
      %v2404 = vrot.slane %v2402, 5
      %v2405 = vsel %vm642, %v2400, %v2404
      %v2407 = vshrl.u32 %v588, 16
      %v2409 = vrot.slane %v2407, 4
      %v2410 = vshll.u32 %v588, 16
      %v2412 = vrot.slane %v2410, 5
      %v2413 = vor.u32 %v2409, %v2412
      %v2414 = vrot.slane %v2413, 4
      %v2416 = vshll.u32 %v589, 16
      %v2418 = vrot.slane %v2416, 5
      %v2419 = vsel %vm642, %v2414, %v2418
      %v2420 = vshrl.u32 %v589, 16
      %v2422 = vrot.slane %v2420, 4
      %v2423 = vor.u32 %v2422, %v2418
      %v2424 = vrot.slane %v2423, 4
      %v2426 = vshll.u32 %v590, 16
      %v2428 = vrot.slane %v2426, 5
      %v2429 = vsel %vm642, %v2424, %v2428
      %s2430 = scalar_lea.vmem %s458, 8
      %v2431 = vld [vmem:[%s2430] sm:$0x3]
      %v2432 = vunpack.c.l.b16 %v2059
      %v2433 = vunpack.c.l.b16 %v2069
      %v2434 = vunpack.c.l.b16 %v2083
      %v2435 = vunpack.c.l.b16 %v2093
      %v2436 = vunpack.c.l.b16 %v2107
      %v2437 = vunpack.c.l.b16 %v2117
      %v2438 = vunpack.c.l.b16 %v2131
      %v2439 = vunpack.c.l.b16 %v2141
      %v2440 = vunpack.c.l.b16 %v2155
      %v2441 = vunpack.c.l.b16 %v2165
      %v2442 = vunpack.c.l.b16 %v2179
      %v2443 = vunpack.c.l.b16 %v2189
      %v2444 = vunpack.c.l.b16 %v2203
      %v2445 = vunpack.c.l.b16 %v2213
      %v2446 = vunpack.c.l.b16 %v2227
      %v2447 = vunpack.c.l.b16 %v2237
      %v2448 = vunpack.c.l.b16 %v2251
      %v2449 = vunpack.c.l.b16 %v2261
      %v2450 = vunpack.c.l.b16 %v2275
      %v2451 = vunpack.c.l.b16 %v2285
      %v2452 = vunpack.c.l.b16 %v2299
      %v2453 = vunpack.c.l.b16 %v2309
      %v2454 = vunpack.c.l.b16 %v2323
      %v2455 = vunpack.c.l.b16 %v2333
      %v2456 = vunpack.c.l.b16 %v2347
      %v2457 = vunpack.c.l.b16 %v2357
      %v2458 = vunpack.c.l.b16 %v2371
      %v2459 = vunpack.c.l.b16 %v2381
      %v2460 = vunpack.c.l.b16 %v2395
      %v2461 = vunpack.c.l.b16 %v2405
      %v2462 = vunpack.c.l.b16 %v2419
      %v2463 = vunpack.c.l.b16 %v2429
      %v2464 = vpack.c.b16 %v2433, %v2432
      %v2465 = vpack.c.b16 %v2435, %v2434
      %v2466 = vpack.c.b16 %v2437, %v2436
      %v2467 = vpack.c.b16 %v2439, %v2438
      %v2468 = vpack.c.b16 %v2441, %v2440
      %v2469 = vpack.c.b16 %v2443, %v2442
      %v2470 = vpack.c.b16 %v2445, %v2444
      %v2471 = vpack.c.b16 %v2447, %v2446
      %v2472 = vpack.c.b16 %v2449, %v2448
      %v2473 = vpack.c.b16 %v2451, %v2450
      %v2474 = vpack.c.b16 %v2453, %v2452
      %v2475 = vpack.c.b16 %v2455, %v2454
      %v2476 = vpack.c.b16 %v2457, %v2456
      %v2477 = vpack.c.b16 %v2459, %v2458
      %v2478 = vpack.c.b16 %v2461, %v2460
      %v2479 = vpack.c.b16 %v2463, %v2462
      %v2481 = vsel %vm1077, %v2464, 0
      %v2484 = vsel %vm1077, %v2465, 0
      %v2487 = vsel %vm1077, %v2466, 0
      %v2490 = vsel %vm1077, %v2467, 0
      %v2493 = vsel %vm1077, %v2468, 0
      %v2496 = vsel %vm1077, %v2469, 0
      %v2499 = vsel %vm1077, %v2470, 0
      %v2502 = vsel %vm1077, %v2471, 0
      %v2505 = vsel %vm1077, %v2472, 0
      %v2508 = vsel %vm1077, %v2473, 0
      %v2511 = vsel %vm1077, %v2474, 0
      %v2514 = vsel %vm1077, %v2475, 0
      %v2517 = vsel %vm1077, %v2476, 0
      %v2520 = vsel %vm1077, %v2477, 0
      %v2523 = vsel %vm1077, %v2478, 0
      %v2526 = vsel %vm1077, %v2479, 0
      %v2529 = vsel %vm1126, %v2431, 0
      %2531 = vmatpush.bf16.msra.mxu0 0
      %2532 = vmatpush.bf16.msra.mxu0 0
      %2533 = vmatpush.bf16.msra.mxu0 0
      %2534 = vmatpush.bf16.msra.mxu0 0
      %2535 = vmatpush.bf16.msra.mxu0 0
      %2536 = vmatpush.bf16.msra.mxu0 0
      %2537 = vmatpush.bf16.msra.mxu0 0
      %2538 = vmatpush.bf16.msra.mxu0 %v2529
      %2539 = vmatmul.bf16.gmra.mxu0 %v2481
      %v2540 = vpop.f32.mrf.mxu0
      %v2541 = vadd.f32 0.0, %v2540
      %v2542 = vpop.f32.mrf.mxu0
      %v2543 = vadd.f32 0.0, %v2542
      %2544 = vmatmul.bf16.gmra.mxu0 %v2484
      %v2545 = vpop.f32.mrf.mxu0
      %v2546 = vadd.f32 0.0, %v2545
      %v2547 = vpop.f32.mrf.mxu0
      %v2548 = vadd.f32 0.0, %v2547
      %2549 = vmatmul.bf16.gmra.mxu0 %v2487
      %v2550 = vpop.f32.mrf.mxu0
      %v2551 = vadd.f32 0.0, %v2550
      %v2552 = vpop.f32.mrf.mxu0
      %v2553 = vadd.f32 0.0, %v2552
      %2554 = vmatmul.bf16.gmra.mxu0 %v2490
      %v2555 = vpop.f32.mrf.mxu0
      %v2556 = vadd.f32 0.0, %v2555
      %v2557 = vpop.f32.mrf.mxu0
      %v2558 = vadd.f32 0.0, %v2557
      %2559 = vmatmul.bf16.gmra.mxu0 %v2493
      %v2560 = vpop.f32.mrf.mxu0
      %v2561 = vadd.f32 0.0, %v2560
      %v2562 = vpop.f32.mrf.mxu0
      %v2563 = vadd.f32 0.0, %v2562
      %2564 = vmatmul.bf16.gmra.mxu0 %v2496
      %v2565 = vpop.f32.mrf.mxu0
      %v2566 = vadd.f32 0.0, %v2565
      %v2567 = vpop.f32.mrf.mxu0
      %v2568 = vadd.f32 0.0, %v2567
      %2569 = vmatmul.bf16.gmra.mxu0 %v2499
      %v2570 = vpop.f32.mrf.mxu0
      %v2571 = vadd.f32 0.0, %v2570
      %v2572 = vpop.f32.mrf.mxu0
      %v2573 = vadd.f32 0.0, %v2572
      %2574 = vmatmul.bf16.gmra.mxu0 %v2502
      %v2575 = vpop.f32.mrf.mxu0
      %v2576 = vadd.f32 0.0, %v2575
      %v2577 = vpop.f32.mrf.mxu0
      %v2578 = vadd.f32 0.0, %v2577
      %2579 = vmatmul.bf16.gmra.mxu0 %v2505
      %v2580 = vpop.f32.mrf.mxu0
      %v2581 = vadd.f32 0.0, %v2580
      %v2582 = vpop.f32.mrf.mxu0
      %v2583 = vadd.f32 0.0, %v2582
      %2584 = vmatmul.bf16.gmra.mxu0 %v2508
      %v2585 = vpop.f32.mrf.mxu0
      %v2586 = vadd.f32 0.0, %v2585
      %v2587 = vpop.f32.mrf.mxu0
      %v2588 = vadd.f32 0.0, %v2587
      %2589 = vmatmul.bf16.gmra.mxu0 %v2511
      %v2590 = vpop.f32.mrf.mxu0
      %v2591 = vadd.f32 0.0, %v2590
      %v2592 = vpop.f32.mrf.mxu0
      %v2593 = vadd.f32 0.0, %v2592
      %2594 = vmatmul.bf16.gmra.mxu0 %v2514
      %v2595 = vpop.f32.mrf.mxu0
      %v2596 = vadd.f32 0.0, %v2595
      %v2597 = vpop.f32.mrf.mxu0
      %v2598 = vadd.f32 0.0, %v2597
      %2599 = vmatmul.bf16.gmra.mxu0 %v2517
      %v2600 = vpop.f32.mrf.mxu0
      %v2601 = vadd.f32 0.0, %v2600
      %v2602 = vpop.f32.mrf.mxu0
      %v2603 = vadd.f32 0.0, %v2602
      %2604 = vmatmul.bf16.gmra.mxu0 %v2520
      %v2605 = vpop.f32.mrf.mxu0
      %v2606 = vadd.f32 0.0, %v2605
      %v2607 = vpop.f32.mrf.mxu0
      %v2608 = vadd.f32 0.0, %v2607
      %2609 = vmatmul.bf16.gmra.mxu0 %v2523
      %v2610 = vpop.f32.mrf.mxu0
      %v2611 = vadd.f32 0.0, %v2610
      %v2612 = vpop.f32.mrf.mxu0
      %v2613 = vadd.f32 0.0, %v2612
      %2614 = vmatmul.bf16.gmra.mxu0 %v2526
      %v2615 = vpop.f32.mrf.mxu0
      %v2616 = vadd.f32 0.0, %v2615
      %v2617 = vpop.f32.mrf.mxu0
      %v2618 = vadd.f32 0.0, %v2617
      %2619 = vdwg.mxu0
      %v2620 = vadd.f32 %v2014, %v2541
      %v2621 = vadd.f32 %v2015, %v2543
      %v2622 = vadd.f32 %v2016, %v2546
      %v2623 = vadd.f32 %v2017, %v2548
      %v2624 = vadd.f32 %v2018, %v2551
      %v2625 = vadd.f32 %v2019, %v2553
      %v2626 = vadd.f32 %v2020, %v2556
      %v2627 = vadd.f32 %v2021, %v2558
      %v2628 = vadd.f32 %v2022, %v2561
      %v2629 = vadd.f32 %v2023, %v2563
      %v2630 = vadd.f32 %v2024, %v2566
      %v2631 = vadd.f32 %v2025, %v2568
      %v2632 = vadd.f32 %v2026, %v2571
      %v2633 = vadd.f32 %v2027, %v2573
      %v2634 = vadd.f32 %v2028, %v2576
      %v2635 = vadd.f32 %v2029, %v2578
      %v2636 = vadd.f32 %v2030, %v2581
      %v2637 = vadd.f32 %v2031, %v2583
      %v2638 = vadd.f32 %v2032, %v2586
      %v2639 = vadd.f32 %v2033, %v2588
      %v2640 = vadd.f32 %v2034, %v2591
      %v2641 = vadd.f32 %v2035, %v2593
      %v2642 = vadd.f32 %v2036, %v2596
      %v2643 = vadd.f32 %v2037, %v2598
      %v2644 = vadd.f32 %v2038, %v2601
      %v2645 = vadd.f32 %v2039, %v2603
      %v2646 = vadd.f32 %v2040, %v2606
      %v2647 = vadd.f32 %v2041, %v2608
      %v2648 = vadd.f32 %v2042, %v2611
      %v2649 = vadd.f32 %v2043, %v2613
      %v2650 = vadd.f32 %v2044, %v2616
      %v2651 = vadd.f32 %v2045, %v2618
      %v2668 = vrot.slane %v543, 5
      %v2669 = vrot.slane %v2668, 4
      %v2670 = vrot.slane %v544, 5
      %v2671 = vsel %vm1457, %v2669, %v2670
      %v2672 = vrot.slane %v2670, 4
      %v2673 = vrot.slane %v545, 5
      %v2674 = vsel %vm1457, %v2672, %v2673
      %v2675 = vrot.slane %v546, 5
      %v2676 = vrot.slane %v2675, 4
      %v2677 = vrot.slane %v547, 5
      %v2678 = vsel %vm1457, %v2676, %v2677
      %v2679 = vrot.slane %v2677, 4
      %v2680 = vrot.slane %v548, 5
      %v2681 = vsel %vm1457, %v2679, %v2680
      %v2682 = vrot.slane %v549, 5
      %v2683 = vrot.slane %v2682, 4
      %v2684 = vrot.slane %v550, 5
      %v2685 = vsel %vm1457, %v2683, %v2684
      %v2686 = vrot.slane %v2684, 4
      %v2687 = vrot.slane %v551, 5
      %v2688 = vsel %vm1457, %v2686, %v2687
      %v2689 = vrot.slane %v552, 5
      %v2690 = vrot.slane %v2689, 4
      %v2691 = vrot.slane %v553, 5
      %v2692 = vsel %vm1457, %v2690, %v2691
      %v2693 = vrot.slane %v2691, 4
      %v2694 = vrot.slane %v554, 5
      %v2695 = vsel %vm1457, %v2693, %v2694
      %v2696 = vrot.slane %v555, 5
      %v2697 = vrot.slane %v2696, 4
      %v2698 = vrot.slane %v556, 5
      %v2699 = vsel %vm1457, %v2697, %v2698
      %v2700 = vrot.slane %v2698, 4
      %v2701 = vrot.slane %v557, 5
      %v2702 = vsel %vm1457, %v2700, %v2701
      %v2703 = vrot.slane %v558, 5
      %v2704 = vrot.slane %v2703, 4
      %v2705 = vrot.slane %v559, 5
      %v2706 = vsel %vm1457, %v2704, %v2705
      %v2707 = vrot.slane %v2705, 4
      %v2708 = vrot.slane %v560, 5
      %v2709 = vsel %vm1457, %v2707, %v2708
      %v2710 = vrot.slane %v561, 5
      %v2711 = vrot.slane %v2710, 4
      %v2712 = vrot.slane %v562, 5
      %v2713 = vsel %vm1457, %v2711, %v2712
      %v2714 = vrot.slane %v2712, 4
      %v2715 = vrot.slane %v563, 5
      %v2716 = vsel %vm1457, %v2714, %v2715
      %v2717 = vrot.slane %v564, 5
      %v2718 = vrot.slane %v2717, 4
      %v2719 = vrot.slane %v565, 5
      %v2720 = vsel %vm1457, %v2718, %v2719
      %v2721 = vrot.slane %v2719, 4
      %v2722 = vrot.slane %v566, 5
      %v2723 = vsel %vm1457, %v2721, %v2722
      %v2724 = vrot.slane %v567, 5
      %v2725 = vrot.slane %v2724, 4
      %v2726 = vrot.slane %v568, 5
      %v2727 = vsel %vm1457, %v2725, %v2726
      %v2728 = vrot.slane %v2726, 4
      %v2729 = vrot.slane %v569, 5
      %v2730 = vsel %vm1457, %v2728, %v2729
      %v2731 = vrot.slane %v570, 5
      %v2732 = vrot.slane %v2731, 4
      %v2733 = vrot.slane %v571, 5
      %v2734 = vsel %vm1457, %v2732, %v2733
      %v2735 = vrot.slane %v2733, 4
      %v2736 = vrot.slane %v572, 5
      %v2737 = vsel %vm1457, %v2735, %v2736
      %v2738 = vrot.slane %v573, 5
      %v2739 = vrot.slane %v2738, 4
      %v2740 = vrot.slane %v574, 5
      %v2741 = vsel %vm1457, %v2739, %v2740
      %v2742 = vrot.slane %v2740, 4
      %v2743 = vrot.slane %v575, 5
      %v2744 = vsel %vm1457, %v2742, %v2743
      %v2745 = vrot.slane %v576, 5
      %v2746 = vrot.slane %v2745, 4
      %v2747 = vrot.slane %v577, 5
      %v2748 = vsel %vm1457, %v2746, %v2747
      %v2749 = vrot.slane %v2747, 4
      %v2750 = vrot.slane %v578, 5
      %v2751 = vsel %vm1457, %v2749, %v2750
      %v2752 = vrot.slane %v579, 5
      %v2753 = vrot.slane %v2752, 4
      %v2754 = vrot.slane %v580, 5
      %v2755 = vsel %vm1457, %v2753, %v2754
      %v2756 = vrot.slane %v2754, 4
      %v2757 = vrot.slane %v581, 5
      %v2758 = vsel %vm1457, %v2756, %v2757
      %v2759 = vrot.slane %v582, 5
      %v2760 = vrot.slane %v2759, 4
      %v2761 = vrot.slane %v583, 5
      %v2762 = vsel %vm1457, %v2760, %v2761
      %v2763 = vrot.slane %v2761, 4
      %v2764 = vrot.slane %v584, 5
      %v2765 = vsel %vm1457, %v2763, %v2764
      %v2766 = vrot.slane %v585, 5
      %v2767 = vrot.slane %v2766, 4
      %v2768 = vrot.slane %v586, 5
      %v2769 = vsel %vm1457, %v2767, %v2768
      %v2770 = vrot.slane %v2768, 4
      %v2771 = vrot.slane %v587, 5
      %v2772 = vsel %vm1457, %v2770, %v2771
      %v2773 = vrot.slane %v588, 5
      %v2774 = vrot.slane %v2773, 4
      %v2775 = vrot.slane %v589, 5
      %v2776 = vsel %vm1457, %v2774, %v2775
      %v2777 = vrot.slane %v2775, 4
      %v2778 = vrot.slane %v590, 5
      %v2779 = vsel %vm1457, %v2777, %v2778
      %s2780 = scalar_lea.vmem %s458, 10
      %v2781 = vld [vmem:[%s2780] sm:$0x3]
      %v2782 = vunpack.c.l.b16 %v2671
      %v2783 = vunpack.c.l.b16 %v2674
      %v2784 = vunpack.c.l.b16 %v2678
      %v2785 = vunpack.c.l.b16 %v2681
      %v2786 = vunpack.c.l.b16 %v2685
      %v2787 = vunpack.c.l.b16 %v2688
      %v2788 = vunpack.c.l.b16 %v2692
      %v2789 = vunpack.c.l.b16 %v2695
      %v2790 = vunpack.c.l.b16 %v2699
      %v2791 = vunpack.c.l.b16 %v2702
      %v2792 = vunpack.c.l.b16 %v2706
      %v2793 = vunpack.c.l.b16 %v2709
      %v2794 = vunpack.c.l.b16 %v2713
      %v2795 = vunpack.c.l.b16 %v2716
      %v2796 = vunpack.c.l.b16 %v2720
      %v2797 = vunpack.c.l.b16 %v2723
      %v2798 = vunpack.c.l.b16 %v2727
      %v2799 = vunpack.c.l.b16 %v2730
      %v2800 = vunpack.c.l.b16 %v2734
      %v2801 = vunpack.c.l.b16 %v2737
      %v2802 = vunpack.c.l.b16 %v2741
      %v2803 = vunpack.c.l.b16 %v2744
      %v2804 = vunpack.c.l.b16 %v2748
      %v2805 = vunpack.c.l.b16 %v2751
      %v2806 = vunpack.c.l.b16 %v2755
      %v2807 = vunpack.c.l.b16 %v2758
      %v2808 = vunpack.c.l.b16 %v2762
      %v2809 = vunpack.c.l.b16 %v2765
      %v2810 = vunpack.c.l.b16 %v2769
      %v2811 = vunpack.c.l.b16 %v2772
      %v2812 = vunpack.c.l.b16 %v2776
      %v2813 = vunpack.c.l.b16 %v2779
      %v2814 = vpack.c.b16 %v2783, %v2782
      %v2815 = vpack.c.b16 %v2785, %v2784
      %v2816 = vpack.c.b16 %v2787, %v2786
      %v2817 = vpack.c.b16 %v2789, %v2788
      %v2818 = vpack.c.b16 %v2791, %v2790
      %v2819 = vpack.c.b16 %v2793, %v2792
      %v2820 = vpack.c.b16 %v2795, %v2794
      %v2821 = vpack.c.b16 %v2797, %v2796
      %v2822 = vpack.c.b16 %v2799, %v2798
      %v2823 = vpack.c.b16 %v2801, %v2800
      %v2824 = vpack.c.b16 %v2803, %v2802
      %v2825 = vpack.c.b16 %v2805, %v2804
      %v2826 = vpack.c.b16 %v2807, %v2806
      %v2827 = vpack.c.b16 %v2809, %v2808
      %v2828 = vpack.c.b16 %v2811, %v2810
      %v2829 = vpack.c.b16 %v2813, %v2812
      %v2831 = vsel %vm1077, %v2814, 0
      %v2834 = vsel %vm1077, %v2815, 0
      %v2837 = vsel %vm1077, %v2816, 0
      %v2840 = vsel %vm1077, %v2817, 0
      %v2843 = vsel %vm1077, %v2818, 0
      %v2846 = vsel %vm1077, %v2819, 0
      %v2849 = vsel %vm1077, %v2820, 0
      %v2852 = vsel %vm1077, %v2821, 0
      %v2855 = vsel %vm1077, %v2822, 0
      %v2858 = vsel %vm1077, %v2823, 0
      %v2861 = vsel %vm1077, %v2824, 0
      %v2864 = vsel %vm1077, %v2825, 0
      %v2867 = vsel %vm1077, %v2826, 0
      %v2870 = vsel %vm1077, %v2827, 0
      %v2873 = vsel %vm1077, %v2828, 0
      %v2876 = vsel %vm1077, %v2829, 0
      %v2879 = vsel %vm1126, %v2781, 0
      %2881 = vmatpush.bf16.msra.mxu0 0
      %2882 = vmatpush.bf16.msra.mxu0 0
      %2883 = vmatpush.bf16.msra.mxu0 0
      %2884 = vmatpush.bf16.msra.mxu0 0
      %2885 = vmatpush.bf16.msra.mxu0 0
      %2886 = vmatpush.bf16.msra.mxu0 0
      %2887 = vmatpush.bf16.msra.mxu0 0
      %2888 = vmatpush.bf16.msra.mxu0 %v2879
      %2889 = vmatmul.bf16.gmra.mxu0 %v2831
      %v2890 = vpop.f32.mrf.mxu0
      %v2891 = vadd.f32 0.0, %v2890
      %v2892 = vpop.f32.mrf.mxu0
      %v2893 = vadd.f32 0.0, %v2892
      %2894 = vmatmul.bf16.gmra.mxu0 %v2834
      %v2895 = vpop.f32.mrf.mxu0
      %v2896 = vadd.f32 0.0, %v2895
      %v2897 = vpop.f32.mrf.mxu0
      %v2898 = vadd.f32 0.0, %v2897
      %2899 = vmatmul.bf16.gmra.mxu0 %v2837
      %v2900 = vpop.f32.mrf.mxu0
      %v2901 = vadd.f32 0.0, %v2900
      %v2902 = vpop.f32.mrf.mxu0
      %v2903 = vadd.f32 0.0, %v2902
      %2904 = vmatmul.bf16.gmra.mxu0 %v2840
      %v2905 = vpop.f32.mrf.mxu0
      %v2906 = vadd.f32 0.0, %v2905
      %v2907 = vpop.f32.mrf.mxu0
      %v2908 = vadd.f32 0.0, %v2907
      %2909 = vmatmul.bf16.gmra.mxu0 %v2843
      %v2910 = vpop.f32.mrf.mxu0
      %v2911 = vadd.f32 0.0, %v2910
      %v2912 = vpop.f32.mrf.mxu0
      %v2913 = vadd.f32 0.0, %v2912
      %2914 = vmatmul.bf16.gmra.mxu0 %v2846
      %v2915 = vpop.f32.mrf.mxu0
      %v2916 = vadd.f32 0.0, %v2915
      %v2917 = vpop.f32.mrf.mxu0
      %v2918 = vadd.f32 0.0, %v2917
      %2919 = vmatmul.bf16.gmra.mxu0 %v2849
      %v2920 = vpop.f32.mrf.mxu0
      %v2921 = vadd.f32 0.0, %v2920
      %v2922 = vpop.f32.mrf.mxu0
      %v2923 = vadd.f32 0.0, %v2922
      %2924 = vmatmul.bf16.gmra.mxu0 %v2852
      %v2925 = vpop.f32.mrf.mxu0
      %v2926 = vadd.f32 0.0, %v2925
      %v2927 = vpop.f32.mrf.mxu0
      %v2928 = vadd.f32 0.0, %v2927
      %2929 = vmatmul.bf16.gmra.mxu0 %v2855
      %v2930 = vpop.f32.mrf.mxu0
      %v2931 = vadd.f32 0.0, %v2930
      %v2932 = vpop.f32.mrf.mxu0
      %v2933 = vadd.f32 0.0, %v2932
      %2934 = vmatmul.bf16.gmra.mxu0 %v2858
      %v2935 = vpop.f32.mrf.mxu0
      %v2936 = vadd.f32 0.0, %v2935
      %v2937 = vpop.f32.mrf.mxu0
      %v2938 = vadd.f32 0.0, %v2937
      %2939 = vmatmul.bf16.gmra.mxu0 %v2861
      %v2940 = vpop.f32.mrf.mxu0
      %v2941 = vadd.f32 0.0, %v2940
      %v2942 = vpop.f32.mrf.mxu0
      %v2943 = vadd.f32 0.0, %v2942
      %2944 = vmatmul.bf16.gmra.mxu0 %v2864
      %v2945 = vpop.f32.mrf.mxu0
      %v2946 = vadd.f32 0.0, %v2945
      %v2947 = vpop.f32.mrf.mxu0
      %v2948 = vadd.f32 0.0, %v2947
      %2949 = vmatmul.bf16.gmra.mxu0 %v2867
      %v2950 = vpop.f32.mrf.mxu0
      %v2951 = vadd.f32 0.0, %v2950
      %v2952 = vpop.f32.mrf.mxu0
      %v2953 = vadd.f32 0.0, %v2952
      %2954 = vmatmul.bf16.gmra.mxu0 %v2870
      %v2955 = vpop.f32.mrf.mxu0
      %v2956 = vadd.f32 0.0, %v2955
      %v2957 = vpop.f32.mrf.mxu0
      %v2958 = vadd.f32 0.0, %v2957
      %2959 = vmatmul.bf16.gmra.mxu0 %v2873
      %v2960 = vpop.f32.mrf.mxu0
      %v2961 = vadd.f32 0.0, %v2960
      %v2962 = vpop.f32.mrf.mxu0
      %v2963 = vadd.f32 0.0, %v2962
      %2964 = vmatmul.bf16.gmra.mxu0 %v2876
      %v2965 = vpop.f32.mrf.mxu0
      %v2966 = vadd.f32 0.0, %v2965
      %v2967 = vpop.f32.mrf.mxu0
      %v2968 = vadd.f32 0.0, %v2967
      %2969 = vdwg.mxu0
      %v2970 = vadd.f32 %v2620, %v2891
      %v2971 = vadd.f32 %v2621, %v2893
      %v2972 = vadd.f32 %v2622, %v2896
      %v2973 = vadd.f32 %v2623, %v2898
      %v2974 = vadd.f32 %v2624, %v2901
      %v2975 = vadd.f32 %v2625, %v2903
      %v2976 = vadd.f32 %v2626, %v2906
      %v2977 = vadd.f32 %v2627, %v2908
      %v2978 = vadd.f32 %v2628, %v2911
      %v2979 = vadd.f32 %v2629, %v2913
      %v2980 = vadd.f32 %v2630, %v2916
      %v2981 = vadd.f32 %v2631, %v2918
      %v2982 = vadd.f32 %v2632, %v2921
      %v2983 = vadd.f32 %v2633, %v2923
      %v2984 = vadd.f32 %v2634, %v2926
      %v2985 = vadd.f32 %v2635, %v2928
      %v2986 = vadd.f32 %v2636, %v2931
      %v2987 = vadd.f32 %v2637, %v2933
      %v2988 = vadd.f32 %v2638, %v2936
      %v2989 = vadd.f32 %v2639, %v2938
      %v2990 = vadd.f32 %v2640, %v2941
      %v2991 = vadd.f32 %v2641, %v2943
      %v2992 = vadd.f32 %v2642, %v2946
      %v2993 = vadd.f32 %v2643, %v2948
      %v2994 = vadd.f32 %v2644, %v2951
      %v2995 = vadd.f32 %v2645, %v2953
      %v2996 = vadd.f32 %v2646, %v2956
      %v2997 = vadd.f32 %v2647, %v2958
      %v2998 = vadd.f32 %v2648, %v2961
      %v2999 = vadd.f32 %v2649, %v2963
      %v3000 = vadd.f32 %v2650, %v2966
      %v3001 = vadd.f32 %v2651, %v2968
      %s3002 = scalar_lea.vmem %s458, 12
      %v3003 = vld [vmem:[%s3002] sm:$0x3]
      %v3036 = vunpack.c.l.b16 %v591
      %v3037 = vunpack.c.l.b16 %v592
      %v3038 = vunpack.c.l.b16 %v594
      %v3039 = vunpack.c.l.b16 %v595
      %v3040 = vunpack.c.l.b16 %v597
      %v3041 = vunpack.c.l.b16 %v598
      %v3042 = vunpack.c.l.b16 %v600
      %v3043 = vunpack.c.l.b16 %v601
      %v3044 = vunpack.c.l.b16 %v603
      %v3045 = vunpack.c.l.b16 %v604
      %v3046 = vunpack.c.l.b16 %v606
      %v3047 = vunpack.c.l.b16 %v607
      %v3048 = vunpack.c.l.b16 %v609
      %v3049 = vunpack.c.l.b16 %v610
      %v3050 = vunpack.c.l.b16 %v612
      %v3051 = vunpack.c.l.b16 %v613
      %v3052 = vunpack.c.l.b16 %v615
      %v3053 = vunpack.c.l.b16 %v616
      %v3054 = vunpack.c.l.b16 %v618
      %v3055 = vunpack.c.l.b16 %v619
      %v3056 = vunpack.c.l.b16 %v621
      %v3057 = vunpack.c.l.b16 %v622
      %v3058 = vunpack.c.l.b16 %v624
      %v3059 = vunpack.c.l.b16 %v625
      %v3060 = vunpack.c.l.b16 %v627
      %v3061 = vunpack.c.l.b16 %v628
      %v3062 = vunpack.c.l.b16 %v630
      %v3063 = vunpack.c.l.b16 %v631
      %v3064 = vunpack.c.l.b16 %v633
      %v3065 = vunpack.c.l.b16 %v634
      %v3066 = vunpack.c.l.b16 %v636
      %v3067 = vunpack.c.l.b16 %v637
      %v3068 = vpack.c.b16 %v3037, %v3036
      %v3069 = vpack.c.b16 %v3039, %v3038
      %v3070 = vpack.c.b16 %v3041, %v3040
      %v3071 = vpack.c.b16 %v3043, %v3042
      %v3072 = vpack.c.b16 %v3045, %v3044
      %v3073 = vpack.c.b16 %v3047, %v3046
      %v3074 = vpack.c.b16 %v3049, %v3048
      %v3075 = vpack.c.b16 %v3051, %v3050
      %v3076 = vpack.c.b16 %v3053, %v3052
      %v3077 = vpack.c.b16 %v3055, %v3054
      %v3078 = vpack.c.b16 %v3057, %v3056
      %v3079 = vpack.c.b16 %v3059, %v3058
      %v3080 = vpack.c.b16 %v3061, %v3060
      %v3081 = vpack.c.b16 %v3063, %v3062
      %v3082 = vpack.c.b16 %v3065, %v3064
      %v3083 = vpack.c.b16 %v3067, %v3066
      %v3085 = vsel %vm1077, %v3068, 0
      %v3088 = vsel %vm1077, %v3069, 0
      %v3091 = vsel %vm1077, %v3070, 0
      %v3094 = vsel %vm1077, %v3071, 0
      %v3097 = vsel %vm1077, %v3072, 0
      %v3100 = vsel %vm1077, %v3073, 0
      %v3103 = vsel %vm1077, %v3074, 0
      %v3106 = vsel %vm1077, %v3075, 0
      %v3109 = vsel %vm1077, %v3076, 0
      %v3112 = vsel %vm1077, %v3077, 0
      %v3115 = vsel %vm1077, %v3078, 0
      %v3118 = vsel %vm1077, %v3079, 0
      %v3121 = vsel %vm1077, %v3080, 0
      %v3124 = vsel %vm1077, %v3081, 0
      %v3127 = vsel %vm1077, %v3082, 0
      %v3130 = vsel %vm1077, %v3083, 0
      %v3133 = vsel %vm1126, %v3003, 0
      %3135 = vmatpush.bf16.msra.mxu0 0
      %3136 = vmatpush.bf16.msra.mxu0 0
      %3137 = vmatpush.bf16.msra.mxu0 0
      %3138 = vmatpush.bf16.msra.mxu0 0
      %3139 = vmatpush.bf16.msra.mxu0 0
      %3140 = vmatpush.bf16.msra.mxu0 0
      %3141 = vmatpush.bf16.msra.mxu0 0
      %3142 = vmatpush.bf16.msra.mxu0 %v3133
      %3143 = vmatmul.bf16.gmra.mxu0 %v3085
      %v3144 = vpop.f32.mrf.mxu0
      %v3145 = vadd.f32 0.0, %v3144
      %v3146 = vpop.f32.mrf.mxu0
      %v3147 = vadd.f32 0.0, %v3146
      %3148 = vmatmul.bf16.gmra.mxu0 %v3088
      %v3149 = vpop.f32.mrf.mxu0
      %v3150 = vadd.f32 0.0, %v3149
      %v3151 = vpop.f32.mrf.mxu0
      %v3152 = vadd.f32 0.0, %v3151
      %3153 = vmatmul.bf16.gmra.mxu0 %v3091
      %v3154 = vpop.f32.mrf.mxu0
      %v3155 = vadd.f32 0.0, %v3154
      %v3156 = vpop.f32.mrf.mxu0
      %v3157 = vadd.f32 0.0, %v3156
      %3158 = vmatmul.bf16.gmra.mxu0 %v3094
      %v3159 = vpop.f32.mrf.mxu0
      %v3160 = vadd.f32 0.0, %v3159
      %v3161 = vpop.f32.mrf.mxu0
      %v3162 = vadd.f32 0.0, %v3161
      %3163 = vmatmul.bf16.gmra.mxu0 %v3097
      %v3164 = vpop.f32.mrf.mxu0
      %v3165 = vadd.f32 0.0, %v3164
      %v3166 = vpop.f32.mrf.mxu0
      %v3167 = vadd.f32 0.0, %v3166
      %3168 = vmatmul.bf16.gmra.mxu0 %v3100
      %v3169 = vpop.f32.mrf.mxu0
      %v3170 = vadd.f32 0.0, %v3169
      %v3171 = vpop.f32.mrf.mxu0
      %v3172 = vadd.f32 0.0, %v3171
      %3173 = vmatmul.bf16.gmra.mxu0 %v3103
      %v3174 = vpop.f32.mrf.mxu0
      %v3175 = vadd.f32 0.0, %v3174
      %v3176 = vpop.f32.mrf.mxu0
      %v3177 = vadd.f32 0.0, %v3176
      %3178 = vmatmul.bf16.gmra.mxu0 %v3106
      %v3179 = vpop.f32.mrf.mxu0
      %v3180 = vadd.f32 0.0, %v3179
      %v3181 = vpop.f32.mrf.mxu0
      %v3182 = vadd.f32 0.0, %v3181
      %3183 = vmatmul.bf16.gmra.mxu0 %v3109
      %v3184 = vpop.f32.mrf.mxu0
      %v3185 = vadd.f32 0.0, %v3184
      %v3186 = vpop.f32.mrf.mxu0
      %v3187 = vadd.f32 0.0, %v3186
      %3188 = vmatmul.bf16.gmra.mxu0 %v3112
      %v3189 = vpop.f32.mrf.mxu0
      %v3190 = vadd.f32 0.0, %v3189
      %v3191 = vpop.f32.mrf.mxu0
      %v3192 = vadd.f32 0.0, %v3191
      %3193 = vmatmul.bf16.gmra.mxu0 %v3115
      %v3194 = vpop.f32.mrf.mxu0
      %v3195 = vadd.f32 0.0, %v3194
      %v3196 = vpop.f32.mrf.mxu0
      %v3197 = vadd.f32 0.0, %v3196
      %3198 = vmatmul.bf16.gmra.mxu0 %v3118
      %v3199 = vpop.f32.mrf.mxu0
      %v3200 = vadd.f32 0.0, %v3199
      %v3201 = vpop.f32.mrf.mxu0
      %v3202 = vadd.f32 0.0, %v3201
      %3203 = vmatmul.bf16.gmra.mxu0 %v3121
      %v3204 = vpop.f32.mrf.mxu0
      %v3205 = vadd.f32 0.0, %v3204
      %v3206 = vpop.f32.mrf.mxu0
      %v3207 = vadd.f32 0.0, %v3206
      %3208 = vmatmul.bf16.gmra.mxu0 %v3124
      %v3209 = vpop.f32.mrf.mxu0
      %v3210 = vadd.f32 0.0, %v3209
      %v3211 = vpop.f32.mrf.mxu0
      %v3212 = vadd.f32 0.0, %v3211
      %3213 = vmatmul.bf16.gmra.mxu0 %v3127
      %v3214 = vpop.f32.mrf.mxu0
      %v3215 = vadd.f32 0.0, %v3214
      %v3216 = vpop.f32.mrf.mxu0
      %v3217 = vadd.f32 0.0, %v3216
      %3218 = vmatmul.bf16.gmra.mxu0 %v3130
      %v3219 = vpop.f32.mrf.mxu0
      %v3220 = vadd.f32 0.0, %v3219
      %v3221 = vpop.f32.mrf.mxu0
      %v3222 = vadd.f32 0.0, %v3221
      %3223 = vdwg.mxu0
      %v3224 = vadd.f32 %v2970, %v3145
      %v3225 = vadd.f32 %v2971, %v3147
      %v3226 = vadd.f32 %v2972, %v3150
      %v3227 = vadd.f32 %v2973, %v3152
      %v3228 = vadd.f32 %v2974, %v3155
      %v3229 = vadd.f32 %v2975, %v3157
      %v3230 = vadd.f32 %v2976, %v3160
      %v3231 = vadd.f32 %v2977, %v3162
      %v3232 = vadd.f32 %v2978, %v3165
      %v3233 = vadd.f32 %v2979, %v3167
      %v3234 = vadd.f32 %v2980, %v3170
      %v3235 = vadd.f32 %v2981, %v3172
      %v3236 = vadd.f32 %v2982, %v3175
      %v3237 = vadd.f32 %v2983, %v3177
      %v3238 = vadd.f32 %v2984, %v3180
      %v3239 = vadd.f32 %v2985, %v3182
      %v3240 = vadd.f32 %v2986, %v3185
      %v3241 = vadd.f32 %v2987, %v3187
      %v3242 = vadd.f32 %v2988, %v3190
      %v3243 = vadd.f32 %v2989, %v3192
      %v3244 = vadd.f32 %v2990, %v3195
      %v3245 = vadd.f32 %v2991, %v3197
      %v3246 = vadd.f32 %v2992, %v3200
      %v3247 = vadd.f32 %v2993, %v3202
      %v3248 = vadd.f32 %v2994, %v3205
      %v3249 = vadd.f32 %v2995, %v3207
      %v3250 = vadd.f32 %v2996, %v3210
      %v3251 = vadd.f32 %v2997, %v3212
      %v3252 = vadd.f32 %v2998, %v3215
      %v3253 = vadd.f32 %v2999, %v3217
      %v3254 = vadd.f32 %v3000, %v3220
      %v3255 = vadd.f32 %v3001, %v3222
      %v3257 = vshrl.u32 %v591, 16
      %v3259 = vrot.slane %v3257, 4
      %v3260 = vshll.u32 %v591, 16
      %v3262 = vrot.slane %v3260, 5
      %v3263 = vor.u32 %v3259, %v3262
      %v3264 = vrot.slane %v3263, 4
      %v3266 = vshll.u32 %v592, 16
      %v3268 = vrot.slane %v3266, 5
      %v3269 = vsel %vm642, %v3264, %v3268
      %v3270 = vshrl.u32 %v592, 16
      %v3272 = vrot.slane %v3270, 4
      %v3273 = vor.u32 %v3272, %v3268
      %v3274 = vrot.slane %v3273, 4
      %v3276 = vshll.u32 %v593, 16
      %v3278 = vrot.slane %v3276, 5
      %v3279 = vsel %vm642, %v3274, %v3278
      %v3281 = vshrl.u32 %v594, 16
      %v3283 = vrot.slane %v3281, 4
      %v3284 = vshll.u32 %v594, 16
      %v3286 = vrot.slane %v3284, 5
      %v3287 = vor.u32 %v3283, %v3286
      %v3288 = vrot.slane %v3287, 4
      %v3290 = vshll.u32 %v595, 16
      %v3292 = vrot.slane %v3290, 5
      %v3293 = vsel %vm642, %v3288, %v3292
      %v3294 = vshrl.u32 %v595, 16
      %v3296 = vrot.slane %v3294, 4
      %v3297 = vor.u32 %v3296, %v3292
      %v3298 = vrot.slane %v3297, 4
      %v3300 = vshll.u32 %v596, 16
      %v3302 = vrot.slane %v3300, 5
      %v3303 = vsel %vm642, %v3298, %v3302
      %v3305 = vshrl.u32 %v597, 16
      %v3307 = vrot.slane %v3305, 4
      %v3308 = vshll.u32 %v597, 16
      %v3310 = vrot.slane %v3308, 5
      %v3311 = vor.u32 %v3307, %v3310
      %v3312 = vrot.slane %v3311, 4
      %v3314 = vshll.u32 %v598, 16
      %v3316 = vrot.slane %v3314, 5
      %v3317 = vsel %vm642, %v3312, %v3316
      %v3318 = vshrl.u32 %v598, 16
      %v3320 = vrot.slane %v3318, 4
      %v3321 = vor.u32 %v3320, %v3316
      %v3322 = vrot.slane %v3321, 4
      %v3324 = vshll.u32 %v599, 16
      %v3326 = vrot.slane %v3324, 5
      %v3327 = vsel %vm642, %v3322, %v3326
      %v3329 = vshrl.u32 %v600, 16
      %v3331 = vrot.slane %v3329, 4
      %v3332 = vshll.u32 %v600, 16
      %v3334 = vrot.slane %v3332, 5
      %v3335 = vor.u32 %v3331, %v3334
      %v3336 = vrot.slane %v3335, 4
      %v3338 = vshll.u32 %v601, 16
      %v3340 = vrot.slane %v3338, 5
      %v3341 = vsel %vm642, %v3336, %v3340
      %v3342 = vshrl.u32 %v601, 16
      %v3344 = vrot.slane %v3342, 4
      %v3345 = vor.u32 %v3344, %v3340
      %v3346 = vrot.slane %v3345, 4
      %v3348 = vshll.u32 %v602, 16
      %v3350 = vrot.slane %v3348, 5
      %v3351 = vsel %vm642, %v3346, %v3350
      %v3353 = vshrl.u32 %v603, 16
      %v3355 = vrot.slane %v3353, 4
      %v3356 = vshll.u32 %v603, 16
      %v3358 = vrot.slane %v3356, 5
      %v3359 = vor.u32 %v3355, %v3358
      %v3360 = vrot.slane %v3359, 4
      %v3362 = vshll.u32 %v604, 16
      %v3364 = vrot.slane %v3362, 5
      %v3365 = vsel %vm642, %v3360, %v3364
      %v3366 = vshrl.u32 %v604, 16
      %v3368 = vrot.slane %v3366, 4
      %v3369 = vor.u32 %v3368, %v3364
      %v3370 = vrot.slane %v3369, 4
      %v3372 = vshll.u32 %v605, 16
      %v3374 = vrot.slane %v3372, 5
      %v3375 = vsel %vm642, %v3370, %v3374
      %v3377 = vshrl.u32 %v606, 16
      %v3379 = vrot.slane %v3377, 4
      %v3380 = vshll.u32 %v606, 16
      %v3382 = vrot.slane %v3380, 5
      %v3383 = vor.u32 %v3379, %v3382
      %v3384 = vrot.slane %v3383, 4
      %v3386 = vshll.u32 %v607, 16
      %v3388 = vrot.slane %v3386, 5
      %v3389 = vsel %vm642, %v3384, %v3388
      %v3390 = vshrl.u32 %v607, 16
      %v3392 = vrot.slane %v3390, 4
      %v3393 = vor.u32 %v3392, %v3388
      %v3394 = vrot.slane %v3393, 4
      %v3396 = vshll.u32 %v608, 16
      %v3398 = vrot.slane %v3396, 5
      %v3399 = vsel %vm642, %v3394, %v3398
      %v3401 = vshrl.u32 %v609, 16
      %v3403 = vrot.slane %v3401, 4
      %v3404 = vshll.u32 %v609, 16
      %v3406 = vrot.slane %v3404, 5
      %v3407 = vor.u32 %v3403, %v3406
      %v3408 = vrot.slane %v3407, 4
      %v3410 = vshll.u32 %v610, 16
      %v3412 = vrot.slane %v3410, 5
      %v3413 = vsel %vm642, %v3408, %v3412
      %v3414 = vshrl.u32 %v610, 16
      %v3416 = vrot.slane %v3414, 4
      %v3417 = vor.u32 %v3416, %v3412
      %v3418 = vrot.slane %v3417, 4
      %v3420 = vshll.u32 %v611, 16
      %v3422 = vrot.slane %v3420, 5
      %v3423 = vsel %vm642, %v3418, %v3422
      %v3425 = vshrl.u32 %v612, 16
      %v3427 = vrot.slane %v3425, 4
      %v3428 = vshll.u32 %v612, 16
      %v3430 = vrot.slane %v3428, 5
      %v3431 = vor.u32 %v3427, %v3430
      %v3432 = vrot.slane %v3431, 4
      %v3434 = vshll.u32 %v613, 16
      %v3436 = vrot.slane %v3434, 5
      %v3437 = vsel %vm642, %v3432, %v3436
      %v3438 = vshrl.u32 %v613, 16
      %v3440 = vrot.slane %v3438, 4
      %v3441 = vor.u32 %v3440, %v3436
      %v3442 = vrot.slane %v3441, 4
      %v3444 = vshll.u32 %v614, 16
      %v3446 = vrot.slane %v3444, 5
      %v3447 = vsel %vm642, %v3442, %v3446
      %v3449 = vshrl.u32 %v615, 16
      %v3451 = vrot.slane %v3449, 4
      %v3452 = vshll.u32 %v615, 16
      %v3454 = vrot.slane %v3452, 5
      %v3455 = vor.u32 %v3451, %v3454
      %v3456 = vrot.slane %v3455, 4
      %v3458 = vshll.u32 %v616, 16
      %v3460 = vrot.slane %v3458, 5
      %v3461 = vsel %vm642, %v3456, %v3460
      %v3462 = vshrl.u32 %v616, 16
      %v3464 = vrot.slane %v3462, 4
      %v3465 = vor.u32 %v3464, %v3460
      %v3466 = vrot.slane %v3465, 4
      %v3468 = vshll.u32 %v617, 16
      %v3470 = vrot.slane %v3468, 5
      %v3471 = vsel %vm642, %v3466, %v3470
      %v3473 = vshrl.u32 %v618, 16
      %v3475 = vrot.slane %v3473, 4
      %v3476 = vshll.u32 %v618, 16
      %v3478 = vrot.slane %v3476, 5
      %v3479 = vor.u32 %v3475, %v3478
      %v3480 = vrot.slane %v3479, 4
      %v3482 = vshll.u32 %v619, 16
      %v3484 = vrot.slane %v3482, 5
      %v3485 = vsel %vm642, %v3480, %v3484
      %v3486 = vshrl.u32 %v619, 16
      %v3488 = vrot.slane %v3486, 4
      %v3489 = vor.u32 %v3488, %v3484
      %v3490 = vrot.slane %v3489, 4
      %v3492 = vshll.u32 %v620, 16
      %v3494 = vrot.slane %v3492, 5
      %v3495 = vsel %vm642, %v3490, %v3494
      %v3497 = vshrl.u32 %v621, 16
      %v3499 = vrot.slane %v3497, 4
      %v3500 = vshll.u32 %v621, 16
      %v3502 = vrot.slane %v3500, 5
      %v3503 = vor.u32 %v3499, %v3502
      %v3504 = vrot.slane %v3503, 4
      %v3506 = vshll.u32 %v622, 16
      %v3508 = vrot.slane %v3506, 5
      %v3509 = vsel %vm642, %v3504, %v3508
      %v3510 = vshrl.u32 %v622, 16
      %v3512 = vrot.slane %v3510, 4
      %v3513 = vor.u32 %v3512, %v3508
      %v3514 = vrot.slane %v3513, 4
      %v3516 = vshll.u32 %v623, 16
      %v3518 = vrot.slane %v3516, 5
      %v3519 = vsel %vm642, %v3514, %v3518
      %v3521 = vshrl.u32 %v624, 16
      %v3523 = vrot.slane %v3521, 4
      %v3524 = vshll.u32 %v624, 16
      %v3526 = vrot.slane %v3524, 5
      %v3527 = vor.u32 %v3523, %v3526
      %v3528 = vrot.slane %v3527, 4
      %v3530 = vshll.u32 %v625, 16
      %v3532 = vrot.slane %v3530, 5
      %v3533 = vsel %vm642, %v3528, %v3532
      %v3534 = vshrl.u32 %v625, 16
      %v3536 = vrot.slane %v3534, 4
      %v3537 = vor.u32 %v3536, %v3532
      %v3538 = vrot.slane %v3537, 4
      %v3540 = vshll.u32 %v626, 16
      %v3542 = vrot.slane %v3540, 5
      %v3543 = vsel %vm642, %v3538, %v3542
      %v3545 = vshrl.u32 %v627, 16
      %v3547 = vrot.slane %v3545, 4
      %v3548 = vshll.u32 %v627, 16
      %v3550 = vrot.slane %v3548, 5
      %v3551 = vor.u32 %v3547, %v3550
      %v3552 = vrot.slane %v3551, 4
      %v3554 = vshll.u32 %v628, 16
      %v3556 = vrot.slane %v3554, 5
      %v3557 = vsel %vm642, %v3552, %v3556
      %v3558 = vshrl.u32 %v628, 16
      %v3560 = vrot.slane %v3558, 4
      %v3561 = vor.u32 %v3560, %v3556
      %v3562 = vrot.slane %v3561, 4
      %v3564 = vshll.u32 %v629, 16
      %v3566 = vrot.slane %v3564, 5
      %v3567 = vsel %vm642, %v3562, %v3566
      %v3569 = vshrl.u32 %v630, 16
      %v3571 = vrot.slane %v3569, 4
      %v3572 = vshll.u32 %v630, 16
      %v3574 = vrot.slane %v3572, 5
      %v3575 = vor.u32 %v3571, %v3574
      %v3576 = vrot.slane %v3575, 4
      %v3578 = vshll.u32 %v631, 16
      %v3580 = vrot.slane %v3578, 5
      %v3581 = vsel %vm642, %v3576, %v3580
      %v3582 = vshrl.u32 %v631, 16
      %v3584 = vrot.slane %v3582, 4
      %v3585 = vor.u32 %v3584, %v3580
      %v3586 = vrot.slane %v3585, 4
      %v3588 = vshll.u32 %v632, 16
      %v3590 = vrot.slane %v3588, 5
      %v3591 = vsel %vm642, %v3586, %v3590
      %v3593 = vshrl.u32 %v633, 16
      %v3595 = vrot.slane %v3593, 4
      %v3596 = vshll.u32 %v633, 16
      %v3598 = vrot.slane %v3596, 5
      %v3599 = vor.u32 %v3595, %v3598
      %v3600 = vrot.slane %v3599, 4
      %v3602 = vshll.u32 %v634, 16
      %v3604 = vrot.slane %v3602, 5
      %v3605 = vsel %vm642, %v3600, %v3604
      %v3606 = vshrl.u32 %v634, 16
      %v3608 = vrot.slane %v3606, 4
      %v3609 = vor.u32 %v3608, %v3604
      %v3610 = vrot.slane %v3609, 4
      %v3612 = vshll.u32 %v635, 16
      %v3614 = vrot.slane %v3612, 5
      %v3615 = vsel %vm642, %v3610, %v3614
      %v3617 = vshrl.u32 %v636, 16
      %v3619 = vrot.slane %v3617, 4
      %v3620 = vshll.u32 %v636, 16
      %v3622 = vrot.slane %v3620, 5
      %v3623 = vor.u32 %v3619, %v3622
      %v3624 = vrot.slane %v3623, 4
      %v3626 = vshll.u32 %v637, 16
      %v3628 = vrot.slane %v3626, 5
      %v3629 = vsel %vm642, %v3624, %v3628
      %v3630 = vshrl.u32 %v637, 16
      %v3632 = vrot.slane %v3630, 4
      %v3633 = vor.u32 %v3632, %v3628
      %v3634 = vrot.slane %v3633, 4
      %v3636 = vshll.u32 %v638, 16
      %v3638 = vrot.slane %v3636, 5
      %v3639 = vsel %vm642, %v3634, %v3638
      %s3640 = scalar_lea.vmem %s458, 14
      %v3641 = vld [vmem:[%s3640] sm:$0x3]
      %v3642 = vunpack.c.l.b16 %v3269
      %v3643 = vunpack.c.l.b16 %v3279
      %v3644 = vunpack.c.l.b16 %v3293
      %v3645 = vunpack.c.l.b16 %v3303
      %v3646 = vunpack.c.l.b16 %v3317
      %v3647 = vunpack.c.l.b16 %v3327
      %v3648 = vunpack.c.l.b16 %v3341
      %v3649 = vunpack.c.l.b16 %v3351
      %v3650 = vunpack.c.l.b16 %v3365
      %v3651 = vunpack.c.l.b16 %v3375
      %v3652 = vunpack.c.l.b16 %v3389
      %v3653 = vunpack.c.l.b16 %v3399
      %v3654 = vunpack.c.l.b16 %v3413
      %v3655 = vunpack.c.l.b16 %v3423
      %v3656 = vunpack.c.l.b16 %v3437
      %v3657 = vunpack.c.l.b16 %v3447
      %v3658 = vunpack.c.l.b16 %v3461
      %v3659 = vunpack.c.l.b16 %v3471
      %v3660 = vunpack.c.l.b16 %v3485
      %v3661 = vunpack.c.l.b16 %v3495
      %v3662 = vunpack.c.l.b16 %v3509
      %v3663 = vunpack.c.l.b16 %v3519
      %v3664 = vunpack.c.l.b16 %v3533
      %v3665 = vunpack.c.l.b16 %v3543
      %v3666 = vunpack.c.l.b16 %v3557
      %v3667 = vunpack.c.l.b16 %v3567
      %v3668 = vunpack.c.l.b16 %v3581
      %v3669 = vunpack.c.l.b16 %v3591
      %v3670 = vunpack.c.l.b16 %v3605
      %v3671 = vunpack.c.l.b16 %v3615
      %v3672 = vunpack.c.l.b16 %v3629
      %v3673 = vunpack.c.l.b16 %v3639
      %v3674 = vpack.c.b16 %v3643, %v3642
      %v3675 = vpack.c.b16 %v3645, %v3644
      %v3676 = vpack.c.b16 %v3647, %v3646
      %v3677 = vpack.c.b16 %v3649, %v3648
      %v3678 = vpack.c.b16 %v3651, %v3650
      %v3679 = vpack.c.b16 %v3653, %v3652
      %v3680 = vpack.c.b16 %v3655, %v3654
      %v3681 = vpack.c.b16 %v3657, %v3656
      %v3682 = vpack.c.b16 %v3659, %v3658
      %v3683 = vpack.c.b16 %v3661, %v3660
      %v3684 = vpack.c.b16 %v3663, %v3662
      %v3685 = vpack.c.b16 %v3665, %v3664
      %v3686 = vpack.c.b16 %v3667, %v3666
      %v3687 = vpack.c.b16 %v3669, %v3668
      %v3688 = vpack.c.b16 %v3671, %v3670
      %v3689 = vpack.c.b16 %v3673, %v3672
      %v3691 = vsel %vm1077, %v3674, 0
      %v3694 = vsel %vm1077, %v3675, 0
      %v3697 = vsel %vm1077, %v3676, 0
      %v3700 = vsel %vm1077, %v3677, 0
      %v3703 = vsel %vm1077, %v3678, 0
      %v3706 = vsel %vm1077, %v3679, 0
      %v3709 = vsel %vm1077, %v3680, 0
      %v3712 = vsel %vm1077, %v3681, 0
      %v3715 = vsel %vm1077, %v3682, 0
      %v3718 = vsel %vm1077, %v3683, 0
      %v3721 = vsel %vm1077, %v3684, 0
      %v3724 = vsel %vm1077, %v3685, 0
      %v3727 = vsel %vm1077, %v3686, 0
      %v3730 = vsel %vm1077, %v3687, 0
      %v3733 = vsel %vm1077, %v3688, 0
      %v3736 = vsel %vm1077, %v3689, 0
      %v3739 = vsel %vm1126, %v3641, 0
      %3741 = vmatpush.bf16.msra.mxu0 0
      %3742 = vmatpush.bf16.msra.mxu0 0
      %3743 = vmatpush.bf16.msra.mxu0 0
      %3744 = vmatpush.bf16.msra.mxu0 0
      %3745 = vmatpush.bf16.msra.mxu0 0
      %3746 = vmatpush.bf16.msra.mxu0 0
      %3747 = vmatpush.bf16.msra.mxu0 0
      %3748 = vmatpush.bf16.msra.mxu0 %v3739
      %3749 = vmatmul.bf16.gmra.mxu0 %v3691
      %v3750 = vpop.f32.mrf.mxu0
      %v3751 = vadd.f32 0.0, %v3750
      %v3752 = vpop.f32.mrf.mxu0
      %v3753 = vadd.f32 0.0, %v3752
      %3754 = vmatmul.bf16.gmra.mxu0 %v3694
      %v3755 = vpop.f32.mrf.mxu0
      %v3756 = vadd.f32 0.0, %v3755
      %v3757 = vpop.f32.mrf.mxu0
      %v3758 = vadd.f32 0.0, %v3757
      %3759 = vmatmul.bf16.gmra.mxu0 %v3697
      %v3760 = vpop.f32.mrf.mxu0
      %v3761 = vadd.f32 0.0, %v3760
      %v3762 = vpop.f32.mrf.mxu0
      %v3763 = vadd.f32 0.0, %v3762
      %3764 = vmatmul.bf16.gmra.mxu0 %v3700
      %v3765 = vpop.f32.mrf.mxu0
      %v3766 = vadd.f32 0.0, %v3765
      %v3767 = vpop.f32.mrf.mxu0
      %v3768 = vadd.f32 0.0, %v3767
      %3769 = vmatmul.bf16.gmra.mxu0 %v3703
      %v3770 = vpop.f32.mrf.mxu0
      %v3771 = vadd.f32 0.0, %v3770
      %v3772 = vpop.f32.mrf.mxu0
      %v3773 = vadd.f32 0.0, %v3772
      %3774 = vmatmul.bf16.gmra.mxu0 %v3706
      %v3775 = vpop.f32.mrf.mxu0
      %v3776 = vadd.f32 0.0, %v3775
      %v3777 = vpop.f32.mrf.mxu0
      %v3778 = vadd.f32 0.0, %v3777
      %3779 = vmatmul.bf16.gmra.mxu0 %v3709
      %v3780 = vpop.f32.mrf.mxu0
      %v3781 = vadd.f32 0.0, %v3780
      %v3782 = vpop.f32.mrf.mxu0
      %v3783 = vadd.f32 0.0, %v3782
      %3784 = vmatmul.bf16.gmra.mxu0 %v3712
      %v3785 = vpop.f32.mrf.mxu0
      %v3786 = vadd.f32 0.0, %v3785
      %v3787 = vpop.f32.mrf.mxu0
      %v3788 = vadd.f32 0.0, %v3787
      %3789 = vmatmul.bf16.gmra.mxu0 %v3715
      %v3790 = vpop.f32.mrf.mxu0
      %v3791 = vadd.f32 0.0, %v3790
      %v3792 = vpop.f32.mrf.mxu0
      %v3793 = vadd.f32 0.0, %v3792
      %3794 = vmatmul.bf16.gmra.mxu0 %v3718
      %v3795 = vpop.f32.mrf.mxu0
      %v3796 = vadd.f32 0.0, %v3795
      %v3797 = vpop.f32.mrf.mxu0
      %v3798 = vadd.f32 0.0, %v3797
      %3799 = vmatmul.bf16.gmra.mxu0 %v3721
      %v3800 = vpop.f32.mrf.mxu0
      %v3801 = vadd.f32 0.0, %v3800
      %v3802 = vpop.f32.mrf.mxu0
      %v3803 = vadd.f32 0.0, %v3802
      %3804 = vmatmul.bf16.gmra.mxu0 %v3724
      %v3805 = vpop.f32.mrf.mxu0
      %v3806 = vadd.f32 0.0, %v3805
      %v3807 = vpop.f32.mrf.mxu0
      %v3808 = vadd.f32 0.0, %v3807
      %3809 = vmatmul.bf16.gmra.mxu0 %v3727
      %v3810 = vpop.f32.mrf.mxu0
      %v3811 = vadd.f32 0.0, %v3810
      %v3812 = vpop.f32.mrf.mxu0
      %v3813 = vadd.f32 0.0, %v3812
      %3814 = vmatmul.bf16.gmra.mxu0 %v3730
      %v3815 = vpop.f32.mrf.mxu0
      %v3816 = vadd.f32 0.0, %v3815
      %v3817 = vpop.f32.mrf.mxu0
      %v3818 = vadd.f32 0.0, %v3817
      %3819 = vmatmul.bf16.gmra.mxu0 %v3733
      %v3820 = vpop.f32.mrf.mxu0
      %v3821 = vadd.f32 0.0, %v3820
      %v3822 = vpop.f32.mrf.mxu0
      %v3823 = vadd.f32 0.0, %v3822
      %3824 = vmatmul.bf16.gmra.mxu0 %v3736
      %v3825 = vpop.f32.mrf.mxu0
      %v3826 = vadd.f32 0.0, %v3825
      %v3827 = vpop.f32.mrf.mxu0
      %v3828 = vadd.f32 0.0, %v3827
      %3829 = vdwg.mxu0
      %v3830 = vadd.f32 %v3224, %v3751
      %v3831 = vadd.f32 %v3225, %v3753
      %v3832 = vadd.f32 %v3226, %v3756
      %v3833 = vadd.f32 %v3227, %v3758
      %v3834 = vadd.f32 %v3228, %v3761
      %v3835 = vadd.f32 %v3229, %v3763
      %v3836 = vadd.f32 %v3230, %v3766
      %v3837 = vadd.f32 %v3231, %v3768
      %v3838 = vadd.f32 %v3232, %v3771
      %v3839 = vadd.f32 %v3233, %v3773
      %v3840 = vadd.f32 %v3234, %v3776
      %v3841 = vadd.f32 %v3235, %v3778
      %v3842 = vadd.f32 %v3236, %v3781
      %v3843 = vadd.f32 %v3237, %v3783
      %v3844 = vadd.f32 %v3238, %v3786
      %v3845 = vadd.f32 %v3239, %v3788
      %v3846 = vadd.f32 %v3240, %v3791
      %v3847 = vadd.f32 %v3241, %v3793
      %v3848 = vadd.f32 %v3242, %v3796
      %v3849 = vadd.f32 %v3243, %v3798
      %v3850 = vadd.f32 %v3244, %v3801
      %v3851 = vadd.f32 %v3245, %v3803
      %v3852 = vadd.f32 %v3246, %v3806
      %v3853 = vadd.f32 %v3247, %v3808
      %v3854 = vadd.f32 %v3248, %v3811
      %v3855 = vadd.f32 %v3249, %v3813
      %v3856 = vadd.f32 %v3250, %v3816
      %v3857 = vadd.f32 %v3251, %v3818
      %v3858 = vadd.f32 %v3252, %v3821
      %v3859 = vadd.f32 %v3253, %v3823
      %v3860 = vadd.f32 %v3254, %v3826
      %v3861 = vadd.f32 %v3255, %v3828
      %v3878 = vrot.slane %v591, 5
      %v3879 = vrot.slane %v3878, 4
      %v3880 = vrot.slane %v592, 5
      %v3881 = vsel %vm1457, %v3879, %v3880
      %v3882 = vrot.slane %v3880, 4
      %v3883 = vrot.slane %v593, 5
      %v3884 = vsel %vm1457, %v3882, %v3883
      %v3885 = vrot.slane %v594, 5
      %v3886 = vrot.slane %v3885, 4
      %v3887 = vrot.slane %v595, 5
      %v3888 = vsel %vm1457, %v3886, %v3887
      %v3889 = vrot.slane %v3887, 4
      %v3890 = vrot.slane %v596, 5
      %v3891 = vsel %vm1457, %v3889, %v3890
      %v3892 = vrot.slane %v597, 5
      %v3893 = vrot.slane %v3892, 4
      %v3894 = vrot.slane %v598, 5
      %v3895 = vsel %vm1457, %v3893, %v3894
      %v3896 = vrot.slane %v3894, 4
      %v3897 = vrot.slane %v599, 5
      %v3898 = vsel %vm1457, %v3896, %v3897
      %v3899 = vrot.slane %v600, 5
      %v3900 = vrot.slane %v3899, 4
      %v3901 = vrot.slane %v601, 5
      %v3902 = vsel %vm1457, %v3900, %v3901
      %v3903 = vrot.slane %v3901, 4
      %v3904 = vrot.slane %v602, 5
      %v3905 = vsel %vm1457, %v3903, %v3904
      %v3906 = vrot.slane %v603, 5
      %v3907 = vrot.slane %v3906, 4
      %v3908 = vrot.slane %v604, 5
      %v3909 = vsel %vm1457, %v3907, %v3908
      %v3910 = vrot.slane %v3908, 4
      %v3911 = vrot.slane %v605, 5
      %v3912 = vsel %vm1457, %v3910, %v3911
      %v3913 = vrot.slane %v606, 5
      %v3914 = vrot.slane %v3913, 4
      %v3915 = vrot.slane %v607, 5
      %v3916 = vsel %vm1457, %v3914, %v3915
      %v3917 = vrot.slane %v3915, 4
      %v3918 = vrot.slane %v608, 5
      %v3919 = vsel %vm1457, %v3917, %v3918
      %v3920 = vrot.slane %v609, 5
      %v3921 = vrot.slane %v3920, 4
      %v3922 = vrot.slane %v610, 5
      %v3923 = vsel %vm1457, %v3921, %v3922
      %v3924 = vrot.slane %v3922, 4
      %v3925 = vrot.slane %v611, 5
      %v3926 = vsel %vm1457, %v3924, %v3925
      %v3927 = vrot.slane %v612, 5
      %v3928 = vrot.slane %v3927, 4
      %v3929 = vrot.slane %v613, 5
      %v3930 = vsel %vm1457, %v3928, %v3929
      %v3931 = vrot.slane %v3929, 4
      %v3932 = vrot.slane %v614, 5
      %v3933 = vsel %vm1457, %v3931, %v3932
      %v3934 = vrot.slane %v615, 5
      %v3935 = vrot.slane %v3934, 4
      %v3936 = vrot.slane %v616, 5
      %v3937 = vsel %vm1457, %v3935, %v3936
      %v3938 = vrot.slane %v3936, 4
      %v3939 = vrot.slane %v617, 5
      %v3940 = vsel %vm1457, %v3938, %v3939
      %v3941 = vrot.slane %v618, 5
      %v3942 = vrot.slane %v3941, 4
      %v3943 = vrot.slane %v619, 5
      %v3944 = vsel %vm1457, %v3942, %v3943
      %v3945 = vrot.slane %v3943, 4
      %v3946 = vrot.slane %v620, 5
      %v3947 = vsel %vm1457, %v3945, %v3946
      %v3948 = vrot.slane %v621, 5
      %v3949 = vrot.slane %v3948, 4
      %v3950 = vrot.slane %v622, 5
      %v3951 = vsel %vm1457, %v3949, %v3950
      %v3952 = vrot.slane %v3950, 4
      %v3953 = vrot.slane %v623, 5
      %v3954 = vsel %vm1457, %v3952, %v3953
      %v3955 = vrot.slane %v624, 5
      %v3956 = vrot.slane %v3955, 4
      %v3957 = vrot.slane %v625, 5
      %v3958 = vsel %vm1457, %v3956, %v3957
      %v3959 = vrot.slane %v3957, 4
      %v3960 = vrot.slane %v626, 5
      %v3961 = vsel %vm1457, %v3959, %v3960
      %v3962 = vrot.slane %v627, 5
      %v3963 = vrot.slane %v3962, 4
      %v3964 = vrot.slane %v628, 5
      %v3965 = vsel %vm1457, %v3963, %v3964
      %v3966 = vrot.slane %v3964, 4
      %v3967 = vrot.slane %v629, 5
      %v3968 = vsel %vm1457, %v3966, %v3967
      %v3969 = vrot.slane %v630, 5
      %v3970 = vrot.slane %v3969, 4
      %v3971 = vrot.slane %v631, 5
      %v3972 = vsel %vm1457, %v3970, %v3971
      %v3973 = vrot.slane %v3971, 4
      %v3974 = vrot.slane %v632, 5
      %v3975 = vsel %vm1457, %v3973, %v3974
      %v3976 = vrot.slane %v633, 5
      %v3977 = vrot.slane %v3976, 4
      %v3978 = vrot.slane %v634, 5
      %v3979 = vsel %vm1457, %v3977, %v3978
      %v3980 = vrot.slane %v3978, 4
      %v3981 = vrot.slane %v635, 5
      %v3982 = vsel %vm1457, %v3980, %v3981
      %v3983 = vrot.slane %v636, 5
      %v3984 = vrot.slane %v3983, 4
      %v3985 = vrot.slane %v637, 5
      %v3986 = vsel %vm1457, %v3984, %v3985
      %v3987 = vrot.slane %v3985, 4
      %v3988 = vrot.slane %v638, 5
      %v3989 = vsel %vm1457, %v3987, %v3988
      %s3990 = scalar_lea.vmem %s458, 16
      %v3991 = vld [vmem:[%s3990] sm:$0x3]
      %v3992 = vunpack.c.l.b16 %v3881
      %v3993 = vunpack.c.l.b16 %v3884
      %v3994 = vunpack.c.l.b16 %v3888
      %v3995 = vunpack.c.l.b16 %v3891
      %v3996 = vunpack.c.l.b16 %v3895
      %v3997 = vunpack.c.l.b16 %v3898
      %v3998 = vunpack.c.l.b16 %v3902
      %v3999 = vunpack.c.l.b16 %v3905
      %v4000 = vunpack.c.l.b16 %v3909
      %v4001 = vunpack.c.l.b16 %v3912
      %v4002 = vunpack.c.l.b16 %v3916
      %v4003 = vunpack.c.l.b16 %v3919
      %v4004 = vunpack.c.l.b16 %v3923
      %v4005 = vunpack.c.l.b16 %v3926
      %v4006 = vunpack.c.l.b16 %v3930
      %v4007 = vunpack.c.l.b16 %v3933
      %v4008 = vunpack.c.l.b16 %v3937
      %v4009 = vunpack.c.l.b16 %v3940
      %v4010 = vunpack.c.l.b16 %v3944
      %v4011 = vunpack.c.l.b16 %v3947
      %v4012 = vunpack.c.l.b16 %v3951
      %v4013 = vunpack.c.l.b16 %v3954
      %v4014 = vunpack.c.l.b16 %v3958
      %v4015 = vunpack.c.l.b16 %v3961
      %v4016 = vunpack.c.l.b16 %v3965
      %v4017 = vunpack.c.l.b16 %v3968
      %v4018 = vunpack.c.l.b16 %v3972
      %v4019 = vunpack.c.l.b16 %v3975
      %v4020 = vunpack.c.l.b16 %v3979
      %v4021 = vunpack.c.l.b16 %v3982
      %v4022 = vunpack.c.l.b16 %v3986
      %v4023 = vunpack.c.l.b16 %v3989
      %v4024 = vpack.c.b16 %v3993, %v3992
      %v4025 = vpack.c.b16 %v3995, %v3994
      %v4026 = vpack.c.b16 %v3997, %v3996
      %v4027 = vpack.c.b16 %v3999, %v3998
      %v4028 = vpack.c.b16 %v4001, %v4000
      %v4029 = vpack.c.b16 %v4003, %v4002
      %v4030 = vpack.c.b16 %v4005, %v4004
      %v4031 = vpack.c.b16 %v4007, %v4006
      %v4032 = vpack.c.b16 %v4009, %v4008
      %v4033 = vpack.c.b16 %v4011, %v4010
      %v4034 = vpack.c.b16 %v4013, %v4012
      %v4035 = vpack.c.b16 %v4015, %v4014
      %v4036 = vpack.c.b16 %v4017, %v4016
      %v4037 = vpack.c.b16 %v4019, %v4018
      %v4038 = vpack.c.b16 %v4021, %v4020
      %v4039 = vpack.c.b16 %v4023, %v4022
      %v4041 = vsel %vm1077, %v4024, 0
      %v4044 = vsel %vm1077, %v4025, 0
      %v4047 = vsel %vm1077, %v4026, 0
      %v4050 = vsel %vm1077, %v4027, 0
      %v4053 = vsel %vm1077, %v4028, 0
      %v4056 = vsel %vm1077, %v4029, 0
      %v4059 = vsel %vm1077, %v4030, 0
      %v4062 = vsel %vm1077, %v4031, 0
      %v4065 = vsel %vm1077, %v4032, 0
      %v4068 = vsel %vm1077, %v4033, 0
      %v4071 = vsel %vm1077, %v4034, 0
      %v4074 = vsel %vm1077, %v4035, 0
      %v4077 = vsel %vm1077, %v4036, 0
      %v4080 = vsel %vm1077, %v4037, 0
      %v4083 = vsel %vm1077, %v4038, 0
      %v4086 = vsel %vm1077, %v4039, 0
      %v4089 = vsel %vm1126, %v3991, 0
      %4091 = vmatpush.bf16.msra.mxu0 0
      %4092 = vmatpush.bf16.msra.mxu0 0
      %4093 = vmatpush.bf16.msra.mxu0 0
      %4094 = vmatpush.bf16.msra.mxu0 0
      %4095 = vmatpush.bf16.msra.mxu0 0
      %4096 = vmatpush.bf16.msra.mxu0 0
      %4097 = vmatpush.bf16.msra.mxu0 0
      %4098 = vmatpush.bf16.msra.mxu0 %v4089
      %4099 = vmatmul.bf16.gmra.mxu0 %v4041
      %v4100 = vpop.f32.mrf.mxu0
      %v4101 = vadd.f32 0.0, %v4100
      %v4102 = vpop.f32.mrf.mxu0
      %v4103 = vadd.f32 0.0, %v4102
      %4104 = vmatmul.bf16.gmra.mxu0 %v4044
      %v4105 = vpop.f32.mrf.mxu0
      %v4106 = vadd.f32 0.0, %v4105
      %v4107 = vpop.f32.mrf.mxu0
      %v4108 = vadd.f32 0.0, %v4107
      %4109 = vmatmul.bf16.gmra.mxu0 %v4047
      %v4110 = vpop.f32.mrf.mxu0
      %v4111 = vadd.f32 0.0, %v4110
      %v4112 = vpop.f32.mrf.mxu0
      %v4113 = vadd.f32 0.0, %v4112
      %4114 = vmatmul.bf16.gmra.mxu0 %v4050
      %v4115 = vpop.f32.mrf.mxu0
      %v4116 = vadd.f32 0.0, %v4115
      %v4117 = vpop.f32.mrf.mxu0
      %v4118 = vadd.f32 0.0, %v4117
      %4119 = vmatmul.bf16.gmra.mxu0 %v4053
      %v4120 = vpop.f32.mrf.mxu0
      %v4121 = vadd.f32 0.0, %v4120
      %v4122 = vpop.f32.mrf.mxu0
      %v4123 = vadd.f32 0.0, %v4122
      %4124 = vmatmul.bf16.gmra.mxu0 %v4056
      %v4125 = vpop.f32.mrf.mxu0
      %v4126 = vadd.f32 0.0, %v4125
      %v4127 = vpop.f32.mrf.mxu0
      %v4128 = vadd.f32 0.0, %v4127
      %4129 = vmatmul.bf16.gmra.mxu0 %v4059
      %v4130 = vpop.f32.mrf.mxu0
      %v4131 = vadd.f32 0.0, %v4130
      %v4132 = vpop.f32.mrf.mxu0
      %v4133 = vadd.f32 0.0, %v4132
      %4134 = vmatmul.bf16.gmra.mxu0 %v4062
      %v4135 = vpop.f32.mrf.mxu0
      %v4136 = vadd.f32 0.0, %v4135
      %v4137 = vpop.f32.mrf.mxu0
      %v4138 = vadd.f32 0.0, %v4137
      %4139 = vmatmul.bf16.gmra.mxu0 %v4065
      %v4140 = vpop.f32.mrf.mxu0
      %v4141 = vadd.f32 0.0, %v4140
      %v4142 = vpop.f32.mrf.mxu0
      %v4143 = vadd.f32 0.0, %v4142
      %4144 = vmatmul.bf16.gmra.mxu0 %v4068
      %v4145 = vpop.f32.mrf.mxu0
      %v4146 = vadd.f32 0.0, %v4145
      %v4147 = vpop.f32.mrf.mxu0
      %v4148 = vadd.f32 0.0, %v4147
      %4149 = vmatmul.bf16.gmra.mxu0 %v4071
      %v4150 = vpop.f32.mrf.mxu0
      %v4151 = vadd.f32 0.0, %v4150
      %v4152 = vpop.f32.mrf.mxu0
      %v4153 = vadd.f32 0.0, %v4152
      %4154 = vmatmul.bf16.gmra.mxu0 %v4074
      %v4155 = vpop.f32.mrf.mxu0
      %v4156 = vadd.f32 0.0, %v4155
      %v4157 = vpop.f32.mrf.mxu0
      %v4158 = vadd.f32 0.0, %v4157
      %4159 = vmatmul.bf16.gmra.mxu0 %v4077
      %v4160 = vpop.f32.mrf.mxu0
      %v4161 = vadd.f32 0.0, %v4160
      %v4162 = vpop.f32.mrf.mxu0
      %v4163 = vadd.f32 0.0, %v4162
      %4164 = vmatmul.bf16.gmra.mxu0 %v4080
      %v4165 = vpop.f32.mrf.mxu0
      %v4166 = vadd.f32 0.0, %v4165
      %v4167 = vpop.f32.mrf.mxu0
      %v4168 = vadd.f32 0.0, %v4167
      %4169 = vmatmul.bf16.gmra.mxu0 %v4083
      %v4170 = vpop.f32.mrf.mxu0
      %v4171 = vadd.f32 0.0, %v4170
      %v4172 = vpop.f32.mrf.mxu0
      %v4173 = vadd.f32 0.0, %v4172
      %4174 = vmatmul.bf16.gmra.mxu0 %v4086
      %v4175 = vpop.f32.mrf.mxu0
      %v4176 = vadd.f32 0.0, %v4175
      %v4177 = vpop.f32.mrf.mxu0
      %v4178 = vadd.f32 0.0, %v4177
      %4179 = vdwg.mxu0
      %v4180 = vadd.f32 %v3830, %v4101
      %v4181 = vadd.f32 %v3831, %v4103
      %v4182 = vadd.f32 %v3832, %v4106
      %v4183 = vadd.f32 %v3833, %v4108
      %v4184 = vadd.f32 %v3834, %v4111
      %v4185 = vadd.f32 %v3835, %v4113
      %v4186 = vadd.f32 %v3836, %v4116
      %v4187 = vadd.f32 %v3837, %v4118
      %v4188 = vadd.f32 %v3838, %v4121
      %v4189 = vadd.f32 %v3839, %v4123
      %v4190 = vadd.f32 %v3840, %v4126
      %v4191 = vadd.f32 %v3841, %v4128
      %v4192 = vadd.f32 %v3842, %v4131
      %v4193 = vadd.f32 %v3843, %v4133
      %v4194 = vadd.f32 %v3844, %v4136
      %v4195 = vadd.f32 %v3845, %v4138
      %v4196 = vadd.f32 %v3846, %v4141
      %v4197 = vadd.f32 %v3847, %v4143
      %v4198 = vadd.f32 %v3848, %v4146
      %v4199 = vadd.f32 %v3849, %v4148
      %v4200 = vadd.f32 %v3850, %v4151
      %v4201 = vadd.f32 %v3851, %v4153
      %v4202 = vadd.f32 %v3852, %v4156
      %v4203 = vadd.f32 %v3853, %v4158
      %v4204 = vadd.f32 %v3854, %v4161
      %v4205 = vadd.f32 %v3855, %v4163
      %v4206 = vadd.f32 %v3856, %v4166
      %v4207 = vadd.f32 %v3857, %v4168
      %v4208 = vadd.f32 %v3858, %v4171
      %v4209 = vadd.f32 %v3859, %v4173
      %v4210 = vadd.f32 %v3860, %v4176
      %v4211 = vadd.f32 %v3861, %v4178
      %v4212 = vld [vmem:[%s461] sm:$0x1]
      %v4214 = vperm.slane %v4212, 0
      %v4216 = vadd.f32 %v4180, %v4214
      %v4217 = vadd.f32 %v4181, %v4214
      %v4218 = vadd.f32 %v4182, %v4214
      %v4219 = vadd.f32 %v4183, %v4214
      %v4220 = vadd.f32 %v4184, %v4214
      %v4221 = vadd.f32 %v4185, %v4214
      %v4222 = vadd.f32 %v4186, %v4214
      %v4223 = vadd.f32 %v4187, %v4214
      %v4224 = vadd.f32 %v4188, %v4214
      %v4225 = vadd.f32 %v4189, %v4214
      %v4226 = vadd.f32 %v4190, %v4214
      %v4227 = vadd.f32 %v4191, %v4214
      %v4228 = vadd.f32 %v4192, %v4214
      %v4229 = vadd.f32 %v4193, %v4214
      %v4230 = vadd.f32 %v4194, %v4214
      %v4231 = vadd.f32 %v4195, %v4214
      %v4232 = vadd.f32 %v4196, %v4214
      %v4233 = vadd.f32 %v4197, %v4214
      %v4234 = vadd.f32 %v4198, %v4214
      %v4235 = vadd.f32 %v4199, %v4214
      %v4236 = vadd.f32 %v4200, %v4214
      %v4237 = vadd.f32 %v4201, %v4214
      %v4238 = vadd.f32 %v4202, %v4214
      %v4239 = vadd.f32 %v4203, %v4214
      %v4240 = vadd.f32 %v4204, %v4214
      %v4241 = vadd.f32 %v4205, %v4214
      %v4242 = vadd.f32 %v4206, %v4214
      %v4243 = vadd.f32 %v4207, %v4214
      %v4244 = vadd.f32 %v4208, %v4214
      %v4245 = vadd.f32 %v4209, %v4214
      %v4246 = vadd.f32 %v4210, %v4214
      %v4247 = vadd.f32 %v4211, %v4214
      %vm4248 = vcmask 261120
      %4249 = vst.msk [vmem:[%s474] sm:$0xff] %vm4248, %v4216
      %4250 = vst.msk [vmem:[%s474 + $0x8] sm:$0xff] %vm4248, %v4217
      %4251 = vst.msk [vmem:[%s474 + $0x10] sm:$0xff] %vm4248, %v4218
      %4252 = vst.msk [vmem:[%s474 + $0x18] sm:$0xff] %vm4248, %v4219
      %4253 = vst.msk [vmem:[%s474 + $0x20] sm:$0xff] %vm4248, %v4220
      %4254 = vst.msk [vmem:[%s474 + $0x28] sm:$0xff] %vm4248, %v4221
      %4255 = vst.msk [vmem:[%s474 + $0x30] sm:$0xff] %vm4248, %v4222
      %4256 = vst.msk [vmem:[%s474 + $0x38] sm:$0xff] %vm4248, %v4223
      %4257 = vst.msk [vmem:[%s474 + $0x40] sm:$0xff] %vm4248, %v4224
      %4258 = vst.msk [vmem:[%s474 + $0x48] sm:$0xff] %vm4248, %v4225
      %4259 = vst.msk [vmem:[%s474 + $0x50] sm:$0xff] %vm4248, %v4226
      %4260 = vst.msk [vmem:[%s474 + $0x58] sm:$0xff] %vm4248, %v4227
      %4261 = vst.msk [vmem:[%s474 + $0x60] sm:$0xff] %vm4248, %v4228
      %4262 = vst.msk [vmem:[%s474 + $0x68] sm:$0xff] %vm4248, %v4229
      %4263 = vst.msk [vmem:[%s474 + $0x70] sm:$0xff] %vm4248, %v4230
      %4264 = vst.msk [vmem:[%s474 + $0x78] sm:$0xff] %vm4248, %v4231
      %4265 = vst.msk [vmem:[%s474 + $0x80] sm:$0xff] %vm4248, %v4232
      %4266 = vst.msk [vmem:[%s474 + $0x88] sm:$0xff] %vm4248, %v4233
      %4267 = vst.msk [vmem:[%s474 + $0x90] sm:$0xff] %vm4248, %v4234
      %4268 = vst.msk [vmem:[%s474 + $0x98] sm:$0xff] %vm4248, %v4235
      %4269 = vst.msk [vmem:[%s474 + $0xa0] sm:$0xff] %vm4248, %v4236
      %4270 = vst.msk [vmem:[%s474 + $0xa8] sm:$0xff] %vm4248, %v4237
      %4271 = vst.msk [vmem:[%s474 + $0xb0] sm:$0xff] %vm4248, %v4238
      %4272 = vst.msk [vmem:[%s474 + $0xb8] sm:$0xff] %vm4248, %v4239
      %4273 = vst.msk [vmem:[%s474 + $0xc0] sm:$0xff] %vm4248, %v4240
      %4274 = vst.msk [vmem:[%s474 + $0xc8] sm:$0xff] %vm4248, %v4241
      %4275 = vst.msk [vmem:[%s474 + $0xd0] sm:$0xff] %vm4248, %v4242
      %4276 = vst.msk [vmem:[%s474 + $0xd8] sm:$0xff] %vm4248, %v4243
      %4277 = vst.msk [vmem:[%s474 + $0xe0] sm:$0xff] %vm4248, %v4244
      %4278 = vst.msk [vmem:[%s474 + $0xe8] sm:$0xff] %vm4248, %v4245
      %4279 = vst.msk [vmem:[%s474 + $0xf0] sm:$0xff] %vm4248, %v4246
      %4280 = vst.msk [vmem:[%s474 + $0xf8] sm:$0xff] %vm4248, %v4247
      %v4281 = vsel %vm4248, %v4216, 0.0
      %v4282 = vsel %vm4248, %v4217, 0.0
      %v4283 = vadd.f32 %v4281, %v4282
      %v4284 = vsel %vm4248, %v4218, 0.0
      %v4285 = vadd.f32 %v4283, %v4284
      %v4286 = vsel %vm4248, %v4219, 0.0
      %v4287 = vadd.f32 %v4285, %v4286
      %v4288 = vsel %vm4248, %v4220, 0.0
      %v4289 = vadd.f32 %v4287, %v4288
      %v4290 = vsel %vm4248, %v4221, 0.0
      %v4291 = vadd.f32 %v4289, %v4290
      %v4292 = vsel %vm4248, %v4222, 0.0
      %v4293 = vadd.f32 %v4291, %v4292
      %v4294 = vsel %vm4248, %v4223, 0.0
      %v4295 = vadd.f32 %v4293, %v4294
      %v4296 = vsel %vm4248, %v4224, 0.0
      %v4297 = vadd.f32 %v4295, %v4296
      %v4298 = vsel %vm4248, %v4225, 0.0
      %v4299 = vadd.f32 %v4297, %v4298
      %v4300 = vsel %vm4248, %v4226, 0.0
      %v4301 = vadd.f32 %v4299, %v4300
      %v4302 = vsel %vm4248, %v4227, 0.0
      %v4303 = vadd.f32 %v4301, %v4302
      %v4304 = vsel %vm4248, %v4228, 0.0
      %v4305 = vadd.f32 %v4303, %v4304
      %v4306 = vsel %vm4248, %v4229, 0.0
      %v4307 = vadd.f32 %v4305, %v4306
      %v4308 = vsel %vm4248, %v4230, 0.0
      %v4309 = vadd.f32 %v4307, %v4308
      %v4310 = vsel %vm4248, %v4231, 0.0
      %v4311 = vadd.f32 %v4309, %v4310
      %v4312 = vsel %vm4248, %v4232, 0.0
      %v4313 = vadd.f32 %v4311, %v4312
      %v4314 = vsel %vm4248, %v4233, 0.0
      %v4315 = vadd.f32 %v4313, %v4314
      %v4316 = vsel %vm4248, %v4234, 0.0
      %v4317 = vadd.f32 %v4315, %v4316
      %v4318 = vsel %vm4248, %v4235, 0.0
      %v4319 = vadd.f32 %v4317, %v4318
      %v4320 = vsel %vm4248, %v4236, 0.0
      %v4321 = vadd.f32 %v4319, %v4320
      %v4322 = vsel %vm4248, %v4237, 0.0
      %v4323 = vadd.f32 %v4321, %v4322
      %v4324 = vsel %vm4248, %v4238, 0.0
      %v4325 = vadd.f32 %v4323, %v4324
      %v4326 = vsel %vm4248, %v4239, 0.0
      %v4327 = vadd.f32 %v4325, %v4326
      %v4328 = vsel %vm4248, %v4240, 0.0
      %v4329 = vadd.f32 %v4327, %v4328
      %v4330 = vsel %vm4248, %v4241, 0.0
      %v4331 = vadd.f32 %v4329, %v4330
      %v4332 = vsel %vm4248, %v4242, 0.0
      %v4333 = vadd.f32 %v4331, %v4332
      %v4334 = vsel %vm4248, %v4243, 0.0
      %v4335 = vadd.f32 %v4333, %v4334
      %v4336 = vsel %vm4248, %v4244, 0.0
      %v4337 = vadd.f32 %v4335, %v4336
      %v4338 = vsel %vm4248, %v4245, 0.0
      %v4339 = vadd.f32 %v4337, %v4338
      %v4340 = vsel %vm4248, %v4246, 0.0
      %v4341 = vadd.f32 %v4339, %v4340
      %v4342 = vsel %vm4248, %v4247, 0.0
      %v4343 = vadd.f32 %v4341, %v4342
      %v4344 = vrot.slane %v4343, 4
      %v4345 = vadd.f32 %v4343, %v4344
      %v4346 = vrot.slane %v4345, 2
      %v4347 = vadd.f32 %v4345, %v4346
      %v4348 = vrot.slane %v4347, 1
      %v4349 = vadd.f32 %v4347, %v4348
      %v4350 = vmul.f32 %v4216, %v4216
      %v4351 = vmul.f32 %v4217, %v4217
      %v4352 = vmul.f32 %v4218, %v4218
      %v4353 = vmul.f32 %v4219, %v4219
      %v4354 = vmul.f32 %v4220, %v4220
      %v4355 = vmul.f32 %v4221, %v4221
      %v4356 = vmul.f32 %v4222, %v4222
      %v4357 = vmul.f32 %v4223, %v4223
      %v4358 = vmul.f32 %v4224, %v4224
      %v4359 = vmul.f32 %v4225, %v4225
      %v4360 = vmul.f32 %v4226, %v4226
      %v4361 = vmul.f32 %v4227, %v4227
      %v4362 = vmul.f32 %v4228, %v4228
      %v4363 = vmul.f32 %v4229, %v4229
      %v4364 = vmul.f32 %v4230, %v4230
      %v4365 = vmul.f32 %v4231, %v4231
      %v4366 = vmul.f32 %v4232, %v4232
      %v4367 = vmul.f32 %v4233, %v4233
      %v4368 = vmul.f32 %v4234, %v4234
      %v4369 = vmul.f32 %v4235, %v4235
      %v4370 = vmul.f32 %v4236, %v4236
      %v4371 = vmul.f32 %v4237, %v4237
      %v4372 = vmul.f32 %v4238, %v4238
      %v4373 = vmul.f32 %v4239, %v4239
      %v4374 = vmul.f32 %v4240, %v4240
      %v4375 = vmul.f32 %v4241, %v4241
      %v4376 = vmul.f32 %v4242, %v4242
      %v4377 = vmul.f32 %v4243, %v4243
      %v4378 = vmul.f32 %v4244, %v4244
      %v4379 = vmul.f32 %v4245, %v4245
      %v4380 = vmul.f32 %v4246, %v4246
      %v4381 = vmul.f32 %v4247, %v4247
      %v4382 = vsel %vm4248, %v4350, 0.0
      %v4383 = vsel %vm4248, %v4351, 0.0
      %v4384 = vadd.f32 %v4382, %v4383
      %v4385 = vsel %vm4248, %v4352, 0.0
      %v4386 = vadd.f32 %v4384, %v4385
      %v4387 = vsel %vm4248, %v4353, 0.0
      %v4388 = vadd.f32 %v4386, %v4387
      %v4389 = vsel %vm4248, %v4354, 0.0
      %v4390 = vadd.f32 %v4388, %v4389
      %v4391 = vsel %vm4248, %v4355, 0.0
      %v4392 = vadd.f32 %v4390, %v4391
      %v4393 = vsel %vm4248, %v4356, 0.0
      %v4394 = vadd.f32 %v4392, %v4393
      %v4395 = vsel %vm4248, %v4357, 0.0
      %v4396 = vadd.f32 %v4394, %v4395
      %v4397 = vsel %vm4248, %v4358, 0.0
      %v4398 = vadd.f32 %v4396, %v4397
      %v4399 = vsel %vm4248, %v4359, 0.0
      %v4400 = vadd.f32 %v4398, %v4399
      %v4401 = vsel %vm4248, %v4360, 0.0
      %v4402 = vadd.f32 %v4400, %v4401
      %v4403 = vsel %vm4248, %v4361, 0.0
      %v4404 = vadd.f32 %v4402, %v4403
      %v4405 = vsel %vm4248, %v4362, 0.0
      %v4406 = vadd.f32 %v4404, %v4405
      %v4407 = vsel %vm4248, %v4363, 0.0
      %v4408 = vadd.f32 %v4406, %v4407
      %v4409 = vsel %vm4248, %v4364, 0.0
      %v4410 = vadd.f32 %v4408, %v4409
      %v4411 = vsel %vm4248, %v4365, 0.0
      %v4412 = vadd.f32 %v4410, %v4411
      %v4413 = vsel %vm4248, %v4366, 0.0
      %v4414 = vadd.f32 %v4412, %v4413
      %v4415 = vsel %vm4248, %v4367, 0.0
      %v4416 = vadd.f32 %v4414, %v4415
      %v4417 = vsel %vm4248, %v4368, 0.0
      %v4418 = vadd.f32 %v4416, %v4417
      %v4419 = vsel %vm4248, %v4369, 0.0
      %v4420 = vadd.f32 %v4418, %v4419
      %v4421 = vsel %vm4248, %v4370, 0.0
      %v4422 = vadd.f32 %v4420, %v4421
      %v4423 = vsel %vm4248, %v4371, 0.0
      %v4424 = vadd.f32 %v4422, %v4423
      %v4425 = vsel %vm4248, %v4372, 0.0
      %v4426 = vadd.f32 %v4424, %v4425
      %v4427 = vsel %vm4248, %v4373, 0.0
      %v4428 = vadd.f32 %v4426, %v4427
      %v4429 = vsel %vm4248, %v4374, 0.0
      %v4430 = vadd.f32 %v4428, %v4429
      %v4431 = vsel %vm4248, %v4375, 0.0
      %v4432 = vadd.f32 %v4430, %v4431
      %v4433 = vsel %vm4248, %v4376, 0.0
      %v4434 = vadd.f32 %v4432, %v4433
      %v4435 = vsel %vm4248, %v4377, 0.0
      %v4436 = vadd.f32 %v4434, %v4435
      %v4437 = vsel %vm4248, %v4378, 0.0
      %v4438 = vadd.f32 %v4436, %v4437
      %v4439 = vsel %vm4248, %v4379, 0.0
      %v4440 = vadd.f32 %v4438, %v4439
      %v4441 = vsel %vm4248, %v4380, 0.0
      %v4442 = vadd.f32 %v4440, %v4441
      %v4443 = vsel %vm4248, %v4381, 0.0
      %v4444 = vadd.f32 %v4442, %v4443
      %v4445 = vrot.slane %v4444, 4
      %v4446 = vadd.f32 %v4444, %v4445
      %v4447 = vrot.slane %v4446, 2
      %v4448 = vadd.f32 %v4446, %v4447
      %v4449 = vrot.slane %v4448, 1
      %v4450 = vadd.f32 %v4448, %v4449
      %4451 = vst.msk [vmem:[%s483] sm:$0xff] %vm4248, %v4349
      %4452 = vst.msk [vmem:[%s492] sm:$0xff] %vm4248, %v4450
      %s4453 = smul.u32 16, %s25
      %p4454 = scmp.lt.s32.totalorder %s24, 1
      %s4455 = scalar_select %p4454, %s24, 1
      %p4456 = scmp.lt.s32.totalorder %s4453, 15
      %s4457 = scalar_select %p4456, %s4453, 15
      %p4458 = scmp.lt.s32.totalorder %s26, 0
      %s4459 = scalar_select %p4458, %s26, 0
      %s4460 = smul.addr %s4457, 2
      %s4461 = sadd.s32 %s4459, %s4460
      %s4462 = smul.addr %s4455, 32
      %s4463 = sadd.s32 %s4461, %s4462
      %s4464 = smul.addr %s4463, 8
      %s4465 = scalar_lea.vmem %s5, %s4464
      %s4466 = sadd.s32 %s24, %s25
      %p4467 = scmp.lt.s32.totalorder %s4466, 1
      %s4468 = scalar_select %p4467, %s4466, 1
      %p4469 = scmp.lt.s32.totalorder %s26, 0
      %s4470 = scalar_select %p4469, %s26, 0
      %s4471 = sadd.s32 %s4470, %s4468
      %s4472 = smul.addr %s4471, 8
      %s4473 = scalar_lea.vmem %s6, %s4472
      %s4474 = sadd.s32 %s24, %s25
      %p4475 = scmp.lt.s32.totalorder %s4474, 1
      %s4476 = scalar_select %p4475, %s4474, 1
      %p4477 = scmp.lt.s32.totalorder %s26, 0
      %s4478 = scalar_select %p4477, %s26, 0
      %s4479 = sadd.s32 %s4478, %s4476
      %s4480 = smul.addr %s4479, 8
      %s4481 = scalar_lea.vmem %s7, %s4480
      // Predicated region
      $region41: #{vgg_block_forward.3} parent=39 // pred_check
        %p4482 = pneg %p196
      $region42: #{vgg_block_forward.3} parent=39 // pred_check_branch
        %4484 = sbr.rel (%p4482) target = $region44
      $region43: #{vgg_block_forward.3} parent=39 // pred_region
        %s4485 = smul.u32 16, %s25
      $region44: #{vgg_block_forward.3} parent=39 // pred_fallthru
        _
      // Predicated region
      $region45: #{vgg_block_forward.3} parent=39 // pred_check
        %p4486 = pneg %p226
      $region46: #{vgg_block_forward.3} parent=39 // pred_check_branch
        %4488 = sbr.rel (%p4486) target = $region48
      $region47: #{vgg_block_forward.3} parent=39 // pred_region
        %s4489 = sadd.s32 %s24, %s25
      $region48: #{vgg_block_forward.3} parent=39 // pred_fallthru
        _
      // Predicated region
      $region49: #{vgg_block_forward.3} parent=39 // pred_check
        %p4490 = pneg %p256
      $region50: #{vgg_block_forward.3} parent=39 // pred_check_branch
        %4492 = sbr.rel (%p4490) target = $region52
      $region51: #{vgg_block_forward.3} parent=39 // pred_region
        %s4493 = sadd.s32 %s24, %s25
      $region52: #{vgg_block_forward.3} parent=39 // pred_fallthru
        _
    $region40: #{vgg_block_forward.3} parent=5 // pred_fallthru
      _
    %p4494 = scmp.le.s32.totalorder 2, %s14
    // Predicated region
    $region53: #{vgg_block_forward.3} parent=5 // pred_check
      %p4495 = pneg %p4494
    $region54: #{vgg_block_forward.3} parent=5 // pred_check_branch
      %4497 = sbr.rel (%p4495) target = $region56
    $region55: #{vgg_block_forward.3} parent=5 // pred_region
      %s4498 = ssub.s32 %s14, 2
      // Predicated region
      $region57: #{vgg_block_forward.3} parent=55 // pred_check
        %p4499 = pneg %p202
      $region58: #{vgg_block_forward.3} parent=55 // pred_check_branch
        %4501 = sbr.rel (%p4499) target = $region60
      $region59: #{vgg_block_forward.3} parent=55 // pred_region
        %s4502 = smul.u32 16, %s28
        %p4503 = scmp.lt.s32.totalorder %s27, 1
        %s4504 = scalar_select %p4503, %s27, 1
        %p4505 = scmp.lt.s32.totalorder %s4502, 15
        %s4506 = scalar_select %p4505, %s4502, 15
        %p4507 = scmp.lt.s32.totalorder %s29, 0
        %s4508 = scalar_select %p4507, %s29, 0
        %s4509 = smul.addr %s4506, 2
        %s4510 = sadd.s32 %s4508, %s4509
        %s4511 = smul.addr %s4504, 32
        %s4512 = sadd.s32 %s4510, %s4511
        %s4513 = smul.addr %s4512, 8
        %s4514 = scalar_lea.vmem %s5, %s4513
      $region60: #{vgg_block_forward.3} parent=55 // pred_fallthru
        _
      // Predicated region
      $region61: #{vgg_block_forward.3} parent=55 // pred_check
        %p4515 = pneg %p232
      $region62: #{vgg_block_forward.3} parent=55 // pred_check_branch
        %4517 = sbr.rel (%p4515) target = $region64
      $region63: #{vgg_block_forward.3} parent=55 // pred_region
        %s4518 = sadd.s32 %s27, %s28
        %p4519 = scmp.lt.s32.totalorder %s4518, 1
        %s4520 = scalar_select %p4519, %s4518, 1
        %p4521 = scmp.lt.s32.totalorder %s29, 0
        %s4522 = scalar_select %p4521, %s29, 0
        %s4523 = sadd.s32 %s4522, %s4520
        %s4524 = smul.addr %s4523, 8
        %s4525 = scalar_lea.vmem %s6, %s4524
      $region64: #{vgg_block_forward.3} parent=55 // pred_fallthru
        _
      // Predicated region
      $region65: #{vgg_block_forward.3} parent=55 // pred_check
        %p4526 = pneg %p262
      $region66: #{vgg_block_forward.3} parent=55 // pred_check_branch
        %4528 = sbr.rel (%p4526) target = $region68
      $region67: #{vgg_block_forward.3} parent=55 // pred_region
        %s4529 = sadd.s32 %s27, %s28
        %p4530 = scmp.lt.s32.totalorder %s4529, 1
        %s4531 = scalar_select %p4530, %s4529, 1
        %p4532 = scmp.lt.s32.totalorder %s29, 0
        %s4533 = scalar_select %p4532, %s29, 0
        %s4534 = sadd.s32 %s4533, %s4531
        %s4535 = smul.addr %s4534, 8
        %s4536 = scalar_lea.vmem %s7, %s4535
      $region68: #{vgg_block_forward.3} parent=55 // pred_fallthru
        _
    $region56: #{vgg_block_forward.3} parent=5 // pred_fallthru
      _
  $region6: #{vgg_block_forward.3} parent=0 // loop_footer
    %s18 = sadd.s32 1, %s14
  $region7: #{vgg_block_forward.3} parent=0 // loop_footer_branch
    %13 = sbr.rel target = $region3
  $region8: #{vgg_block_forward.3} parent=0 // loop_exit
    _

// kernel: vgg_block_forward.4
$region0: #{vgg_block_forward.4}
  #allocation0 [shape = 'u32[]', space=smem, size = 0x4, offset = 0x4, fixed_abs, tag = 'smem constant byte address 0x4 - core index']
  #allocation1 [shape = 'u32[72,128]{1,0:T(1,128)}', space=vmem, size = 0x9000, scoped, tag = 'internal scratch']
  %s0 = inlined_call_operand.vmem [shape: f32[2,16,18,32], index: 0, kind: input, shape index: {}]
  %s1 = inlined_call_operand.vmem [shape: f32[2,16,18,32], index: 1, kind: input, shape index: {}]
  %s2 = inlined_call_operand.vmem [shape: f32[2,16,18,32], index: 2, kind: input, shape index: {}]
  %s3 = inlined_call_operand.vmem [shape: f32[1,32], index: 3, kind: input, shape index: {}]
  %s4 = inlined_call_operand.vmem [shape: f32[1,32], index: 4, kind: input, shape index: {}]
  %s5 = inlined_call_operand.vmem [shape: bf16[9,32,32], index: 5, kind: input, shape index: {}]
  %s6 = inlined_call_operand.vmem [shape: f32[1,32], index: 6, kind: input, shape index: {}]
  %s7 = inlined_call_operand.vmem [shape: f32[2,16,16,32], index: 7, kind: output, shape index: {0}]
  %s8 = inlined_call_operand.vmem [shape: f32[2,8,32], index: 8, kind: output, shape index: {1}]
  %s9 = inlined_call_operand.vmem [shape: f32[2,8,32], index: 9, kind: output, shape index: {2}]
  %10 = xla_tuple %s7, %s8, %s9
  %s11 = sld [smem:[#allocation0]]
  $region77: #{vgg_block_forward.4} parent=0
    _
  %s13 = ssub.s32 1, %s11
  %s14 = scalar_select 0, %s13, %s11
  loop: start=0, step=1, limit=4
  $region2: #{vgg_block_forward.4} parent=0 // loop_pre_header
    _
  $region3: #{vgg_block_forward.4} parent=0 // loop_header
    %s16 = sphi 0, %s20
    %p17 = scmp.ge.s32.totalorder %s16, 4
    %s23 = sphi 0, %s42
    %s24 = sphi 0, %s38
    %s25 = sphi 0, %s34
    %s26 = sphi 0, %s23
    %s27 = sphi 0, %s24
    %s28 = sphi 0, %s25
    %s29 = sphi 0, %s26
    %s30 = sphi 0, %s27
    %s31 = sphi 0, %s28
    %s47 = sphi 0, %s49
    %s50 = sphi 0, %s47
    %s51 = sphi 0, %s50
    %s67 = sphi 0, %s51
    %s75 = sphi 0, %s77
    %s78 = sphi 0, %s75
    %s79 = sphi 0, %s78
    %s95 = sphi 0, %s79
    %s103 = sphi 0, %s105
    %s106 = sphi 0, %s103
    %s107 = sphi 0, %s106
    %s123 = sphi 0, %s107
    %s127 = sphi 0, %s127
    %s129 = sphi 0, %s127
    %s130 = sphi 0, %s129
    %s144 = sphi 0, %s130
    %s148 = sphi 0, %s148
    %s150 = sphi 0, %s148
    %s151 = sphi 0, %s150
    %s165 = sphi 0, %s151
    %s171 = sphi 0, %s173
    %s174 = sphi 0, %s171
    %s175 = sphi 0, %s174
    %s191 = sphi 0, %s175
    %s197 = sphi 0, %s199
    %s200 = sphi 0, %s197
    %s201 = sphi 0, %s200
    %s217 = sphi 0, %s201
    %s227 = sphi 0, %s229
    %s230 = sphi 0, %s227
    %s231 = sphi 0, %s230
    %s247 = sphi 0, %s231
    %s257 = sphi 0, %s259
    %s260 = sphi 0, %s257
    %s261 = sphi 0, %s260
    %s277 = sphi 0, %s261
    %s287 = sphi 0, %s289
    %s290 = sphi 0, %s287
    %s291 = sphi 0, %s290
    %s307 = sphi 0, %s291
  $region4: #{vgg_block_forward.4} parent=0 // loop_header_branch
    %19 = sbr.rel (%p17) target = $region8
  $region5: #{vgg_block_forward.4} parent=0 // loop_body
    %s21 = ssub.s32 %s16, 1
    %s22 = ssub.s32 %s16, 2
    %s32 = sadd.s32 1, %s25
    %p33 = scmp.ge.s32.totalorder %s32, 1
    %s34 = scalar_select %p33, 0, %s32
    %s35 = sadd.s32 1, %s24
    %s36 = scalar_select %p33, %s35, %s24
    %p37 = scmp.ge.s32.totalorder %s36, 1
    %s38 = scalar_select %p37, 0, %s36
    %s39 = sadd.s32 1, %s23
    %s40 = scalar_select %p37, %s39, %s23
    %p41 = scmp.ge.s32.totalorder %s40, 2
    %s42 = scalar_select %p41, 0, %s40
    %s43 = ssub.s32 %s23, %s42
    %s44 = ssub.s32 %s24, %s38
    %s45 = sor.u32 %s43, %s44
    %p46 = scmp.eq.s32.totalorder %s45, 0
    %s48 = sadd.s32 %s47, 1
    %s49 = scalar_select %p46, %s47, %s48
    %p52 = pneg %p46
    %p53 = scmp.eq.s32.totalorder %s16, 1
    %p54 = por %p52, %p53
    %p55 = scmp.ne.s32.totalorder %s47, %s50
    %p56 = scmp.eq.s32.totalorder %s16, 0
    %p57 = por %p55, %p56
    %p58 = scmp.ne.s32.totalorder %s47, %s50
    %p59 = scmp.eq.s32.totalorder %s21, 1
    %p60 = por %p58, %p59
    %p61 = scmp.ne.s32.totalorder %s50, %s51
    %p62 = scmp.eq.s32.totalorder %s21, 0
    %p63 = por %p61, %p62
    %p64 = scmp.ne.s32.totalorder %s50, %s51
    %p65 = scmp.eq.s32.totalorder %s22, 1
    %p66 = por %p64, %p65
    %p68 = scmp.ne.s32.totalorder %s51, %s67
    %p69 = scmp.eq.s32.totalorder %s22, 0
    %p70 = por %p68, %p69
    %s71 = ssub.s32 %s23, %s42
    %s72 = ssub.s32 %s24, %s38
    %s73 = sor.u32 %s71, %s72
    %p74 = scmp.eq.s32.totalorder %s73, 0
    %s76 = sadd.s32 %s75, 1
    %s77 = scalar_select %p74, %s75, %s76
    %p80 = pneg %p74
    %p81 = scmp.eq.s32.totalorder %s16, 1
    %p82 = por %p80, %p81
    %p83 = scmp.ne.s32.totalorder %s75, %s78
    %p84 = scmp.eq.s32.totalorder %s16, 0
    %p85 = por %p83, %p84
    %p86 = scmp.ne.s32.totalorder %s75, %s78
    %p87 = scmp.eq.s32.totalorder %s21, 1
    %p88 = por %p86, %p87
    %p89 = scmp.ne.s32.totalorder %s78, %s79
    %p90 = scmp.eq.s32.totalorder %s21, 0
    %p91 = por %p89, %p90
    %p92 = scmp.ne.s32.totalorder %s78, %s79
    %p93 = scmp.eq.s32.totalorder %s22, 1
    %p94 = por %p92, %p93
    %p96 = scmp.ne.s32.totalorder %s79, %s95
    %p97 = scmp.eq.s32.totalorder %s22, 0
    %p98 = por %p96, %p97
    %s99 = ssub.s32 %s23, %s42
    %s100 = ssub.s32 %s24, %s38
    %s101 = sor.u32 %s99, %s100
    %p102 = scmp.eq.s32.totalorder %s101, 0
    %s104 = sadd.s32 %s103, 1
    %s105 = scalar_select %p102, %s103, %s104
    %p108 = pneg %p102
    %p109 = scmp.eq.s32.totalorder %s16, 1
    %p110 = por %p108, %p109
    %p111 = scmp.ne.s32.totalorder %s103, %s106
    %p112 = scmp.eq.s32.totalorder %s16, 0
    %p113 = por %p111, %p112
    %p114 = scmp.ne.s32.totalorder %s103, %s106
    %p115 = scmp.eq.s32.totalorder %s21, 1
    %p116 = por %p114, %p115
    %p117 = scmp.ne.s32.totalorder %s106, %s107
    %p118 = scmp.eq.s32.totalorder %s21, 0
    %p119 = por %p117, %p118
    %p120 = scmp.ne.s32.totalorder %s106, %s107
    %p121 = scmp.eq.s32.totalorder %s22, 1
    %p122 = por %p120, %p121
    %p124 = scmp.ne.s32.totalorder %s107, %s123
    %p125 = scmp.eq.s32.totalorder %s22, 0
    %p126 = por %p124, %p125
    %s128 = sadd.s32 %s127, 1
    %p131 = scmp.eq.s32.totalorder %s16, 1
    %p132 = scmp.ne.s32.totalorder %s127, %s129
    %p133 = scmp.eq.s32.totalorder %s16, 0
    %p134 = por %p132, %p133
    %p135 = scmp.ne.s32.totalorder %s127, %s129
    %p136 = scmp.eq.s32.totalorder %s21, 1
    %p137 = por %p135, %p136
    %p138 = scmp.ne.s32.totalorder %s129, %s130
    %p139 = scmp.eq.s32.totalorder %s21, 0
    %p140 = por %p138, %p139
    %p141 = scmp.ne.s32.totalorder %s129, %s130
    %p142 = scmp.eq.s32.totalorder %s22, 1
    %p143 = por %p141, %p142
    %p145 = scmp.ne.s32.totalorder %s130, %s144
    %p146 = scmp.eq.s32.totalorder %s22, 0
    %p147 = por %p145, %p146
    %s149 = sadd.s32 %s148, 1
    %p152 = scmp.eq.s32.totalorder %s16, 1
    %p153 = scmp.ne.s32.totalorder %s148, %s150
    %p154 = scmp.eq.s32.totalorder %s16, 0
    %p155 = por %p153, %p154
    %p156 = scmp.ne.s32.totalorder %s148, %s150
    %p157 = scmp.eq.s32.totalorder %s21, 1
    %p158 = por %p156, %p157
    %p159 = scmp.ne.s32.totalorder %s150, %s151
    %p160 = scmp.eq.s32.totalorder %s21, 0
    %p161 = por %p159, %p160
    %p162 = scmp.ne.s32.totalorder %s150, %s151
    %p163 = scmp.eq.s32.totalorder %s22, 1
    %p164 = por %p162, %p163
    %p166 = scmp.ne.s32.totalorder %s151, %s165
    %p167 = scmp.eq.s32.totalorder %s22, 0
    %p168 = por %p166, %p167
    %s169 = ssub.s32 %s25, %s34
    %p170 = scmp.eq.s32.totalorder %s169, 0
    %s172 = sadd.s32 %s171, 1
    %s173 = scalar_select %p170, %s171, %s172
    %p176 = pneg %p170
    %p177 = scmp.eq.s32.totalorder %s16, 1
    %p178 = por %p176, %p177
    %p179 = scmp.ne.s32.totalorder %s171, %s174
    %p180 = scmp.eq.s32.totalorder %s16, 0
    %p181 = por %p179, %p180
    %p182 = scmp.ne.s32.totalorder %s171, %s174
    %p183 = scmp.eq.s32.totalorder %s21, 1
    %p184 = por %p182, %p183
    %p185 = scmp.ne.s32.totalorder %s174, %s175
    %p186 = scmp.eq.s32.totalorder %s21, 0
    %p187 = por %p185, %p186
    %p188 = scmp.ne.s32.totalorder %s174, %s175
    %p189 = scmp.eq.s32.totalorder %s22, 1
    %p190 = por %p188, %p189
    %p192 = scmp.ne.s32.totalorder %s175, %s191
    %p193 = scmp.eq.s32.totalorder %s22, 0
    %p194 = por %p192, %p193
    %s195 = ssub.s32 %s25, %s34
    %p196 = scmp.eq.s32.totalorder %s195, 0
    %s198 = sadd.s32 %s197, 1
    %s199 = scalar_select %p196, %s197, %s198
    %p202 = pneg %p196
    %p203 = scmp.eq.s32.totalorder %s16, 1
    %p204 = por %p202, %p203
    %p205 = scmp.ne.s32.totalorder %s197, %s200
    %p206 = scmp.eq.s32.totalorder %s16, 0
    %p207 = por %p205, %p206
    %p208 = scmp.ne.s32.totalorder %s197, %s200
    %p209 = scmp.eq.s32.totalorder %s21, 1
    %p210 = por %p208, %p209
    %p211 = scmp.ne.s32.totalorder %s200, %s201
    %p212 = scmp.eq.s32.totalorder %s21, 0
    %p213 = por %p211, %p212
    %p214 = scmp.ne.s32.totalorder %s200, %s201
    %p215 = scmp.eq.s32.totalorder %s22, 1
    %p216 = por %p214, %p215
    %p218 = scmp.ne.s32.totalorder %s201, %s217
    %p219 = scmp.eq.s32.totalorder %s22, 0
    %p220 = por %p218, %p219
    %s221 = ssub.s32 %s23, %s42
    %s222 = ssub.s32 %s24, %s38
    %s223 = sor.u32 %s221, %s222
    %s224 = ssub.s32 %s25, %s34
    %s225 = sor.u32 %s223, %s224
    %p226 = scmp.eq.s32.totalorder %s225, 0
    %s228 = sadd.s32 %s227, 1
    %s229 = scalar_select %p226, %s227, %s228
    %p232 = pneg %p226
    %p233 = scmp.eq.s32.totalorder %s16, 1
    %p234 = por %p232, %p233
    %p235 = scmp.ne.s32.totalorder %s227, %s230
    %p236 = scmp.eq.s32.totalorder %s16, 0
    %p237 = por %p235, %p236
    %p238 = scmp.ne.s32.totalorder %s227, %s230
    %p239 = scmp.eq.s32.totalorder %s21, 1
    %p240 = por %p238, %p239
    %p241 = scmp.ne.s32.totalorder %s230, %s231
    %p242 = scmp.eq.s32.totalorder %s21, 0
    %p243 = por %p241, %p242
    %p244 = scmp.ne.s32.totalorder %s230, %s231
    %p245 = scmp.eq.s32.totalorder %s22, 1
    %p246 = por %p244, %p245
    %p248 = scmp.ne.s32.totalorder %s231, %s247
    %p249 = scmp.eq.s32.totalorder %s22, 0
    %p250 = por %p248, %p249
    %s251 = sadd.s32 %s23, %s24
    %s252 = sadd.s32 %s42, %s38
    %s253 = ssub.s32 %s251, %s252
    %s254 = ssub.s32 %s25, %s34
    %s255 = sor.u32 %s253, %s254
    %p256 = scmp.eq.s32.totalorder %s255, 0
    %s258 = sadd.s32 %s257, 1
    %s259 = scalar_select %p256, %s257, %s258
    %p262 = pneg %p256
    %p263 = scmp.eq.s32.totalorder %s16, 1
    %p264 = por %p262, %p263
    %p265 = scmp.ne.s32.totalorder %s257, %s260
    %p266 = scmp.eq.s32.totalorder %s16, 0
    %p267 = por %p265, %p266
    %p268 = scmp.ne.s32.totalorder %s257, %s260
    %p269 = scmp.eq.s32.totalorder %s21, 1
    %p270 = por %p268, %p269
    %p271 = scmp.ne.s32.totalorder %s260, %s261
    %p272 = scmp.eq.s32.totalorder %s21, 0
    %p273 = por %p271, %p272
    %p274 = scmp.ne.s32.totalorder %s260, %s261
    %p275 = scmp.eq.s32.totalorder %s22, 1
    %p276 = por %p274, %p275
    %p278 = scmp.ne.s32.totalorder %s261, %s277
    %p279 = scmp.eq.s32.totalorder %s22, 0
    %p280 = por %p278, %p279
    %s281 = sadd.s32 %s23, %s24
    %s282 = sadd.s32 %s42, %s38
    %s283 = ssub.s32 %s281, %s282
    %s284 = ssub.s32 %s25, %s34
    %s285 = sor.u32 %s283, %s284
    %p286 = scmp.eq.s32.totalorder %s285, 0
    %s288 = sadd.s32 %s287, 1
    %s289 = scalar_select %p286, %s287, %s288
    %p292 = pneg %p286
    %p293 = scmp.eq.s32.totalorder %s16, 1
    %p294 = por %p292, %p293
    %p295 = scmp.ne.s32.totalorder %s287, %s290
    %p296 = scmp.eq.s32.totalorder %s16, 0
    %p297 = por %p295, %p296
    %p298 = scmp.ne.s32.totalorder %s287, %s290
    %p299 = scmp.eq.s32.totalorder %s21, 1
    %p300 = por %p298, %p299
    %p301 = scmp.ne.s32.totalorder %s290, %s291
    %p302 = scmp.eq.s32.totalorder %s21, 0
    %p303 = por %p301, %p302
    %p304 = scmp.ne.s32.totalorder %s290, %s291
    %p305 = scmp.eq.s32.totalorder %s22, 1
    %p306 = por %p304, %p305
    %p308 = scmp.ne.s32.totalorder %s291, %s307
    %p309 = scmp.eq.s32.totalorder %s22, 0
    %p310 = por %p308, %p309
    %p311 = scmp.le.s32.totalorder 1, %s16
    %p312 = scmp.lt.s32.totalorder %s16, 3
    %p313 = pnand %p311, %p312
    %p314 = pneg %p313
    // Predicated region
    $region9: #{vgg_block_forward.4} parent=5 // pred_check
      _
    $region10: #{vgg_block_forward.4} parent=5 // pred_check_branch
      %316 = sbr.rel (%p313) target = $region12
    $region11: #{vgg_block_forward.4} parent=5 // pred_region
      %s317 = ssub.s32 %s16, 1
      // Predicated region
      $region13: #{vgg_block_forward.4} parent=11 // pred_check
        %p318 = pneg %p140
      $region14: #{vgg_block_forward.4} parent=11 // pred_check_branch
        %320 = sbr.rel (%p318) target = $region16
      $region15: #{vgg_block_forward.4} parent=11 // pred_region
        _
      $region16: #{vgg_block_forward.4} parent=11 // pred_fallthru
        _
      // Predicated region
      $region17: #{vgg_block_forward.4} parent=11 // pred_check
        %p321 = pneg %p161
      $region18: #{vgg_block_forward.4} parent=11 // pred_check_branch
        %323 = sbr.rel (%p321) target = $region20
      $region19: #{vgg_block_forward.4} parent=11 // pred_region
        _
      $region20: #{vgg_block_forward.4} parent=11 // pred_fallthru
        _
      // Predicated region
      $region21: #{vgg_block_forward.4} parent=11 // pred_check
        %p324 = pneg %p187
      $region22: #{vgg_block_forward.4} parent=11 // pred_check_branch
        %326 = sbr.rel (%p324) target = $region24
      $region23: #{vgg_block_forward.4} parent=11 // pred_region
        %p327 = scmp.lt.s32.totalorder %s28, 0
        %s328 = scalar_select %p327, %s28, 0
        %s329 = smul.addr %s328, 4
        %s330 = scalar_lea.vmem %s5, %s329
      $region24: #{vgg_block_forward.4} parent=11 // pred_fallthru
        _
      // Predicated region
      $region25: #{vgg_block_forward.4} parent=11 // pred_check
        %p331 = pneg %p213
      $region26: #{vgg_block_forward.4} parent=11 // pred_check_branch
        %333 = sbr.rel (%p331) target = $region28
      $region27: #{vgg_block_forward.4} parent=11 // pred_region
        %p334 = scmp.lt.s32.totalorder %s28, 0
        %s335 = scalar_select %p334, %s28, 0
        %s336 = scalar_lea.vmem %s6, %s335
      $region28: #{vgg_block_forward.4} parent=11 // pred_fallthru
        _
    $region12: #{vgg_block_forward.4} parent=5 // pred_fallthru
      _
    %p337 = scmp.lt.s32.totalorder %s16, 2
    // Predicated region
    $region29: #{vgg_block_forward.4} parent=5 // pred_check
      %p338 = pneg %p337
    $region30: #{vgg_block_forward.4} parent=5 // pred_check_branch
      %340 = sbr.rel (%p338) target = $region32
    $region31: #{vgg_block_forward.4} parent=5 // pred_region
      // Predicated region
      $region33: #{vgg_block_forward.4} parent=31 // pred_check
        %p341 = pneg %p57
      $region34: #{vgg_block_forward.4} parent=31 // pred_check_branch
        %343 = sbr.rel (%p341) target = $region36
      $region35: #{vgg_block_forward.4} parent=31 // pred_region
        %s344 = smul.u32 16, %s24
        %p345 = scmp.lt.s32.totalorder %s23, 1
        %s346 = scalar_select %p345, %s23, 1
        %p347 = scmp.lt.s32.totalorder %s344, 15
        %s348 = scalar_select %p347, %s344, 15
        %s349 = smul.addr %s348, 3
        %s350 = smul.addr %s346, 48
        %s351 = sadd.s32 %s349, %s350
        %s352 = smul.addr %s351, 8
        %s353 = scalar_lea.vmem %s0, %s352
        %s354 = smul.u32 16, %s24
      $region36: #{vgg_block_forward.4} parent=31 // pred_fallthru
        _
      // Predicated region
      $region37: #{vgg_block_forward.4} parent=31 // pred_check
        %p355 = pneg %p85
      $region38: #{vgg_block_forward.4} parent=31 // pred_check_branch
        %357 = sbr.rel (%p355) target = $region40
      $region39: #{vgg_block_forward.4} parent=31 // pred_region
        %s358 = smul.u32 16, %s24
        %p359 = scmp.lt.s32.totalorder %s23, 1
        %s360 = scalar_select %p359, %s23, 1
        %p361 = scmp.lt.s32.totalorder %s358, 15
        %s362 = scalar_select %p361, %s358, 15
        %s363 = smul.addr %s362, 3
        %s364 = smul.addr %s360, 48
        %s365 = sadd.s32 %s363, %s364
        %s366 = smul.addr %s365, 8
        %s367 = scalar_lea.vmem %s1, %s366
        %s368 = smul.u32 16, %s24
      $region40: #{vgg_block_forward.4} parent=31 // pred_fallthru
        _
      // Predicated region
      $region41: #{vgg_block_forward.4} parent=31 // pred_check
        %p369 = pneg %p113
      $region42: #{vgg_block_forward.4} parent=31 // pred_check_branch
        %371 = sbr.rel (%p369) target = $region44
      $region43: #{vgg_block_forward.4} parent=31 // pred_region
        %s372 = smul.u32 16, %s24
        %p373 = scmp.lt.s32.totalorder %s23, 1
        %s374 = scalar_select %p373, %s23, 1
        %p375 = scmp.lt.s32.totalorder %s372, 15
        %s376 = scalar_select %p375, %s372, 15
        %s377 = smul.addr %s376, 3
        %s378 = smul.addr %s374, 48
        %s379 = sadd.s32 %s377, %s378
        %s380 = smul.addr %s379, 8
        %s381 = scalar_lea.vmem %s2, %s380
        %s382 = smul.u32 16, %s24
      $region44: #{vgg_block_forward.4} parent=31 // pred_fallthru
        _
    $region32: #{vgg_block_forward.4} parent=5 // pred_fallthru
      _
    %p383 = scmp.le.s32.totalorder 1, %s16
    %p384 = scmp.lt.s32.totalorder %s16, 3
    %p385 = pnand %p383, %p384
    %p386 = pneg %p385
    // Predicated region
    $region45: #{vgg_block_forward.4} parent=5 // pred_check
      _
    $region46: #{vgg_block_forward.4} parent=5 // pred_check_branch
      %388 = sbr.rel (%p385) target = $region48
    $region47: #{vgg_block_forward.4} parent=5 // pred_region
      %s389 = ssub.s32 %s16, 1
      %s390 = smul.u32 16, %s27
      %p391 = scmp.lt.s32.totalorder %s26, 1
      %s392 = scalar_select %p391, %s26, 1
      %p393 = scmp.lt.s32.totalorder %s390, 15
      %s394 = scalar_select %p393, %s390, 15
      %s395 = smul.addr %s394, 3
      %s396 = smul.addr %s392, 48
      %s397 = sadd.s32 %s395, %s396
      %s398 = smul.addr %s397, 8
      %s399 = scalar_lea.vmem %s0, %s398
      %p400 = pneg %p63
      %p401 = pneg %p60
      %s402 = smul.u32 16, %s27
      %p403 = scmp.lt.s32.totalorder %s26, 1
      %s404 = scalar_select %p403, %s26, 1
      %p405 = scmp.lt.s32.totalorder %s402, 15
      %s406 = scalar_select %p405, %s402, 15
      %s407 = smul.addr %s406, 3
      %s408 = smul.addr %s404, 48
      %s409 = sadd.s32 %s407, %s408
      %s410 = smul.addr %s409, 8
      %s411 = scalar_lea.vmem %s1, %s410
      %p412 = pneg %p91
      %p413 = pneg %p88
      %s414 = smul.u32 16, %s27
      %p415 = scmp.lt.s32.totalorder %s26, 1
      %s416 = scalar_select %p415, %s26, 1
      %p417 = scmp.lt.s32.totalorder %s414, 15
      %s418 = scalar_select %p417, %s414, 15
      %s419 = smul.addr %s418, 3
      %s420 = smul.addr %s416, 48
      %s421 = sadd.s32 %s419, %s420
      %s422 = smul.addr %s421, 8
      %s423 = scalar_lea.vmem %s2, %s422
      %p424 = pneg %p119
      %p425 = pneg %p116
      %p426 = pneg %p140
      %p427 = pneg %p137
      %p428 = pneg %p161
      %p429 = pneg %p158
      %p430 = scmp.lt.s32.totalorder %s28, 0
      %s431 = scalar_select %p430, %s28, 0
      %s432 = smul.addr %s431, 4
      %s433 = scalar_lea.vmem %s5, %s432
      %p434 = pneg %p187
      %p435 = pneg %p184
      %p436 = scmp.lt.s32.totalorder %s28, 0
      %s437 = scalar_select %p436, %s28, 0
      %s438 = scalar_lea.vmem %s6, %s437
      %p439 = pneg %p213
      %p440 = pneg %p210
      %p441 = pneg %p243
      %p442 = pneg %p240
      %s443 = smul.u32 16, %s27
      %p444 = scmp.lt.s32.totalorder %s26, 1
      %s445 = scalar_select %p444, %s26, 1
      %p446 = scmp.lt.s32.totalorder %s443, 15
      %s447 = scalar_select %p446, %s443, 15
      %p448 = scmp.lt.s32.totalorder %s28, 0
      %s449 = scalar_select %p448, %s28, 0
      %s450 = smul.addr %s447, 2
      %s451 = sadd.s32 %s449, %s450
      %s452 = smul.addr %s445, 32
      %s453 = sadd.s32 %s451, %s452
      %s454 = smul.addr %s453, 8
      %s455 = scalar_lea.vmem %s7, %s454
      %p456 = pneg %p273
      %p457 = pneg %p270
      %s458 = sadd.s32 %s26, %s27
      %p459 = scmp.lt.s32.totalorder %s458, 1
      %s460 = scalar_select %p459, %s458, 1
      %p461 = scmp.lt.s32.totalorder %s28, 0
      %s462 = scalar_select %p461, %s28, 0
      %s463 = sadd.s32 %s462, %s460
      %s464 = smul.addr %s463, 8
      %s465 = scalar_lea.vmem %s8, %s464
      %p466 = pneg %p303
      %p467 = pneg %p300
      %s468 = sadd.s32 %s26, %s27
      %p469 = scmp.lt.s32.totalorder %s468, 1
      %s470 = scalar_select %p469, %s468, 1
      %p471 = scmp.lt.s32.totalorder %s28, 0
      %s472 = scalar_select %p471, %s28, 0
      %s473 = sadd.s32 %s472, %s470
      %s474 = smul.addr %s473, 8
      %s475 = scalar_lea.vmem %s9, %s474
      %s476 = smul.u32 16, %s27
      %p477 = scmp.lt.s32.totalorder %s26, 1
      %s478 = scalar_select %p477, %s26, 1
      %p479 = scmp.lt.s32.totalorder %s476, 15
      %s480 = scalar_select %p479, %s476, 15
      %s481 = smul.addr %s480, 3
      %s482 = smul.addr %s478, 48
      %s483 = sadd.s32 %s481, %s482
      %s484 = smul.addr %s483, 8
      %s485 = scalar_lea.vmem %s0, %s484
      %s486 = smul.u32 16, %s27
      %s487 = smul.u32 16, %s27
      %p488 = scmp.lt.s32.totalorder %s26, 1
      %s489 = scalar_select %p488, %s26, 1
      %p490 = scmp.lt.s32.totalorder %s487, 15
      %s491 = scalar_select %p490, %s487, 15
      %s492 = smul.addr %s491, 3
      %s493 = smul.addr %s489, 48
      %s494 = sadd.s32 %s492, %s493
      %s495 = smul.addr %s494, 8
      %s496 = scalar_lea.vmem %s1, %s495
      %s497 = smul.u32 16, %s27
      %s498 = smul.u32 16, %s27
      %p499 = scmp.lt.s32.totalorder %s26, 1
      %s500 = scalar_select %p499, %s26, 1
      %p501 = scmp.lt.s32.totalorder %s498, 15
      %s502 = scalar_select %p501, %s498, 15
      %s503 = smul.addr %s502, 3
      %s504 = smul.addr %s500, 48
      %s505 = sadd.s32 %s503, %s504
      %s506 = smul.addr %s505, 8
      %s507 = scalar_lea.vmem %s2, %s506
      %s508 = smul.u32 16, %s27
      %p509 = scmp.lt.s32.totalorder %s28, 0
      %s510 = scalar_select %p509, %s28, 0
      %s511 = smul.addr %s510, 4
      %s512 = scalar_lea.vmem %s5, %s511
      %p513 = scmp.lt.s32.totalorder %s28, 0
      %s514 = scalar_select %p513, %s28, 0
      %s515 = scalar_lea.vmem %s6, %s514
      %s516 = smul.u32 16, %s27
      %p517 = scmp.lt.s32.totalorder %s26, 1
      %s518 = scalar_select %p517, %s26, 1
      %p519 = scmp.lt.s32.totalorder %s516, 15
      %s520 = scalar_select %p519, %s516, 15
      %p521 = scmp.lt.s32.totalorder %s28, 0
      %s522 = scalar_select %p521, %s28, 0
      %s523 = smul.addr %s520, 2
      %s524 = sadd.s32 %s522, %s523
      %s525 = smul.addr %s518, 32
      %s526 = sadd.s32 %s524, %s525
      %s527 = smul.addr %s526, 8
      %s528 = scalar_lea.vmem %s7, %s527
      %s529 = smul.u32 16, %s27
      %s530 = sadd.s32 %s26, %s27
      %p531 = scmp.lt.s32.totalorder %s530, 1
      %s532 = scalar_select %p531, %s530, 1
      %p533 = scmp.lt.s32.totalorder %s28, 0
      %s534 = scalar_select %p533, %s28, 0
      %s535 = sadd.s32 %s534, %s532
      %s536 = smul.addr %s535, 8
      %s537 = scalar_lea.vmem %s8, %s536
      %s538 = sadd.s32 %s26, %s27
      %s539 = sadd.s32 %s26, %s27
      %p540 = scmp.lt.s32.totalorder %s539, 1
      %s541 = scalar_select %p540, %s539, 1
      %p542 = scmp.lt.s32.totalorder %s28, 0
      %s543 = scalar_select %p542, %s28, 0
      %s544 = sadd.s32 %s543, %s541
      %s545 = smul.addr %s544, 8
      %s546 = scalar_lea.vmem %s9, %s545
      %s547 = sadd.s32 %s26, %s27
      %v549 = vld [vmem:[%s3] sm:$0x1]
      %v550 = vld [vmem:[%s4] sm:$0x1]
      %v551 = vld [vmem:[%s485] sm:$0xff]
      %v552 = vld [vmem:[%s485 + $0x8] sm:$0xff]
      %v553 = vld [vmem:[%s485 + $0x10] sm:$0x3]
      %v554 = vld [vmem:[%s485 + $0x18] sm:$0xff]
      %v555 = vld [vmem:[%s485 + $0x20] sm:$0xff]
      %v556 = vld [vmem:[%s485 + $0x28] sm:$0x3]
      %v557 = vld [vmem:[%s485 + $0x30] sm:$0xff]
      %v558 = vld [vmem:[%s485 + $0x38] sm:$0xff]
      %v559 = vld [vmem:[%s485 + $0x40] sm:$0x3]
      %v560 = vld [vmem:[%s485 + $0x48] sm:$0xff]
      %v561 = vld [vmem:[%s485 + $0x50] sm:$0xff]
      %v562 = vld [vmem:[%s485 + $0x58] sm:$0x3]
      %v563 = vld [vmem:[%s485 + $0x60] sm:$0xff]
      %v564 = vld [vmem:[%s485 + $0x68] sm:$0xff]
      %v565 = vld [vmem:[%s485 + $0x70] sm:$0x3]
      %v566 = vld [vmem:[%s485 + $0x78] sm:$0xff]
      %v567 = vld [vmem:[%s485 + $0x80] sm:$0xff]
      %v568 = vld [vmem:[%s485 + $0x88] sm:$0x3]
      %v569 = vld [vmem:[%s485 + $0x90] sm:$0xff]
      %v570 = vld [vmem:[%s485 + $0x98] sm:$0xff]
      %v571 = vld [vmem:[%s485 + $0xa0] sm:$0x3]
      %v572 = vld [vmem:[%s485 + $0xa8] sm:$0xff]
      %v573 = vld [vmem:[%s485 + $0xb0] sm:$0xff]
      %v574 = vld [vmem:[%s485 + $0xb8] sm:$0x3]
      %v575 = vld [vmem:[%s485 + $0xc0] sm:$0xff]
      %v576 = vld [vmem:[%s485 + $0xc8] sm:$0xff]
      %v577 = vld [vmem:[%s485 + $0xd0] sm:$0x3]
      %v578 = vld [vmem:[%s485 + $0xd8] sm:$0xff]
      %v579 = vld [vmem:[%s485 + $0xe0] sm:$0xff]
      %v580 = vld [vmem:[%s485 + $0xe8] sm:$0x3]
      %v581 = vld [vmem:[%s485 + $0xf0] sm:$0xff]
      %v582 = vld [vmem:[%s485 + $0xf8] sm:$0xff]
      %v583 = vld [vmem:[%s485 + $0x100] sm:$0x3]
      %v584 = vld [vmem:[%s485 + $0x108] sm:$0xff]
      %v585 = vld [vmem:[%s485 + $0x110] sm:$0xff]
      %v586 = vld [vmem:[%s485 + $0x118] sm:$0x3]
      %v587 = vld [vmem:[%s485 + $0x120] sm:$0xff]
      %v588 = vld [vmem:[%s485 + $0x128] sm:$0xff]
      %v589 = vld [vmem:[%s485 + $0x130] sm:$0x3]
      %v590 = vld [vmem:[%s485 + $0x138] sm:$0xff]
      %v591 = vld [vmem:[%s485 + $0x140] sm:$0xff]
      %v592 = vld [vmem:[%s485 + $0x148] sm:$0x3]
      %v593 = vld [vmem:[%s485 + $0x150] sm:$0xff]
      %v594 = vld [vmem:[%s485 + $0x158] sm:$0xff]
      %v595 = vld [vmem:[%s485 + $0x160] sm:$0x3]
      %v596 = vld [vmem:[%s485 + $0x168] sm:$0xff]
      %v597 = vld [vmem:[%s485 + $0x170] sm:$0xff]
      %v598 = vld [vmem:[%s485 + $0x178] sm:$0x3]
      %v600 = vperm.slane %v549, 0
      %v602 = vmul.f32 %v551, %v600
      %v603 = vmul.f32 %v552, %v600
      %v604 = vmul.f32 %v553, %v600
      %v605 = vmul.f32 %v554, %v600
      %v606 = vmul.f32 %v555, %v600
      %v607 = vmul.f32 %v556, %v600
      %v608 = vmul.f32 %v557, %v600
      %v609 = vmul.f32 %v558, %v600
      %v610 = vmul.f32 %v559, %v600
      %v611 = vmul.f32 %v560, %v600
      %v612 = vmul.f32 %v561, %v600
      %v613 = vmul.f32 %v562, %v600
      %v614 = vmul.f32 %v563, %v600
      %v615 = vmul.f32 %v564, %v600
      %v616 = vmul.f32 %v565, %v600
      %v617 = vmul.f32 %v566, %v600
      %v618 = vmul.f32 %v567, %v600
      %v619 = vmul.f32 %v568, %v600
      %v620 = vmul.f32 %v569, %v600
      %v621 = vmul.f32 %v570, %v600
      %v622 = vmul.f32 %v571, %v600
      %v623 = vmul.f32 %v572, %v600
      %v624 = vmul.f32 %v573, %v600
      %v625 = vmul.f32 %v574, %v600
      %v626 = vmul.f32 %v575, %v600
      %v627 = vmul.f32 %v576, %v600
      %v628 = vmul.f32 %v577, %v600
      %v629 = vmul.f32 %v578, %v600
      %v630 = vmul.f32 %v579, %v600
      %v631 = vmul.f32 %v580, %v600
      %v632 = vmul.f32 %v581, %v600
      %v633 = vmul.f32 %v582, %v600
      %v634 = vmul.f32 %v583, %v600
      %v635 = vmul.f32 %v584, %v600
      %v636 = vmul.f32 %v585, %v600
      %v637 = vmul.f32 %v586, %v600
      %v638 = vmul.f32 %v587, %v600
      %v639 = vmul.f32 %v588, %v600
      %v640 = vmul.f32 %v589, %v600
      %v641 = vmul.f32 %v590, %v600
      %v642 = vmul.f32 %v591, %v600
      %v643 = vmul.f32 %v592, %v600
      %v644 = vmul.f32 %v593, %v600
      %v645 = vmul.f32 %v594, %v600
      %v646 = vmul.f32 %v595, %v600
      %v647 = vmul.f32 %v596, %v600
      %v648 = vmul.f32 %v597, %v600
      %v649 = vmul.f32 %v598, %v600
      %v651 = vperm.slane %v550, 0
      %v653 = vadd.f32 %v602, %v651
      %v654 = vadd.f32 %v603, %v651
      %v655 = vadd.f32 %v604, %v651
      %v656 = vadd.f32 %v605, %v651
      %v657 = vadd.f32 %v606, %v651
      %v658 = vadd.f32 %v607, %v651
      %v659 = vadd.f32 %v608, %v651
      %v660 = vadd.f32 %v609, %v651
      %v661 = vadd.f32 %v610, %v651
      %v662 = vadd.f32 %v611, %v651
      %v663 = vadd.f32 %v612, %v651
      %v664 = vadd.f32 %v613, %v651
      %v665 = vadd.f32 %v614, %v651
      %v666 = vadd.f32 %v615, %v651
      %v667 = vadd.f32 %v616, %v651
      %v668 = vadd.f32 %v617, %v651
      %v669 = vadd.f32 %v618, %v651
      %v670 = vadd.f32 %v619, %v651
      %v671 = vadd.f32 %v620, %v651
      %v672 = vadd.f32 %v621, %v651
      %v673 = vadd.f32 %v622, %v651
      %v674 = vadd.f32 %v623, %v651
      %v675 = vadd.f32 %v624, %v651
      %v676 = vadd.f32 %v625, %v651
      %v677 = vadd.f32 %v626, %v651
      %v678 = vadd.f32 %v627, %v651
      %v679 = vadd.f32 %v628, %v651
      %v680 = vadd.f32 %v629, %v651
      %v681 = vadd.f32 %v630, %v651
      %v682 = vadd.f32 %v631, %v651
      %v683 = vadd.f32 %v632, %v651
      %v684 = vadd.f32 %v633, %v651
      %v685 = vadd.f32 %v634, %v651
      %v686 = vadd.f32 %v635, %v651
      %v687 = vadd.f32 %v636, %v651
      %v688 = vadd.f32 %v637, %v651
      %v689 = vadd.f32 %v638, %v651
      %v690 = vadd.f32 %v639, %v651
      %v691 = vadd.f32 %v640, %v651
      %v692 = vadd.f32 %v641, %v651
      %v693 = vadd.f32 %v642, %v651
      %v694 = vadd.f32 %v643, %v651
      %v695 = vadd.f32 %v644, %v651
      %v696 = vadd.f32 %v645, %v651
      %v697 = vadd.f32 %v646, %v651
      %v698 = vadd.f32 %v647, %v651
      %v699 = vadd.f32 %v648, %v651
      %v700 = vadd.f32 %v649, %v651
      %v701 = vmax.f32 %v653, 0.0
      %v702 = vmax.f32 %v654, 0.0
      %v703 = vmax.f32 %v655, 0.0
      %v704 = vmax.f32 %v656, 0.0
      %v705 = vmax.f32 %v657, 0.0
      %v706 = vmax.f32 %v658, 0.0
      %v707 = vmax.f32 %v659, 0.0
      %v708 = vmax.f32 %v660, 0.0
      %v709 = vmax.f32 %v661, 0.0
      %v710 = vmax.f32 %v662, 0.0
      %v711 = vmax.f32 %v663, 0.0
      %v712 = vmax.f32 %v664, 0.0
      %v713 = vmax.f32 %v665, 0.0
      %v714 = vmax.f32 %v666, 0.0
      %v715 = vmax.f32 %v667, 0.0
      %v716 = vmax.f32 %v668, 0.0
      %v717 = vmax.f32 %v669, 0.0
      %v718 = vmax.f32 %v670, 0.0
      %v719 = vmax.f32 %v671, 0.0
      %v720 = vmax.f32 %v672, 0.0
      %v721 = vmax.f32 %v673, 0.0
      %v722 = vmax.f32 %v674, 0.0
      %v723 = vmax.f32 %v675, 0.0
      %v724 = vmax.f32 %v676, 0.0
      %v725 = vmax.f32 %v677, 0.0
      %v726 = vmax.f32 %v678, 0.0
      %v727 = vmax.f32 %v679, 0.0
      %v728 = vmax.f32 %v680, 0.0
      %v729 = vmax.f32 %v681, 0.0
      %v730 = vmax.f32 %v682, 0.0
      %v731 = vmax.f32 %v683, 0.0
      %v732 = vmax.f32 %v684, 0.0
      %v733 = vmax.f32 %v685, 0.0
      %v734 = vmax.f32 %v686, 0.0
      %v735 = vmax.f32 %v687, 0.0
      %v736 = vmax.f32 %v688, 0.0
      %v737 = vmax.f32 %v689, 0.0
      %v738 = vmax.f32 %v690, 0.0
      %v739 = vmax.f32 %v691, 0.0
      %v740 = vmax.f32 %v692, 0.0
      %v741 = vmax.f32 %v693, 0.0
      %v742 = vmax.f32 %v694, 0.0
      %v743 = vmax.f32 %v695, 0.0
      %v744 = vmax.f32 %v696, 0.0
      %v745 = vmax.f32 %v697, 0.0
      %v746 = vmax.f32 %v698, 0.0
      %v747 = vmax.f32 %v699, 0.0
      %v748 = vmax.f32 %v700, 0.0
      %v749 = vlaneseq
      %v750 = vshrl.u32 %v749, 7
      %v751 = vadd.s32 %v750, 8
      %v752 = vadd.s32 %v750, 16
      %s753 = smul.u32 %s27, 16
      %v754 = vstv %s753
      %v755 = vadd.s32 %v754, 1
      %v756 = vadd.s32 %v754, 2
      %v757 = vadd.s32 %v754, 3
      %v758 = vadd.s32 %v754, 4
      %v759 = vadd.s32 %v754, 5
      %v760 = vadd.s32 %v754, 6
      %v761 = vadd.s32 %v754, 7
      %v762 = vadd.s32 %v754, 8
      %v763 = vadd.s32 %v754, 9
      %v764 = vadd.s32 %v754, 10
      %v765 = vadd.s32 %v754, 11
      %v766 = vadd.s32 %v754, 12
      %v767 = vadd.s32 %v754, 13
      %v768 = vadd.s32 %v754, 14
      %v769 = vadd.s32 %v754, 15
      %vm770 = vcmp.ge.s32.totalorder %v750, 1
      %vm771 = vcmp.ge.s32.totalorder %v751, 1
      %vm772 = vcmp.ge.s32.totalorder %v752, 1
      %vm773 = vcmp.le.s32.totalorder %v750, 16
      %vm774 = vcmp.le.s32.totalorder %v751, 16
      %vm775 = vcmp.le.s32.totalorder %v752, 16
      %vm776 = vmand %vm770, %vm773
      %vm777 = vmand %vm771, %vm774
      %vm778 = vmand %vm772, %vm775
      %vm779 = vcmp.ge.s32.totalorder %v754, 1
      %vm780 = vcmp.ge.s32.totalorder %v755, 1
      %vm781 = vcmp.ge.s32.totalorder %v756, 1
      %vm782 = vcmp.ge.s32.totalorder %v757, 1
      %vm783 = vcmp.ge.s32.totalorder %v758, 1
      %vm784 = vcmp.ge.s32.totalorder %v759, 1
      %vm785 = vcmp.ge.s32.totalorder %v760, 1
      %vm786 = vcmp.ge.s32.totalorder %v761, 1
      %vm787 = vcmp.ge.s32.totalorder %v762, 1
      %vm788 = vcmp.ge.s32.totalorder %v763, 1
      %vm789 = vcmp.ge.s32.totalorder %v764, 1
      %vm790 = vcmp.ge.s32.totalorder %v765, 1
      %vm791 = vcmp.ge.s32.totalorder %v766, 1
      %vm792 = vcmp.ge.s32.totalorder %v767, 1
      %vm793 = vcmp.ge.s32.totalorder %v768, 1
      %vm794 = vcmp.ge.s32.totalorder %v769, 1
      %vm795 = vmand %vm776, %vm779
      %vm796 = vmand %vm777, %vm779
      %vm797 = vmand %vm778, %vm779
      %vm798 = vmand %vm776, %vm780
      %vm799 = vmand %vm777, %vm780
      %vm800 = vmand %vm778, %vm780
      %vm801 = vmand %vm776, %vm781
      %vm802 = vmand %vm777, %vm781
      %vm803 = vmand %vm778, %vm781
      %vm804 = vmand %vm776, %vm782
      %vm805 = vmand %vm777, %vm782
      %vm806 = vmand %vm778, %vm782
      %vm807 = vmand %vm776, %vm783
      %vm808 = vmand %vm777, %vm783
      %vm809 = vmand %vm778, %vm783
      %vm810 = vmand %vm776, %vm784
      %vm811 = vmand %vm777, %vm784
      %vm812 = vmand %vm778, %vm784
      %vm813 = vmand %vm776, %vm785
      %vm814 = vmand %vm777, %vm785
      %vm815 = vmand %vm778, %vm785
      %vm816 = vmand %vm776, %vm786
      %vm817 = vmand %vm777, %vm786
      %vm818 = vmand %vm778, %vm786
      %vm819 = vmand %vm776, %vm787
      %vm820 = vmand %vm777, %vm787
      %vm821 = vmand %vm778, %vm787
      %vm822 = vmand %vm776, %vm788
      %vm823 = vmand %vm777, %vm788
      %vm824 = vmand %vm778, %vm788
      %vm825 = vmand %vm776, %vm789
      %vm826 = vmand %vm777, %vm789
      %vm827 = vmand %vm778, %vm789
      %vm828 = vmand %vm776, %vm790
      %vm829 = vmand %vm777, %vm790
      %vm830 = vmand %vm778, %vm790
      %vm831 = vmand %vm776, %vm791
      %vm832 = vmand %vm777, %vm791
      %vm833 = vmand %vm778, %vm791
      %vm834 = vmand %vm776, %vm792
      %vm835 = vmand %vm777, %vm792
      %vm836 = vmand %vm778, %vm792
      %vm837 = vmand %vm776, %vm793
      %vm838 = vmand %vm777, %vm793
      %vm839 = vmand %vm778, %vm793
      %vm840 = vmand %vm776, %vm794
      %vm841 = vmand %vm777, %vm794
      %vm842 = vmand %vm778, %vm794
      %vm843 = vcmp.le.s32.totalorder %v754, 16
      %vm844 = vcmp.le.s32.totalorder %v755, 16
      %vm845 = vcmp.le.s32.totalorder %v756, 16
      %vm846 = vcmp.le.s32.totalorder %v757, 16
      %vm847 = vcmp.le.s32.totalorder %v758, 16
      %vm848 = vcmp.le.s32.totalorder %v759, 16
      %vm849 = vcmp.le.s32.totalorder %v760, 16
      %vm850 = vcmp.le.s32.totalorder %v761, 16
      %vm851 = vcmp.le.s32.totalorder %v762, 16
      %vm852 = vcmp.le.s32.totalorder %v763, 16
      %vm853 = vcmp.le.s32.totalorder %v764, 16
      %vm854 = vcmp.le.s32.totalorder %v765, 16
      %vm855 = vcmp.le.s32.totalorder %v766, 16
      %vm856 = vcmp.le.s32.totalorder %v767, 16
      %vm857 = vcmp.le.s32.totalorder %v768, 16
      %vm858 = vcmp.le.s32.totalorder %v769, 16
      %vm859 = vmand %vm795, %vm843
      %vm860 = vmand %vm796, %vm843
      %vm861 = vmand %vm797, %vm843
      %vm862 = vmand %vm798, %vm844
      %vm863 = vmand %vm799, %vm844
      %vm864 = vmand %vm800, %vm844
      %vm865 = vmand %vm801, %vm845
      %vm866 = vmand %vm802, %vm845
      %vm867 = vmand %vm803, %vm845
      %vm868 = vmand %vm804, %vm846
      %vm869 = vmand %vm805, %vm846
      %vm870 = vmand %vm806, %vm846
      %vm871 = vmand %vm807, %vm847
      %vm872 = vmand %vm808, %vm847
      %vm873 = vmand %vm809, %vm847
      %vm874 = vmand %vm810, %vm848
      %vm875 = vmand %vm811, %vm848
      %vm876 = vmand %vm812, %vm848
      %vm877 = vmand %vm813, %vm849
      %vm878 = vmand %vm814, %vm849
      %vm879 = vmand %vm815, %vm849
      %vm880 = vmand %vm816, %vm850
      %vm881 = vmand %vm817, %vm850
      %vm882 = vmand %vm818, %vm850
      %vm883 = vmand %vm819, %vm851
      %vm884 = vmand %vm820, %vm851
      %vm885 = vmand %vm821, %vm851
      %vm886 = vmand %vm822, %vm852
      %vm887 = vmand %vm823, %vm852
      %vm888 = vmand %vm824, %vm852
      %vm889 = vmand %vm825, %vm853
      %vm890 = vmand %vm826, %vm853
      %vm891 = vmand %vm827, %vm853
      %vm892 = vmand %vm828, %vm854
      %vm893 = vmand %vm829, %vm854
      %vm894 = vmand %vm830, %vm854
      %vm895 = vmand %vm831, %vm855
      %vm896 = vmand %vm832, %vm855
      %vm897 = vmand %vm833, %vm855
      %vm898 = vmand %vm834, %vm856
      %vm899 = vmand %vm835, %vm856
      %vm900 = vmand %vm836, %vm856
      %vm901 = vmand %vm837, %vm857
      %vm902 = vmand %vm838, %vm857
      %vm903 = vmand %vm839, %vm857
      %vm904 = vmand %vm840, %vm858
      %vm905 = vmand %vm841, %vm858
      %vm906 = vmand %vm842, %vm858
      %v907 = vsel %vm859, %v701, 0.0
      %v908 = vsel %vm860, %v702, 0.0
      %v909 = vsel %vm861, %v703, 0.0
      %v910 = vsel %vm862, %v704, 0.0
      %v911 = vsel %vm863, %v705, 0.0
      %v912 = vsel %vm864, %v706, 0.0
      %v913 = vsel %vm865, %v707, 0.0
      %v914 = vsel %vm866, %v708, 0.0
      %v915 = vsel %vm867, %v709, 0.0
      %v916 = vsel %vm868, %v710, 0.0
      %v917 = vsel %vm869, %v711, 0.0
      %v918 = vsel %vm870, %v712, 0.0
      %v919 = vsel %vm871, %v713, 0.0
      %v920 = vsel %vm872, %v714, 0.0
      %v921 = vsel %vm873, %v715, 0.0
      %v922 = vsel %vm874, %v716, 0.0
      %v923 = vsel %vm875, %v717, 0.0
      %v924 = vsel %vm876, %v718, 0.0
      %v925 = vsel %vm877, %v719, 0.0
      %v926 = vsel %vm878, %v720, 0.0
      %v927 = vsel %vm879, %v721, 0.0
      %v928 = vsel %vm880, %v722, 0.0
      %v929 = vsel %vm881, %v723, 0.0
      %v930 = vsel %vm882, %v724, 0.0
      %v931 = vsel %vm883, %v725, 0.0
      %v932 = vsel %vm884, %v726, 0.0
      %v933 = vsel %vm885, %v727, 0.0
      %v934 = vsel %vm886, %v728, 0.0
      %v935 = vsel %vm887, %v729, 0.0
      %v936 = vsel %vm888, %v730, 0.0
      %v937 = vsel %vm889, %v731, 0.0
      %v938 = vsel %vm890, %v732, 0.0
      %v939 = vsel %vm891, %v733, 0.0
      %v940 = vsel %vm892, %v734, 0.0
      %v941 = vsel %vm893, %v735, 0.0
      %v942 = vsel %vm894, %v736, 0.0
      %v943 = vsel %vm895, %v737, 0.0
      %v944 = vsel %vm896, %v738, 0.0
      %v945 = vsel %vm897, %v739, 0.0
      %v946 = vsel %vm898, %v740, 0.0
      %v947 = vsel %vm899, %v741, 0.0
      %v948 = vsel %vm900, %v742, 0.0
      %v949 = vsel %vm901, %v743, 0.0
      %v950 = vsel %vm902, %v744, 0.0
      %v951 = vsel %vm903, %v745, 0.0
      %v952 = vsel %vm904, %v746, 0.0
      %v953 = vsel %vm905, %v747, 0.0
      %v954 = vsel %vm906, %v748, 0.0
      %v955 = vpack.c.bf16 %v907, %v907
      %v956 = vpack.c.bf16 %v908, %v908
      %v957 = vpack.c.bf16 %v909, %v909
      %v958 = vpack.c.bf16 %v910, %v910
      %v959 = vpack.c.bf16 %v911, %v911
      %v960 = vpack.c.bf16 %v912, %v912
      %v961 = vpack.c.bf16 %v913, %v913
      %v962 = vpack.c.bf16 %v914, %v914
      %v963 = vpack.c.bf16 %v915, %v915
      %v964 = vpack.c.bf16 %v916, %v916
      %v965 = vpack.c.bf16 %v917, %v917
      %v966 = vpack.c.bf16 %v918, %v918
      %v967 = vpack.c.bf16 %v919, %v919
      %v968 = vpack.c.bf16 %v920, %v920
      %v969 = vpack.c.bf16 %v921, %v921
      %v970 = vpack.c.bf16 %v922, %v922
      %v971 = vpack.c.bf16 %v923, %v923
      %v972 = vpack.c.bf16 %v924, %v924
      %v973 = vpack.c.bf16 %v925, %v925
      %v974 = vpack.c.bf16 %v926, %v926
      %v975 = vpack.c.bf16 %v927, %v927
      %v976 = vpack.c.bf16 %v928, %v928
      %v977 = vpack.c.bf16 %v929, %v929
      %v978 = vpack.c.bf16 %v930, %v930
      %v979 = vpack.c.bf16 %v931, %v931
      %v980 = vpack.c.bf16 %v932, %v932
      %v981 = vpack.c.bf16 %v933, %v933
      %v982 = vpack.c.bf16 %v934, %v934
      %v983 = vpack.c.bf16 %v935, %v935
      %v984 = vpack.c.bf16 %v936, %v936
      %v985 = vpack.c.bf16 %v937, %v937
      %v986 = vpack.c.bf16 %v938, %v938
      %v987 = vpack.c.bf16 %v939, %v939
      %v988 = vpack.c.bf16 %v940, %v940
      %v989 = vpack.c.bf16 %v941, %v941
      %v990 = vpack.c.bf16 %v942, %v942
      %v991 = vpack.c.bf16 %v943, %v943
      %v992 = vpack.c.bf16 %v944, %v944
      %v993 = vpack.c.bf16 %v945, %v945
      %v994 = vpack.c.bf16 %v946, %v946
      %v995 = vpack.c.bf16 %v947, %v947
      %v996 = vpack.c.bf16 %v948, %v948
      %v997 = vpack.c.bf16 %v949, %v949
      %v998 = vpack.c.bf16 %v950, %v950
      %v999 = vpack.c.bf16 %v951, %v951
      %v1000 = vpack.c.bf16 %v952, %v952
      %v1001 = vpack.c.bf16 %v953, %v953
      %v1002 = vpack.c.bf16 %v954, %v954
      %v1003 = vld [vmem:[%s496] sm:$0xff]
      %v1004 = vld [vmem:[%s496 + $0x8] sm:$0xff]
      %v1005 = vld [vmem:[%s496 + $0x10] sm:$0x3]
      %v1006 = vld [vmem:[%s496 + $0x18] sm:$0xff]
      %v1007 = vld [vmem:[%s496 + $0x20] sm:$0xff]
      %v1008 = vld [vmem:[%s496 + $0x28] sm:$0x3]
      %v1009 = vld [vmem:[%s496 + $0x30] sm:$0xff]
      %v1010 = vld [vmem:[%s496 + $0x38] sm:$0xff]
      %v1011 = vld [vmem:[%s496 + $0x40] sm:$0x3]
      %v1012 = vld [vmem:[%s496 + $0x48] sm:$0xff]
      %v1013 = vld [vmem:[%s496 + $0x50] sm:$0xff]
      %v1014 = vld [vmem:[%s496 + $0x58] sm:$0x3]
      %v1015 = vld [vmem:[%s496 + $0x60] sm:$0xff]
      %v1016 = vld [vmem:[%s496 + $0x68] sm:$0xff]
      %v1017 = vld [vmem:[%s496 + $0x70] sm:$0x3]
      %v1018 = vld [vmem:[%s496 + $0x78] sm:$0xff]
      %v1019 = vld [vmem:[%s496 + $0x80] sm:$0xff]
      %v1020 = vld [vmem:[%s496 + $0x88] sm:$0x3]
      %v1021 = vld [vmem:[%s496 + $0x90] sm:$0xff]
      %v1022 = vld [vmem:[%s496 + $0x98] sm:$0xff]
      %v1023 = vld [vmem:[%s496 + $0xa0] sm:$0x3]
      %v1024 = vld [vmem:[%s496 + $0xa8] sm:$0xff]
      %v1025 = vld [vmem:[%s496 + $0xb0] sm:$0xff]
      %v1026 = vld [vmem:[%s496 + $0xb8] sm:$0x3]
      %v1027 = vld [vmem:[%s496 + $0xc0] sm:$0xff]
      %v1028 = vld [vmem:[%s496 + $0xc8] sm:$0xff]
      %v1029 = vld [vmem:[%s496 + $0xd0] sm:$0x3]
      %v1030 = vld [vmem:[%s496 + $0xd8] sm:$0xff]
      %v1031 = vld [vmem:[%s496 + $0xe0] sm:$0xff]
      %v1032 = vld [vmem:[%s496 + $0xe8] sm:$0x3]
      %v1033 = vld [vmem:[%s496 + $0xf0] sm:$0xff]
      %v1034 = vld [vmem:[%s496 + $0xf8] sm:$0xff]
      %v1035 = vld [vmem:[%s496 + $0x100] sm:$0x3]
      %v1036 = vld [vmem:[%s496 + $0x108] sm:$0xff]
      %v1037 = vld [vmem:[%s496 + $0x110] sm:$0xff]
      %v1038 = vld [vmem:[%s496 + $0x118] sm:$0x3]
      %v1039 = vld [vmem:[%s496 + $0x120] sm:$0xff]
      %v1040 = vld [vmem:[%s496 + $0x128] sm:$0xff]
      %v1041 = vld [vmem:[%s496 + $0x130] sm:$0x3]
      %v1042 = vld [vmem:[%s496 + $0x138] sm:$0xff]
      %v1043 = vld [vmem:[%s496 + $0x140] sm:$0xff]
      %v1044 = vld [vmem:[%s496 + $0x148] sm:$0x3]
      %v1045 = vld [vmem:[%s496 + $0x150] sm:$0xff]
      %v1046 = vld [vmem:[%s496 + $0x158] sm:$0xff]
      %v1047 = vld [vmem:[%s496 + $0x160] sm:$0x3]
      %v1048 = vld [vmem:[%s496 + $0x168] sm:$0xff]
      %v1049 = vld [vmem:[%s496 + $0x170] sm:$0xff]
      %v1050 = vld [vmem:[%s496 + $0x178] sm:$0x3]
      %v1051 = vmul.f32 %v1003, %v600
      %v1052 = vmul.f32 %v1004, %v600
      %v1053 = vmul.f32 %v1005, %v600
      %v1054 = vmul.f32 %v1006, %v600
      %v1055 = vmul.f32 %v1007, %v600
      %v1056 = vmul.f32 %v1008, %v600
      %v1057 = vmul.f32 %v1009, %v600
      %v1058 = vmul.f32 %v1010, %v600
      %v1059 = vmul.f32 %v1011, %v600
      %v1060 = vmul.f32 %v1012, %v600
      %v1061 = vmul.f32 %v1013, %v600
      %v1062 = vmul.f32 %v1014, %v600
      %v1063 = vmul.f32 %v1015, %v600
      %v1064 = vmul.f32 %v1016, %v600
      %v1065 = vmul.f32 %v1017, %v600
      %v1066 = vmul.f32 %v1018, %v600
      %v1067 = vmul.f32 %v1019, %v600
      %v1068 = vmul.f32 %v1020, %v600
      %v1069 = vmul.f32 %v1021, %v600
      %v1070 = vmul.f32 %v1022, %v600
      %v1071 = vmul.f32 %v1023, %v600
      %v1072 = vmul.f32 %v1024, %v600
      %v1073 = vmul.f32 %v1025, %v600
      %v1074 = vmul.f32 %v1026, %v600
      %v1075 = vmul.f32 %v1027, %v600
      %v1076 = vmul.f32 %v1028, %v600
      %v1077 = vmul.f32 %v1029, %v600
      %v1078 = vmul.f32 %v1030, %v600
      %v1079 = vmul.f32 %v1031, %v600
      %v1080 = vmul.f32 %v1032, %v600
      %v1081 = vmul.f32 %v1033, %v600
      %v1082 = vmul.f32 %v1034, %v600
      %v1083 = vmul.f32 %v1035, %v600
      %v1084 = vmul.f32 %v1036, %v600
      %v1085 = vmul.f32 %v1037, %v600
      %v1086 = vmul.f32 %v1038, %v600
      %v1087 = vmul.f32 %v1039, %v600
      %v1088 = vmul.f32 %v1040, %v600
      %v1089 = vmul.f32 %v1041, %v600
      %v1090 = vmul.f32 %v1042, %v600
      %v1091 = vmul.f32 %v1043, %v600
      %v1092 = vmul.f32 %v1044, %v600
      %v1093 = vmul.f32 %v1045, %v600
      %v1094 = vmul.f32 %v1046, %v600
      %v1095 = vmul.f32 %v1047, %v600
      %v1096 = vmul.f32 %v1048, %v600
      %v1097 = vmul.f32 %v1049, %v600
      %v1098 = vmul.f32 %v1050, %v600
      %v1099 = vadd.f32 %v1051, %v651
      %v1100 = vadd.f32 %v1052, %v651
      %v1101 = vadd.f32 %v1053, %v651
      %v1102 = vadd.f32 %v1054, %v651
      %v1103 = vadd.f32 %v1055, %v651
      %v1104 = vadd.f32 %v1056, %v651
      %v1105 = vadd.f32 %v1057, %v651
      %v1106 = vadd.f32 %v1058, %v651
      %v1107 = vadd.f32 %v1059, %v651
      %v1108 = vadd.f32 %v1060, %v651
      %v1109 = vadd.f32 %v1061, %v651
      %v1110 = vadd.f32 %v1062, %v651
      %v1111 = vadd.f32 %v1063, %v651
      %v1112 = vadd.f32 %v1064, %v651
      %v1113 = vadd.f32 %v1065, %v651
      %v1114 = vadd.f32 %v1066, %v651
      %v1115 = vadd.f32 %v1067, %v651
      %v1116 = vadd.f32 %v1068, %v651
      %v1117 = vadd.f32 %v1069, %v651
      %v1118 = vadd.f32 %v1070, %v651
      %v1119 = vadd.f32 %v1071, %v651
      %v1120 = vadd.f32 %v1072, %v651
      %v1121 = vadd.f32 %v1073, %v651
      %v1122 = vadd.f32 %v1074, %v651
      %v1123 = vadd.f32 %v1075, %v651
      %v1124 = vadd.f32 %v1076, %v651
      %v1125 = vadd.f32 %v1077, %v651
      %v1126 = vadd.f32 %v1078, %v651
      %v1127 = vadd.f32 %v1079, %v651
      %v1128 = vadd.f32 %v1080, %v651
      %v1129 = vadd.f32 %v1081, %v651
      %v1130 = vadd.f32 %v1082, %v651
      %v1131 = vadd.f32 %v1083, %v651
      %v1132 = vadd.f32 %v1084, %v651
      %v1133 = vadd.f32 %v1085, %v651
      %v1134 = vadd.f32 %v1086, %v651
      %v1135 = vadd.f32 %v1087, %v651
      %v1136 = vadd.f32 %v1088, %v651
      %v1137 = vadd.f32 %v1089, %v651
      %v1138 = vadd.f32 %v1090, %v651
      %v1139 = vadd.f32 %v1091, %v651
      %v1140 = vadd.f32 %v1092, %v651
      %v1141 = vadd.f32 %v1093, %v651
      %v1142 = vadd.f32 %v1094, %v651
      %v1143 = vadd.f32 %v1095, %v651
      %v1144 = vadd.f32 %v1096, %v651
      %v1145 = vadd.f32 %v1097, %v651
      %v1146 = vadd.f32 %v1098, %v651
      %v1147 = vmax.f32 %v1099, 0.0
      %v1148 = vmax.f32 %v1100, 0.0
      %v1149 = vmax.f32 %v1101, 0.0
      %v1150 = vmax.f32 %v1102, 0.0
      %v1151 = vmax.f32 %v1103, 0.0
      %v1152 = vmax.f32 %v1104, 0.0
      %v1153 = vmax.f32 %v1105, 0.0
      %v1154 = vmax.f32 %v1106, 0.0
      %v1155 = vmax.f32 %v1107, 0.0
      %v1156 = vmax.f32 %v1108, 0.0
      %v1157 = vmax.f32 %v1109, 0.0
      %v1158 = vmax.f32 %v1110, 0.0
      %v1159 = vmax.f32 %v1111, 0.0
      %v1160 = vmax.f32 %v1112, 0.0
      %v1161 = vmax.f32 %v1113, 0.0
      %v1162 = vmax.f32 %v1114, 0.0
      %v1163 = vmax.f32 %v1115, 0.0
      %v1164 = vmax.f32 %v1116, 0.0
      %v1165 = vmax.f32 %v1117, 0.0
      %v1166 = vmax.f32 %v1118, 0.0
      %v1167 = vmax.f32 %v1119, 0.0
      %v1168 = vmax.f32 %v1120, 0.0
      %v1169 = vmax.f32 %v1121, 0.0
      %v1170 = vmax.f32 %v1122, 0.0
      %v1171 = vmax.f32 %v1123, 0.0
      %v1172 = vmax.f32 %v1124, 0.0
      %v1173 = vmax.f32 %v1125, 0.0
      %v1174 = vmax.f32 %v1126, 0.0
      %v1175 = vmax.f32 %v1127, 0.0
      %v1176 = vmax.f32 %v1128, 0.0
      %v1177 = vmax.f32 %v1129, 0.0
      %v1178 = vmax.f32 %v1130, 0.0
      %v1179 = vmax.f32 %v1131, 0.0
      %v1180 = vmax.f32 %v1132, 0.0
      %v1181 = vmax.f32 %v1133, 0.0
      %v1182 = vmax.f32 %v1134, 0.0
      %v1183 = vmax.f32 %v1135, 0.0
      %v1184 = vmax.f32 %v1136, 0.0
      %v1185 = vmax.f32 %v1137, 0.0
      %v1186 = vmax.f32 %v1138, 0.0
      %v1187 = vmax.f32 %v1139, 0.0
      %v1188 = vmax.f32 %v1140, 0.0
      %v1189 = vmax.f32 %v1141, 0.0
      %v1190 = vmax.f32 %v1142, 0.0
      %v1191 = vmax.f32 %v1143, 0.0
      %v1192 = vmax.f32 %v1144, 0.0
      %v1193 = vmax.f32 %v1145, 0.0
      %v1194 = vmax.f32 %v1146, 0.0
      %s1195 = sadd.s32 %s753, 1
      %v1196 = vstv %s1195
      %v1197 = vadd.s32 %v1196, 1
      %v1198 = vadd.s32 %v1196, 2
      %v1199 = vadd.s32 %v1196, 3
      %v1200 = vadd.s32 %v1196, 4
      %v1201 = vadd.s32 %v1196, 5
      %v1202 = vadd.s32 %v1196, 6
      %v1203 = vadd.s32 %v1196, 7
      %v1204 = vadd.s32 %v1196, 8
      %v1205 = vadd.s32 %v1196, 9
      %v1206 = vadd.s32 %v1196, 10
      %v1207 = vadd.s32 %v1196, 11
      %v1208 = vadd.s32 %v1196, 12
      %v1209 = vadd.s32 %v1196, 13
      %v1210 = vadd.s32 %v1196, 14
      %v1211 = vadd.s32 %v1196, 15
      %vm1212 = vcmp.ge.s32.totalorder %v1196, 1
      %vm1213 = vcmp.ge.s32.totalorder %v1197, 1
      %vm1214 = vcmp.ge.s32.totalorder %v1198, 1
      %vm1215 = vcmp.ge.s32.totalorder %v1199, 1
      %vm1216 = vcmp.ge.s32.totalorder %v1200, 1
      %vm1217 = vcmp.ge.s32.totalorder %v1201, 1
      %vm1218 = vcmp.ge.s32.totalorder %v1202, 1
      %vm1219 = vcmp.ge.s32.totalorder %v1203, 1
      %vm1220 = vcmp.ge.s32.totalorder %v1204, 1
      %vm1221 = vcmp.ge.s32.totalorder %v1205, 1
      %vm1222 = vcmp.ge.s32.totalorder %v1206, 1
      %vm1223 = vcmp.ge.s32.totalorder %v1207, 1
      %vm1224 = vcmp.ge.s32.totalorder %v1208, 1
      %vm1225 = vcmp.ge.s32.totalorder %v1209, 1
      %vm1226 = vcmp.ge.s32.totalorder %v1210, 1
      %vm1227 = vcmp.ge.s32.totalorder %v1211, 1
      %vm1228 = vmand %vm776, %vm1212
      %vm1229 = vmand %vm777, %vm1212
      %vm1230 = vmand %vm778, %vm1212
      %vm1231 = vmand %vm776, %vm1213
      %vm1232 = vmand %vm777, %vm1213
      %vm1233 = vmand %vm778, %vm1213
      %vm1234 = vmand %vm776, %vm1214
      %vm1235 = vmand %vm777, %vm1214
      %vm1236 = vmand %vm778, %vm1214
      %vm1237 = vmand %vm776, %vm1215
      %vm1238 = vmand %vm777, %vm1215
      %vm1239 = vmand %vm778, %vm1215
      %vm1240 = vmand %vm776, %vm1216
      %vm1241 = vmand %vm777, %vm1216
      %vm1242 = vmand %vm778, %vm1216
      %vm1243 = vmand %vm776, %vm1217
      %vm1244 = vmand %vm777, %vm1217
      %vm1245 = vmand %vm778, %vm1217
      %vm1246 = vmand %vm776, %vm1218
      %vm1247 = vmand %vm777, %vm1218
      %vm1248 = vmand %vm778, %vm1218
      %vm1249 = vmand %vm776, %vm1219
      %vm1250 = vmand %vm777, %vm1219
      %vm1251 = vmand %vm778, %vm1219
      %vm1252 = vmand %vm776, %vm1220
      %vm1253 = vmand %vm777, %vm1220
      %vm1254 = vmand %vm778, %vm1220
      %vm1255 = vmand %vm776, %vm1221
      %vm1256 = vmand %vm777, %vm1221
      %vm1257 = vmand %vm778, %vm1221
      %vm1258 = vmand %vm776, %vm1222
      %vm1259 = vmand %vm777, %vm1222
      %vm1260 = vmand %vm778, %vm1222
      %vm1261 = vmand %vm776, %vm1223
      %vm1262 = vmand %vm777, %vm1223
      %vm1263 = vmand %vm778, %vm1223
      %vm1264 = vmand %vm776, %vm1224
      %vm1265 = vmand %vm777, %vm1224
      %vm1266 = vmand %vm778, %vm1224
      %vm1267 = vmand %vm776, %vm1225
      %vm1268 = vmand %vm777, %vm1225
      %vm1269 = vmand %vm778, %vm1225
      %vm1270 = vmand %vm776, %vm1226
      %vm1271 = vmand %vm777, %vm1226
      %vm1272 = vmand %vm778, %vm1226
      %vm1273 = vmand %vm776, %vm1227
      %vm1274 = vmand %vm777, %vm1227
      %vm1275 = vmand %vm778, %vm1227
      %vm1276 = vcmp.le.s32.totalorder %v1196, 16
      %vm1277 = vcmp.le.s32.totalorder %v1197, 16
      %vm1278 = vcmp.le.s32.totalorder %v1198, 16
      %vm1279 = vcmp.le.s32.totalorder %v1199, 16
      %vm1280 = vcmp.le.s32.totalorder %v1200, 16
      %vm1281 = vcmp.le.s32.totalorder %v1201, 16
      %vm1282 = vcmp.le.s32.totalorder %v1202, 16
      %vm1283 = vcmp.le.s32.totalorder %v1203, 16
      %vm1284 = vcmp.le.s32.totalorder %v1204, 16
      %vm1285 = vcmp.le.s32.totalorder %v1205, 16
      %vm1286 = vcmp.le.s32.totalorder %v1206, 16
      %vm1287 = vcmp.le.s32.totalorder %v1207, 16
      %vm1288 = vcmp.le.s32.totalorder %v1208, 16
      %vm1289 = vcmp.le.s32.totalorder %v1209, 16
      %vm1290 = vcmp.le.s32.totalorder %v1210, 16
      %vm1291 = vcmp.le.s32.totalorder %v1211, 16
      %vm1292 = vmand %vm1228, %vm1276
      %vm1293 = vmand %vm1229, %vm1276
      %vm1294 = vmand %vm1230, %vm1276
      %vm1295 = vmand %vm1231, %vm1277
      %vm1296 = vmand %vm1232, %vm1277
      %vm1297 = vmand %vm1233, %vm1277
      %vm1298 = vmand %vm1234, %vm1278
      %vm1299 = vmand %vm1235, %vm1278
      %vm1300 = vmand %vm1236, %vm1278
      %vm1301 = vmand %vm1237, %vm1279
      %vm1302 = vmand %vm1238, %vm1279
      %vm1303 = vmand %vm1239, %vm1279
      %vm1304 = vmand %vm1240, %vm1280
      %vm1305 = vmand %vm1241, %vm1280
      %vm1306 = vmand %vm1242, %vm1280
      %vm1307 = vmand %vm1243, %vm1281
      %vm1308 = vmand %vm1244, %vm1281
      %vm1309 = vmand %vm1245, %vm1281
      %vm1310 = vmand %vm1246, %vm1282
      %vm1311 = vmand %vm1247, %vm1282
      %vm1312 = vmand %vm1248, %vm1282
      %vm1313 = vmand %vm1249, %vm1283
      %vm1314 = vmand %vm1250, %vm1283
      %vm1315 = vmand %vm1251, %vm1283
      %vm1316 = vmand %vm1252, %vm1284
      %vm1317 = vmand %vm1253, %vm1284
      %vm1318 = vmand %vm1254, %vm1284
      %vm1319 = vmand %vm1255, %vm1285
      %vm1320 = vmand %vm1256, %vm1285
      %vm1321 = vmand %vm1257, %vm1285
      %vm1322 = vmand %vm1258, %vm1286
      %vm1323 = vmand %vm1259, %vm1286
      %vm1324 = vmand %vm1260, %vm1286
      %vm1325 = vmand %vm1261, %vm1287
      %vm1326 = vmand %vm1262, %vm1287
      %vm1327 = vmand %vm1263, %vm1287
      %vm1328 = vmand %vm1264, %vm1288
      %vm1329 = vmand %vm1265, %vm1288
      %vm1330 = vmand %vm1266, %vm1288
      %vm1331 = vmand %vm1267, %vm1289
      %vm1332 = vmand %vm1268, %vm1289
      %vm1333 = vmand %vm1269, %vm1289
      %vm1334 = vmand %vm1270, %vm1290
      %vm1335 = vmand %vm1271, %vm1290
      %vm1336 = vmand %vm1272, %vm1290
      %vm1337 = vmand %vm1273, %vm1291
      %vm1338 = vmand %vm1274, %vm1291
      %vm1339 = vmand %vm1275, %vm1291
      %v1340 = vsel %vm1292, %v1147, 0.0
      %v1341 = vsel %vm1293, %v1148, 0.0
      %v1342 = vsel %vm1294, %v1149, 0.0
      %v1343 = vsel %vm1295, %v1150, 0.0
      %v1344 = vsel %vm1296, %v1151, 0.0
      %v1345 = vsel %vm1297, %v1152, 0.0
      %v1346 = vsel %vm1298, %v1153, 0.0
      %v1347 = vsel %vm1299, %v1154, 0.0
      %v1348 = vsel %vm1300, %v1155, 0.0
      %v1349 = vsel %vm1301, %v1156, 0.0
      %v1350 = vsel %vm1302, %v1157, 0.0
      %v1351 = vsel %vm1303, %v1158, 0.0
      %v1352 = vsel %vm1304, %v1159, 0.0
      %v1353 = vsel %vm1305, %v1160, 0.0
      %v1354 = vsel %vm1306, %v1161, 0.0
      %v1355 = vsel %vm1307, %v1162, 0.0
      %v1356 = vsel %vm1308, %v1163, 0.0
      %v1357 = vsel %vm1309, %v1164, 0.0
      %v1358 = vsel %vm1310, %v1165, 0.0
      %v1359 = vsel %vm1311, %v1166, 0.0
      %v1360 = vsel %vm1312, %v1167, 0.0
      %v1361 = vsel %vm1313, %v1168, 0.0
      %v1362 = vsel %vm1314, %v1169, 0.0
      %v1363 = vsel %vm1315, %v1170, 0.0
      %v1364 = vsel %vm1316, %v1171, 0.0
      %v1365 = vsel %vm1317, %v1172, 0.0
      %v1366 = vsel %vm1318, %v1173, 0.0
      %v1367 = vsel %vm1319, %v1174, 0.0
      %v1368 = vsel %vm1320, %v1175, 0.0
      %v1369 = vsel %vm1321, %v1176, 0.0
      %v1370 = vsel %vm1322, %v1177, 0.0
      %v1371 = vsel %vm1323, %v1178, 0.0
      %v1372 = vsel %vm1324, %v1179, 0.0
      %v1373 = vsel %vm1325, %v1180, 0.0
      %v1374 = vsel %vm1326, %v1181, 0.0
      %v1375 = vsel %vm1327, %v1182, 0.0
      %v1376 = vsel %vm1328, %v1183, 0.0
      %v1377 = vsel %vm1329, %v1184, 0.0
      %v1378 = vsel %vm1330, %v1185, 0.0
      %v1379 = vsel %vm1331, %v1186, 0.0
      %v1380 = vsel %vm1332, %v1187, 0.0
      %v1381 = vsel %vm1333, %v1188, 0.0
      %v1382 = vsel %vm1334, %v1189, 0.0
      %v1383 = vsel %vm1335, %v1190, 0.0
      %v1384 = vsel %vm1336, %v1191, 0.0
      %v1385 = vsel %vm1337, %v1192, 0.0
      %v1386 = vsel %vm1338, %v1193, 0.0
      %v1387 = vsel %vm1339, %v1194, 0.0
      %v1388 = vpack.c.bf16 %v1340, %v1340
      %v1389 = vpack.c.bf16 %v1341, %v1341
      %v1390 = vpack.c.bf16 %v1342, %v1342
      %v1391 = vpack.c.bf16 %v1343, %v1343
      %v1392 = vpack.c.bf16 %v1344, %v1344
      %v1393 = vpack.c.bf16 %v1345, %v1345
      %v1394 = vpack.c.bf16 %v1346, %v1346
      %v1395 = vpack.c.bf16 %v1347, %v1347
      %v1396 = vpack.c.bf16 %v1348, %v1348
      %v1397 = vpack.c.bf16 %v1349, %v1349
      %v1398 = vpack.c.bf16 %v1350, %v1350
      %v1399 = vpack.c.bf16 %v1351, %v1351
      %v1400 = vpack.c.bf16 %v1352, %v1352
      %v1401 = vpack.c.bf16 %v1353, %v1353
      %v1402 = vpack.c.bf16 %v1354, %v1354
      %v1403 = vpack.c.bf16 %v1355, %v1355
      %v1404 = vpack.c.bf16 %v1356, %v1356
      %v1405 = vpack.c.bf16 %v1357, %v1357
      %v1406 = vpack.c.bf16 %v1358, %v1358
      %v1407 = vpack.c.bf16 %v1359, %v1359
      %v1408 = vpack.c.bf16 %v1360, %v1360
      %v1409 = vpack.c.bf16 %v1361, %v1361
      %v1410 = vpack.c.bf16 %v1362, %v1362
      %v1411 = vpack.c.bf16 %v1363, %v1363
      %v1412 = vpack.c.bf16 %v1364, %v1364
      %v1413 = vpack.c.bf16 %v1365, %v1365
      %v1414 = vpack.c.bf16 %v1366, %v1366
      %v1415 = vpack.c.bf16 %v1367, %v1367
      %v1416 = vpack.c.bf16 %v1368, %v1368
      %v1417 = vpack.c.bf16 %v1369, %v1369
      %v1418 = vpack.c.bf16 %v1370, %v1370
      %v1419 = vpack.c.bf16 %v1371, %v1371
      %v1420 = vpack.c.bf16 %v1372, %v1372
      %v1421 = vpack.c.bf16 %v1373, %v1373
      %v1422 = vpack.c.bf16 %v1374, %v1374
      %v1423 = vpack.c.bf16 %v1375, %v1375
      %v1424 = vpack.c.bf16 %v1376, %v1376
      %v1425 = vpack.c.bf16 %v1377, %v1377
      %v1426 = vpack.c.bf16 %v1378, %v1378
      %v1427 = vpack.c.bf16 %v1379, %v1379
      %v1428 = vpack.c.bf16 %v1380, %v1380
      %v1429 = vpack.c.bf16 %v1381, %v1381
      %v1430 = vpack.c.bf16 %v1382, %v1382
      %v1431 = vpack.c.bf16 %v1383, %v1383
      %v1432 = vpack.c.bf16 %v1384, %v1384
      %v1433 = vpack.c.bf16 %v1385, %v1385
      %v1434 = vpack.c.bf16 %v1386, %v1386
      %v1435 = vpack.c.bf16 %v1387, %v1387
      %v1436 = vld [vmem:[%s507] sm:$0xff]
      %v1437 = vld [vmem:[%s507 + $0x8] sm:$0xff]
      %v1438 = vld [vmem:[%s507 + $0x10] sm:$0x3]
      %v1439 = vld [vmem:[%s507 + $0x18] sm:$0xff]
      %v1440 = vld [vmem:[%s507 + $0x20] sm:$0xff]
      %v1441 = vld [vmem:[%s507 + $0x28] sm:$0x3]
      %v1442 = vld [vmem:[%s507 + $0x30] sm:$0xff]
      %v1443 = vld [vmem:[%s507 + $0x38] sm:$0xff]
      %v1444 = vld [vmem:[%s507 + $0x40] sm:$0x3]
      %v1445 = vld [vmem:[%s507 + $0x48] sm:$0xff]
      %v1446 = vld [vmem:[%s507 + $0x50] sm:$0xff]
      %v1447 = vld [vmem:[%s507 + $0x58] sm:$0x3]
      %v1448 = vld [vmem:[%s507 + $0x60] sm:$0xff]
      %v1449 = vld [vmem:[%s507 + $0x68] sm:$0xff]
      %v1450 = vld [vmem:[%s507 + $0x70] sm:$0x3]
      %v1451 = vld [vmem:[%s507 + $0x78] sm:$0xff]
      %v1452 = vld [vmem:[%s507 + $0x80] sm:$0xff]
      %v1453 = vld [vmem:[%s507 + $0x88] sm:$0x3]
      %v1454 = vld [vmem:[%s507 + $0x90] sm:$0xff]
      %v1455 = vld [vmem:[%s507 + $0x98] sm:$0xff]
      %v1456 = vld [vmem:[%s507 + $0xa0] sm:$0x3]
      %v1457 = vld [vmem:[%s507 + $0xa8] sm:$0xff]
      %v1458 = vld [vmem:[%s507 + $0xb0] sm:$0xff]
      %v1459 = vld [vmem:[%s507 + $0xb8] sm:$0x3]
      %v1460 = vld [vmem:[%s507 + $0xc0] sm:$0xff]
      %v1461 = vld [vmem:[%s507 + $0xc8] sm:$0xff]
      %v1462 = vld [vmem:[%s507 + $0xd0] sm:$0x3]
      %v1463 = vld [vmem:[%s507 + $0xd8] sm:$0xff]
      %v1464 = vld [vmem:[%s507 + $0xe0] sm:$0xff]
      %v1465 = vld [vmem:[%s507 + $0xe8] sm:$0x3]
      %v1466 = vld [vmem:[%s507 + $0xf0] sm:$0xff]
      %v1467 = vld [vmem:[%s507 + $0xf8] sm:$0xff]
      %v1468 = vld [vmem:[%s507 + $0x100] sm:$0x3]
      %v1469 = vld [vmem:[%s507 + $0x108] sm:$0xff]
      %v1470 = vld [vmem:[%s507 + $0x110] sm:$0xff]
      %v1471 = vld [vmem:[%s507 + $0x118] sm:$0x3]
      %v1472 = vld [vmem:[%s507 + $0x120] sm:$0xff]
      %v1473 = vld [vmem:[%s507 + $0x128] sm:$0xff]
      %v1474 = vld [vmem:[%s507 + $0x130] sm:$0x3]
      %v1475 = vld [vmem:[%s507 + $0x138] sm:$0xff]
      %v1476 = vld [vmem:[%s507 + $0x140] sm:$0xff]
      %v1477 = vld [vmem:[%s507 + $0x148] sm:$0x3]
      %v1478 = vld [vmem:[%s507 + $0x150] sm:$0xff]
      %v1479 = vld [vmem:[%s507 + $0x158] sm:$0xff]
      %v1480 = vld [vmem:[%s507 + $0x160] sm:$0x3]
      %v1481 = vld [vmem:[%s507 + $0x168] sm:$0xff]
      %v1482 = vld [vmem:[%s507 + $0x170] sm:$0xff]
      %v1483 = vld [vmem:[%s507 + $0x178] sm:$0x3]
      %v1484 = vmul.f32 %v1436, %v600
      %v1485 = vmul.f32 %v1437, %v600
      %v1486 = vmul.f32 %v1438, %v600
      %v1487 = vmul.f32 %v1439, %v600
      %v1488 = vmul.f32 %v1440, %v600
      %v1489 = vmul.f32 %v1441, %v600
      %v1490 = vmul.f32 %v1442, %v600
      %v1491 = vmul.f32 %v1443, %v600
      %v1492 = vmul.f32 %v1444, %v600
      %v1493 = vmul.f32 %v1445, %v600
      %v1494 = vmul.f32 %v1446, %v600
      %v1495 = vmul.f32 %v1447, %v600
      %v1496 = vmul.f32 %v1448, %v600
      %v1497 = vmul.f32 %v1449, %v600
      %v1498 = vmul.f32 %v1450, %v600
      %v1499 = vmul.f32 %v1451, %v600
      %v1500 = vmul.f32 %v1452, %v600
      %v1501 = vmul.f32 %v1453, %v600
      %v1502 = vmul.f32 %v1454, %v600
      %v1503 = vmul.f32 %v1455, %v600
      %v1504 = vmul.f32 %v1456, %v600
      %v1505 = vmul.f32 %v1457, %v600
      %v1506 = vmul.f32 %v1458, %v600
      %v1507 = vmul.f32 %v1459, %v600
      %v1508 = vmul.f32 %v1460, %v600
      %v1509 = vmul.f32 %v1461, %v600
      %v1510 = vmul.f32 %v1462, %v600
      %v1511 = vmul.f32 %v1463, %v600
      %v1512 = vmul.f32 %v1464, %v600
      %v1513 = vmul.f32 %v1465, %v600
      %v1514 = vmul.f32 %v1466, %v600
      %v1515 = vmul.f32 %v1467, %v600
      %v1516 = vmul.f32 %v1468, %v600
      %v1517 = vmul.f32 %v1469, %v600
      %v1518 = vmul.f32 %v1470, %v600
      %v1519 = vmul.f32 %v1471, %v600
      %v1520 = vmul.f32 %v1472, %v600
      %v1521 = vmul.f32 %v1473, %v600
      %v1522 = vmul.f32 %v1474, %v600
      %v1523 = vmul.f32 %v1475, %v600
      %v1524 = vmul.f32 %v1476, %v600
      %v1525 = vmul.f32 %v1477, %v600
      %v1526 = vmul.f32 %v1478, %v600
      %v1527 = vmul.f32 %v1479, %v600
      %v1528 = vmul.f32 %v1480, %v600
      %v1529 = vmul.f32 %v1481, %v600
      %v1530 = vmul.f32 %v1482, %v600
      %v1531 = vmul.f32 %v1483, %v600
      %v1532 = vadd.f32 %v1484, %v651
      %v1533 = vadd.f32 %v1485, %v651
      %v1534 = vadd.f32 %v1486, %v651
      %v1535 = vadd.f32 %v1487, %v651
      %v1536 = vadd.f32 %v1488, %v651
      %v1537 = vadd.f32 %v1489, %v651
      %v1538 = vadd.f32 %v1490, %v651
      %v1539 = vadd.f32 %v1491, %v651
      %v1540 = vadd.f32 %v1492, %v651
      %v1541 = vadd.f32 %v1493, %v651
      %v1542 = vadd.f32 %v1494, %v651
      %v1543 = vadd.f32 %v1495, %v651
      %v1544 = vadd.f32 %v1496, %v651
      %v1545 = vadd.f32 %v1497, %v651
      %v1546 = vadd.f32 %v1498, %v651
      %v1547 = vadd.f32 %v1499, %v651
      %v1548 = vadd.f32 %v1500, %v651
      %v1549 = vadd.f32 %v1501, %v651
      %v1550 = vadd.f32 %v1502, %v651
      %v1551 = vadd.f32 %v1503, %v651
      %v1552 = vadd.f32 %v1504, %v651
      %v1553 = vadd.f32 %v1505, %v651
      %v1554 = vadd.f32 %v1506, %v651
      %v1555 = vadd.f32 %v1507, %v651
      %v1556 = vadd.f32 %v1508, %v651
      %v1557 = vadd.f32 %v1509, %v651
      %v1558 = vadd.f32 %v1510, %v651
      %v1559 = vadd.f32 %v1511, %v651
      %v1560 = vadd.f32 %v1512, %v651
      %v1561 = vadd.f32 %v1513, %v651
      %v1562 = vadd.f32 %v1514, %v651
      %v1563 = vadd.f32 %v1515, %v651
      %v1564 = vadd.f32 %v1516, %v651
      %v1565 = vadd.f32 %v1517, %v651
      %v1566 = vadd.f32 %v1518, %v651
      %v1567 = vadd.f32 %v1519, %v651
      %v1568 = vadd.f32 %v1520, %v651
      %v1569 = vadd.f32 %v1521, %v651
      %v1570 = vadd.f32 %v1522, %v651
      %v1571 = vadd.f32 %v1523, %v651
      %v1572 = vadd.f32 %v1524, %v651
      %v1573 = vadd.f32 %v1525, %v651
      %v1574 = vadd.f32 %v1526, %v651
      %v1575 = vadd.f32 %v1527, %v651
      %v1576 = vadd.f32 %v1528, %v651
      %v1577 = vadd.f32 %v1529, %v651
      %v1578 = vadd.f32 %v1530, %v651
      %v1579 = vadd.f32 %v1531, %v651
      %v1580 = vmax.f32 %v1532, 0.0
      %v1581 = vmax.f32 %v1533, 0.0
      %v1582 = vmax.f32 %v1534, 0.0
      %v1583 = vmax.f32 %v1535, 0.0
      %v1584 = vmax.f32 %v1536, 0.0
      %v1585 = vmax.f32 %v1537, 0.0
      %v1586 = vmax.f32 %v1538, 0.0
      %v1587 = vmax.f32 %v1539, 0.0
      %v1588 = vmax.f32 %v1540, 0.0
      %v1589 = vmax.f32 %v1541, 0.0
      %v1590 = vmax.f32 %v1542, 0.0
      %v1591 = vmax.f32 %v1543, 0.0
      %v1592 = vmax.f32 %v1544, 0.0
      %v1593 = vmax.f32 %v1545, 0.0
      %v1594 = vmax.f32 %v1546, 0.0
      %v1595 = vmax.f32 %v1547, 0.0
      %v1596 = vmax.f32 %v1548, 0.0
      %v1597 = vmax.f32 %v1549, 0.0
      %v1598 = vmax.f32 %v1550, 0.0
      %v1599 = vmax.f32 %v1551, 0.0
      %v1600 = vmax.f32 %v1552, 0.0
      %v1601 = vmax.f32 %v1553, 0.0
      %v1602 = vmax.f32 %v1554, 0.0
      %v1603 = vmax.f32 %v1555, 0.0
      %v1604 = vmax.f32 %v1556, 0.0
      %v1605 = vmax.f32 %v1557, 0.0
      %v1606 = vmax.f32 %v1558, 0.0
      %v1607 = vmax.f32 %v1559, 0.0
      %v1608 = vmax.f32 %v1560, 0.0
      %v1609 = vmax.f32 %v1561, 0.0
      %v1610 = vmax.f32 %v1562, 0.0
      %v1611 = vmax.f32 %v1563, 0.0
      %v1612 = vmax.f32 %v1564, 0.0
      %v1613 = vmax.f32 %v1565, 0.0
      %v1614 = vmax.f32 %v1566, 0.0
      %v1615 = vmax.f32 %v1567, 0.0
      %v1616 = vmax.f32 %v1568, 0.0
      %v1617 = vmax.f32 %v1569, 0.0
      %v1618 = vmax.f32 %v1570, 0.0
      %v1619 = vmax.f32 %v1571, 0.0
      %v1620 = vmax.f32 %v1572, 0.0
      %v1621 = vmax.f32 %v1573, 0.0
      %v1622 = vmax.f32 %v1574, 0.0
      %v1623 = vmax.f32 %v1575, 0.0
      %v1624 = vmax.f32 %v1576, 0.0
      %v1625 = vmax.f32 %v1577, 0.0
      %v1626 = vmax.f32 %v1578, 0.0
      %v1627 = vmax.f32 %v1579, 0.0
      %s1628 = sadd.s32 %s753, 2
      %v1629 = vstv %s1628
      %v1630 = vadd.s32 %v1629, 1
      %v1631 = vadd.s32 %v1629, 2
      %v1632 = vadd.s32 %v1629, 3
      %v1633 = vadd.s32 %v1629, 4
      %v1634 = vadd.s32 %v1629, 5
      %v1635 = vadd.s32 %v1629, 6
      %v1636 = vadd.s32 %v1629, 7
      %v1637 = vadd.s32 %v1629, 8
      %v1638 = vadd.s32 %v1629, 9
      %v1639 = vadd.s32 %v1629, 10
      %v1640 = vadd.s32 %v1629, 11
      %v1641 = vadd.s32 %v1629, 12
      %v1642 = vadd.s32 %v1629, 13
      %v1643 = vadd.s32 %v1629, 14
      %v1644 = vadd.s32 %v1629, 15
      %vm1645 = vcmp.ge.s32.totalorder %v1629, 1
      %vm1646 = vcmp.ge.s32.totalorder %v1630, 1
      %vm1647 = vcmp.ge.s32.totalorder %v1631, 1
      %vm1648 = vcmp.ge.s32.totalorder %v1632, 1
      %vm1649 = vcmp.ge.s32.totalorder %v1633, 1
      %vm1650 = vcmp.ge.s32.totalorder %v1634, 1
      %vm1651 = vcmp.ge.s32.totalorder %v1635, 1
      %vm1652 = vcmp.ge.s32.totalorder %v1636, 1
      %vm1653 = vcmp.ge.s32.totalorder %v1637, 1
      %vm1654 = vcmp.ge.s32.totalorder %v1638, 1
      %vm1655 = vcmp.ge.s32.totalorder %v1639, 1
      %vm1656 = vcmp.ge.s32.totalorder %v1640, 1
      %vm1657 = vcmp.ge.s32.totalorder %v1641, 1
      %vm1658 = vcmp.ge.s32.totalorder %v1642, 1
      %vm1659 = vcmp.ge.s32.totalorder %v1643, 1
      %vm1660 = vcmp.ge.s32.totalorder %v1644, 1
      %vm1661 = vmand %vm776, %vm1645
      %vm1662 = vmand %vm777, %vm1645
      %vm1663 = vmand %vm778, %vm1645
      %vm1664 = vmand %vm776, %vm1646
      %vm1665 = vmand %vm777, %vm1646
      %vm1666 = vmand %vm778, %vm1646
      %vm1667 = vmand %vm776, %vm1647
      %vm1668 = vmand %vm777, %vm1647
      %vm1669 = vmand %vm778, %vm1647
      %vm1670 = vmand %vm776, %vm1648
      %vm1671 = vmand %vm777, %vm1648
      %vm1672 = vmand %vm778, %vm1648
      %vm1673 = vmand %vm776, %vm1649
      %vm1674 = vmand %vm777, %vm1649
      %vm1675 = vmand %vm778, %vm1649
      %vm1676 = vmand %vm776, %vm1650
      %vm1677 = vmand %vm777, %vm1650
      %vm1678 = vmand %vm778, %vm1650
      %vm1679 = vmand %vm776, %vm1651
      %vm1680 = vmand %vm777, %vm1651
      %vm1681 = vmand %vm778, %vm1651
      %vm1682 = vmand %vm776, %vm1652
      %vm1683 = vmand %vm777, %vm1652
      %vm1684 = vmand %vm778, %vm1652
      %vm1685 = vmand %vm776, %vm1653
      %vm1686 = vmand %vm777, %vm1653
      %vm1687 = vmand %vm778, %vm1653
      %vm1688 = vmand %vm776, %vm1654
      %vm1689 = vmand %vm777, %vm1654
      %vm1690 = vmand %vm778, %vm1654
      %vm1691 = vmand %vm776, %vm1655
      %vm1692 = vmand %vm777, %vm1655
      %vm1693 = vmand %vm778, %vm1655
      %vm1694 = vmand %vm776, %vm1656
      %vm1695 = vmand %vm777, %vm1656
      %vm1696 = vmand %vm778, %vm1656
      %vm1697 = vmand %vm776, %vm1657
      %vm1698 = vmand %vm777, %vm1657
      %vm1699 = vmand %vm778, %vm1657
      %vm1700 = vmand %vm776, %vm1658
      %vm1701 = vmand %vm777, %vm1658
      %vm1702 = vmand %vm778, %vm1658
      %vm1703 = vmand %vm776, %vm1659
      %vm1704 = vmand %vm777, %vm1659
      %vm1705 = vmand %vm778, %vm1659
      %vm1706 = vmand %vm776, %vm1660
      %vm1707 = vmand %vm777, %vm1660
      %vm1708 = vmand %vm778, %vm1660
      %vm1709 = vcmp.le.s32.totalorder %v1629, 16
      %vm1710 = vcmp.le.s32.totalorder %v1630, 16
      %vm1711 = vcmp.le.s32.totalorder %v1631, 16
      %vm1712 = vcmp.le.s32.totalorder %v1632, 16
      %vm1713 = vcmp.le.s32.totalorder %v1633, 16
      %vm1714 = vcmp.le.s32.totalorder %v1634, 16
      %vm1715 = vcmp.le.s32.totalorder %v1635, 16
      %vm1716 = vcmp.le.s32.totalorder %v1636, 16
      %vm1717 = vcmp.le.s32.totalorder %v1637, 16
      %vm1718 = vcmp.le.s32.totalorder %v1638, 16
      %vm1719 = vcmp.le.s32.totalorder %v1639, 16
      %vm1720 = vcmp.le.s32.totalorder %v1640, 16
      %vm1721 = vcmp.le.s32.totalorder %v1641, 16
      %vm1722 = vcmp.le.s32.totalorder %v1642, 16
      %vm1723 = vcmp.le.s32.totalorder %v1643, 16
      %vm1724 = vcmp.le.s32.totalorder %v1644, 16
      %vm1725 = vmand %vm1661, %vm1709
      %vm1726 = vmand %vm1662, %vm1709
      %vm1727 = vmand %vm1663, %vm1709
      %vm1728 = vmand %vm1664, %vm1710
      %vm1729 = vmand %vm1665, %vm1710
      %vm1730 = vmand %vm1666, %vm1710
      %vm1731 = vmand %vm1667, %vm1711
      %vm1732 = vmand %vm1668, %vm1711
      %vm1733 = vmand %vm1669, %vm1711
      %vm1734 = vmand %vm1670, %vm1712
      %vm1735 = vmand %vm1671, %vm1712
      %vm1736 = vmand %vm1672, %vm1712
      %vm1737 = vmand %vm1673, %vm1713
      %vm1738 = vmand %vm1674, %vm1713
      %vm1739 = vmand %vm1675, %vm1713
      %vm1740 = vmand %vm1676, %vm1714
      %vm1741 = vmand %vm1677, %vm1714
      %vm1742 = vmand %vm1678, %vm1714
      %vm1743 = vmand %vm1679, %vm1715
      %vm1744 = vmand %vm1680, %vm1715
      %vm1745 = vmand %vm1681, %vm1715
      %vm1746 = vmand %vm1682, %vm1716
      %vm1747 = vmand %vm1683, %vm1716
      %vm1748 = vmand %vm1684, %vm1716
      %vm1749 = vmand %vm1685, %vm1717
      %vm1750 = vmand %vm1686, %vm1717
      %vm1751 = vmand %vm1687, %vm1717
      %vm1752 = vmand %vm1688, %vm1718
      %vm1753 = vmand %vm1689, %vm1718
      %vm1754 = vmand %vm1690, %vm1718
      %vm1755 = vmand %vm1691, %vm1719
      %vm1756 = vmand %vm1692, %vm1719
      %vm1757 = vmand %vm1693, %vm1719
      %vm1758 = vmand %vm1694, %vm1720
      %vm1759 = vmand %vm1695, %vm1720
      %vm1760 = vmand %vm1696, %vm1720
      %vm1761 = vmand %vm1697, %vm1721
      %vm1762 = vmand %vm1698, %vm1721
      %vm1763 = vmand %vm1699, %vm1721
      %vm1764 = vmand %vm1700, %vm1722
      %vm1765 = vmand %vm1701, %vm1722
      %vm1766 = vmand %vm1702, %vm1722
      %vm1767 = vmand %vm1703, %vm1723
      %vm1768 = vmand %vm1704, %vm1723
      %vm1769 = vmand %vm1705, %vm1723
      %vm1770 = vmand %vm1706, %vm1724
      %vm1771 = vmand %vm1707, %vm1724
      %vm1772 = vmand %vm1708, %vm1724
      %v1773 = vsel %vm1725, %v1580, 0.0
      %v1774 = vsel %vm1726, %v1581, 0.0
      %v1775 = vsel %vm1727, %v1582, 0.0
      %v1776 = vsel %vm1728, %v1583, 0.0
      %v1777 = vsel %vm1729, %v1584, 0.0
      %v1778 = vsel %vm1730, %v1585, 0.0
      %v1779 = vsel %vm1731, %v1586, 0.0
      %v1780 = vsel %vm1732, %v1587, 0.0
      %v1781 = vsel %vm1733, %v1588, 0.0
      %v1782 = vsel %vm1734, %v1589, 0.0
      %v1783 = vsel %vm1735, %v1590, 0.0
      %v1784 = vsel %vm1736, %v1591, 0.0
      %v1785 = vsel %vm1737, %v1592, 0.0
      %v1786 = vsel %vm1738, %v1593, 0.0
      %v1787 = vsel %vm1739, %v1594, 0.0
      %v1788 = vsel %vm1740, %v1595, 0.0
      %v1789 = vsel %vm1741, %v1596, 0.0
      %v1790 = vsel %vm1742, %v1597, 0.0
      %v1791 = vsel %vm1743, %v1598, 0.0
      %v1792 = vsel %vm1744, %v1599, 0.0
      %v1793 = vsel %vm1745, %v1600, 0.0
      %v1794 = vsel %vm1746, %v1601, 0.0
      %v1795 = vsel %vm1747, %v1602, 0.0
      %v1796 = vsel %vm1748, %v1603, 0.0
      %v1797 = vsel %vm1749, %v1604, 0.0
      %v1798 = vsel %vm1750, %v1605, 0.0
      %v1799 = vsel %vm1751, %v1606, 0.0
      %v1800 = vsel %vm1752, %v1607, 0.0
      %v1801 = vsel %vm1753, %v1608, 0.0
      %v1802 = vsel %vm1754, %v1609, 0.0
      %v1803 = vsel %vm1755, %v1610, 0.0
      %v1804 = vsel %vm1756, %v1611, 0.0
      %v1805 = vsel %vm1757, %v1612, 0.0
      %v1806 = vsel %vm1758, %v1613, 0.0
      %v1807 = vsel %vm1759, %v1614, 0.0
      %v1808 = vsel %vm1760, %v1615, 0.0
      %v1809 = vsel %vm1761, %v1616, 0.0
      %v1810 = vsel %vm1762, %v1617, 0.0
      %v1811 = vsel %vm1763, %v1618, 0.0
      %v1812 = vsel %vm1764, %v1619, 0.0
      %v1813 = vsel %vm1765, %v1620, 0.0
      %v1814 = vsel %vm1766, %v1621, 0.0
      %v1815 = vsel %vm1767, %v1622, 0.0
      %v1816 = vsel %vm1768, %v1623, 0.0
      %v1817 = vsel %vm1769, %v1624, 0.0
      %v1818 = vsel %vm1770, %v1625, 0.0
      %v1819 = vsel %vm1771, %v1626, 0.0
      %v1820 = vsel %vm1772, %v1627, 0.0
      %v1821 = vpack.c.bf16 %v1773, %v1773
      %v1822 = vpack.c.bf16 %v1774, %v1774
      %v1823 = vpack.c.bf16 %v1775, %v1775
      %v1824 = vpack.c.bf16 %v1776, %v1776
      %v1825 = vpack.c.bf16 %v1777, %v1777
      %v1826 = vpack.c.bf16 %v1778, %v1778
      %v1827 = vpack.c.bf16 %v1779, %v1779
      %v1828 = vpack.c.bf16 %v1780, %v1780
      %v1829 = vpack.c.bf16 %v1781, %v1781
      %v1830 = vpack.c.bf16 %v1782, %v1782
      %v1831 = vpack.c.bf16 %v1783, %v1783
      %v1832 = vpack.c.bf16 %v1784, %v1784
      %v1833 = vpack.c.bf16 %v1785, %v1785
      %v1834 = vpack.c.bf16 %v1786, %v1786
      %v1835 = vpack.c.bf16 %v1787, %v1787
      %v1836 = vpack.c.bf16 %v1788, %v1788
      %v1837 = vpack.c.bf16 %v1789, %v1789
      %v1838 = vpack.c.bf16 %v1790, %v1790
      %v1839 = vpack.c.bf16 %v1791, %v1791
      %v1840 = vpack.c.bf16 %v1792, %v1792
      %v1841 = vpack.c.bf16 %v1793, %v1793
      %v1842 = vpack.c.bf16 %v1794, %v1794
      %v1843 = vpack.c.bf16 %v1795, %v1795
      %v1844 = vpack.c.bf16 %v1796, %v1796
      %v1845 = vpack.c.bf16 %v1797, %v1797
      %v1846 = vpack.c.bf16 %v1798, %v1798
      %v1847 = vpack.c.bf16 %v1799, %v1799
      %v1848 = vpack.c.bf16 %v1800, %v1800
      %v1849 = vpack.c.bf16 %v1801, %v1801
      %v1850 = vpack.c.bf16 %v1802, %v1802
      %v1851 = vpack.c.bf16 %v1803, %v1803
      %v1852 = vpack.c.bf16 %v1804, %v1804
      %v1853 = vpack.c.bf16 %v1805, %v1805
      %v1854 = vpack.c.bf16 %v1806, %v1806
      %v1855 = vpack.c.bf16 %v1807, %v1807
      %v1856 = vpack.c.bf16 %v1808, %v1808
      %v1857 = vpack.c.bf16 %v1809, %v1809
      %v1858 = vpack.c.bf16 %v1810, %v1810
      %v1859 = vpack.c.bf16 %v1811, %v1811
      %v1860 = vpack.c.bf16 %v1812, %v1812
      %v1861 = vpack.c.bf16 %v1813, %v1813
      %v1862 = vpack.c.bf16 %v1814, %v1814
      %v1863 = vpack.c.bf16 %v1815, %v1815
      %v1864 = vpack.c.bf16 %v1816, %v1816
      %v1865 = vpack.c.bf16 %v1817, %v1817
      %v1866 = vpack.c.bf16 %v1818, %v1818
      %v1867 = vpack.c.bf16 %v1819, %v1819
      %v1868 = vpack.c.bf16 %v1820, %v1820
      %v1869 = vld [vmem:[%s512] sm:$0xf]
      %v1870 = vld [vmem:[%s512 + $0x4] sm:$0xf]
      %v1871 = vld [vmem:[%s512 + $0x8] sm:$0xf]
      %v1872 = vld [vmem:[%s512 + $0xc] sm:$0xf]
      %vm1873 = vsmask.f32 3328
      %vm1874 = vsmask.f32 7440
      %vm1875 = vmor %vm1873, %vm1874
      %v1877 = vshrl.u32 %v955, 16
      %v1879 = vrot.slane %v1877, 4
      %v1880 = vshll.u32 %v955, 16
      %v1882 = vrot.slane %v1880, 5
      %v1883 = vor.u32 %v1879, %v1882
      %v1884 = vrot.slane %v1883, 4
      %v1886 = vshll.u32 %v956, 16
      %v1888 = vrot.slane %v1886, 5
      %v1889 = vsel %vm1875, %v1884, %v1888
      %v1890 = vshrl.u32 %v956, 16
      %v1892 = vrot.slane %v1890, 4
      %v1893 = vor.u32 %v1892, %v1888
      %v1894 = vrot.slane %v1893, 4
      %v1896 = vshll.u32 %v957, 16
      %v1898 = vrot.slane %v1896, 5
      %v1899 = vsel %vm1875, %v1894, %v1898
      %v1901 = vshrl.u32 %v958, 16
      %v1903 = vrot.slane %v1901, 4
      %v1904 = vshll.u32 %v958, 16
      %v1906 = vrot.slane %v1904, 5
      %v1907 = vor.u32 %v1903, %v1906
      %v1908 = vrot.slane %v1907, 4
      %v1910 = vshll.u32 %v959, 16
      %v1912 = vrot.slane %v1910, 5
      %v1913 = vsel %vm1875, %v1908, %v1912
      %v1914 = vshrl.u32 %v959, 16
      %v1916 = vrot.slane %v1914, 4
      %v1917 = vor.u32 %v1916, %v1912
      %v1918 = vrot.slane %v1917, 4
      %v1920 = vshll.u32 %v960, 16
      %v1922 = vrot.slane %v1920, 5
      %v1923 = vsel %vm1875, %v1918, %v1922
      %v1925 = vshrl.u32 %v961, 16
      %v1927 = vrot.slane %v1925, 4
      %v1928 = vshll.u32 %v961, 16
      %v1930 = vrot.slane %v1928, 5
      %v1931 = vor.u32 %v1927, %v1930
      %v1932 = vrot.slane %v1931, 4
      %v1934 = vshll.u32 %v962, 16
      %v1936 = vrot.slane %v1934, 5
      %v1937 = vsel %vm1875, %v1932, %v1936
      %v1938 = vshrl.u32 %v962, 16
      %v1940 = vrot.slane %v1938, 4
      %v1941 = vor.u32 %v1940, %v1936
      %v1942 = vrot.slane %v1941, 4
      %v1944 = vshll.u32 %v963, 16
      %v1946 = vrot.slane %v1944, 5
      %v1947 = vsel %vm1875, %v1942, %v1946
      %v1949 = vshrl.u32 %v964, 16
      %v1951 = vrot.slane %v1949, 4
      %v1952 = vshll.u32 %v964, 16
      %v1954 = vrot.slane %v1952, 5
      %v1955 = vor.u32 %v1951, %v1954
      %v1956 = vrot.slane %v1955, 4
      %v1958 = vshll.u32 %v965, 16
      %v1960 = vrot.slane %v1958, 5
      %v1961 = vsel %vm1875, %v1956, %v1960
      %v1962 = vshrl.u32 %v965, 16
      %v1964 = vrot.slane %v1962, 4
      %v1965 = vor.u32 %v1964, %v1960
      %v1966 = vrot.slane %v1965, 4
      %v1968 = vshll.u32 %v966, 16
      %v1970 = vrot.slane %v1968, 5
      %v1971 = vsel %vm1875, %v1966, %v1970
      %v1973 = vshrl.u32 %v967, 16
      %v1975 = vrot.slane %v1973, 4
      %v1976 = vshll.u32 %v967, 16
      %v1978 = vrot.slane %v1976, 5
      %v1979 = vor.u32 %v1975, %v1978
      %v1980 = vrot.slane %v1979, 4
      %v1982 = vshll.u32 %v968, 16
      %v1984 = vrot.slane %v1982, 5
      %v1985 = vsel %vm1875, %v1980, %v1984
      %v1986 = vshrl.u32 %v968, 16
      %v1988 = vrot.slane %v1986, 4
      %v1989 = vor.u32 %v1988, %v1984
      %v1990 = vrot.slane %v1989, 4
      %v1992 = vshll.u32 %v969, 16
      %v1994 = vrot.slane %v1992, 5
      %v1995 = vsel %vm1875, %v1990, %v1994
      %v1997 = vshrl.u32 %v970, 16
      %v1999 = vrot.slane %v1997, 4
      %v2000 = vshll.u32 %v970, 16
      %v2002 = vrot.slane %v2000, 5
      %v2003 = vor.u32 %v1999, %v2002
      %v2004 = vrot.slane %v2003, 4
      %v2006 = vshll.u32 %v971, 16
      %v2008 = vrot.slane %v2006, 5
      %v2009 = vsel %vm1875, %v2004, %v2008
      %v2010 = vshrl.u32 %v971, 16
      %v2012 = vrot.slane %v2010, 4
      %v2013 = vor.u32 %v2012, %v2008
      %v2014 = vrot.slane %v2013, 4
      %v2016 = vshll.u32 %v972, 16
      %v2018 = vrot.slane %v2016, 5
      %v2019 = vsel %vm1875, %v2014, %v2018
      %v2021 = vshrl.u32 %v973, 16
      %v2023 = vrot.slane %v2021, 4
      %v2024 = vshll.u32 %v973, 16
      %v2026 = vrot.slane %v2024, 5
      %v2027 = vor.u32 %v2023, %v2026
      %v2028 = vrot.slane %v2027, 4
      %v2030 = vshll.u32 %v974, 16
      %v2032 = vrot.slane %v2030, 5
      %v2033 = vsel %vm1875, %v2028, %v2032
      %v2034 = vshrl.u32 %v974, 16
      %v2036 = vrot.slane %v2034, 4
      %v2037 = vor.u32 %v2036, %v2032
      %v2038 = vrot.slane %v2037, 4
      %v2040 = vshll.u32 %v975, 16
      %v2042 = vrot.slane %v2040, 5
      %v2043 = vsel %vm1875, %v2038, %v2042
      %v2045 = vshrl.u32 %v976, 16
      %v2047 = vrot.slane %v2045, 4
      %v2048 = vshll.u32 %v976, 16
      %v2050 = vrot.slane %v2048, 5
      %v2051 = vor.u32 %v2047, %v2050
      %v2052 = vrot.slane %v2051, 4
      %v2054 = vshll.u32 %v977, 16
      %v2056 = vrot.slane %v2054, 5
      %v2057 = vsel %vm1875, %v2052, %v2056
      %v2058 = vshrl.u32 %v977, 16
      %v2060 = vrot.slane %v2058, 4
      %v2061 = vor.u32 %v2060, %v2056
      %v2062 = vrot.slane %v2061, 4
      %v2064 = vshll.u32 %v978, 16
      %v2066 = vrot.slane %v2064, 5
      %v2067 = vsel %vm1875, %v2062, %v2066
      %v2069 = vshrl.u32 %v979, 16
      %v2071 = vrot.slane %v2069, 4
      %v2072 = vshll.u32 %v979, 16
      %v2074 = vrot.slane %v2072, 5
      %v2075 = vor.u32 %v2071, %v2074
      %v2076 = vrot.slane %v2075, 4
      %v2078 = vshll.u32 %v980, 16
      %v2080 = vrot.slane %v2078, 5
      %v2081 = vsel %vm1875, %v2076, %v2080
      %v2082 = vshrl.u32 %v980, 16
      %v2084 = vrot.slane %v2082, 4
      %v2085 = vor.u32 %v2084, %v2080
      %v2086 = vrot.slane %v2085, 4
      %v2088 = vshll.u32 %v981, 16
      %v2090 = vrot.slane %v2088, 5
      %v2091 = vsel %vm1875, %v2086, %v2090
      %v2093 = vshrl.u32 %v982, 16
      %v2095 = vrot.slane %v2093, 4
      %v2096 = vshll.u32 %v982, 16
      %v2098 = vrot.slane %v2096, 5
      %v2099 = vor.u32 %v2095, %v2098
      %v2100 = vrot.slane %v2099, 4
      %v2102 = vshll.u32 %v983, 16
      %v2104 = vrot.slane %v2102, 5
      %v2105 = vsel %vm1875, %v2100, %v2104
      %v2106 = vshrl.u32 %v983, 16
      %v2108 = vrot.slane %v2106, 4
      %v2109 = vor.u32 %v2108, %v2104
      %v2110 = vrot.slane %v2109, 4
      %v2112 = vshll.u32 %v984, 16
      %v2114 = vrot.slane %v2112, 5
      %v2115 = vsel %vm1875, %v2110, %v2114
      %v2117 = vshrl.u32 %v985, 16
      %v2119 = vrot.slane %v2117, 4
      %v2120 = vshll.u32 %v985, 16
      %v2122 = vrot.slane %v2120, 5
      %v2123 = vor.u32 %v2119, %v2122
      %v2124 = vrot.slane %v2123, 4
      %v2126 = vshll.u32 %v986, 16
      %v2128 = vrot.slane %v2126, 5
      %v2129 = vsel %vm1875, %v2124, %v2128
      %v2130 = vshrl.u32 %v986, 16
      %v2132 = vrot.slane %v2130, 4
      %v2133 = vor.u32 %v2132, %v2128
      %v2134 = vrot.slane %v2133, 4
      %v2136 = vshll.u32 %v987, 16
      %v2138 = vrot.slane %v2136, 5
      %v2139 = vsel %vm1875, %v2134, %v2138
      %v2141 = vshrl.u32 %v988, 16
      %v2143 = vrot.slane %v2141, 4
      %v2144 = vshll.u32 %v988, 16
      %v2146 = vrot.slane %v2144, 5
      %v2147 = vor.u32 %v2143, %v2146
      %v2148 = vrot.slane %v2147, 4
      %v2150 = vshll.u32 %v989, 16
      %v2152 = vrot.slane %v2150, 5
      %v2153 = vsel %vm1875, %v2148, %v2152
      %v2154 = vshrl.u32 %v989, 16
      %v2156 = vrot.slane %v2154, 4
      %v2157 = vor.u32 %v2156, %v2152
      %v2158 = vrot.slane %v2157, 4
      %v2160 = vshll.u32 %v990, 16
      %v2162 = vrot.slane %v2160, 5
      %v2163 = vsel %vm1875, %v2158, %v2162
      %v2165 = vshrl.u32 %v991, 16
      %v2167 = vrot.slane %v2165, 4
      %v2168 = vshll.u32 %v991, 16
      %v2170 = vrot.slane %v2168, 5
      %v2171 = vor.u32 %v2167, %v2170
      %v2172 = vrot.slane %v2171, 4
      %v2174 = vshll.u32 %v992, 16
      %v2176 = vrot.slane %v2174, 5
      %v2177 = vsel %vm1875, %v2172, %v2176
      %v2178 = vshrl.u32 %v992, 16
      %v2180 = vrot.slane %v2178, 4
      %v2181 = vor.u32 %v2180, %v2176
      %v2182 = vrot.slane %v2181, 4
      %v2184 = vshll.u32 %v993, 16
      %v2186 = vrot.slane %v2184, 5
      %v2187 = vsel %vm1875, %v2182, %v2186
      %v2189 = vshrl.u32 %v994, 16
      %v2191 = vrot.slane %v2189, 4
      %v2192 = vshll.u32 %v994, 16
      %v2194 = vrot.slane %v2192, 5
      %v2195 = vor.u32 %v2191, %v2194
      %v2196 = vrot.slane %v2195, 4
      %v2198 = vshll.u32 %v995, 16
      %v2200 = vrot.slane %v2198, 5
      %v2201 = vsel %vm1875, %v2196, %v2200
      %v2202 = vshrl.u32 %v995, 16
      %v2204 = vrot.slane %v2202, 4
      %v2205 = vor.u32 %v2204, %v2200
      %v2206 = vrot.slane %v2205, 4
      %v2208 = vshll.u32 %v996, 16
      %v2210 = vrot.slane %v2208, 5
      %v2211 = vsel %vm1875, %v2206, %v2210
      %v2213 = vshrl.u32 %v997, 16
      %v2215 = vrot.slane %v2213, 4
      %v2216 = vshll.u32 %v997, 16
      %v2218 = vrot.slane %v2216, 5
      %v2219 = vor.u32 %v2215, %v2218
      %v2220 = vrot.slane %v2219, 4
      %v2222 = vshll.u32 %v998, 16
      %v2224 = vrot.slane %v2222, 5
      %v2225 = vsel %vm1875, %v2220, %v2224
      %v2226 = vshrl.u32 %v998, 16
      %v2228 = vrot.slane %v2226, 4
      %v2229 = vor.u32 %v2228, %v2224
      %v2230 = vrot.slane %v2229, 4
      %v2232 = vshll.u32 %v999, 16
      %v2234 = vrot.slane %v2232, 5
      %v2235 = vsel %vm1875, %v2230, %v2234
      %v2237 = vshrl.u32 %v1000, 16
      %v2239 = vrot.slane %v2237, 4
      %v2240 = vshll.u32 %v1000, 16
      %v2242 = vrot.slane %v2240, 5
      %v2243 = vor.u32 %v2239, %v2242
      %v2244 = vrot.slane %v2243, 4
      %v2246 = vshll.u32 %v1001, 16
      %v2248 = vrot.slane %v2246, 5
      %v2249 = vsel %vm1875, %v2244, %v2248
      %v2250 = vshrl.u32 %v1001, 16
      %v2252 = vrot.slane %v2250, 4
      %v2253 = vor.u32 %v2252, %v2248
      %v2254 = vrot.slane %v2253, 4
      %v2256 = vshll.u32 %v1002, 16
      %v2258 = vrot.slane %v2256, 5
      %v2259 = vsel %vm1875, %v2254, %v2258
      %s2260 = scalar_lea.vmem %s512, 16
      %v2261 = vld [vmem:[%s2260] sm:$0xf]
      %v2262 = vld [vmem:[%s2260 + $0x4] sm:$0xf]
      %v2263 = vld [vmem:[%s2260 + $0x8] sm:$0xf]
      %v2264 = vld [vmem:[%s2260 + $0xc] sm:$0xf]
      %v2265 = vunpack.c.l.b16 %v1889
      %v2266 = vunpack.c.l.b16 %v1899
      %v2267 = vunpack.c.l.b16 %v1913
      %v2268 = vunpack.c.l.b16 %v1923
      %v2269 = vunpack.c.l.b16 %v1937
      %v2270 = vunpack.c.l.b16 %v1947
      %v2271 = vunpack.c.l.b16 %v1961
      %v2272 = vunpack.c.l.b16 %v1971
      %v2273 = vunpack.c.l.b16 %v1985
      %v2274 = vunpack.c.l.b16 %v1995
      %v2275 = vunpack.c.l.b16 %v2009
      %v2276 = vunpack.c.l.b16 %v2019
      %v2277 = vunpack.c.l.b16 %v2033
      %v2278 = vunpack.c.l.b16 %v2043
      %v2279 = vunpack.c.l.b16 %v2057
      %v2280 = vunpack.c.l.b16 %v2067
      %v2281 = vunpack.c.l.b16 %v2081
      %v2282 = vunpack.c.l.b16 %v2091
      %v2283 = vunpack.c.l.b16 %v2105
      %v2284 = vunpack.c.l.b16 %v2115
      %v2285 = vunpack.c.l.b16 %v2129
      %v2286 = vunpack.c.l.b16 %v2139
      %v2287 = vunpack.c.l.b16 %v2153
      %v2288 = vunpack.c.l.b16 %v2163
      %v2289 = vunpack.c.l.b16 %v2177
      %v2290 = vunpack.c.l.b16 %v2187
      %v2291 = vunpack.c.l.b16 %v2201
      %v2292 = vunpack.c.l.b16 %v2211
      %v2293 = vunpack.c.l.b16 %v2225
      %v2294 = vunpack.c.l.b16 %v2235
      %v2295 = vunpack.c.l.b16 %v2249
      %v2296 = vunpack.c.l.b16 %v2259
      %v2297 = vpack.c.b16 %v2266, %v2265
      %v2298 = vpack.c.b16 %v2268, %v2267
      %v2299 = vpack.c.b16 %v2270, %v2269
      %v2300 = vpack.c.b16 %v2272, %v2271
      %v2301 = vpack.c.b16 %v2274, %v2273
      %v2302 = vpack.c.b16 %v2276, %v2275
      %v2303 = vpack.c.b16 %v2278, %v2277
      %v2304 = vpack.c.b16 %v2280, %v2279
      %v2305 = vpack.c.b16 %v2282, %v2281
      %v2306 = vpack.c.b16 %v2284, %v2283
      %v2307 = vpack.c.b16 %v2286, %v2285
      %v2308 = vpack.c.b16 %v2288, %v2287
      %v2309 = vpack.c.b16 %v2290, %v2289
      %v2310 = vpack.c.b16 %v2292, %v2291
      %v2311 = vpack.c.b16 %v2294, %v2293
      %v2312 = vpack.c.b16 %v2296, %v2295
      %v2317 = vunpack.c.l.b16 %v2261
      %v2318 = vunpack.c.l.b16 %v2262
      %v2319 = vunpack.c.l.b16 %v2263
      %v2320 = vunpack.c.l.b16 %v2264
      %v2321 = vpack.c.b16 %v2318, %v2317
      %v2322 = vpack.c.b16 %v2320, %v2319
      %vm2325 = vcmask 261120
      %v2327 = vsel %vm2325, %v2297, 0
      %v2330 = vsel %vm2325, %v2298, 0
      %v2333 = vsel %vm2325, %v2299, 0
      %v2336 = vsel %vm2325, %v2300, 0
      %v2339 = vsel %vm2325, %v2301, 0
      %v2342 = vsel %vm2325, %v2302, 0
      %v2345 = vsel %vm2325, %v2303, 0
      %v2348 = vsel %vm2325, %v2304, 0
      %v2351 = vsel %vm2325, %v2305, 0
      %v2354 = vsel %vm2325, %v2306, 0
      %v2357 = vsel %vm2325, %v2307, 0
      %v2360 = vsel %vm2325, %v2308, 0
      %v2363 = vsel %vm2325, %v2309, 0
      %v2366 = vsel %vm2325, %v2310, 0
      %v2369 = vsel %vm2325, %v2311, 0
      %v2372 = vsel %vm2325, %v2312, 0
      %2374 = vmatpush.bf16.msra.mxu0 0
      %2375 = vmatpush.bf16.msra.mxu0 0
      %2376 = vmatpush.bf16.msra.mxu0 0
      %2377 = vmatpush.bf16.msra.mxu0 0
      %2378 = vmatpush.bf16.msra.mxu0 0
      %2379 = vmatpush.bf16.msra.mxu0 0
      %2380 = vmatpush.bf16.msra.mxu0 %v2322
      %2381 = vmatpush.bf16.msra.mxu0 %v2321
      %2382 = vmatmul.bf16.gmra.mxu0 %v2327
      %v2383 = vpop.f32.mrf.mxu0
      %v2384 = vadd.f32 0.0, %v2383
      %v2385 = vpop.f32.mrf.mxu0
      %v2386 = vadd.f32 0.0, %v2385
      %2387 = vmatmul.bf16.gmra.mxu0 %v2330
      %v2388 = vpop.f32.mrf.mxu0
      %v2389 = vadd.f32 0.0, %v2388
      %v2390 = vpop.f32.mrf.mxu0
      %v2391 = vadd.f32 0.0, %v2390
      %2392 = vmatmul.bf16.gmra.mxu0 %v2333
      %v2393 = vpop.f32.mrf.mxu0
      %v2394 = vadd.f32 0.0, %v2393
      %v2395 = vpop.f32.mrf.mxu0
      %v2396 = vadd.f32 0.0, %v2395
      %2397 = vmatmul.bf16.gmra.mxu0 %v2336
      %v2398 = vpop.f32.mrf.mxu0
      %v2399 = vadd.f32 0.0, %v2398
      %v2400 = vpop.f32.mrf.mxu0
      %v2401 = vadd.f32 0.0, %v2400
      %2402 = vmatmul.bf16.gmra.mxu0 %v2339
      %v2403 = vpop.f32.mrf.mxu0
      %v2404 = vadd.f32 0.0, %v2403
      %v2405 = vpop.f32.mrf.mxu0
      %v2406 = vadd.f32 0.0, %v2405
      %2407 = vmatmul.bf16.gmra.mxu0 %v2342
      %v2408 = vpop.f32.mrf.mxu0
      %v2409 = vadd.f32 0.0, %v2408
      %v2410 = vpop.f32.mrf.mxu0
      %v2411 = vadd.f32 0.0, %v2410
      %2412 = vmatmul.bf16.gmra.mxu0 %v2345
      %v2413 = vpop.f32.mrf.mxu0
      %v2414 = vadd.f32 0.0, %v2413
      %v2415 = vpop.f32.mrf.mxu0
      %v2416 = vadd.f32 0.0, %v2415
      %2417 = vmatmul.bf16.gmra.mxu0 %v2348
      %v2418 = vpop.f32.mrf.mxu0
      %v2419 = vadd.f32 0.0, %v2418
      %v2420 = vpop.f32.mrf.mxu0
      %v2421 = vadd.f32 0.0, %v2420
      %2422 = vmatmul.bf16.gmra.mxu0 %v2351
      %v2423 = vpop.f32.mrf.mxu0
      %v2424 = vadd.f32 0.0, %v2423
      %v2425 = vpop.f32.mrf.mxu0
      %v2426 = vadd.f32 0.0, %v2425
      %2427 = vmatmul.bf16.gmra.mxu0 %v2354
      %v2428 = vpop.f32.mrf.mxu0
      %v2429 = vadd.f32 0.0, %v2428
      %v2430 = vpop.f32.mrf.mxu0
      %v2431 = vadd.f32 0.0, %v2430
      %2432 = vmatmul.bf16.gmra.mxu0 %v2357
      %v2433 = vpop.f32.mrf.mxu0
      %v2434 = vadd.f32 0.0, %v2433
      %v2435 = vpop.f32.mrf.mxu0
      %v2436 = vadd.f32 0.0, %v2435
      %2437 = vmatmul.bf16.gmra.mxu0 %v2360
      %v2438 = vpop.f32.mrf.mxu0
      %v2439 = vadd.f32 0.0, %v2438
      %v2440 = vpop.f32.mrf.mxu0
      %v2441 = vadd.f32 0.0, %v2440
      %2442 = vmatmul.bf16.gmra.mxu0 %v2363
      %v2443 = vpop.f32.mrf.mxu0
      %v2444 = vadd.f32 0.0, %v2443
      %v2445 = vpop.f32.mrf.mxu0
      %v2446 = vadd.f32 0.0, %v2445
      %2447 = vmatmul.bf16.gmra.mxu0 %v2366
      %v2448 = vpop.f32.mrf.mxu0
      %v2449 = vadd.f32 0.0, %v2448
      %v2450 = vpop.f32.mrf.mxu0
      %v2451 = vadd.f32 0.0, %v2450
      %2452 = vmatmul.bf16.gmra.mxu0 %v2369
      %v2453 = vpop.f32.mrf.mxu0
      %v2454 = vadd.f32 0.0, %v2453
      %v2455 = vpop.f32.mrf.mxu0
      %v2456 = vadd.f32 0.0, %v2455
      %2457 = vmatmul.bf16.gmra.mxu0 %v2372
      %v2458 = vpop.f32.mrf.mxu0
      %v2459 = vadd.f32 0.0, %v2458
      %v2460 = vpop.f32.mrf.mxu0
      %v2461 = vadd.f32 0.0, %v2460
      %2462 = vdwg.mxu0
      %v2495 = vunpack.c.l.b16 %v955
      %v2496 = vunpack.c.l.b16 %v956
      %v2497 = vunpack.c.l.b16 %v958
      %v2498 = vunpack.c.l.b16 %v959
      %v2499 = vunpack.c.l.b16 %v961
      %v2500 = vunpack.c.l.b16 %v962
      %v2501 = vunpack.c.l.b16 %v964
      %v2502 = vunpack.c.l.b16 %v965
      %v2503 = vunpack.c.l.b16 %v967
      %v2504 = vunpack.c.l.b16 %v968
      %v2505 = vunpack.c.l.b16 %v970
      %v2506 = vunpack.c.l.b16 %v971
      %v2507 = vunpack.c.l.b16 %v973
      %v2508 = vunpack.c.l.b16 %v974
      %v2509 = vunpack.c.l.b16 %v976
      %v2510 = vunpack.c.l.b16 %v977
      %v2511 = vunpack.c.l.b16 %v979
      %v2512 = vunpack.c.l.b16 %v980
      %v2513 = vunpack.c.l.b16 %v982
      %v2514 = vunpack.c.l.b16 %v983
      %v2515 = vunpack.c.l.b16 %v985
      %v2516 = vunpack.c.l.b16 %v986
      %v2517 = vunpack.c.l.b16 %v988
      %v2518 = vunpack.c.l.b16 %v989
      %v2519 = vunpack.c.l.b16 %v991
      %v2520 = vunpack.c.l.b16 %v992
      %v2521 = vunpack.c.l.b16 %v994
      %v2522 = vunpack.c.l.b16 %v995
      %v2523 = vunpack.c.l.b16 %v997
      %v2524 = vunpack.c.l.b16 %v998
      %v2525 = vunpack.c.l.b16 %v1000
      %v2526 = vunpack.c.l.b16 %v1001
      %v2527 = vpack.c.b16 %v2496, %v2495
      %v2528 = vpack.c.b16 %v2498, %v2497
      %v2529 = vpack.c.b16 %v2500, %v2499
      %v2530 = vpack.c.b16 %v2502, %v2501
      %v2531 = vpack.c.b16 %v2504, %v2503
      %v2532 = vpack.c.b16 %v2506, %v2505
      %v2533 = vpack.c.b16 %v2508, %v2507
      %v2534 = vpack.c.b16 %v2510, %v2509
      %v2535 = vpack.c.b16 %v2512, %v2511
      %v2536 = vpack.c.b16 %v2514, %v2513
      %v2537 = vpack.c.b16 %v2516, %v2515
      %v2538 = vpack.c.b16 %v2518, %v2517
      %v2539 = vpack.c.b16 %v2520, %v2519
      %v2540 = vpack.c.b16 %v2522, %v2521
      %v2541 = vpack.c.b16 %v2524, %v2523
      %v2542 = vpack.c.b16 %v2526, %v2525
      %v2547 = vunpack.c.l.b16 %v1869
      %v2548 = vunpack.c.l.b16 %v1870
      %v2549 = vunpack.c.l.b16 %v1871
      %v2550 = vunpack.c.l.b16 %v1872
      %v2551 = vpack.c.b16 %v2548, %v2547
      %v2552 = vpack.c.b16 %v2550, %v2549
      %v2556 = vsel %vm2325, %v2527, 0
      %v2559 = vsel %vm2325, %v2528, 0
      %v2562 = vsel %vm2325, %v2529, 0
      %v2565 = vsel %vm2325, %v2530, 0
      %v2568 = vsel %vm2325, %v2531, 0
      %v2571 = vsel %vm2325, %v2532, 0
      %v2574 = vsel %vm2325, %v2533, 0
      %v2577 = vsel %vm2325, %v2534, 0
      %v2580 = vsel %vm2325, %v2535, 0
      %v2583 = vsel %vm2325, %v2536, 0
      %v2586 = vsel %vm2325, %v2537, 0
      %v2589 = vsel %vm2325, %v2538, 0
      %v2592 = vsel %vm2325, %v2539, 0
      %v2595 = vsel %vm2325, %v2540, 0
      %v2598 = vsel %vm2325, %v2541, 0
      %v2601 = vsel %vm2325, %v2542, 0
      %2603 = vmatpush.bf16.msra.mxu0 0
      %2604 = vmatpush.bf16.msra.mxu0 0
      %2605 = vmatpush.bf16.msra.mxu0 0
      %2606 = vmatpush.bf16.msra.mxu0 0
      %2607 = vmatpush.bf16.msra.mxu0 0
      %2608 = vmatpush.bf16.msra.mxu0 0
      %2609 = vmatpush.bf16.msra.mxu0 %v2552
      %2610 = vmatpush.bf16.msra.mxu0 %v2551
      %2611 = vmatmul.bf16.gmra.mxu0 %v2556
      %v2612 = vpop.f32.mrf.mxu0
      %v2613 = vadd.f32 %v2384, %v2612
      %v2614 = vpop.f32.mrf.mxu0
      %v2615 = vadd.f32 %v2386, %v2614
      %2616 = vmatmul.bf16.gmra.mxu0 %v2559
      %v2617 = vpop.f32.mrf.mxu0
      %v2618 = vadd.f32 %v2389, %v2617
      %v2619 = vpop.f32.mrf.mxu0
      %v2620 = vadd.f32 %v2391, %v2619
      %2621 = vmatmul.bf16.gmra.mxu0 %v2562
      %v2622 = vpop.f32.mrf.mxu0
      %v2623 = vadd.f32 %v2394, %v2622
      %v2624 = vpop.f32.mrf.mxu0
      %v2625 = vadd.f32 %v2396, %v2624
      %2626 = vmatmul.bf16.gmra.mxu0 %v2565
      %v2627 = vpop.f32.mrf.mxu0
      %v2628 = vadd.f32 %v2399, %v2627
      %v2629 = vpop.f32.mrf.mxu0
      %v2630 = vadd.f32 %v2401, %v2629
      %2631 = vmatmul.bf16.gmra.mxu0 %v2568
      %v2632 = vpop.f32.mrf.mxu0
      %v2633 = vadd.f32 %v2404, %v2632
      %v2634 = vpop.f32.mrf.mxu0
      %v2635 = vadd.f32 %v2406, %v2634
      %2636 = vmatmul.bf16.gmra.mxu0 %v2571
      %v2637 = vpop.f32.mrf.mxu0
      %v2638 = vadd.f32 %v2409, %v2637
      %v2639 = vpop.f32.mrf.mxu0
      %v2640 = vadd.f32 %v2411, %v2639
      %2641 = vmatmul.bf16.gmra.mxu0 %v2574
      %v2642 = vpop.f32.mrf.mxu0
      %v2643 = vadd.f32 %v2414, %v2642
      %v2644 = vpop.f32.mrf.mxu0
      %v2645 = vadd.f32 %v2416, %v2644
      %2646 = vmatmul.bf16.gmra.mxu0 %v2577
      %v2647 = vpop.f32.mrf.mxu0
      %v2648 = vadd.f32 %v2419, %v2647
      %v2649 = vpop.f32.mrf.mxu0
      %v2650 = vadd.f32 %v2421, %v2649
      %2651 = vmatmul.bf16.gmra.mxu0 %v2580
      %v2652 = vpop.f32.mrf.mxu0
      %v2653 = vadd.f32 %v2424, %v2652
      %v2654 = vpop.f32.mrf.mxu0
      %v2655 = vadd.f32 %v2426, %v2654
      %2656 = vmatmul.bf16.gmra.mxu0 %v2583
      %v2657 = vpop.f32.mrf.mxu0
      %v2658 = vadd.f32 %v2429, %v2657
      %v2659 = vpop.f32.mrf.mxu0
      %v2660 = vadd.f32 %v2431, %v2659
      %2661 = vmatmul.bf16.gmra.mxu0 %v2586
      %v2662 = vpop.f32.mrf.mxu0
      %v2663 = vadd.f32 %v2434, %v2662
      %v2664 = vpop.f32.mrf.mxu0
      %v2665 = vadd.f32 %v2436, %v2664
      %2666 = vmatmul.bf16.gmra.mxu0 %v2589
      %v2667 = vpop.f32.mrf.mxu0
      %v2668 = vadd.f32 %v2439, %v2667
      %v2669 = vpop.f32.mrf.mxu0
      %v2670 = vadd.f32 %v2441, %v2669
      %2671 = vmatmul.bf16.gmra.mxu0 %v2592
      %v2672 = vpop.f32.mrf.mxu0
      %v2673 = vadd.f32 %v2444, %v2672
      %v2674 = vpop.f32.mrf.mxu0
      %v2675 = vadd.f32 %v2446, %v2674
      %2676 = vmatmul.bf16.gmra.mxu0 %v2595
      %v2677 = vpop.f32.mrf.mxu0
      %v2678 = vadd.f32 %v2449, %v2677
      %v2679 = vpop.f32.mrf.mxu0
      %v2680 = vadd.f32 %v2451, %v2679
      %2681 = vmatmul.bf16.gmra.mxu0 %v2598
      %v2682 = vpop.f32.mrf.mxu0
      %v2683 = vadd.f32 %v2454, %v2682
      %v2684 = vpop.f32.mrf.mxu0
      %v2685 = vadd.f32 %v2456, %v2684
      %2686 = vmatmul.bf16.gmra.mxu0 %v2601
      %v2687 = vpop.f32.mrf.mxu0
      %v2688 = vadd.f32 %v2459, %v2687
      %v2689 = vpop.f32.mrf.mxu0
      %v2690 = vadd.f32 %v2461, %v2689
      %2691 = vdwg.mxu0
      %vm2708 = vcmask 1042432
      %vm2709 = vcmask 1046532
      %vm2710 = vmor %vm2708, %vm2709
      %v2711 = vrot.slane %v955, 5
      %v2712 = vrot.slane %v2711, 4
      %v2713 = vrot.slane %v956, 5
      %v2714 = vsel %vm2710, %v2712, %v2713
      %v2715 = vrot.slane %v2713, 4
      %v2716 = vrot.slane %v957, 5
      %v2717 = vsel %vm2710, %v2715, %v2716
      %v2718 = vrot.slane %v958, 5
      %v2719 = vrot.slane %v2718, 4
      %v2720 = vrot.slane %v959, 5
      %v2721 = vsel %vm2710, %v2719, %v2720
      %v2722 = vrot.slane %v2720, 4
      %v2723 = vrot.slane %v960, 5
      %v2724 = vsel %vm2710, %v2722, %v2723
      %v2725 = vrot.slane %v961, 5
      %v2726 = vrot.slane %v2725, 4
      %v2727 = vrot.slane %v962, 5
      %v2728 = vsel %vm2710, %v2726, %v2727
      %v2729 = vrot.slane %v2727, 4
      %v2730 = vrot.slane %v963, 5
      %v2731 = vsel %vm2710, %v2729, %v2730
      %v2732 = vrot.slane %v964, 5
      %v2733 = vrot.slane %v2732, 4
      %v2734 = vrot.slane %v965, 5
      %v2735 = vsel %vm2710, %v2733, %v2734
      %v2736 = vrot.slane %v2734, 4
      %v2737 = vrot.slane %v966, 5
      %v2738 = vsel %vm2710, %v2736, %v2737
      %v2739 = vrot.slane %v967, 5
      %v2740 = vrot.slane %v2739, 4
      %v2741 = vrot.slane %v968, 5
      %v2742 = vsel %vm2710, %v2740, %v2741
      %v2743 = vrot.slane %v2741, 4
      %v2744 = vrot.slane %v969, 5
      %v2745 = vsel %vm2710, %v2743, %v2744
      %v2746 = vrot.slane %v970, 5
      %v2747 = vrot.slane %v2746, 4
      %v2748 = vrot.slane %v971, 5
      %v2749 = vsel %vm2710, %v2747, %v2748
      %v2750 = vrot.slane %v2748, 4
      %v2751 = vrot.slane %v972, 5
      %v2752 = vsel %vm2710, %v2750, %v2751
      %v2753 = vrot.slane %v973, 5
      %v2754 = vrot.slane %v2753, 4
      %v2755 = vrot.slane %v974, 5
      %v2756 = vsel %vm2710, %v2754, %v2755
      %v2757 = vrot.slane %v2755, 4
      %v2758 = vrot.slane %v975, 5
      %v2759 = vsel %vm2710, %v2757, %v2758
      %v2760 = vrot.slane %v976, 5
      %v2761 = vrot.slane %v2760, 4
      %v2762 = vrot.slane %v977, 5
      %v2763 = vsel %vm2710, %v2761, %v2762
      %v2764 = vrot.slane %v2762, 4
      %v2765 = vrot.slane %v978, 5
      %v2766 = vsel %vm2710, %v2764, %v2765
      %v2767 = vrot.slane %v979, 5
      %v2768 = vrot.slane %v2767, 4
      %v2769 = vrot.slane %v980, 5
      %v2770 = vsel %vm2710, %v2768, %v2769
      %v2771 = vrot.slane %v2769, 4
      %v2772 = vrot.slane %v981, 5
      %v2773 = vsel %vm2710, %v2771, %v2772
      %v2774 = vrot.slane %v982, 5
      %v2775 = vrot.slane %v2774, 4
      %v2776 = vrot.slane %v983, 5
      %v2777 = vsel %vm2710, %v2775, %v2776
      %v2778 = vrot.slane %v2776, 4
      %v2779 = vrot.slane %v984, 5
      %v2780 = vsel %vm2710, %v2778, %v2779
      %v2781 = vrot.slane %v985, 5
      %v2782 = vrot.slane %v2781, 4
      %v2783 = vrot.slane %v986, 5
      %v2784 = vsel %vm2710, %v2782, %v2783
      %v2785 = vrot.slane %v2783, 4
      %v2786 = vrot.slane %v987, 5
      %v2787 = vsel %vm2710, %v2785, %v2786
      %v2788 = vrot.slane %v988, 5
      %v2789 = vrot.slane %v2788, 4
      %v2790 = vrot.slane %v989, 5
      %v2791 = vsel %vm2710, %v2789, %v2790
      %v2792 = vrot.slane %v2790, 4
      %v2793 = vrot.slane %v990, 5
      %v2794 = vsel %vm2710, %v2792, %v2793
      %v2795 = vrot.slane %v991, 5
      %v2796 = vrot.slane %v2795, 4
      %v2797 = vrot.slane %v992, 5
      %v2798 = vsel %vm2710, %v2796, %v2797
      %v2799 = vrot.slane %v2797, 4
      %v2800 = vrot.slane %v993, 5
      %v2801 = vsel %vm2710, %v2799, %v2800
      %v2802 = vrot.slane %v994, 5
      %v2803 = vrot.slane %v2802, 4
      %v2804 = vrot.slane %v995, 5
      %v2805 = vsel %vm2710, %v2803, %v2804
      %v2806 = vrot.slane %v2804, 4
      %v2807 = vrot.slane %v996, 5
      %v2808 = vsel %vm2710, %v2806, %v2807
      %v2809 = vrot.slane %v997, 5
      %v2810 = vrot.slane %v2809, 4
      %v2811 = vrot.slane %v998, 5
      %v2812 = vsel %vm2710, %v2810, %v2811
      %v2813 = vrot.slane %v2811, 4
      %v2814 = vrot.slane %v999, 5
      %v2815 = vsel %vm2710, %v2813, %v2814
      %v2816 = vrot.slane %v1000, 5
      %v2817 = vrot.slane %v2816, 4
      %v2818 = vrot.slane %v1001, 5
      %v2819 = vsel %vm2710, %v2817, %v2818
      %v2820 = vrot.slane %v2818, 4
      %v2821 = vrot.slane %v1002, 5
      %v2822 = vsel %vm2710, %v2820, %v2821
      %s2823 = scalar_lea.vmem %s512, 32
      %v2824 = vld [vmem:[%s2823] sm:$0xf]
      %v2825 = vld [vmem:[%s2823 + $0x4] sm:$0xf]
      %v2826 = vld [vmem:[%s2823 + $0x8] sm:$0xf]
      %v2827 = vld [vmem:[%s2823 + $0xc] sm:$0xf]
      %v2828 = vunpack.c.l.b16 %v2714
      %v2829 = vunpack.c.l.b16 %v2717
      %v2830 = vunpack.c.l.b16 %v2721
      %v2831 = vunpack.c.l.b16 %v2724
      %v2832 = vunpack.c.l.b16 %v2728
      %v2833 = vunpack.c.l.b16 %v2731
      %v2834 = vunpack.c.l.b16 %v2735
      %v2835 = vunpack.c.l.b16 %v2738
      %v2836 = vunpack.c.l.b16 %v2742
      %v2837 = vunpack.c.l.b16 %v2745
      %v2838 = vunpack.c.l.b16 %v2749
      %v2839 = vunpack.c.l.b16 %v2752
      %v2840 = vunpack.c.l.b16 %v2756
      %v2841 = vunpack.c.l.b16 %v2759
      %v2842 = vunpack.c.l.b16 %v2763
      %v2843 = vunpack.c.l.b16 %v2766
      %v2844 = vunpack.c.l.b16 %v2770
      %v2845 = vunpack.c.l.b16 %v2773
      %v2846 = vunpack.c.l.b16 %v2777
      %v2847 = vunpack.c.l.b16 %v2780
      %v2848 = vunpack.c.l.b16 %v2784
      %v2849 = vunpack.c.l.b16 %v2787
      %v2850 = vunpack.c.l.b16 %v2791
      %v2851 = vunpack.c.l.b16 %v2794
      %v2852 = vunpack.c.l.b16 %v2798
      %v2853 = vunpack.c.l.b16 %v2801
      %v2854 = vunpack.c.l.b16 %v2805
      %v2855 = vunpack.c.l.b16 %v2808
      %v2856 = vunpack.c.l.b16 %v2812
      %v2857 = vunpack.c.l.b16 %v2815
      %v2858 = vunpack.c.l.b16 %v2819
      %v2859 = vunpack.c.l.b16 %v2822
      %v2860 = vpack.c.b16 %v2829, %v2828
      %v2861 = vpack.c.b16 %v2831, %v2830
      %v2862 = vpack.c.b16 %v2833, %v2832
      %v2863 = vpack.c.b16 %v2835, %v2834
      %v2864 = vpack.c.b16 %v2837, %v2836
      %v2865 = vpack.c.b16 %v2839, %v2838
      %v2866 = vpack.c.b16 %v2841, %v2840
      %v2867 = vpack.c.b16 %v2843, %v2842
      %v2868 = vpack.c.b16 %v2845, %v2844
      %v2869 = vpack.c.b16 %v2847, %v2846
      %v2870 = vpack.c.b16 %v2849, %v2848
      %v2871 = vpack.c.b16 %v2851, %v2850
      %v2872 = vpack.c.b16 %v2853, %v2852
      %v2873 = vpack.c.b16 %v2855, %v2854
      %v2874 = vpack.c.b16 %v2857, %v2856
      %v2875 = vpack.c.b16 %v2859, %v2858
      %v2880 = vunpack.c.l.b16 %v2824
      %v2881 = vunpack.c.l.b16 %v2825
      %v2882 = vunpack.c.l.b16 %v2826
      %v2883 = vunpack.c.l.b16 %v2827
      %v2884 = vpack.c.b16 %v2881, %v2880
      %v2885 = vpack.c.b16 %v2883, %v2882
      %v2889 = vsel %vm2325, %v2860, 0
      %v2892 = vsel %vm2325, %v2861, 0
      %v2895 = vsel %vm2325, %v2862, 0
      %v2898 = vsel %vm2325, %v2863, 0
      %v2901 = vsel %vm2325, %v2864, 0
      %v2904 = vsel %vm2325, %v2865, 0
      %v2907 = vsel %vm2325, %v2866, 0
      %v2910 = vsel %vm2325, %v2867, 0
      %v2913 = vsel %vm2325, %v2868, 0
      %v2916 = vsel %vm2325, %v2869, 0
      %v2919 = vsel %vm2325, %v2870, 0
      %v2922 = vsel %vm2325, %v2871, 0
      %v2925 = vsel %vm2325, %v2872, 0
      %v2928 = vsel %vm2325, %v2873, 0
      %v2931 = vsel %vm2325, %v2874, 0
      %v2934 = vsel %vm2325, %v2875, 0
      %2936 = vmatpush.bf16.msra.mxu0 0
      %2937 = vmatpush.bf16.msra.mxu0 0
      %2938 = vmatpush.bf16.msra.mxu0 0
      %2939 = vmatpush.bf16.msra.mxu0 0
      %2940 = vmatpush.bf16.msra.mxu0 0
      %2941 = vmatpush.bf16.msra.mxu0 0
      %2942 = vmatpush.bf16.msra.mxu0 %v2885
      %2943 = vmatpush.bf16.msra.mxu0 %v2884
      %2944 = vmatmul.bf16.gmra.mxu0 %v2889
      %v2945 = vpop.f32.mrf.mxu0
      %v2946 = vadd.f32 0.0, %v2945
      %v2947 = vpop.f32.mrf.mxu0
      %v2948 = vadd.f32 0.0, %v2947
      %2949 = vmatmul.bf16.gmra.mxu0 %v2892
      %v2950 = vpop.f32.mrf.mxu0
      %v2951 = vadd.f32 0.0, %v2950
      %v2952 = vpop.f32.mrf.mxu0
      %v2953 = vadd.f32 0.0, %v2952
      %2954 = vmatmul.bf16.gmra.mxu0 %v2895
      %v2955 = vpop.f32.mrf.mxu0
      %v2956 = vadd.f32 0.0, %v2955
      %v2957 = vpop.f32.mrf.mxu0
      %v2958 = vadd.f32 0.0, %v2957
      %2959 = vmatmul.bf16.gmra.mxu0 %v2898
      %v2960 = vpop.f32.mrf.mxu0
      %v2961 = vadd.f32 0.0, %v2960
      %v2962 = vpop.f32.mrf.mxu0
      %v2963 = vadd.f32 0.0, %v2962
      %2964 = vmatmul.bf16.gmra.mxu0 %v2901
      %v2965 = vpop.f32.mrf.mxu0
      %v2966 = vadd.f32 0.0, %v2965
      %v2967 = vpop.f32.mrf.mxu0
      %v2968 = vadd.f32 0.0, %v2967
      %2969 = vmatmul.bf16.gmra.mxu0 %v2904
      %v2970 = vpop.f32.mrf.mxu0
      %v2971 = vadd.f32 0.0, %v2970
      %v2972 = vpop.f32.mrf.mxu0
      %v2973 = vadd.f32 0.0, %v2972
      %2974 = vmatmul.bf16.gmra.mxu0 %v2907
      %v2975 = vpop.f32.mrf.mxu0
      %v2976 = vadd.f32 0.0, %v2975
      %v2977 = vpop.f32.mrf.mxu0
      %v2978 = vadd.f32 0.0, %v2977
      %2979 = vmatmul.bf16.gmra.mxu0 %v2910
      %v2980 = vpop.f32.mrf.mxu0
      %v2981 = vadd.f32 0.0, %v2980
      %v2982 = vpop.f32.mrf.mxu0
      %v2983 = vadd.f32 0.0, %v2982
      %2984 = vmatmul.bf16.gmra.mxu0 %v2913
      %v2985 = vpop.f32.mrf.mxu0
      %v2986 = vadd.f32 0.0, %v2985
      %v2987 = vpop.f32.mrf.mxu0
      %v2988 = vadd.f32 0.0, %v2987
      %2989 = vmatmul.bf16.gmra.mxu0 %v2916
      %v2990 = vpop.f32.mrf.mxu0
      %v2991 = vadd.f32 0.0, %v2990
      %v2992 = vpop.f32.mrf.mxu0
      %v2993 = vadd.f32 0.0, %v2992
      %2994 = vmatmul.bf16.gmra.mxu0 %v2919
      %v2995 = vpop.f32.mrf.mxu0
      %v2996 = vadd.f32 0.0, %v2995
      %v2997 = vpop.f32.mrf.mxu0
      %v2998 = vadd.f32 0.0, %v2997
      %2999 = vmatmul.bf16.gmra.mxu0 %v2922
      %v3000 = vpop.f32.mrf.mxu0
      %v3001 = vadd.f32 0.0, %v3000
      %v3002 = vpop.f32.mrf.mxu0
      %v3003 = vadd.f32 0.0, %v3002
      %3004 = vmatmul.bf16.gmra.mxu0 %v2925
      %v3005 = vpop.f32.mrf.mxu0
      %v3006 = vadd.f32 0.0, %v3005
      %v3007 = vpop.f32.mrf.mxu0
      %v3008 = vadd.f32 0.0, %v3007
      %3009 = vmatmul.bf16.gmra.mxu0 %v2928
      %v3010 = vpop.f32.mrf.mxu0
      %v3011 = vadd.f32 0.0, %v3010
      %v3012 = vpop.f32.mrf.mxu0
      %v3013 = vadd.f32 0.0, %v3012
      %3014 = vmatmul.bf16.gmra.mxu0 %v2931
      %v3015 = vpop.f32.mrf.mxu0
      %v3016 = vadd.f32 0.0, %v3015
      %v3017 = vpop.f32.mrf.mxu0
      %v3018 = vadd.f32 0.0, %v3017
      %3019 = vmatmul.bf16.gmra.mxu0 %v2934
      %v3020 = vpop.f32.mrf.mxu0
      %v3021 = vadd.f32 0.0, %v3020
      %v3022 = vpop.f32.mrf.mxu0
      %v3023 = vadd.f32 0.0, %v3022
      %3024 = vdwg.mxu0
      %v3025 = vadd.f32 %v2613, %v2946
      %v3026 = vadd.f32 %v2615, %v2948
      %v3027 = vadd.f32 %v2618, %v2951
      %v3028 = vadd.f32 %v2620, %v2953
      %v3029 = vadd.f32 %v2623, %v2956
      %v3030 = vadd.f32 %v2625, %v2958
      %v3031 = vadd.f32 %v2628, %v2961
      %v3032 = vadd.f32 %v2630, %v2963
      %v3033 = vadd.f32 %v2633, %v2966
      %v3034 = vadd.f32 %v2635, %v2968
      %v3035 = vadd.f32 %v2638, %v2971
      %v3036 = vadd.f32 %v2640, %v2973
      %v3037 = vadd.f32 %v2643, %v2976
      %v3038 = vadd.f32 %v2645, %v2978
      %v3039 = vadd.f32 %v2648, %v2981
      %v3040 = vadd.f32 %v2650, %v2983
      %v3041 = vadd.f32 %v2653, %v2986
      %v3042 = vadd.f32 %v2655, %v2988
      %v3043 = vadd.f32 %v2658, %v2991
      %v3044 = vadd.f32 %v2660, %v2993
      %v3045 = vadd.f32 %v2663, %v2996
      %v3046 = vadd.f32 %v2665, %v2998
      %v3047 = vadd.f32 %v2668, %v3001
      %v3048 = vadd.f32 %v2670, %v3003
      %v3049 = vadd.f32 %v2673, %v3006
      %v3050 = vadd.f32 %v2675, %v3008
      %v3051 = vadd.f32 %v2678, %v3011
      %v3052 = vadd.f32 %v2680, %v3013
      %v3053 = vadd.f32 %v2683, %v3016
      %v3054 = vadd.f32 %v2685, %v3018
      %v3055 = vadd.f32 %v2688, %v3021
      %v3056 = vadd.f32 %v2690, %v3023
      %s3057 = scalar_lea.vmem %s512, 48
      %v3058 = vld [vmem:[%s3057] sm:$0xf]
      %v3059 = vld [vmem:[%s3057 + $0x4] sm:$0xf]
      %v3060 = vld [vmem:[%s3057 + $0x8] sm:$0xf]
      %v3061 = vld [vmem:[%s3057 + $0xc] sm:$0xf]
      %v3094 = vunpack.c.l.b16 %v1388
      %v3095 = vunpack.c.l.b16 %v1389
      %v3096 = vunpack.c.l.b16 %v1391
      %v3097 = vunpack.c.l.b16 %v1392
      %v3098 = vunpack.c.l.b16 %v1394
      %v3099 = vunpack.c.l.b16 %v1395
      %v3100 = vunpack.c.l.b16 %v1397
      %v3101 = vunpack.c.l.b16 %v1398
      %v3102 = vunpack.c.l.b16 %v1400
      %v3103 = vunpack.c.l.b16 %v1401
      %v3104 = vunpack.c.l.b16 %v1403
      %v3105 = vunpack.c.l.b16 %v1404
      %v3106 = vunpack.c.l.b16 %v1406
      %v3107 = vunpack.c.l.b16 %v1407
      %v3108 = vunpack.c.l.b16 %v1409
      %v3109 = vunpack.c.l.b16 %v1410
      %v3110 = vunpack.c.l.b16 %v1412
      %v3111 = vunpack.c.l.b16 %v1413
      %v3112 = vunpack.c.l.b16 %v1415
      %v3113 = vunpack.c.l.b16 %v1416
      %v3114 = vunpack.c.l.b16 %v1418
      %v3115 = vunpack.c.l.b16 %v1419
      %v3116 = vunpack.c.l.b16 %v1421
      %v3117 = vunpack.c.l.b16 %v1422
      %v3118 = vunpack.c.l.b16 %v1424
      %v3119 = vunpack.c.l.b16 %v1425
      %v3120 = vunpack.c.l.b16 %v1427
      %v3121 = vunpack.c.l.b16 %v1428
      %v3122 = vunpack.c.l.b16 %v1430
      %v3123 = vunpack.c.l.b16 %v1431
      %v3124 = vunpack.c.l.b16 %v1433
      %v3125 = vunpack.c.l.b16 %v1434
      %v3126 = vpack.c.b16 %v3095, %v3094
      %v3127 = vpack.c.b16 %v3097, %v3096
      %v3128 = vpack.c.b16 %v3099, %v3098
      %v3129 = vpack.c.b16 %v3101, %v3100
      %v3130 = vpack.c.b16 %v3103, %v3102
      %v3131 = vpack.c.b16 %v3105, %v3104
      %v3132 = vpack.c.b16 %v3107, %v3106
      %v3133 = vpack.c.b16 %v3109, %v3108
      %v3134 = vpack.c.b16 %v3111, %v3110
      %v3135 = vpack.c.b16 %v3113, %v3112
      %v3136 = vpack.c.b16 %v3115, %v3114
      %v3137 = vpack.c.b16 %v3117, %v3116
      %v3138 = vpack.c.b16 %v3119, %v3118
      %v3139 = vpack.c.b16 %v3121, %v3120
      %v3140 = vpack.c.b16 %v3123, %v3122
      %v3141 = vpack.c.b16 %v3125, %v3124
      %v3146 = vunpack.c.l.b16 %v3058
      %v3147 = vunpack.c.l.b16 %v3059
      %v3148 = vunpack.c.l.b16 %v3060
      %v3149 = vunpack.c.l.b16 %v3061
      %v3150 = vpack.c.b16 %v3147, %v3146
      %v3151 = vpack.c.b16 %v3149, %v3148
      %v3155 = vsel %vm2325, %v3126, 0
      %v3158 = vsel %vm2325, %v3127, 0
      %v3161 = vsel %vm2325, %v3128, 0
      %v3164 = vsel %vm2325, %v3129, 0
      %v3167 = vsel %vm2325, %v3130, 0
      %v3170 = vsel %vm2325, %v3131, 0
      %v3173 = vsel %vm2325, %v3132, 0
      %v3176 = vsel %vm2325, %v3133, 0
      %v3179 = vsel %vm2325, %v3134, 0
      %v3182 = vsel %vm2325, %v3135, 0
      %v3185 = vsel %vm2325, %v3136, 0
      %v3188 = vsel %vm2325, %v3137, 0
      %v3191 = vsel %vm2325, %v3138, 0
      %v3194 = vsel %vm2325, %v3139, 0
      %v3197 = vsel %vm2325, %v3140, 0
      %v3200 = vsel %vm2325, %v3141, 0
      %3202 = vmatpush.bf16.msra.mxu0 0
      %3203 = vmatpush.bf16.msra.mxu0 0
      %3204 = vmatpush.bf16.msra.mxu0 0
      %3205 = vmatpush.bf16.msra.mxu0 0
      %3206 = vmatpush.bf16.msra.mxu0 0
      %3207 = vmatpush.bf16.msra.mxu0 0
      %3208 = vmatpush.bf16.msra.mxu0 %v3151
      %3209 = vmatpush.bf16.msra.mxu0 %v3150
      %3210 = vmatmul.bf16.gmra.mxu0 %v3155
      %v3211 = vpop.f32.mrf.mxu0
      %v3212 = vadd.f32 0.0, %v3211
      %v3213 = vpop.f32.mrf.mxu0
      %v3214 = vadd.f32 0.0, %v3213
      %3215 = vmatmul.bf16.gmra.mxu0 %v3158
      %v3216 = vpop.f32.mrf.mxu0
      %v3217 = vadd.f32 0.0, %v3216
      %v3218 = vpop.f32.mrf.mxu0
      %v3219 = vadd.f32 0.0, %v3218
      %3220 = vmatmul.bf16.gmra.mxu0 %v3161
      %v3221 = vpop.f32.mrf.mxu0
      %v3222 = vadd.f32 0.0, %v3221
      %v3223 = vpop.f32.mrf.mxu0
      %v3224 = vadd.f32 0.0, %v3223
      %3225 = vmatmul.bf16.gmra.mxu0 %v3164
      %v3226 = vpop.f32.mrf.mxu0
      %v3227 = vadd.f32 0.0, %v3226
      %v3228 = vpop.f32.mrf.mxu0
      %v3229 = vadd.f32 0.0, %v3228
      %3230 = vmatmul.bf16.gmra.mxu0 %v3167
      %v3231 = vpop.f32.mrf.mxu0
      %v3232 = vadd.f32 0.0, %v3231
      %v3233 = vpop.f32.mrf.mxu0
      %v3234 = vadd.f32 0.0, %v3233
      %3235 = vmatmul.bf16.gmra.mxu0 %v3170
      %v3236 = vpop.f32.mrf.mxu0
      %v3237 = vadd.f32 0.0, %v3236
      %v3238 = vpop.f32.mrf.mxu0
      %v3239 = vadd.f32 0.0, %v3238
      %3240 = vmatmul.bf16.gmra.mxu0 %v3173
      %v3241 = vpop.f32.mrf.mxu0
      %v3242 = vadd.f32 0.0, %v3241
      %v3243 = vpop.f32.mrf.mxu0
      %v3244 = vadd.f32 0.0, %v3243
      %3245 = vmatmul.bf16.gmra.mxu0 %v3176
      %v3246 = vpop.f32.mrf.mxu0
      %v3247 = vadd.f32 0.0, %v3246
      %v3248 = vpop.f32.mrf.mxu0
      %v3249 = vadd.f32 0.0, %v3248
      %3250 = vmatmul.bf16.gmra.mxu0 %v3179
      %v3251 = vpop.f32.mrf.mxu0
      %v3252 = vadd.f32 0.0, %v3251
      %v3253 = vpop.f32.mrf.mxu0
      %v3254 = vadd.f32 0.0, %v3253
      %3255 = vmatmul.bf16.gmra.mxu0 %v3182
      %v3256 = vpop.f32.mrf.mxu0
      %v3257 = vadd.f32 0.0, %v3256
      %v3258 = vpop.f32.mrf.mxu0
      %v3259 = vadd.f32 0.0, %v3258
      %3260 = vmatmul.bf16.gmra.mxu0 %v3185
      %v3261 = vpop.f32.mrf.mxu0
      %v3262 = vadd.f32 0.0, %v3261
      %v3263 = vpop.f32.mrf.mxu0
      %v3264 = vadd.f32 0.0, %v3263
      %3265 = vmatmul.bf16.gmra.mxu0 %v3188
      %v3266 = vpop.f32.mrf.mxu0
      %v3267 = vadd.f32 0.0, %v3266
      %v3268 = vpop.f32.mrf.mxu0
      %v3269 = vadd.f32 0.0, %v3268
      %3270 = vmatmul.bf16.gmra.mxu0 %v3191
      %v3271 = vpop.f32.mrf.mxu0
      %v3272 = vadd.f32 0.0, %v3271
      %v3273 = vpop.f32.mrf.mxu0
      %v3274 = vadd.f32 0.0, %v3273
      %3275 = vmatmul.bf16.gmra.mxu0 %v3194
      %v3276 = vpop.f32.mrf.mxu0
      %v3277 = vadd.f32 0.0, %v3276
      %v3278 = vpop.f32.mrf.mxu0
      %v3279 = vadd.f32 0.0, %v3278
      %3280 = vmatmul.bf16.gmra.mxu0 %v3197
      %v3281 = vpop.f32.mrf.mxu0
      %v3282 = vadd.f32 0.0, %v3281
      %v3283 = vpop.f32.mrf.mxu0
      %v3284 = vadd.f32 0.0, %v3283
      %3285 = vmatmul.bf16.gmra.mxu0 %v3200
      %v3286 = vpop.f32.mrf.mxu0
      %v3287 = vadd.f32 0.0, %v3286
      %v3288 = vpop.f32.mrf.mxu0
      %v3289 = vadd.f32 0.0, %v3288
      %3290 = vdwg.mxu0
      %v3291 = vadd.f32 %v3025, %v3212
      %v3292 = vadd.f32 %v3026, %v3214
      %v3293 = vadd.f32 %v3027, %v3217
      %v3294 = vadd.f32 %v3028, %v3219
      %v3295 = vadd.f32 %v3029, %v3222
      %v3296 = vadd.f32 %v3030, %v3224
      %v3297 = vadd.f32 %v3031, %v3227
      %v3298 = vadd.f32 %v3032, %v3229
      %v3299 = vadd.f32 %v3033, %v3232
      %v3300 = vadd.f32 %v3034, %v3234
      %v3301 = vadd.f32 %v3035, %v3237
      %v3302 = vadd.f32 %v3036, %v3239
      %v3303 = vadd.f32 %v3037, %v3242
      %v3304 = vadd.f32 %v3038, %v3244
      %v3305 = vadd.f32 %v3039, %v3247
      %v3306 = vadd.f32 %v3040, %v3249
      %v3307 = vadd.f32 %v3041, %v3252
      %v3308 = vadd.f32 %v3042, %v3254
      %v3309 = vadd.f32 %v3043, %v3257
      %v3310 = vadd.f32 %v3044, %v3259
      %v3311 = vadd.f32 %v3045, %v3262
      %v3312 = vadd.f32 %v3046, %v3264
      %v3313 = vadd.f32 %v3047, %v3267
      %v3314 = vadd.f32 %v3048, %v3269
      %v3315 = vadd.f32 %v3049, %v3272
      %v3316 = vadd.f32 %v3050, %v3274
      %v3317 = vadd.f32 %v3051, %v3277
      %v3318 = vadd.f32 %v3052, %v3279
      %v3319 = vadd.f32 %v3053, %v3282
      %v3320 = vadd.f32 %v3054, %v3284
      %v3321 = vadd.f32 %v3055, %v3287
      %v3322 = vadd.f32 %v3056, %v3289
      %v3324 = vshrl.u32 %v1388, 16
      %v3326 = vrot.slane %v3324, 4
      %v3327 = vshll.u32 %v1388, 16
      %v3329 = vrot.slane %v3327, 5
      %v3330 = vor.u32 %v3326, %v3329
      %v3331 = vrot.slane %v3330, 4
      %v3333 = vshll.u32 %v1389, 16
      %v3335 = vrot.slane %v3333, 5
      %v3336 = vsel %vm1875, %v3331, %v3335
      %v3337 = vshrl.u32 %v1389, 16
      %v3339 = vrot.slane %v3337, 4
      %v3340 = vor.u32 %v3339, %v3335
      %v3341 = vrot.slane %v3340, 4
      %v3343 = vshll.u32 %v1390, 16
      %v3345 = vrot.slane %v3343, 5
      %v3346 = vsel %vm1875, %v3341, %v3345
      %v3348 = vshrl.u32 %v1391, 16
      %v3350 = vrot.slane %v3348, 4
      %v3351 = vshll.u32 %v1391, 16
      %v3353 = vrot.slane %v3351, 5
      %v3354 = vor.u32 %v3350, %v3353
      %v3355 = vrot.slane %v3354, 4
      %v3357 = vshll.u32 %v1392, 16
      %v3359 = vrot.slane %v3357, 5
      %v3360 = vsel %vm1875, %v3355, %v3359
      %v3361 = vshrl.u32 %v1392, 16
      %v3363 = vrot.slane %v3361, 4
      %v3364 = vor.u32 %v3363, %v3359
      %v3365 = vrot.slane %v3364, 4
      %v3367 = vshll.u32 %v1393, 16
      %v3369 = vrot.slane %v3367, 5
      %v3370 = vsel %vm1875, %v3365, %v3369
      %v3372 = vshrl.u32 %v1394, 16
      %v3374 = vrot.slane %v3372, 4
      %v3375 = vshll.u32 %v1394, 16
      %v3377 = vrot.slane %v3375, 5
      %v3378 = vor.u32 %v3374, %v3377
      %v3379 = vrot.slane %v3378, 4
      %v3381 = vshll.u32 %v1395, 16
      %v3383 = vrot.slane %v3381, 5
      %v3384 = vsel %vm1875, %v3379, %v3383
      %v3385 = vshrl.u32 %v1395, 16
      %v3387 = vrot.slane %v3385, 4
      %v3388 = vor.u32 %v3387, %v3383
      %v3389 = vrot.slane %v3388, 4
      %v3391 = vshll.u32 %v1396, 16
      %v3393 = vrot.slane %v3391, 5
      %v3394 = vsel %vm1875, %v3389, %v3393
      %v3396 = vshrl.u32 %v1397, 16
      %v3398 = vrot.slane %v3396, 4
      %v3399 = vshll.u32 %v1397, 16
      %v3401 = vrot.slane %v3399, 5
      %v3402 = vor.u32 %v3398, %v3401
      %v3403 = vrot.slane %v3402, 4
      %v3405 = vshll.u32 %v1398, 16
      %v3407 = vrot.slane %v3405, 5
      %v3408 = vsel %vm1875, %v3403, %v3407
      %v3409 = vshrl.u32 %v1398, 16
      %v3411 = vrot.slane %v3409, 4
      %v3412 = vor.u32 %v3411, %v3407
      %v3413 = vrot.slane %v3412, 4
      %v3415 = vshll.u32 %v1399, 16
      %v3417 = vrot.slane %v3415, 5
      %v3418 = vsel %vm1875, %v3413, %v3417
      %v3420 = vshrl.u32 %v1400, 16
      %v3422 = vrot.slane %v3420, 4
      %v3423 = vshll.u32 %v1400, 16
      %v3425 = vrot.slane %v3423, 5
      %v3426 = vor.u32 %v3422, %v3425
      %v3427 = vrot.slane %v3426, 4
      %v3429 = vshll.u32 %v1401, 16
      %v3431 = vrot.slane %v3429, 5
      %v3432 = vsel %vm1875, %v3427, %v3431
      %v3433 = vshrl.u32 %v1401, 16
      %v3435 = vrot.slane %v3433, 4
      %v3436 = vor.u32 %v3435, %v3431
      %v3437 = vrot.slane %v3436, 4
      %v3439 = vshll.u32 %v1402, 16
      %v3441 = vrot.slane %v3439, 5
      %v3442 = vsel %vm1875, %v3437, %v3441
      %v3444 = vshrl.u32 %v1403, 16
      %v3446 = vrot.slane %v3444, 4
      %v3447 = vshll.u32 %v1403, 16
      %v3449 = vrot.slane %v3447, 5
      %v3450 = vor.u32 %v3446, %v3449
      %v3451 = vrot.slane %v3450, 4
      %v3453 = vshll.u32 %v1404, 16
      %v3455 = vrot.slane %v3453, 5
      %v3456 = vsel %vm1875, %v3451, %v3455
      %v3457 = vshrl.u32 %v1404, 16
      %v3459 = vrot.slane %v3457, 4
      %v3460 = vor.u32 %v3459, %v3455
      %v3461 = vrot.slane %v3460, 4
      %v3463 = vshll.u32 %v1405, 16
      %v3465 = vrot.slane %v3463, 5
      %v3466 = vsel %vm1875, %v3461, %v3465
      %v3468 = vshrl.u32 %v1406, 16
      %v3470 = vrot.slane %v3468, 4
      %v3471 = vshll.u32 %v1406, 16
      %v3473 = vrot.slane %v3471, 5
      %v3474 = vor.u32 %v3470, %v3473
      %v3475 = vrot.slane %v3474, 4
      %v3477 = vshll.u32 %v1407, 16
      %v3479 = vrot.slane %v3477, 5
      %v3480 = vsel %vm1875, %v3475, %v3479
      %v3481 = vshrl.u32 %v1407, 16
      %v3483 = vrot.slane %v3481, 4
      %v3484 = vor.u32 %v3483, %v3479
      %v3485 = vrot.slane %v3484, 4
      %v3487 = vshll.u32 %v1408, 16
      %v3489 = vrot.slane %v3487, 5
      %v3490 = vsel %vm1875, %v3485, %v3489
      %v3492 = vshrl.u32 %v1409, 16
      %v3494 = vrot.slane %v3492, 4
      %v3495 = vshll.u32 %v1409, 16
      %v3497 = vrot.slane %v3495, 5
      %v3498 = vor.u32 %v3494, %v3497
      %v3499 = vrot.slane %v3498, 4
      %v3501 = vshll.u32 %v1410, 16
      %v3503 = vrot.slane %v3501, 5
      %v3504 = vsel %vm1875, %v3499, %v3503
      %v3505 = vshrl.u32 %v1410, 16
      %v3507 = vrot.slane %v3505, 4
      %v3508 = vor.u32 %v3507, %v3503
      %v3509 = vrot.slane %v3508, 4
      %v3511 = vshll.u32 %v1411, 16
      %v3513 = vrot.slane %v3511, 5
      %v3514 = vsel %vm1875, %v3509, %v3513
      %v3516 = vshrl.u32 %v1412, 16
      %v3518 = vrot.slane %v3516, 4
      %v3519 = vshll.u32 %v1412, 16
      %v3521 = vrot.slane %v3519, 5
      %v3522 = vor.u32 %v3518, %v3521
      %v3523 = vrot.slane %v3522, 4
      %v3525 = vshll.u32 %v1413, 16
      %v3527 = vrot.slane %v3525, 5
      %v3528 = vsel %vm1875, %v3523, %v3527
      %v3529 = vshrl.u32 %v1413, 16
      %v3531 = vrot.slane %v3529, 4
      %v3532 = vor.u32 %v3531, %v3527
      %v3533 = vrot.slane %v3532, 4
      %v3535 = vshll.u32 %v1414, 16
      %v3537 = vrot.slane %v3535, 5
      %v3538 = vsel %vm1875, %v3533, %v3537
      %v3540 = vshrl.u32 %v1415, 16
      %v3542 = vrot.slane %v3540, 4
      %v3543 = vshll.u32 %v1415, 16
      %v3545 = vrot.slane %v3543, 5
      %v3546 = vor.u32 %v3542, %v3545
      %v3547 = vrot.slane %v3546, 4
      %v3549 = vshll.u32 %v1416, 16
      %v3551 = vrot.slane %v3549, 5
      %v3552 = vsel %vm1875, %v3547, %v3551
      %v3553 = vshrl.u32 %v1416, 16
      %v3555 = vrot.slane %v3553, 4
      %v3556 = vor.u32 %v3555, %v3551
      %v3557 = vrot.slane %v3556, 4
      %v3559 = vshll.u32 %v1417, 16
      %v3561 = vrot.slane %v3559, 5
      %v3562 = vsel %vm1875, %v3557, %v3561
      %v3564 = vshrl.u32 %v1418, 16
      %v3566 = vrot.slane %v3564, 4
      %v3567 = vshll.u32 %v1418, 16
      %v3569 = vrot.slane %v3567, 5
      %v3570 = vor.u32 %v3566, %v3569
      %v3571 = vrot.slane %v3570, 4
      %v3573 = vshll.u32 %v1419, 16
      %v3575 = vrot.slane %v3573, 5
      %v3576 = vsel %vm1875, %v3571, %v3575
      %v3577 = vshrl.u32 %v1419, 16
      %v3579 = vrot.slane %v3577, 4
      %v3580 = vor.u32 %v3579, %v3575
      %v3581 = vrot.slane %v3580, 4
      %v3583 = vshll.u32 %v1420, 16
      %v3585 = vrot.slane %v3583, 5
      %v3586 = vsel %vm1875, %v3581, %v3585
      %v3588 = vshrl.u32 %v1421, 16
      %v3590 = vrot.slane %v3588, 4
      %v3591 = vshll.u32 %v1421, 16
      %v3593 = vrot.slane %v3591, 5
      %v3594 = vor.u32 %v3590, %v3593
      %v3595 = vrot.slane %v3594, 4
      %v3597 = vshll.u32 %v1422, 16
      %v3599 = vrot.slane %v3597, 5
      %v3600 = vsel %vm1875, %v3595, %v3599
      %v3601 = vshrl.u32 %v1422, 16
      %v3603 = vrot.slane %v3601, 4
      %v3604 = vor.u32 %v3603, %v3599
      %v3605 = vrot.slane %v3604, 4
      %v3607 = vshll.u32 %v1423, 16
      %v3609 = vrot.slane %v3607, 5
      %v3610 = vsel %vm1875, %v3605, %v3609
      %v3612 = vshrl.u32 %v1424, 16
      %v3614 = vrot.slane %v3612, 4
      %v3615 = vshll.u32 %v1424, 16
      %v3617 = vrot.slane %v3615, 5
      %v3618 = vor.u32 %v3614, %v3617
      %v3619 = vrot.slane %v3618, 4
      %v3621 = vshll.u32 %v1425, 16
      %v3623 = vrot.slane %v3621, 5
      %v3624 = vsel %vm1875, %v3619, %v3623
      %v3625 = vshrl.u32 %v1425, 16
      %v3627 = vrot.slane %v3625, 4
      %v3628 = vor.u32 %v3627, %v3623
      %v3629 = vrot.slane %v3628, 4
      %v3631 = vshll.u32 %v1426, 16
      %v3633 = vrot.slane %v3631, 5
      %v3634 = vsel %vm1875, %v3629, %v3633
      %v3636 = vshrl.u32 %v1427, 16
      %v3638 = vrot.slane %v3636, 4
      %v3639 = vshll.u32 %v1427, 16
      %v3641 = vrot.slane %v3639, 5
      %v3642 = vor.u32 %v3638, %v3641
      %v3643 = vrot.slane %v3642, 4
      %v3645 = vshll.u32 %v1428, 16
      %v3647 = vrot.slane %v3645, 5
      %v3648 = vsel %vm1875, %v3643, %v3647
      %v3649 = vshrl.u32 %v1428, 16
      %v3651 = vrot.slane %v3649, 4
      %v3652 = vor.u32 %v3651, %v3647
      %v3653 = vrot.slane %v3652, 4
      %v3655 = vshll.u32 %v1429, 16
      %v3657 = vrot.slane %v3655, 5
      %v3658 = vsel %vm1875, %v3653, %v3657
      %v3660 = vshrl.u32 %v1430, 16
      %v3662 = vrot.slane %v3660, 4
      %v3663 = vshll.u32 %v1430, 16
      %v3665 = vrot.slane %v3663, 5
      %v3666 = vor.u32 %v3662, %v3665
      %v3667 = vrot.slane %v3666, 4
      %v3669 = vshll.u32 %v1431, 16
      %v3671 = vrot.slane %v3669, 5
      %v3672 = vsel %vm1875, %v3667, %v3671
      %v3673 = vshrl.u32 %v1431, 16
      %v3675 = vrot.slane %v3673, 4
      %v3676 = vor.u32 %v3675, %v3671
      %v3677 = vrot.slane %v3676, 4
      %v3679 = vshll.u32 %v1432, 16
      %v3681 = vrot.slane %v3679, 5
      %v3682 = vsel %vm1875, %v3677, %v3681
      %v3684 = vshrl.u32 %v1433, 16
      %v3686 = vrot.slane %v3684, 4
      %v3687 = vshll.u32 %v1433, 16
      %v3689 = vrot.slane %v3687, 5
      %v3690 = vor.u32 %v3686, %v3689
      %v3691 = vrot.slane %v3690, 4
      %v3693 = vshll.u32 %v1434, 16
      %v3695 = vrot.slane %v3693, 5
      %v3696 = vsel %vm1875, %v3691, %v3695
      %v3697 = vshrl.u32 %v1434, 16
      %v3699 = vrot.slane %v3697, 4
      %v3700 = vor.u32 %v3699, %v3695
      %v3701 = vrot.slane %v3700, 4
      %v3703 = vshll.u32 %v1435, 16
      %v3705 = vrot.slane %v3703, 5
      %v3706 = vsel %vm1875, %v3701, %v3705
      %s3707 = scalar_lea.vmem %s512, 64
      %v3708 = vld [vmem:[%s3707] sm:$0xf]
      %v3709 = vld [vmem:[%s3707 + $0x4] sm:$0xf]
      %v3710 = vld [vmem:[%s3707 + $0x8] sm:$0xf]
      %v3711 = vld [vmem:[%s3707 + $0xc] sm:$0xf]
      %v3712 = vunpack.c.l.b16 %v3336
      %v3713 = vunpack.c.l.b16 %v3346
      %v3714 = vunpack.c.l.b16 %v3360
      %v3715 = vunpack.c.l.b16 %v3370
      %v3716 = vunpack.c.l.b16 %v3384
      %v3717 = vunpack.c.l.b16 %v3394
      %v3718 = vunpack.c.l.b16 %v3408
      %v3719 = vunpack.c.l.b16 %v3418
      %v3720 = vunpack.c.l.b16 %v3432
      %v3721 = vunpack.c.l.b16 %v3442
      %v3722 = vunpack.c.l.b16 %v3456
      %v3723 = vunpack.c.l.b16 %v3466
      %v3724 = vunpack.c.l.b16 %v3480
      %v3725 = vunpack.c.l.b16 %v3490
      %v3726 = vunpack.c.l.b16 %v3504
      %v3727 = vunpack.c.l.b16 %v3514
      %v3728 = vunpack.c.l.b16 %v3528
      %v3729 = vunpack.c.l.b16 %v3538
      %v3730 = vunpack.c.l.b16 %v3552
      %v3731 = vunpack.c.l.b16 %v3562
      %v3732 = vunpack.c.l.b16 %v3576
      %v3733 = vunpack.c.l.b16 %v3586
      %v3734 = vunpack.c.l.b16 %v3600
      %v3735 = vunpack.c.l.b16 %v3610
      %v3736 = vunpack.c.l.b16 %v3624
      %v3737 = vunpack.c.l.b16 %v3634
      %v3738 = vunpack.c.l.b16 %v3648
      %v3739 = vunpack.c.l.b16 %v3658
      %v3740 = vunpack.c.l.b16 %v3672
      %v3741 = vunpack.c.l.b16 %v3682
      %v3742 = vunpack.c.l.b16 %v3696
      %v3743 = vunpack.c.l.b16 %v3706
      %v3744 = vpack.c.b16 %v3713, %v3712
      %v3745 = vpack.c.b16 %v3715, %v3714
      %v3746 = vpack.c.b16 %v3717, %v3716
      %v3747 = vpack.c.b16 %v3719, %v3718
      %v3748 = vpack.c.b16 %v3721, %v3720
      %v3749 = vpack.c.b16 %v3723, %v3722
      %v3750 = vpack.c.b16 %v3725, %v3724
      %v3751 = vpack.c.b16 %v3727, %v3726
      %v3752 = vpack.c.b16 %v3729, %v3728
      %v3753 = vpack.c.b16 %v3731, %v3730
      %v3754 = vpack.c.b16 %v3733, %v3732
      %v3755 = vpack.c.b16 %v3735, %v3734
      %v3756 = vpack.c.b16 %v3737, %v3736
      %v3757 = vpack.c.b16 %v3739, %v3738
      %v3758 = vpack.c.b16 %v3741, %v3740
      %v3759 = vpack.c.b16 %v3743, %v3742
      %v3764 = vunpack.c.l.b16 %v3708
      %v3765 = vunpack.c.l.b16 %v3709
      %v3766 = vunpack.c.l.b16 %v3710
      %v3767 = vunpack.c.l.b16 %v3711
      %v3768 = vpack.c.b16 %v3765, %v3764
      %v3769 = vpack.c.b16 %v3767, %v3766
      %v3773 = vsel %vm2325, %v3744, 0
      %v3776 = vsel %vm2325, %v3745, 0
      %v3779 = vsel %vm2325, %v3746, 0
      %v3782 = vsel %vm2325, %v3747, 0
      %v3785 = vsel %vm2325, %v3748, 0
      %v3788 = vsel %vm2325, %v3749, 0
      %v3791 = vsel %vm2325, %v3750, 0
      %v3794 = vsel %vm2325, %v3751, 0
      %v3797 = vsel %vm2325, %v3752, 0
      %v3800 = vsel %vm2325, %v3753, 0
      %v3803 = vsel %vm2325, %v3754, 0
      %v3806 = vsel %vm2325, %v3755, 0
      %v3809 = vsel %vm2325, %v3756, 0
      %v3812 = vsel %vm2325, %v3757, 0
      %v3815 = vsel %vm2325, %v3758, 0
      %v3818 = vsel %vm2325, %v3759, 0
      %3820 = vmatpush.bf16.msra.mxu0 0
      %3821 = vmatpush.bf16.msra.mxu0 0
      %3822 = vmatpush.bf16.msra.mxu0 0
      %3823 = vmatpush.bf16.msra.mxu0 0
      %3824 = vmatpush.bf16.msra.mxu0 0
      %3825 = vmatpush.bf16.msra.mxu0 0
      %3826 = vmatpush.bf16.msra.mxu0 %v3769
      %3827 = vmatpush.bf16.msra.mxu0 %v3768
      %3828 = vmatmul.bf16.gmra.mxu0 %v3773
      %v3829 = vpop.f32.mrf.mxu0
      %v3830 = vadd.f32 0.0, %v3829
      %v3831 = vpop.f32.mrf.mxu0
      %v3832 = vadd.f32 0.0, %v3831
      %3833 = vmatmul.bf16.gmra.mxu0 %v3776
      %v3834 = vpop.f32.mrf.mxu0
      %v3835 = vadd.f32 0.0, %v3834
      %v3836 = vpop.f32.mrf.mxu0
      %v3837 = vadd.f32 0.0, %v3836
      %3838 = vmatmul.bf16.gmra.mxu0 %v3779
      %v3839 = vpop.f32.mrf.mxu0
      %v3840 = vadd.f32 0.0, %v3839
      %v3841 = vpop.f32.mrf.mxu0
      %v3842 = vadd.f32 0.0, %v3841
      %3843 = vmatmul.bf16.gmra.mxu0 %v3782
      %v3844 = vpop.f32.mrf.mxu0
      %v3845 = vadd.f32 0.0, %v3844
      %v3846 = vpop.f32.mrf.mxu0
      %v3847 = vadd.f32 0.0, %v3846
      %3848 = vmatmul.bf16.gmra.mxu0 %v3785
      %v3849 = vpop.f32.mrf.mxu0
      %v3850 = vadd.f32 0.0, %v3849
      %v3851 = vpop.f32.mrf.mxu0
      %v3852 = vadd.f32 0.0, %v3851
      %3853 = vmatmul.bf16.gmra.mxu0 %v3788
      %v3854 = vpop.f32.mrf.mxu0
      %v3855 = vadd.f32 0.0, %v3854
      %v3856 = vpop.f32.mrf.mxu0
      %v3857 = vadd.f32 0.0, %v3856
      %3858 = vmatmul.bf16.gmra.mxu0 %v3791
      %v3859 = vpop.f32.mrf.mxu0
      %v3860 = vadd.f32 0.0, %v3859
      %v3861 = vpop.f32.mrf.mxu0
      %v3862 = vadd.f32 0.0, %v3861
      %3863 = vmatmul.bf16.gmra.mxu0 %v3794
      %v3864 = vpop.f32.mrf.mxu0
      %v3865 = vadd.f32 0.0, %v3864
      %v3866 = vpop.f32.mrf.mxu0
      %v3867 = vadd.f32 0.0, %v3866
      %3868 = vmatmul.bf16.gmra.mxu0 %v3797
      %v3869 = vpop.f32.mrf.mxu0
      %v3870 = vadd.f32 0.0, %v3869
      %v3871 = vpop.f32.mrf.mxu0
      %v3872 = vadd.f32 0.0, %v3871
      %3873 = vmatmul.bf16.gmra.mxu0 %v3800
      %v3874 = vpop.f32.mrf.mxu0
      %v3875 = vadd.f32 0.0, %v3874
      %v3876 = vpop.f32.mrf.mxu0
      %v3877 = vadd.f32 0.0, %v3876
      %3878 = vmatmul.bf16.gmra.mxu0 %v3803
      %v3879 = vpop.f32.mrf.mxu0
      %v3880 = vadd.f32 0.0, %v3879
      %v3881 = vpop.f32.mrf.mxu0
      %v3882 = vadd.f32 0.0, %v3881
      %3883 = vmatmul.bf16.gmra.mxu0 %v3806
      %v3884 = vpop.f32.mrf.mxu0
      %v3885 = vadd.f32 0.0, %v3884
      %v3886 = vpop.f32.mrf.mxu0
      %v3887 = vadd.f32 0.0, %v3886
      %3888 = vmatmul.bf16.gmra.mxu0 %v3809
      %v3889 = vpop.f32.mrf.mxu0
      %v3890 = vadd.f32 0.0, %v3889
      %v3891 = vpop.f32.mrf.mxu0
      %v3892 = vadd.f32 0.0, %v3891
      %3893 = vmatmul.bf16.gmra.mxu0 %v3812
      %v3894 = vpop.f32.mrf.mxu0
      %v3895 = vadd.f32 0.0, %v3894
      %v3896 = vpop.f32.mrf.mxu0
      %v3897 = vadd.f32 0.0, %v3896
      %3898 = vmatmul.bf16.gmra.mxu0 %v3815
      %v3899 = vpop.f32.mrf.mxu0
      %v3900 = vadd.f32 0.0, %v3899
      %v3901 = vpop.f32.mrf.mxu0
      %v3902 = vadd.f32 0.0, %v3901
      %3903 = vmatmul.bf16.gmra.mxu0 %v3818
      %v3904 = vpop.f32.mrf.mxu0
      %v3905 = vadd.f32 0.0, %v3904
      %v3906 = vpop.f32.mrf.mxu0
      %v3907 = vadd.f32 0.0, %v3906
      %3908 = vdwg.mxu0
      %v3909 = vadd.f32 %v3291, %v3830
      %v3910 = vadd.f32 %v3292, %v3832
      %v3911 = vadd.f32 %v3293, %v3835
      %v3912 = vadd.f32 %v3294, %v3837
      %v3913 = vadd.f32 %v3295, %v3840
      %v3914 = vadd.f32 %v3296, %v3842
      %v3915 = vadd.f32 %v3297, %v3845
      %v3916 = vadd.f32 %v3298, %v3847
      %v3917 = vadd.f32 %v3299, %v3850
      %v3918 = vadd.f32 %v3300, %v3852
      %v3919 = vadd.f32 %v3301, %v3855
      %v3920 = vadd.f32 %v3302, %v3857
      %v3921 = vadd.f32 %v3303, %v3860
      %v3922 = vadd.f32 %v3304, %v3862
      %v3923 = vadd.f32 %v3305, %v3865
      %v3924 = vadd.f32 %v3306, %v3867
      %v3925 = vadd.f32 %v3307, %v3870
      %v3926 = vadd.f32 %v3308, %v3872
      %v3927 = vadd.f32 %v3309, %v3875
      %v3928 = vadd.f32 %v3310, %v3877
      %v3929 = vadd.f32 %v3311, %v3880
      %v3930 = vadd.f32 %v3312, %v3882
      %v3931 = vadd.f32 %v3313, %v3885
      %v3932 = vadd.f32 %v3314, %v3887
      %v3933 = vadd.f32 %v3315, %v3890
      %v3934 = vadd.f32 %v3316, %v3892
      %v3935 = vadd.f32 %v3317, %v3895
      %v3936 = vadd.f32 %v3318, %v3897
      %v3937 = vadd.f32 %v3319, %v3900
      %v3938 = vadd.f32 %v3320, %v3902
      %v3939 = vadd.f32 %v3321, %v3905
      %v3940 = vadd.f32 %v3322, %v3907
      %v3957 = vrot.slane %v1388, 5
      %v3958 = vrot.slane %v3957, 4
      %v3959 = vrot.slane %v1389, 5
      %v3960 = vsel %vm2710, %v3958, %v3959
      %v3961 = vrot.slane %v3959, 4
      %v3962 = vrot.slane %v1390, 5
      %v3963 = vsel %vm2710, %v3961, %v3962
      %v3964 = vrot.slane %v1391, 5
      %v3965 = vrot.slane %v3964, 4
      %v3966 = vrot.slane %v1392, 5
      %v3967 = vsel %vm2710, %v3965, %v3966
      %v3968 = vrot.slane %v3966, 4
      %v3969 = vrot.slane %v1393, 5
      %v3970 = vsel %vm2710, %v3968, %v3969
      %v3971 = vrot.slane %v1394, 5
      %v3972 = vrot.slane %v3971, 4
      %v3973 = vrot.slane %v1395, 5
      %v3974 = vsel %vm2710, %v3972, %v3973
      %v3975 = vrot.slane %v3973, 4
      %v3976 = vrot.slane %v1396, 5
      %v3977 = vsel %vm2710, %v3975, %v3976
      %v3978 = vrot.slane %v1397, 5
      %v3979 = vrot.slane %v3978, 4
      %v3980 = vrot.slane %v1398, 5
      %v3981 = vsel %vm2710, %v3979, %v3980
      %v3982 = vrot.slane %v3980, 4
      %v3983 = vrot.slane %v1399, 5
      %v3984 = vsel %vm2710, %v3982, %v3983
      %v3985 = vrot.slane %v1400, 5
      %v3986 = vrot.slane %v3985, 4
      %v3987 = vrot.slane %v1401, 5
      %v3988 = vsel %vm2710, %v3986, %v3987
      %v3989 = vrot.slane %v3987, 4
      %v3990 = vrot.slane %v1402, 5
      %v3991 = vsel %vm2710, %v3989, %v3990
      %v3992 = vrot.slane %v1403, 5
      %v3993 = vrot.slane %v3992, 4
      %v3994 = vrot.slane %v1404, 5
      %v3995 = vsel %vm2710, %v3993, %v3994
      %v3996 = vrot.slane %v3994, 4
      %v3997 = vrot.slane %v1405, 5
      %v3998 = vsel %vm2710, %v3996, %v3997
      %v3999 = vrot.slane %v1406, 5
      %v4000 = vrot.slane %v3999, 4
      %v4001 = vrot.slane %v1407, 5
      %v4002 = vsel %vm2710, %v4000, %v4001
      %v4003 = vrot.slane %v4001, 4
      %v4004 = vrot.slane %v1408, 5
      %v4005 = vsel %vm2710, %v4003, %v4004
      %v4006 = vrot.slane %v1409, 5
      %v4007 = vrot.slane %v4006, 4
      %v4008 = vrot.slane %v1410, 5
      %v4009 = vsel %vm2710, %v4007, %v4008
      %v4010 = vrot.slane %v4008, 4
      %v4011 = vrot.slane %v1411, 5
      %v4012 = vsel %vm2710, %v4010, %v4011
      %v4013 = vrot.slane %v1412, 5
      %v4014 = vrot.slane %v4013, 4
      %v4015 = vrot.slane %v1413, 5
      %v4016 = vsel %vm2710, %v4014, %v4015
      %v4017 = vrot.slane %v4015, 4
      %v4018 = vrot.slane %v1414, 5
      %v4019 = vsel %vm2710, %v4017, %v4018
      %v4020 = vrot.slane %v1415, 5
      %v4021 = vrot.slane %v4020, 4
      %v4022 = vrot.slane %v1416, 5
      %v4023 = vsel %vm2710, %v4021, %v4022
      %v4024 = vrot.slane %v4022, 4
      %v4025 = vrot.slane %v1417, 5
      %v4026 = vsel %vm2710, %v4024, %v4025
      %v4027 = vrot.slane %v1418, 5
      %v4028 = vrot.slane %v4027, 4
      %v4029 = vrot.slane %v1419, 5
      %v4030 = vsel %vm2710, %v4028, %v4029
      %v4031 = vrot.slane %v4029, 4
      %v4032 = vrot.slane %v1420, 5
      %v4033 = vsel %vm2710, %v4031, %v4032
      %v4034 = vrot.slane %v1421, 5
      %v4035 = vrot.slane %v4034, 4
      %v4036 = vrot.slane %v1422, 5
      %v4037 = vsel %vm2710, %v4035, %v4036
      %v4038 = vrot.slane %v4036, 4
      %v4039 = vrot.slane %v1423, 5
      %v4040 = vsel %vm2710, %v4038, %v4039
      %v4041 = vrot.slane %v1424, 5
      %v4042 = vrot.slane %v4041, 4
      %v4043 = vrot.slane %v1425, 5
      %v4044 = vsel %vm2710, %v4042, %v4043
      %v4045 = vrot.slane %v4043, 4
      %v4046 = vrot.slane %v1426, 5
      %v4047 = vsel %vm2710, %v4045, %v4046
      %v4048 = vrot.slane %v1427, 5
      %v4049 = vrot.slane %v4048, 4
      %v4050 = vrot.slane %v1428, 5
      %v4051 = vsel %vm2710, %v4049, %v4050
      %v4052 = vrot.slane %v4050, 4
      %v4053 = vrot.slane %v1429, 5
      %v4054 = vsel %vm2710, %v4052, %v4053
      %v4055 = vrot.slane %v1430, 5
      %v4056 = vrot.slane %v4055, 4
      %v4057 = vrot.slane %v1431, 5
      %v4058 = vsel %vm2710, %v4056, %v4057
      %v4059 = vrot.slane %v4057, 4
      %v4060 = vrot.slane %v1432, 5
      %v4061 = vsel %vm2710, %v4059, %v4060
      %v4062 = vrot.slane %v1433, 5
      %v4063 = vrot.slane %v4062, 4
      %v4064 = vrot.slane %v1434, 5
      %v4065 = vsel %vm2710, %v4063, %v4064
      %v4066 = vrot.slane %v4064, 4
      %v4067 = vrot.slane %v1435, 5
      %v4068 = vsel %vm2710, %v4066, %v4067
      %s4069 = scalar_lea.vmem %s512, 80
      %v4070 = vld [vmem:[%s4069] sm:$0xf]
      %v4071 = vld [vmem:[%s4069 + $0x4] sm:$0xf]
      %v4072 = vld [vmem:[%s4069 + $0x8] sm:$0xf]
      %v4073 = vld [vmem:[%s4069 + $0xc] sm:$0xf]
      %v4074 = vunpack.c.l.b16 %v3960
      %v4075 = vunpack.c.l.b16 %v3963
      %v4076 = vunpack.c.l.b16 %v3967
      %v4077 = vunpack.c.l.b16 %v3970
      %v4078 = vunpack.c.l.b16 %v3974
      %v4079 = vunpack.c.l.b16 %v3977
      %v4080 = vunpack.c.l.b16 %v3981
      %v4081 = vunpack.c.l.b16 %v3984
      %v4082 = vunpack.c.l.b16 %v3988
      %v4083 = vunpack.c.l.b16 %v3991
      %v4084 = vunpack.c.l.b16 %v3995
      %v4085 = vunpack.c.l.b16 %v3998
      %v4086 = vunpack.c.l.b16 %v4002
      %v4087 = vunpack.c.l.b16 %v4005
      %v4088 = vunpack.c.l.b16 %v4009
      %v4089 = vunpack.c.l.b16 %v4012
      %v4090 = vunpack.c.l.b16 %v4016
      %v4091 = vunpack.c.l.b16 %v4019
      %v4092 = vunpack.c.l.b16 %v4023
      %v4093 = vunpack.c.l.b16 %v4026
      %v4094 = vunpack.c.l.b16 %v4030
      %v4095 = vunpack.c.l.b16 %v4033
      %v4096 = vunpack.c.l.b16 %v4037
      %v4097 = vunpack.c.l.b16 %v4040
      %v4098 = vunpack.c.l.b16 %v4044
      %v4099 = vunpack.c.l.b16 %v4047
      %v4100 = vunpack.c.l.b16 %v4051
      %v4101 = vunpack.c.l.b16 %v4054
      %v4102 = vunpack.c.l.b16 %v4058
      %v4103 = vunpack.c.l.b16 %v4061
      %v4104 = vunpack.c.l.b16 %v4065
      %v4105 = vunpack.c.l.b16 %v4068
      %v4106 = vpack.c.b16 %v4075, %v4074
      %v4107 = vpack.c.b16 %v4077, %v4076
      %v4108 = vpack.c.b16 %v4079, %v4078
      %v4109 = vpack.c.b16 %v4081, %v4080
      %v4110 = vpack.c.b16 %v4083, %v4082
      %v4111 = vpack.c.b16 %v4085, %v4084
      %v4112 = vpack.c.b16 %v4087, %v4086
      %v4113 = vpack.c.b16 %v4089, %v4088
      %v4114 = vpack.c.b16 %v4091, %v4090
      %v4115 = vpack.c.b16 %v4093, %v4092
      %v4116 = vpack.c.b16 %v4095, %v4094
      %v4117 = vpack.c.b16 %v4097, %v4096
      %v4118 = vpack.c.b16 %v4099, %v4098
      %v4119 = vpack.c.b16 %v4101, %v4100
      %v4120 = vpack.c.b16 %v4103, %v4102
      %v4121 = vpack.c.b16 %v4105, %v4104
      %v4126 = vunpack.c.l.b16 %v4070
      %v4127 = vunpack.c.l.b16 %v4071
      %v4128 = vunpack.c.l.b16 %v4072
      %v4129 = vunpack.c.l.b16 %v4073
      %v4130 = vpack.c.b16 %v4127, %v4126
      %v4131 = vpack.c.b16 %v4129, %v4128
      %v4135 = vsel %vm2325, %v4106, 0
      %v4138 = vsel %vm2325, %v4107, 0
      %v4141 = vsel %vm2325, %v4108, 0
      %v4144 = vsel %vm2325, %v4109, 0
      %v4147 = vsel %vm2325, %v4110, 0
      %v4150 = vsel %vm2325, %v4111, 0
      %v4153 = vsel %vm2325, %v4112, 0
      %v4156 = vsel %vm2325, %v4113, 0
      %v4159 = vsel %vm2325, %v4114, 0
      %v4162 = vsel %vm2325, %v4115, 0
      %v4165 = vsel %vm2325, %v4116, 0
      %v4168 = vsel %vm2325, %v4117, 0
      %v4171 = vsel %vm2325, %v4118, 0
      %v4174 = vsel %vm2325, %v4119, 0
      %v4177 = vsel %vm2325, %v4120, 0
      %v4180 = vsel %vm2325, %v4121, 0
      %4182 = vmatpush.bf16.msra.mxu0 0
      %4183 = vmatpush.bf16.msra.mxu0 0
      %4184 = vmatpush.bf16.msra.mxu0 0
      %4185 = vmatpush.bf16.msra.mxu0 0
      %4186 = vmatpush.bf16.msra.mxu0 0
      %4187 = vmatpush.bf16.msra.mxu0 0
      %4188 = vmatpush.bf16.msra.mxu0 %v4131
      %4189 = vmatpush.bf16.msra.mxu0 %v4130
      %4190 = vmatmul.bf16.gmra.mxu0 %v4135
      %v4191 = vpop.f32.mrf.mxu0
      %v4192 = vadd.f32 0.0, %v4191
      %v4193 = vpop.f32.mrf.mxu0
      %v4194 = vadd.f32 0.0, %v4193
      %4195 = vmatmul.bf16.gmra.mxu0 %v4138
      %v4196 = vpop.f32.mrf.mxu0
      %v4197 = vadd.f32 0.0, %v4196
      %v4198 = vpop.f32.mrf.mxu0
      %v4199 = vadd.f32 0.0, %v4198
      %4200 = vmatmul.bf16.gmra.mxu0 %v4141
      %v4201 = vpop.f32.mrf.mxu0
      %v4202 = vadd.f32 0.0, %v4201
      %v4203 = vpop.f32.mrf.mxu0
      %v4204 = vadd.f32 0.0, %v4203
      %4205 = vmatmul.bf16.gmra.mxu0 %v4144
      %v4206 = vpop.f32.mrf.mxu0
      %v4207 = vadd.f32 0.0, %v4206
      %v4208 = vpop.f32.mrf.mxu0
      %v4209 = vadd.f32 0.0, %v4208
      %4210 = vmatmul.bf16.gmra.mxu0 %v4147
      %v4211 = vpop.f32.mrf.mxu0
      %v4212 = vadd.f32 0.0, %v4211
      %v4213 = vpop.f32.mrf.mxu0
      %v4214 = vadd.f32 0.0, %v4213
      %4215 = vmatmul.bf16.gmra.mxu0 %v4150
      %v4216 = vpop.f32.mrf.mxu0
      %v4217 = vadd.f32 0.0, %v4216
      %v4218 = vpop.f32.mrf.mxu0
      %v4219 = vadd.f32 0.0, %v4218
      %4220 = vmatmul.bf16.gmra.mxu0 %v4153
      %v4221 = vpop.f32.mrf.mxu0
      %v4222 = vadd.f32 0.0, %v4221
      %v4223 = vpop.f32.mrf.mxu0
      %v4224 = vadd.f32 0.0, %v4223
      %4225 = vmatmul.bf16.gmra.mxu0 %v4156
      %v4226 = vpop.f32.mrf.mxu0
      %v4227 = vadd.f32 0.0, %v4226
      %v4228 = vpop.f32.mrf.mxu0
      %v4229 = vadd.f32 0.0, %v4228
      %4230 = vmatmul.bf16.gmra.mxu0 %v4159
      %v4231 = vpop.f32.mrf.mxu0
      %v4232 = vadd.f32 0.0, %v4231
      %v4233 = vpop.f32.mrf.mxu0
      %v4234 = vadd.f32 0.0, %v4233
      %4235 = vmatmul.bf16.gmra.mxu0 %v4162
      %v4236 = vpop.f32.mrf.mxu0
      %v4237 = vadd.f32 0.0, %v4236
      %v4238 = vpop.f32.mrf.mxu0
      %v4239 = vadd.f32 0.0, %v4238
      %4240 = vmatmul.bf16.gmra.mxu0 %v4165
      %v4241 = vpop.f32.mrf.mxu0
      %v4242 = vadd.f32 0.0, %v4241
      %v4243 = vpop.f32.mrf.mxu0
      %v4244 = vadd.f32 0.0, %v4243
      %4245 = vmatmul.bf16.gmra.mxu0 %v4168
      %v4246 = vpop.f32.mrf.mxu0
      %v4247 = vadd.f32 0.0, %v4246
      %v4248 = vpop.f32.mrf.mxu0
      %v4249 = vadd.f32 0.0, %v4248
      %4250 = vmatmul.bf16.gmra.mxu0 %v4171
      %v4251 = vpop.f32.mrf.mxu0
      %v4252 = vadd.f32 0.0, %v4251
      %v4253 = vpop.f32.mrf.mxu0
      %v4254 = vadd.f32 0.0, %v4253
      %4255 = vmatmul.bf16.gmra.mxu0 %v4174
      %v4256 = vpop.f32.mrf.mxu0
      %v4257 = vadd.f32 0.0, %v4256
      %v4258 = vpop.f32.mrf.mxu0
      %v4259 = vadd.f32 0.0, %v4258
      %4260 = vmatmul.bf16.gmra.mxu0 %v4177
      %v4261 = vpop.f32.mrf.mxu0
      %v4262 = vadd.f32 0.0, %v4261
      %v4263 = vpop.f32.mrf.mxu0
      %v4264 = vadd.f32 0.0, %v4263
      %4265 = vmatmul.bf16.gmra.mxu0 %v4180
      %v4266 = vpop.f32.mrf.mxu0
      %v4267 = vadd.f32 0.0, %v4266
      %v4268 = vpop.f32.mrf.mxu0
      %v4269 = vadd.f32 0.0, %v4268
      %4270 = vdwg.mxu0
      %v4271 = vadd.f32 %v3909, %v4192
      %v4272 = vadd.f32 %v3910, %v4194
      %v4273 = vadd.f32 %v3911, %v4197
      %v4274 = vadd.f32 %v3912, %v4199
      %v4275 = vadd.f32 %v3913, %v4202
      %v4276 = vadd.f32 %v3914, %v4204
      %v4277 = vadd.f32 %v3915, %v4207
      %v4278 = vadd.f32 %v3916, %v4209
      %v4279 = vadd.f32 %v3917, %v4212
      %v4280 = vadd.f32 %v3918, %v4214
      %v4281 = vadd.f32 %v3919, %v4217
      %v4282 = vadd.f32 %v3920, %v4219
      %v4283 = vadd.f32 %v3921, %v4222
      %v4284 = vadd.f32 %v3922, %v4224
      %v4285 = vadd.f32 %v3923, %v4227
      %v4286 = vadd.f32 %v3924, %v4229
      %v4287 = vadd.f32 %v3925, %v4232
      %v4288 = vadd.f32 %v3926, %v4234
      %v4289 = vadd.f32 %v3927, %v4237
      %v4290 = vadd.f32 %v3928, %v4239
      %v4291 = vadd.f32 %v3929, %v4242
      %v4292 = vadd.f32 %v3930, %v4244
      %v4293 = vadd.f32 %v3931, %v4247
      %v4294 = vadd.f32 %v3932, %v4249
      %v4295 = vadd.f32 %v3933, %v4252
      %v4296 = vadd.f32 %v3934, %v4254
      %v4297 = vadd.f32 %v3935, %v4257
      %v4298 = vadd.f32 %v3936, %v4259
      %v4299 = vadd.f32 %v3937, %v4262
      %v4300 = vadd.f32 %v3938, %v4264
      %v4301 = vadd.f32 %v3939, %v4267
      %v4302 = vadd.f32 %v3940, %v4269
      %s4303 = scalar_lea.vmem %s512, 96
      %v4304 = vld [vmem:[%s4303] sm:$0xf]
      %v4305 = vld [vmem:[%s4303 + $0x4] sm:$0xf]
      %v4306 = vld [vmem:[%s4303 + $0x8] sm:$0xf]
      %v4307 = vld [vmem:[%s4303 + $0xc] sm:$0xf]
      %v4340 = vunpack.c.l.b16 %v1821
      %v4341 = vunpack.c.l.b16 %v1822
      %v4342 = vunpack.c.l.b16 %v1824
      %v4343 = vunpack.c.l.b16 %v1825
      %v4344 = vunpack.c.l.b16 %v1827
      %v4345 = vunpack.c.l.b16 %v1828
      %v4346 = vunpack.c.l.b16 %v1830
      %v4347 = vunpack.c.l.b16 %v1831
      %v4348 = vunpack.c.l.b16 %v1833
      %v4349 = vunpack.c.l.b16 %v1834
      %v4350 = vunpack.c.l.b16 %v1836
      %v4351 = vunpack.c.l.b16 %v1837
      %v4352 = vunpack.c.l.b16 %v1839
      %v4353 = vunpack.c.l.b16 %v1840
      %v4354 = vunpack.c.l.b16 %v1842
      %v4355 = vunpack.c.l.b16 %v1843
      %v4356 = vunpack.c.l.b16 %v1845
      %v4357 = vunpack.c.l.b16 %v1846
      %v4358 = vunpack.c.l.b16 %v1848
      %v4359 = vunpack.c.l.b16 %v1849
      %v4360 = vunpack.c.l.b16 %v1851
      %v4361 = vunpack.c.l.b16 %v1852
      %v4362 = vunpack.c.l.b16 %v1854
      %v4363 = vunpack.c.l.b16 %v1855
      %v4364 = vunpack.c.l.b16 %v1857
      %v4365 = vunpack.c.l.b16 %v1858
      %v4366 = vunpack.c.l.b16 %v1860
      %v4367 = vunpack.c.l.b16 %v1861
      %v4368 = vunpack.c.l.b16 %v1863
      %v4369 = vunpack.c.l.b16 %v1864
      %v4370 = vunpack.c.l.b16 %v1866
      %v4371 = vunpack.c.l.b16 %v1867
      %v4372 = vpack.c.b16 %v4341, %v4340
      %v4373 = vpack.c.b16 %v4343, %v4342
      %v4374 = vpack.c.b16 %v4345, %v4344
      %v4375 = vpack.c.b16 %v4347, %v4346
      %v4376 = vpack.c.b16 %v4349, %v4348
      %v4377 = vpack.c.b16 %v4351, %v4350
      %v4378 = vpack.c.b16 %v4353, %v4352
      %v4379 = vpack.c.b16 %v4355, %v4354
      %v4380 = vpack.c.b16 %v4357, %v4356
      %v4381 = vpack.c.b16 %v4359, %v4358
      %v4382 = vpack.c.b16 %v4361, %v4360
      %v4383 = vpack.c.b16 %v4363, %v4362
      %v4384 = vpack.c.b16 %v4365, %v4364
      %v4385 = vpack.c.b16 %v4367, %v4366
      %v4386 = vpack.c.b16 %v4369, %v4368
      %v4387 = vpack.c.b16 %v4371, %v4370
      %v4392 = vunpack.c.l.b16 %v4304
      %v4393 = vunpack.c.l.b16 %v4305
      %v4394 = vunpack.c.l.b16 %v4306
      %v4395 = vunpack.c.l.b16 %v4307
      %v4396 = vpack.c.b16 %v4393, %v4392
      %v4397 = vpack.c.b16 %v4395, %v4394
      %v4401 = vsel %vm2325, %v4372, 0
      %v4404 = vsel %vm2325, %v4373, 0
      %v4407 = vsel %vm2325, %v4374, 0
      %v4410 = vsel %vm2325, %v4375, 0
      %v4413 = vsel %vm2325, %v4376, 0
      %v4416 = vsel %vm2325, %v4377, 0
      %v4419 = vsel %vm2325, %v4378, 0
      %v4422 = vsel %vm2325, %v4379, 0
      %v4425 = vsel %vm2325, %v4380, 0
      %v4428 = vsel %vm2325, %v4381, 0
      %v4431 = vsel %vm2325, %v4382, 0
      %v4434 = vsel %vm2325, %v4383, 0
      %v4437 = vsel %vm2325, %v4384, 0
      %v4440 = vsel %vm2325, %v4385, 0
      %v4443 = vsel %vm2325, %v4386, 0
      %v4446 = vsel %vm2325, %v4387, 0
      %4448 = vmatpush.bf16.msra.mxu0 0
      %4449 = vmatpush.bf16.msra.mxu0 0
      %4450 = vmatpush.bf16.msra.mxu0 0
      %4451 = vmatpush.bf16.msra.mxu0 0
      %4452 = vmatpush.bf16.msra.mxu0 0
      %4453 = vmatpush.bf16.msra.mxu0 0
      %4454 = vmatpush.bf16.msra.mxu0 %v4397
      %4455 = vmatpush.bf16.msra.mxu0 %v4396
      %4456 = vmatmul.bf16.gmra.mxu0 %v4401
      %v4457 = vpop.f32.mrf.mxu0
      %v4458 = vadd.f32 0.0, %v4457
      %v4459 = vpop.f32.mrf.mxu0
      %v4460 = vadd.f32 0.0, %v4459
      %4461 = vmatmul.bf16.gmra.mxu0 %v4404
      %v4462 = vpop.f32.mrf.mxu0
      %v4463 = vadd.f32 0.0, %v4462
      %v4464 = vpop.f32.mrf.mxu0
      %v4465 = vadd.f32 0.0, %v4464
      %4466 = vmatmul.bf16.gmra.mxu0 %v4407
      %v4467 = vpop.f32.mrf.mxu0
      %v4468 = vadd.f32 0.0, %v4467
      %v4469 = vpop.f32.mrf.mxu0
      %v4470 = vadd.f32 0.0, %v4469
      %4471 = vmatmul.bf16.gmra.mxu0 %v4410
      %v4472 = vpop.f32.mrf.mxu0
      %v4473 = vadd.f32 0.0, %v4472
      %v4474 = vpop.f32.mrf.mxu0
      %v4475 = vadd.f32 0.0, %v4474
      %4476 = vmatmul.bf16.gmra.mxu0 %v4413
      %v4477 = vpop.f32.mrf.mxu0
      %v4478 = vadd.f32 0.0, %v4477
      %v4479 = vpop.f32.mrf.mxu0
      %v4480 = vadd.f32 0.0, %v4479
      %4481 = vmatmul.bf16.gmra.mxu0 %v4416
      %v4482 = vpop.f32.mrf.mxu0
      %v4483 = vadd.f32 0.0, %v4482
      %v4484 = vpop.f32.mrf.mxu0
      %v4485 = vadd.f32 0.0, %v4484
      %4486 = vmatmul.bf16.gmra.mxu0 %v4419
      %v4487 = vpop.f32.mrf.mxu0
      %v4488 = vadd.f32 0.0, %v4487
      %v4489 = vpop.f32.mrf.mxu0
      %v4490 = vadd.f32 0.0, %v4489
      %4491 = vmatmul.bf16.gmra.mxu0 %v4422
      %v4492 = vpop.f32.mrf.mxu0
      %v4493 = vadd.f32 0.0, %v4492
      %v4494 = vpop.f32.mrf.mxu0
      %v4495 = vadd.f32 0.0, %v4494
      %4496 = vmatmul.bf16.gmra.mxu0 %v4425
      %v4497 = vpop.f32.mrf.mxu0
      %v4498 = vadd.f32 0.0, %v4497
      %v4499 = vpop.f32.mrf.mxu0
      %v4500 = vadd.f32 0.0, %v4499
      %4501 = vmatmul.bf16.gmra.mxu0 %v4428
      %v4502 = vpop.f32.mrf.mxu0
      %v4503 = vadd.f32 0.0, %v4502
      %v4504 = vpop.f32.mrf.mxu0
      %v4505 = vadd.f32 0.0, %v4504
      %4506 = vmatmul.bf16.gmra.mxu0 %v4431
      %v4507 = vpop.f32.mrf.mxu0
      %v4508 = vadd.f32 0.0, %v4507
      %v4509 = vpop.f32.mrf.mxu0
      %v4510 = vadd.f32 0.0, %v4509
      %4511 = vmatmul.bf16.gmra.mxu0 %v4434
      %v4512 = vpop.f32.mrf.mxu0
      %v4513 = vadd.f32 0.0, %v4512
      %v4514 = vpop.f32.mrf.mxu0
      %v4515 = vadd.f32 0.0, %v4514
      %4516 = vmatmul.bf16.gmra.mxu0 %v4437
      %v4517 = vpop.f32.mrf.mxu0
      %v4518 = vadd.f32 0.0, %v4517
      %v4519 = vpop.f32.mrf.mxu0
      %v4520 = vadd.f32 0.0, %v4519
      %4521 = vmatmul.bf16.gmra.mxu0 %v4440
      %v4522 = vpop.f32.mrf.mxu0
      %v4523 = vadd.f32 0.0, %v4522
      %v4524 = vpop.f32.mrf.mxu0
      %v4525 = vadd.f32 0.0, %v4524
      %4526 = vmatmul.bf16.gmra.mxu0 %v4443
      %v4527 = vpop.f32.mrf.mxu0
      %v4528 = vadd.f32 0.0, %v4527
      %v4529 = vpop.f32.mrf.mxu0
      %v4530 = vadd.f32 0.0, %v4529
      %4531 = vmatmul.bf16.gmra.mxu0 %v4446
      %v4532 = vpop.f32.mrf.mxu0
      %v4533 = vadd.f32 0.0, %v4532
      %v4534 = vpop.f32.mrf.mxu0
      %v4535 = vadd.f32 0.0, %v4534
      %4536 = vdwg.mxu0
      %v4537 = vadd.f32 %v4271, %v4458
      %v4538 = vadd.f32 %v4272, %v4460
      %v4539 = vadd.f32 %v4273, %v4463
      %v4540 = vadd.f32 %v4274, %v4465
      %v4541 = vadd.f32 %v4275, %v4468
      %v4542 = vadd.f32 %v4276, %v4470
      %v4543 = vadd.f32 %v4277, %v4473
      %v4544 = vadd.f32 %v4278, %v4475
      %v4545 = vadd.f32 %v4279, %v4478
      %v4546 = vadd.f32 %v4280, %v4480
      %v4547 = vadd.f32 %v4281, %v4483
      %v4548 = vadd.f32 %v4282, %v4485
      %v4549 = vadd.f32 %v4283, %v4488
      %v4550 = vadd.f32 %v4284, %v4490
      %v4551 = vadd.f32 %v4285, %v4493
      %v4552 = vadd.f32 %v4286, %v4495
      %v4553 = vadd.f32 %v4287, %v4498
      %v4554 = vadd.f32 %v4288, %v4500
      %v4555 = vadd.f32 %v4289, %v4503
      %v4556 = vadd.f32 %v4290, %v4505
      %v4557 = vadd.f32 %v4291, %v4508
      %v4558 = vadd.f32 %v4292, %v4510
      %v4559 = vadd.f32 %v4293, %v4513
      %v4560 = vadd.f32 %v4294, %v4515
      %v4561 = vadd.f32 %v4295, %v4518
      %v4562 = vadd.f32 %v4296, %v4520
      %v4563 = vadd.f32 %v4297, %v4523
      %v4564 = vadd.f32 %v4298, %v4525
      %v4565 = vadd.f32 %v4299, %v4528
      %v4566 = vadd.f32 %v4300, %v4530
      %v4567 = vadd.f32 %v4301, %v4533
      %v4568 = vadd.f32 %v4302, %v4535
      %v4570 = vshrl.u32 %v1821, 16
      %v4572 = vrot.slane %v4570, 4
      %v4573 = vshll.u32 %v1821, 16
      %v4575 = vrot.slane %v4573, 5
      %v4576 = vor.u32 %v4572, %v4575
      %v4577 = vrot.slane %v4576, 4
      %v4579 = vshll.u32 %v1822, 16
      %v4581 = vrot.slane %v4579, 5
      %v4582 = vsel %vm1875, %v4577, %v4581
      %v4583 = vshrl.u32 %v1822, 16
      %v4585 = vrot.slane %v4583, 4
      %v4586 = vor.u32 %v4585, %v4581
      %v4587 = vrot.slane %v4586, 4
      %v4589 = vshll.u32 %v1823, 16
      %v4591 = vrot.slane %v4589, 5
      %v4592 = vsel %vm1875, %v4587, %v4591
      %v4594 = vshrl.u32 %v1824, 16
      %v4596 = vrot.slane %v4594, 4
      %v4597 = vshll.u32 %v1824, 16
      %v4599 = vrot.slane %v4597, 5
      %v4600 = vor.u32 %v4596, %v4599
      %v4601 = vrot.slane %v4600, 4
      %v4603 = vshll.u32 %v1825, 16
      %v4605 = vrot.slane %v4603, 5
      %v4606 = vsel %vm1875, %v4601, %v4605
      %v4607 = vshrl.u32 %v1825, 16
      %v4609 = vrot.slane %v4607, 4
      %v4610 = vor.u32 %v4609, %v4605
      %v4611 = vrot.slane %v4610, 4
      %v4613 = vshll.u32 %v1826, 16
      %v4615 = vrot.slane %v4613, 5
      %v4616 = vsel %vm1875, %v4611, %v4615
      %v4618 = vshrl.u32 %v1827, 16
      %v4620 = vrot.slane %v4618, 4
      %v4621 = vshll.u32 %v1827, 16
      %v4623 = vrot.slane %v4621, 5
      %v4624 = vor.u32 %v4620, %v4623
      %v4625 = vrot.slane %v4624, 4
      %v4627 = vshll.u32 %v1828, 16
      %v4629 = vrot.slane %v4627, 5
      %v4630 = vsel %vm1875, %v4625, %v4629
      %v4631 = vshrl.u32 %v1828, 16
      %v4633 = vrot.slane %v4631, 4
      %v4634 = vor.u32 %v4633, %v4629
      %v4635 = vrot.slane %v4634, 4
      %v4637 = vshll.u32 %v1829, 16
      %v4639 = vrot.slane %v4637, 5
      %v4640 = vsel %vm1875, %v4635, %v4639
      %v4642 = vshrl.u32 %v1830, 16
      %v4644 = vrot.slane %v4642, 4
      %v4645 = vshll.u32 %v1830, 16
      %v4647 = vrot.slane %v4645, 5
      %v4648 = vor.u32 %v4644, %v4647
      %v4649 = vrot.slane %v4648, 4
      %v4651 = vshll.u32 %v1831, 16
      %v4653 = vrot.slane %v4651, 5
      %v4654 = vsel %vm1875, %v4649, %v4653
      %v4655 = vshrl.u32 %v1831, 16
      %v4657 = vrot.slane %v4655, 4
      %v4658 = vor.u32 %v4657, %v4653
      %v4659 = vrot.slane %v4658, 4
      %v4661 = vshll.u32 %v1832, 16
      %v4663 = vrot.slane %v4661, 5
      %v4664 = vsel %vm1875, %v4659, %v4663
      %v4666 = vshrl.u32 %v1833, 16
      %v4668 = vrot.slane %v4666, 4
      %v4669 = vshll.u32 %v1833, 16
      %v4671 = vrot.slane %v4669, 5
      %v4672 = vor.u32 %v4668, %v4671
      %v4673 = vrot.slane %v4672, 4
      %v4675 = vshll.u32 %v1834, 16
      %v4677 = vrot.slane %v4675, 5
      %v4678 = vsel %vm1875, %v4673, %v4677
      %v4679 = vshrl.u32 %v1834, 16
      %v4681 = vrot.slane %v4679, 4
      %v4682 = vor.u32 %v4681, %v4677
      %v4683 = vrot.slane %v4682, 4
      %v4685 = vshll.u32 %v1835, 16
      %v4687 = vrot.slane %v4685, 5
      %v4688 = vsel %vm1875, %v4683, %v4687
      %v4690 = vshrl.u32 %v1836, 16
      %v4692 = vrot.slane %v4690, 4
      %v4693 = vshll.u32 %v1836, 16
      %v4695 = vrot.slane %v4693, 5
      %v4696 = vor.u32 %v4692, %v4695
      %v4697 = vrot.slane %v4696, 4
      %v4699 = vshll.u32 %v1837, 16
      %v4701 = vrot.slane %v4699, 5
      %v4702 = vsel %vm1875, %v4697, %v4701
      %v4703 = vshrl.u32 %v1837, 16
      %v4705 = vrot.slane %v4703, 4
      %v4706 = vor.u32 %v4705, %v4701
      %v4707 = vrot.slane %v4706, 4
      %v4709 = vshll.u32 %v1838, 16
      %v4711 = vrot.slane %v4709, 5
      %v4712 = vsel %vm1875, %v4707, %v4711
      %v4714 = vshrl.u32 %v1839, 16
      %v4716 = vrot.slane %v4714, 4
      %v4717 = vshll.u32 %v1839, 16
      %v4719 = vrot.slane %v4717, 5
      %v4720 = vor.u32 %v4716, %v4719
      %v4721 = vrot.slane %v4720, 4
      %v4723 = vshll.u32 %v1840, 16
      %v4725 = vrot.slane %v4723, 5
      %v4726 = vsel %vm1875, %v4721, %v4725
      %v4727 = vshrl.u32 %v1840, 16
      %v4729 = vrot.slane %v4727, 4
      %v4730 = vor.u32 %v4729, %v4725
      %v4731 = vrot.slane %v4730, 4
      %v4733 = vshll.u32 %v1841, 16
      %v4735 = vrot.slane %v4733, 5
      %v4736 = vsel %vm1875, %v4731, %v4735
      %v4738 = vshrl.u32 %v1842, 16
      %v4740 = vrot.slane %v4738, 4
      %v4741 = vshll.u32 %v1842, 16
      %v4743 = vrot.slane %v4741, 5
      %v4744 = vor.u32 %v4740, %v4743
      %v4745 = vrot.slane %v4744, 4
      %v4747 = vshll.u32 %v1843, 16
      %v4749 = vrot.slane %v4747, 5
      %v4750 = vsel %vm1875, %v4745, %v4749
      %v4751 = vshrl.u32 %v1843, 16
      %v4753 = vrot.slane %v4751, 4
      %v4754 = vor.u32 %v4753, %v4749
      %v4755 = vrot.slane %v4754, 4
      %v4757 = vshll.u32 %v1844, 16
      %v4759 = vrot.slane %v4757, 5
      %v4760 = vsel %vm1875, %v4755, %v4759
      %v4762 = vshrl.u32 %v1845, 16
      %v4764 = vrot.slane %v4762, 4
      %v4765 = vshll.u32 %v1845, 16
      %v4767 = vrot.slane %v4765, 5
      %v4768 = vor.u32 %v4764, %v4767
      %v4769 = vrot.slane %v4768, 4
      %v4771 = vshll.u32 %v1846, 16
      %v4773 = vrot.slane %v4771, 5
      %v4774 = vsel %vm1875, %v4769, %v4773
      %v4775 = vshrl.u32 %v1846, 16
      %v4777 = vrot.slane %v4775, 4
      %v4778 = vor.u32 %v4777, %v4773
      %v4779 = vrot.slane %v4778, 4
      %v4781 = vshll.u32 %v1847, 16
      %v4783 = vrot.slane %v4781, 5
      %v4784 = vsel %vm1875, %v4779, %v4783
      %v4786 = vshrl.u32 %v1848, 16
      %v4788 = vrot.slane %v4786, 4
      %v4789 = vshll.u32 %v1848, 16
      %v4791 = vrot.slane %v4789, 5
      %v4792 = vor.u32 %v4788, %v4791
      %v4793 = vrot.slane %v4792, 4
      %v4795 = vshll.u32 %v1849, 16
      %v4797 = vrot.slane %v4795, 5
      %v4798 = vsel %vm1875, %v4793, %v4797
      %v4799 = vshrl.u32 %v1849, 16
      %v4801 = vrot.slane %v4799, 4
      %v4802 = vor.u32 %v4801, %v4797
      %v4803 = vrot.slane %v4802, 4
      %v4805 = vshll.u32 %v1850, 16
      %v4807 = vrot.slane %v4805, 5
      %v4808 = vsel %vm1875, %v4803, %v4807
      %v4810 = vshrl.u32 %v1851, 16
      %v4812 = vrot.slane %v4810, 4
      %v4813 = vshll.u32 %v1851, 16
      %v4815 = vrot.slane %v4813, 5
      %v4816 = vor.u32 %v4812, %v4815
      %v4817 = vrot.slane %v4816, 4
      %v4819 = vshll.u32 %v1852, 16
      %v4821 = vrot.slane %v4819, 5
      %v4822 = vsel %vm1875, %v4817, %v4821
      %v4823 = vshrl.u32 %v1852, 16
      %v4825 = vrot.slane %v4823, 4
      %v4826 = vor.u32 %v4825, %v4821
      %v4827 = vrot.slane %v4826, 4
      %v4829 = vshll.u32 %v1853, 16
      %v4831 = vrot.slane %v4829, 5
      %v4832 = vsel %vm1875, %v4827, %v4831
      %v4834 = vshrl.u32 %v1854, 16
      %v4836 = vrot.slane %v4834, 4
      %v4837 = vshll.u32 %v1854, 16
      %v4839 = vrot.slane %v4837, 5
      %v4840 = vor.u32 %v4836, %v4839
      %v4841 = vrot.slane %v4840, 4
      %v4843 = vshll.u32 %v1855, 16
      %v4845 = vrot.slane %v4843, 5
      %v4846 = vsel %vm1875, %v4841, %v4845
      %v4847 = vshrl.u32 %v1855, 16
      %v4849 = vrot.slane %v4847, 4
      %v4850 = vor.u32 %v4849, %v4845
      %v4851 = vrot.slane %v4850, 4
      %v4853 = vshll.u32 %v1856, 16
      %v4855 = vrot.slane %v4853, 5
      %v4856 = vsel %vm1875, %v4851, %v4855
      %v4858 = vshrl.u32 %v1857, 16
      %v4860 = vrot.slane %v4858, 4
      %v4861 = vshll.u32 %v1857, 16
      %v4863 = vrot.slane %v4861, 5
      %v4864 = vor.u32 %v4860, %v4863
      %v4865 = vrot.slane %v4864, 4
      %v4867 = vshll.u32 %v1858, 16
      %v4869 = vrot.slane %v4867, 5
      %v4870 = vsel %vm1875, %v4865, %v4869
      %v4871 = vshrl.u32 %v1858, 16
      %v4873 = vrot.slane %v4871, 4
      %v4874 = vor.u32 %v4873, %v4869
      %v4875 = vrot.slane %v4874, 4
      %v4877 = vshll.u32 %v1859, 16
      %v4879 = vrot.slane %v4877, 5
      %v4880 = vsel %vm1875, %v4875, %v4879
      %v4882 = vshrl.u32 %v1860, 16
      %v4884 = vrot.slane %v4882, 4
      %v4885 = vshll.u32 %v1860, 16
      %v4887 = vrot.slane %v4885, 5
      %v4888 = vor.u32 %v4884, %v4887
      %v4889 = vrot.slane %v4888, 4
      %v4891 = vshll.u32 %v1861, 16
      %v4893 = vrot.slane %v4891, 5
      %v4894 = vsel %vm1875, %v4889, %v4893
      %v4895 = vshrl.u32 %v1861, 16
      %v4897 = vrot.slane %v4895, 4
      %v4898 = vor.u32 %v4897, %v4893
      %v4899 = vrot.slane %v4898, 4
      %v4901 = vshll.u32 %v1862, 16
      %v4903 = vrot.slane %v4901, 5
      %v4904 = vsel %vm1875, %v4899, %v4903
      %v4906 = vshrl.u32 %v1863, 16
      %v4908 = vrot.slane %v4906, 4
      %v4909 = vshll.u32 %v1863, 16
      %v4911 = vrot.slane %v4909, 5
      %v4912 = vor.u32 %v4908, %v4911
      %v4913 = vrot.slane %v4912, 4
      %v4915 = vshll.u32 %v1864, 16
      %v4917 = vrot.slane %v4915, 5
      %v4918 = vsel %vm1875, %v4913, %v4917
      %v4919 = vshrl.u32 %v1864, 16
      %v4921 = vrot.slane %v4919, 4
      %v4922 = vor.u32 %v4921, %v4917
      %v4923 = vrot.slane %v4922, 4
      %v4925 = vshll.u32 %v1865, 16
      %v4927 = vrot.slane %v4925, 5
      %v4928 = vsel %vm1875, %v4923, %v4927
      %v4930 = vshrl.u32 %v1866, 16
      %v4932 = vrot.slane %v4930, 4
      %v4933 = vshll.u32 %v1866, 16
      %v4935 = vrot.slane %v4933, 5
      %v4936 = vor.u32 %v4932, %v4935
      %v4937 = vrot.slane %v4936, 4
      %v4939 = vshll.u32 %v1867, 16
      %v4941 = vrot.slane %v4939, 5
      %v4942 = vsel %vm1875, %v4937, %v4941
      %v4943 = vshrl.u32 %v1867, 16
      %v4945 = vrot.slane %v4943, 4
      %v4946 = vor.u32 %v4945, %v4941
      %v4947 = vrot.slane %v4946, 4
      %v4949 = vshll.u32 %v1868, 16
      %v4951 = vrot.slane %v4949, 5
      %v4952 = vsel %vm1875, %v4947, %v4951
      %s4953 = scalar_lea.vmem %s512, 112
      %v4954 = vld [vmem:[%s4953] sm:$0xf]
      %v4955 = vld [vmem:[%s4953 + $0x4] sm:$0xf]
      %v4956 = vld [vmem:[%s4953 + $0x8] sm:$0xf]
      %v4957 = vld [vmem:[%s4953 + $0xc] sm:$0xf]
      %v4958 = vunpack.c.l.b16 %v4582
      %v4959 = vunpack.c.l.b16 %v4592
      %v4960 = vunpack.c.l.b16 %v4606
      %v4961 = vunpack.c.l.b16 %v4616
      %v4962 = vunpack.c.l.b16 %v4630
      %v4963 = vunpack.c.l.b16 %v4640
      %v4964 = vunpack.c.l.b16 %v4654
      %v4965 = vunpack.c.l.b16 %v4664
      %v4966 = vunpack.c.l.b16 %v4678
      %v4967 = vunpack.c.l.b16 %v4688
      %v4968 = vunpack.c.l.b16 %v4702
      %v4969 = vunpack.c.l.b16 %v4712
      %v4970 = vunpack.c.l.b16 %v4726
      %v4971 = vunpack.c.l.b16 %v4736
      %v4972 = vunpack.c.l.b16 %v4750
      %v4973 = vunpack.c.l.b16 %v4760
      %v4974 = vunpack.c.l.b16 %v4774
      %v4975 = vunpack.c.l.b16 %v4784
      %v4976 = vunpack.c.l.b16 %v4798
      %v4977 = vunpack.c.l.b16 %v4808
      %v4978 = vunpack.c.l.b16 %v4822
      %v4979 = vunpack.c.l.b16 %v4832
      %v4980 = vunpack.c.l.b16 %v4846
      %v4981 = vunpack.c.l.b16 %v4856
      %v4982 = vunpack.c.l.b16 %v4870
      %v4983 = vunpack.c.l.b16 %v4880
      %v4984 = vunpack.c.l.b16 %v4894
      %v4985 = vunpack.c.l.b16 %v4904
      %v4986 = vunpack.c.l.b16 %v4918
      %v4987 = vunpack.c.l.b16 %v4928
      %v4988 = vunpack.c.l.b16 %v4942
      %v4989 = vunpack.c.l.b16 %v4952
      %v4990 = vpack.c.b16 %v4959, %v4958
      %v4991 = vpack.c.b16 %v4961, %v4960
      %v4992 = vpack.c.b16 %v4963, %v4962
      %v4993 = vpack.c.b16 %v4965, %v4964
      %v4994 = vpack.c.b16 %v4967, %v4966
      %v4995 = vpack.c.b16 %v4969, %v4968
      %v4996 = vpack.c.b16 %v4971, %v4970
      %v4997 = vpack.c.b16 %v4973, %v4972
      %v4998 = vpack.c.b16 %v4975, %v4974
      %v4999 = vpack.c.b16 %v4977, %v4976
      %v5000 = vpack.c.b16 %v4979, %v4978
      %v5001 = vpack.c.b16 %v4981, %v4980
      %v5002 = vpack.c.b16 %v4983, %v4982
      %v5003 = vpack.c.b16 %v4985, %v4984
      %v5004 = vpack.c.b16 %v4987, %v4986
      %v5005 = vpack.c.b16 %v4989, %v4988
      %v5010 = vunpack.c.l.b16 %v4954
      %v5011 = vunpack.c.l.b16 %v4955
      %v5012 = vunpack.c.l.b16 %v4956
      %v5013 = vunpack.c.l.b16 %v4957
      %v5014 = vpack.c.b16 %v5011, %v5010
      %v5015 = vpack.c.b16 %v5013, %v5012
      %v5019 = vsel %vm2325, %v4990, 0
      %v5022 = vsel %vm2325, %v4991, 0
      %v5025 = vsel %vm2325, %v4992, 0
      %v5028 = vsel %vm2325, %v4993, 0
      %v5031 = vsel %vm2325, %v4994, 0
      %v5034 = vsel %vm2325, %v4995, 0
      %v5037 = vsel %vm2325, %v4996, 0
      %v5040 = vsel %vm2325, %v4997, 0
      %v5043 = vsel %vm2325, %v4998, 0
      %v5046 = vsel %vm2325, %v4999, 0
      %v5049 = vsel %vm2325, %v5000, 0
      %v5052 = vsel %vm2325, %v5001, 0
      %v5055 = vsel %vm2325, %v5002, 0
      %v5058 = vsel %vm2325, %v5003, 0
      %v5061 = vsel %vm2325, %v5004, 0
      %v5064 = vsel %vm2325, %v5005, 0
      %5066 = vmatpush.bf16.msra.mxu0 0
      %5067 = vmatpush.bf16.msra.mxu0 0
      %5068 = vmatpush.bf16.msra.mxu0 0
      %5069 = vmatpush.bf16.msra.mxu0 0
      %5070 = vmatpush.bf16.msra.mxu0 0
      %5071 = vmatpush.bf16.msra.mxu0 0
      %5072 = vmatpush.bf16.msra.mxu0 %v5015
      %5073 = vmatpush.bf16.msra.mxu0 %v5014
      %5074 = vmatmul.bf16.gmra.mxu0 %v5019
      %v5075 = vpop.f32.mrf.mxu0
      %v5076 = vadd.f32 0.0, %v5075
      %v5077 = vpop.f32.mrf.mxu0
      %v5078 = vadd.f32 0.0, %v5077
      %5079 = vmatmul.bf16.gmra.mxu0 %v5022
      %v5080 = vpop.f32.mrf.mxu0
      %v5081 = vadd.f32 0.0, %v5080
      %v5082 = vpop.f32.mrf.mxu0
      %v5083 = vadd.f32 0.0, %v5082
      %5084 = vmatmul.bf16.gmra.mxu0 %v5025
      %v5085 = vpop.f32.mrf.mxu0
      %v5086 = vadd.f32 0.0, %v5085
      %v5087 = vpop.f32.mrf.mxu0
      %v5088 = vadd.f32 0.0, %v5087
      %5089 = vmatmul.bf16.gmra.mxu0 %v5028
      %v5090 = vpop.f32.mrf.mxu0
      %v5091 = vadd.f32 0.0, %v5090
      %v5092 = vpop.f32.mrf.mxu0
      %v5093 = vadd.f32 0.0, %v5092
      %5094 = vmatmul.bf16.gmra.mxu0 %v5031
      %v5095 = vpop.f32.mrf.mxu0
      %v5096 = vadd.f32 0.0, %v5095
      %v5097 = vpop.f32.mrf.mxu0
      %v5098 = vadd.f32 0.0, %v5097
      %5099 = vmatmul.bf16.gmra.mxu0 %v5034
      %v5100 = vpop.f32.mrf.mxu0
      %v5101 = vadd.f32 0.0, %v5100
      %v5102 = vpop.f32.mrf.mxu0
      %v5103 = vadd.f32 0.0, %v5102
      %5104 = vmatmul.bf16.gmra.mxu0 %v5037
      %v5105 = vpop.f32.mrf.mxu0
      %v5106 = vadd.f32 0.0, %v5105
      %v5107 = vpop.f32.mrf.mxu0
      %v5108 = vadd.f32 0.0, %v5107
      %5109 = vmatmul.bf16.gmra.mxu0 %v5040
      %v5110 = vpop.f32.mrf.mxu0
      %v5111 = vadd.f32 0.0, %v5110
      %v5112 = vpop.f32.mrf.mxu0
      %v5113 = vadd.f32 0.0, %v5112
      %5114 = vmatmul.bf16.gmra.mxu0 %v5043
      %v5115 = vpop.f32.mrf.mxu0
      %v5116 = vadd.f32 0.0, %v5115
      %v5117 = vpop.f32.mrf.mxu0
      %v5118 = vadd.f32 0.0, %v5117
      %5119 = vmatmul.bf16.gmra.mxu0 %v5046
      %v5120 = vpop.f32.mrf.mxu0
      %v5121 = vadd.f32 0.0, %v5120
      %v5122 = vpop.f32.mrf.mxu0
      %v5123 = vadd.f32 0.0, %v5122
      %5124 = vmatmul.bf16.gmra.mxu0 %v5049
      %v5125 = vpop.f32.mrf.mxu0
      %v5126 = vadd.f32 0.0, %v5125
      %v5127 = vpop.f32.mrf.mxu0
      %v5128 = vadd.f32 0.0, %v5127
      %5129 = vmatmul.bf16.gmra.mxu0 %v5052
      %v5130 = vpop.f32.mrf.mxu0
      %v5131 = vadd.f32 0.0, %v5130
      %v5132 = vpop.f32.mrf.mxu0
      %v5133 = vadd.f32 0.0, %v5132
      %5134 = vmatmul.bf16.gmra.mxu0 %v5055
      %v5135 = vpop.f32.mrf.mxu0
      %v5136 = vadd.f32 0.0, %v5135
      %v5137 = vpop.f32.mrf.mxu0
      %v5138 = vadd.f32 0.0, %v5137
      %5139 = vmatmul.bf16.gmra.mxu0 %v5058
      %v5140 = vpop.f32.mrf.mxu0
      %v5141 = vadd.f32 0.0, %v5140
      %v5142 = vpop.f32.mrf.mxu0
      %v5143 = vadd.f32 0.0, %v5142
      %5144 = vmatmul.bf16.gmra.mxu0 %v5061
      %v5145 = vpop.f32.mrf.mxu0
      %v5146 = vadd.f32 0.0, %v5145
      %v5147 = vpop.f32.mrf.mxu0
      %v5148 = vadd.f32 0.0, %v5147
      %5149 = vmatmul.bf16.gmra.mxu0 %v5064
      %v5150 = vpop.f32.mrf.mxu0
      %v5151 = vadd.f32 0.0, %v5150
      %v5152 = vpop.f32.mrf.mxu0
      %v5153 = vadd.f32 0.0, %v5152
      %5154 = vdwg.mxu0
      %v5155 = vadd.f32 %v4537, %v5076
      %v5156 = vadd.f32 %v4538, %v5078
      %v5157 = vadd.f32 %v4539, %v5081
      %v5158 = vadd.f32 %v4540, %v5083
      %v5159 = vadd.f32 %v4541, %v5086
      %v5160 = vadd.f32 %v4542, %v5088
      %v5161 = vadd.f32 %v4543, %v5091
      %v5162 = vadd.f32 %v4544, %v5093
      %v5163 = vadd.f32 %v4545, %v5096
      %v5164 = vadd.f32 %v4546, %v5098
      %v5165 = vadd.f32 %v4547, %v5101
      %v5166 = vadd.f32 %v4548, %v5103
      %v5167 = vadd.f32 %v4549, %v5106
      %v5168 = vadd.f32 %v4550, %v5108
      %v5169 = vadd.f32 %v4551, %v5111
      %v5170 = vadd.f32 %v4552, %v5113
      %v5171 = vadd.f32 %v4553, %v5116
      %v5172 = vadd.f32 %v4554, %v5118
      %v5173 = vadd.f32 %v4555, %v5121
      %v5174 = vadd.f32 %v4556, %v5123
      %v5175 = vadd.f32 %v4557, %v5126
      %v5176 = vadd.f32 %v4558, %v5128
      %v5177 = vadd.f32 %v4559, %v5131
      %v5178 = vadd.f32 %v4560, %v5133
      %v5179 = vadd.f32 %v4561, %v5136
      %v5180 = vadd.f32 %v4562, %v5138
      %v5181 = vadd.f32 %v4563, %v5141
      %v5182 = vadd.f32 %v4564, %v5143
      %v5183 = vadd.f32 %v4565, %v5146
      %v5184 = vadd.f32 %v4566, %v5148
      %v5185 = vadd.f32 %v4567, %v5151
      %v5186 = vadd.f32 %v4568, %v5153
      %v5203 = vrot.slane %v1821, 5
      %v5204 = vrot.slane %v5203, 4
      %v5205 = vrot.slane %v1822, 5
      %v5206 = vsel %vm2710, %v5204, %v5205
      %v5207 = vrot.slane %v5205, 4
      %v5208 = vrot.slane %v1823, 5
      %v5209 = vsel %vm2710, %v5207, %v5208
      %v5210 = vrot.slane %v1824, 5
      %v5211 = vrot.slane %v5210, 4
      %v5212 = vrot.slane %v1825, 5
      %v5213 = vsel %vm2710, %v5211, %v5212
      %v5214 = vrot.slane %v5212, 4
      %v5215 = vrot.slane %v1826, 5
      %v5216 = vsel %vm2710, %v5214, %v5215
      %v5217 = vrot.slane %v1827, 5
      %v5218 = vrot.slane %v5217, 4
      %v5219 = vrot.slane %v1828, 5
      %v5220 = vsel %vm2710, %v5218, %v5219
      %v5221 = vrot.slane %v5219, 4
      %v5222 = vrot.slane %v1829, 5
      %v5223 = vsel %vm2710, %v5221, %v5222
      %v5224 = vrot.slane %v1830, 5
      %v5225 = vrot.slane %v5224, 4
      %v5226 = vrot.slane %v1831, 5
      %v5227 = vsel %vm2710, %v5225, %v5226
      %v5228 = vrot.slane %v5226, 4
      %v5229 = vrot.slane %v1832, 5
      %v5230 = vsel %vm2710, %v5228, %v5229
      %v5231 = vrot.slane %v1833, 5
      %v5232 = vrot.slane %v5231, 4
      %v5233 = vrot.slane %v1834, 5
      %v5234 = vsel %vm2710, %v5232, %v5233
      %v5235 = vrot.slane %v5233, 4
      %v5236 = vrot.slane %v1835, 5
      %v5237 = vsel %vm2710, %v5235, %v5236
      %v5238 = vrot.slane %v1836, 5
      %v5239 = vrot.slane %v5238, 4
      %v5240 = vrot.slane %v1837, 5
      %v5241 = vsel %vm2710, %v5239, %v5240
      %v5242 = vrot.slane %v5240, 4
      %v5243 = vrot.slane %v1838, 5
      %v5244 = vsel %vm2710, %v5242, %v5243
      %v5245 = vrot.slane %v1839, 5
      %v5246 = vrot.slane %v5245, 4
      %v5247 = vrot.slane %v1840, 5
      %v5248 = vsel %vm2710, %v5246, %v5247
      %v5249 = vrot.slane %v5247, 4
      %v5250 = vrot.slane %v1841, 5
      %v5251 = vsel %vm2710, %v5249, %v5250
      %v5252 = vrot.slane %v1842, 5
      %v5253 = vrot.slane %v5252, 4
      %v5254 = vrot.slane %v1843, 5
      %v5255 = vsel %vm2710, %v5253, %v5254
      %v5256 = vrot.slane %v5254, 4
      %v5257 = vrot.slane %v1844, 5
      %v5258 = vsel %vm2710, %v5256, %v5257
      %v5259 = vrot.slane %v1845, 5
      %v5260 = vrot.slane %v5259, 4
      %v5261 = vrot.slane %v1846, 5
      %v5262 = vsel %vm2710, %v5260, %v5261
      %v5263 = vrot.slane %v5261, 4
      %v5264 = vrot.slane %v1847, 5
      %v5265 = vsel %vm2710, %v5263, %v5264
      %v5266 = vrot.slane %v1848, 5
      %v5267 = vrot.slane %v5266, 4
      %v5268 = vrot.slane %v1849, 5
      %v5269 = vsel %vm2710, %v5267, %v5268
      %v5270 = vrot.slane %v5268, 4
      %v5271 = vrot.slane %v1850, 5
      %v5272 = vsel %vm2710, %v5270, %v5271
      %v5273 = vrot.slane %v1851, 5
      %v5274 = vrot.slane %v5273, 4
      %v5275 = vrot.slane %v1852, 5
      %v5276 = vsel %vm2710, %v5274, %v5275
      %v5277 = vrot.slane %v5275, 4
      %v5278 = vrot.slane %v1853, 5
      %v5279 = vsel %vm2710, %v5277, %v5278
      %v5280 = vrot.slane %v1854, 5
      %v5281 = vrot.slane %v5280, 4
      %v5282 = vrot.slane %v1855, 5
      %v5283 = vsel %vm2710, %v5281, %v5282
      %v5284 = vrot.slane %v5282, 4
      %v5285 = vrot.slane %v1856, 5
      %v5286 = vsel %vm2710, %v5284, %v5285
      %v5287 = vrot.slane %v1857, 5
      %v5288 = vrot.slane %v5287, 4
      %v5289 = vrot.slane %v1858, 5
      %v5290 = vsel %vm2710, %v5288, %v5289
      %v5291 = vrot.slane %v5289, 4
      %v5292 = vrot.slane %v1859, 5
      %v5293 = vsel %vm2710, %v5291, %v5292
      %v5294 = vrot.slane %v1860, 5
      %v5295 = vrot.slane %v5294, 4
      %v5296 = vrot.slane %v1861, 5
      %v5297 = vsel %vm2710, %v5295, %v5296
      %v5298 = vrot.slane %v5296, 4
      %v5299 = vrot.slane %v1862, 5
      %v5300 = vsel %vm2710, %v5298, %v5299
      %v5301 = vrot.slane %v1863, 5
      %v5302 = vrot.slane %v5301, 4
      %v5303 = vrot.slane %v1864, 5
      %v5304 = vsel %vm2710, %v5302, %v5303
      %v5305 = vrot.slane %v5303, 4
      %v5306 = vrot.slane %v1865, 5
      %v5307 = vsel %vm2710, %v5305, %v5306
      %v5308 = vrot.slane %v1866, 5
      %v5309 = vrot.slane %v5308, 4
      %v5310 = vrot.slane %v1867, 5
      %v5311 = vsel %vm2710, %v5309, %v5310
      %v5312 = vrot.slane %v5310, 4
      %v5313 = vrot.slane %v1868, 5
      %v5314 = vsel %vm2710, %v5312, %v5313
      %s5315 = scalar_lea.vmem %s512, 128
      %v5316 = vld [vmem:[%s5315] sm:$0xf]
      %v5317 = vld [vmem:[%s5315 + $0x4] sm:$0xf]
      %v5318 = vld [vmem:[%s5315 + $0x8] sm:$0xf]
      %v5319 = vld [vmem:[%s5315 + $0xc] sm:$0xf]
      %v5320 = vunpack.c.l.b16 %v5206
      %v5321 = vunpack.c.l.b16 %v5209
      %v5322 = vunpack.c.l.b16 %v5213
      %v5323 = vunpack.c.l.b16 %v5216
      %v5324 = vunpack.c.l.b16 %v5220
      %v5325 = vunpack.c.l.b16 %v5223
      %v5326 = vunpack.c.l.b16 %v5227
      %v5327 = vunpack.c.l.b16 %v5230
      %v5328 = vunpack.c.l.b16 %v5234
      %v5329 = vunpack.c.l.b16 %v5237
      %v5330 = vunpack.c.l.b16 %v5241
      %v5331 = vunpack.c.l.b16 %v5244
      %v5332 = vunpack.c.l.b16 %v5248
      %v5333 = vunpack.c.l.b16 %v5251
      %v5334 = vunpack.c.l.b16 %v5255
      %v5335 = vunpack.c.l.b16 %v5258
      %v5336 = vunpack.c.l.b16 %v5262
      %v5337 = vunpack.c.l.b16 %v5265
      %v5338 = vunpack.c.l.b16 %v5269
      %v5339 = vunpack.c.l.b16 %v5272
      %v5340 = vunpack.c.l.b16 %v5276
      %v5341 = vunpack.c.l.b16 %v5279
      %v5342 = vunpack.c.l.b16 %v5283
      %v5343 = vunpack.c.l.b16 %v5286
      %v5344 = vunpack.c.l.b16 %v5290
      %v5345 = vunpack.c.l.b16 %v5293
      %v5346 = vunpack.c.l.b16 %v5297
      %v5347 = vunpack.c.l.b16 %v5300
      %v5348 = vunpack.c.l.b16 %v5304
      %v5349 = vunpack.c.l.b16 %v5307
      %v5350 = vunpack.c.l.b16 %v5311
      %v5351 = vunpack.c.l.b16 %v5314
      %v5352 = vpack.c.b16 %v5321, %v5320
      %v5353 = vpack.c.b16 %v5323, %v5322
      %v5354 = vpack.c.b16 %v5325, %v5324
      %v5355 = vpack.c.b16 %v5327, %v5326
      %v5356 = vpack.c.b16 %v5329, %v5328
      %v5357 = vpack.c.b16 %v5331, %v5330
      %v5358 = vpack.c.b16 %v5333, %v5332
      %v5359 = vpack.c.b16 %v5335, %v5334
      %v5360 = vpack.c.b16 %v5337, %v5336
      %v5361 = vpack.c.b16 %v5339, %v5338
      %v5362 = vpack.c.b16 %v5341, %v5340
      %v5363 = vpack.c.b16 %v5343, %v5342
      %v5364 = vpack.c.b16 %v5345, %v5344
      %v5365 = vpack.c.b16 %v5347, %v5346
      %v5366 = vpack.c.b16 %v5349, %v5348
      %v5367 = vpack.c.b16 %v5351, %v5350
      %v5372 = vunpack.c.l.b16 %v5316
      %v5373 = vunpack.c.l.b16 %v5317
      %v5374 = vunpack.c.l.b16 %v5318
      %v5375 = vunpack.c.l.b16 %v5319
      %v5376 = vpack.c.b16 %v5373, %v5372
      %v5377 = vpack.c.b16 %v5375, %v5374
      %v5381 = vsel %vm2325, %v5352, 0
      %v5384 = vsel %vm2325, %v5353, 0
      %v5387 = vsel %vm2325, %v5354, 0
      %v5390 = vsel %vm2325, %v5355, 0
      %v5393 = vsel %vm2325, %v5356, 0
      %v5396 = vsel %vm2325, %v5357, 0
      %v5399 = vsel %vm2325, %v5358, 0
      %v5402 = vsel %vm2325, %v5359, 0
      %v5405 = vsel %vm2325, %v5360, 0
      %v5408 = vsel %vm2325, %v5361, 0
      %v5411 = vsel %vm2325, %v5362, 0
      %v5414 = vsel %vm2325, %v5363, 0
      %v5417 = vsel %vm2325, %v5364, 0
      %v5420 = vsel %vm2325, %v5365, 0
      %v5423 = vsel %vm2325, %v5366, 0
      %v5426 = vsel %vm2325, %v5367, 0
      %5428 = vmatpush.bf16.msra.mxu0 0
      %5429 = vmatpush.bf16.msra.mxu0 0
      %5430 = vmatpush.bf16.msra.mxu0 0
      %5431 = vmatpush.bf16.msra.mxu0 0
      %5432 = vmatpush.bf16.msra.mxu0 0
      %5433 = vmatpush.bf16.msra.mxu0 0
      %5434 = vmatpush.bf16.msra.mxu0 %v5377
      %5435 = vmatpush.bf16.msra.mxu0 %v5376
      %5436 = vmatmul.bf16.gmra.mxu0 %v5381
      %v5437 = vpop.f32.mrf.mxu0
      %v5438 = vadd.f32 0.0, %v5437
      %v5439 = vpop.f32.mrf.mxu0
      %v5440 = vadd.f32 0.0, %v5439
      %5441 = vmatmul.bf16.gmra.mxu0 %v5384
      %v5442 = vpop.f32.mrf.mxu0
      %v5443 = vadd.f32 0.0, %v5442
      %v5444 = vpop.f32.mrf.mxu0
      %v5445 = vadd.f32 0.0, %v5444
      %5446 = vmatmul.bf16.gmra.mxu0 %v5387
      %v5447 = vpop.f32.mrf.mxu0
      %v5448 = vadd.f32 0.0, %v5447
      %v5449 = vpop.f32.mrf.mxu0
      %v5450 = vadd.f32 0.0, %v5449
      %5451 = vmatmul.bf16.gmra.mxu0 %v5390
      %v5452 = vpop.f32.mrf.mxu0
      %v5453 = vadd.f32 0.0, %v5452
      %v5454 = vpop.f32.mrf.mxu0
      %v5455 = vadd.f32 0.0, %v5454
      %5456 = vmatmul.bf16.gmra.mxu0 %v5393
      %v5457 = vpop.f32.mrf.mxu0
      %v5458 = vadd.f32 0.0, %v5457
      %v5459 = vpop.f32.mrf.mxu0
      %v5460 = vadd.f32 0.0, %v5459
      %5461 = vmatmul.bf16.gmra.mxu0 %v5396
      %v5462 = vpop.f32.mrf.mxu0
      %v5463 = vadd.f32 0.0, %v5462
      %v5464 = vpop.f32.mrf.mxu0
      %v5465 = vadd.f32 0.0, %v5464
      %5466 = vmatmul.bf16.gmra.mxu0 %v5399
      %v5467 = vpop.f32.mrf.mxu0
      %v5468 = vadd.f32 0.0, %v5467
      %v5469 = vpop.f32.mrf.mxu0
      %v5470 = vadd.f32 0.0, %v5469
      %5471 = vmatmul.bf16.gmra.mxu0 %v5402
      %v5472 = vpop.f32.mrf.mxu0
      %v5473 = vadd.f32 0.0, %v5472
      %v5474 = vpop.f32.mrf.mxu0
      %v5475 = vadd.f32 0.0, %v5474
      %5476 = vmatmul.bf16.gmra.mxu0 %v5405
      %v5477 = vpop.f32.mrf.mxu0
      %v5478 = vadd.f32 0.0, %v5477
      %v5479 = vpop.f32.mrf.mxu0
      %v5480 = vadd.f32 0.0, %v5479
      %5481 = vmatmul.bf16.gmra.mxu0 %v5408
      %v5482 = vpop.f32.mrf.mxu0
      %v5483 = vadd.f32 0.0, %v5482
      %v5484 = vpop.f32.mrf.mxu0
      %v5485 = vadd.f32 0.0, %v5484
      %5486 = vmatmul.bf16.gmra.mxu0 %v5411
      %v5487 = vpop.f32.mrf.mxu0
      %v5488 = vadd.f32 0.0, %v5487
      %v5489 = vpop.f32.mrf.mxu0
      %v5490 = vadd.f32 0.0, %v5489
      %5491 = vmatmul.bf16.gmra.mxu0 %v5414
      %v5492 = vpop.f32.mrf.mxu0
      %v5493 = vadd.f32 0.0, %v5492
      %v5494 = vpop.f32.mrf.mxu0
      %v5495 = vadd.f32 0.0, %v5494
      %5496 = vmatmul.bf16.gmra.mxu0 %v5417
      %v5497 = vpop.f32.mrf.mxu0
      %v5498 = vadd.f32 0.0, %v5497
      %v5499 = vpop.f32.mrf.mxu0
      %v5500 = vadd.f32 0.0, %v5499
      %5501 = vmatmul.bf16.gmra.mxu0 %v5420
      %v5502 = vpop.f32.mrf.mxu0
      %v5503 = vadd.f32 0.0, %v5502
      %v5504 = vpop.f32.mrf.mxu0
      %v5505 = vadd.f32 0.0, %v5504
      %5506 = vmatmul.bf16.gmra.mxu0 %v5423
      %v5507 = vpop.f32.mrf.mxu0
      %v5508 = vadd.f32 0.0, %v5507
      %v5509 = vpop.f32.mrf.mxu0
      %v5510 = vadd.f32 0.0, %v5509
      %5511 = vmatmul.bf16.gmra.mxu0 %v5426
      %v5512 = vpop.f32.mrf.mxu0
      %v5513 = vadd.f32 0.0, %v5512
      %v5514 = vpop.f32.mrf.mxu0
      %v5515 = vadd.f32 0.0, %v5514
      %5516 = vdwg.mxu0
      %v5517 = vadd.f32 %v5155, %v5438
      %v5518 = vadd.f32 %v5156, %v5440
      %v5519 = vadd.f32 %v5157, %v5443
      %v5520 = vadd.f32 %v5158, %v5445
      %v5521 = vadd.f32 %v5159, %v5448
      %v5522 = vadd.f32 %v5160, %v5450
      %v5523 = vadd.f32 %v5161, %v5453
      %v5524 = vadd.f32 %v5162, %v5455
      %v5525 = vadd.f32 %v5163, %v5458
      %v5526 = vadd.f32 %v5164, %v5460
      %v5527 = vadd.f32 %v5165, %v5463
      %v5528 = vadd.f32 %v5166, %v5465
      %v5529 = vadd.f32 %v5167, %v5468
      %v5530 = vadd.f32 %v5168, %v5470
      %v5531 = vadd.f32 %v5169, %v5473
      %v5532 = vadd.f32 %v5170, %v5475
      %v5533 = vadd.f32 %v5171, %v5478
      %v5534 = vadd.f32 %v5172, %v5480
      %v5535 = vadd.f32 %v5173, %v5483
      %v5536 = vadd.f32 %v5174, %v5485
      %v5537 = vadd.f32 %v5175, %v5488
      %v5538 = vadd.f32 %v5176, %v5490
      %v5539 = vadd.f32 %v5177, %v5493
      %v5540 = vadd.f32 %v5178, %v5495
      %v5541 = vadd.f32 %v5179, %v5498
      %v5542 = vadd.f32 %v5180, %v5500
      %v5543 = vadd.f32 %v5181, %v5503
      %v5544 = vadd.f32 %v5182, %v5505
      %v5545 = vadd.f32 %v5183, %v5508
      %v5546 = vadd.f32 %v5184, %v5510
      %v5547 = vadd.f32 %v5185, %v5513
      %v5548 = vadd.f32 %v5186, %v5515
      %v5549 = vld [vmem:[%s515] sm:$0x1]
      %v5551 = vperm.slane %v5549, 0
      %v5553 = vadd.f32 %v5517, %v5551
      %v5554 = vadd.f32 %v5518, %v5551
      %v5555 = vadd.f32 %v5519, %v5551
      %v5556 = vadd.f32 %v5520, %v5551
      %v5557 = vadd.f32 %v5521, %v5551
      %v5558 = vadd.f32 %v5522, %v5551
      %v5559 = vadd.f32 %v5523, %v5551
      %v5560 = vadd.f32 %v5524, %v5551
      %v5561 = vadd.f32 %v5525, %v5551
      %v5562 = vadd.f32 %v5526, %v5551
      %v5563 = vadd.f32 %v5527, %v5551
      %v5564 = vadd.f32 %v5528, %v5551
      %v5565 = vadd.f32 %v5529, %v5551
      %v5566 = vadd.f32 %v5530, %v5551
      %v5567 = vadd.f32 %v5531, %v5551
      %v5568 = vadd.f32 %v5532, %v5551
      %v5569 = vadd.f32 %v5533, %v5551
      %v5570 = vadd.f32 %v5534, %v5551
      %v5571 = vadd.f32 %v5535, %v5551
      %v5572 = vadd.f32 %v5536, %v5551
      %v5573 = vadd.f32 %v5537, %v5551
      %v5574 = vadd.f32 %v5538, %v5551
      %v5575 = vadd.f32 %v5539, %v5551
      %v5576 = vadd.f32 %v5540, %v5551
      %v5577 = vadd.f32 %v5541, %v5551
      %v5578 = vadd.f32 %v5542, %v5551
      %v5579 = vadd.f32 %v5543, %v5551
      %v5580 = vadd.f32 %v5544, %v5551
      %v5581 = vadd.f32 %v5545, %v5551
      %v5582 = vadd.f32 %v5546, %v5551
      %v5583 = vadd.f32 %v5547, %v5551
      %v5584 = vadd.f32 %v5548, %v5551
      %5585 = vst.msk [vmem:[%s528] sm:$0xff] %vm2325, %v5553
      %5586 = vst.msk [vmem:[%s528 + $0x8] sm:$0xff] %vm2325, %v5554
      %5587 = vst.msk [vmem:[%s528 + $0x10] sm:$0xff] %vm2325, %v5555
      %5588 = vst.msk [vmem:[%s528 + $0x18] sm:$0xff] %vm2325, %v5556
      %5589 = vst.msk [vmem:[%s528 + $0x20] sm:$0xff] %vm2325, %v5557
      %5590 = vst.msk [vmem:[%s528 + $0x28] sm:$0xff] %vm2325, %v5558
      %5591 = vst.msk [vmem:[%s528 + $0x30] sm:$0xff] %vm2325, %v5559
      %5592 = vst.msk [vmem:[%s528 + $0x38] sm:$0xff] %vm2325, %v5560
      %5593 = vst.msk [vmem:[%s528 + $0x40] sm:$0xff] %vm2325, %v5561
      %5594 = vst.msk [vmem:[%s528 + $0x48] sm:$0xff] %vm2325, %v5562
      %5595 = vst.msk [vmem:[%s528 + $0x50] sm:$0xff] %vm2325, %v5563
      %5596 = vst.msk [vmem:[%s528 + $0x58] sm:$0xff] %vm2325, %v5564
      %5597 = vst.msk [vmem:[%s528 + $0x60] sm:$0xff] %vm2325, %v5565
      %5598 = vst.msk [vmem:[%s528 + $0x68] sm:$0xff] %vm2325, %v5566
      %5599 = vst.msk [vmem:[%s528 + $0x70] sm:$0xff] %vm2325, %v5567
      %5600 = vst.msk [vmem:[%s528 + $0x78] sm:$0xff] %vm2325, %v5568
      %5601 = vst.msk [vmem:[%s528 + $0x80] sm:$0xff] %vm2325, %v5569
      %5602 = vst.msk [vmem:[%s528 + $0x88] sm:$0xff] %vm2325, %v5570
      %5603 = vst.msk [vmem:[%s528 + $0x90] sm:$0xff] %vm2325, %v5571
      %5604 = vst.msk [vmem:[%s528 + $0x98] sm:$0xff] %vm2325, %v5572
      %5605 = vst.msk [vmem:[%s528 + $0xa0] sm:$0xff] %vm2325, %v5573
      %5606 = vst.msk [vmem:[%s528 + $0xa8] sm:$0xff] %vm2325, %v5574
      %5607 = vst.msk [vmem:[%s528 + $0xb0] sm:$0xff] %vm2325, %v5575
      %5608 = vst.msk [vmem:[%s528 + $0xb8] sm:$0xff] %vm2325, %v5576
      %5609 = vst.msk [vmem:[%s528 + $0xc0] sm:$0xff] %vm2325, %v5577
      %5610 = vst.msk [vmem:[%s528 + $0xc8] sm:$0xff] %vm2325, %v5578
      %5611 = vst.msk [vmem:[%s528 + $0xd0] sm:$0xff] %vm2325, %v5579
      %5612 = vst.msk [vmem:[%s528 + $0xd8] sm:$0xff] %vm2325, %v5580
      %5613 = vst.msk [vmem:[%s528 + $0xe0] sm:$0xff] %vm2325, %v5581
      %5614 = vst.msk [vmem:[%s528 + $0xe8] sm:$0xff] %vm2325, %v5582
      %5615 = vst.msk [vmem:[%s528 + $0xf0] sm:$0xff] %vm2325, %v5583
      %5616 = vst.msk [vmem:[%s528 + $0xf8] sm:$0xff] %vm2325, %v5584
      %v5617 = vsel %vm2325, %v5553, 0.0
      %v5618 = vsel %vm2325, %v5554, 0.0
      %v5619 = vadd.f32 %v5617, %v5618
      %v5620 = vsel %vm2325, %v5555, 0.0
      %v5621 = vadd.f32 %v5619, %v5620
      %v5622 = vsel %vm2325, %v5556, 0.0
      %v5623 = vadd.f32 %v5621, %v5622
      %v5624 = vsel %vm2325, %v5557, 0.0
      %v5625 = vadd.f32 %v5623, %v5624
      %v5626 = vsel %vm2325, %v5558, 0.0
      %v5627 = vadd.f32 %v5625, %v5626
      %v5628 = vsel %vm2325, %v5559, 0.0
      %v5629 = vadd.f32 %v5627, %v5628
      %v5630 = vsel %vm2325, %v5560, 0.0
      %v5631 = vadd.f32 %v5629, %v5630
      %v5632 = vsel %vm2325, %v5561, 0.0
      %v5633 = vadd.f32 %v5631, %v5632
      %v5634 = vsel %vm2325, %v5562, 0.0
      %v5635 = vadd.f32 %v5633, %v5634
      %v5636 = vsel %vm2325, %v5563, 0.0
      %v5637 = vadd.f32 %v5635, %v5636
      %v5638 = vsel %vm2325, %v5564, 0.0
      %v5639 = vadd.f32 %v5637, %v5638
      %v5640 = vsel %vm2325, %v5565, 0.0
      %v5641 = vadd.f32 %v5639, %v5640
      %v5642 = vsel %vm2325, %v5566, 0.0
      %v5643 = vadd.f32 %v5641, %v5642
      %v5644 = vsel %vm2325, %v5567, 0.0
      %v5645 = vadd.f32 %v5643, %v5644
      %v5646 = vsel %vm2325, %v5568, 0.0
      %v5647 = vadd.f32 %v5645, %v5646
      %v5648 = vsel %vm2325, %v5569, 0.0
      %v5649 = vadd.f32 %v5647, %v5648
      %v5650 = vsel %vm2325, %v5570, 0.0
      %v5651 = vadd.f32 %v5649, %v5650
      %v5652 = vsel %vm2325, %v5571, 0.0
      %v5653 = vadd.f32 %v5651, %v5652
      %v5654 = vsel %vm2325, %v5572, 0.0
      %v5655 = vadd.f32 %v5653, %v5654
      %v5656 = vsel %vm2325, %v5573, 0.0
      %v5657 = vadd.f32 %v5655, %v5656
      %v5658 = vsel %vm2325, %v5574, 0.0
      %v5659 = vadd.f32 %v5657, %v5658
      %v5660 = vsel %vm2325, %v5575, 0.0
      %v5661 = vadd.f32 %v5659, %v5660
      %v5662 = vsel %vm2325, %v5576, 0.0
      %v5663 = vadd.f32 %v5661, %v5662
      %v5664 = vsel %vm2325, %v5577, 0.0
      %v5665 = vadd.f32 %v5663, %v5664
      %v5666 = vsel %vm2325, %v5578, 0.0
      %v5667 = vadd.f32 %v5665, %v5666
      %v5668 = vsel %vm2325, %v5579, 0.0
      %v5669 = vadd.f32 %v5667, %v5668
      %v5670 = vsel %vm2325, %v5580, 0.0
      %v5671 = vadd.f32 %v5669, %v5670
      %v5672 = vsel %vm2325, %v5581, 0.0
      %v5673 = vadd.f32 %v5671, %v5672
      %v5674 = vsel %vm2325, %v5582, 0.0
      %v5675 = vadd.f32 %v5673, %v5674
      %v5676 = vsel %vm2325, %v5583, 0.0
      %v5677 = vadd.f32 %v5675, %v5676
      %v5678 = vsel %vm2325, %v5584, 0.0
      %v5679 = vadd.f32 %v5677, %v5678
      %v5680 = vrot.slane %v5679, 4
      %v5681 = vadd.f32 %v5679, %v5680
      %v5682 = vrot.slane %v5681, 2
      %v5683 = vadd.f32 %v5681, %v5682
      %v5684 = vrot.slane %v5683, 1
      %v5685 = vadd.f32 %v5683, %v5684
      %v5686 = vmul.f32 %v5553, %v5553
      %v5687 = vmul.f32 %v5554, %v5554
      %v5688 = vmul.f32 %v5555, %v5555
      %v5689 = vmul.f32 %v5556, %v5556
      %v5690 = vmul.f32 %v5557, %v5557
      %v5691 = vmul.f32 %v5558, %v5558
      %v5692 = vmul.f32 %v5559, %v5559
      %v5693 = vmul.f32 %v5560, %v5560
      %v5694 = vmul.f32 %v5561, %v5561
      %v5695 = vmul.f32 %v5562, %v5562
      %v5696 = vmul.f32 %v5563, %v5563
      %v5697 = vmul.f32 %v5564, %v5564
      %v5698 = vmul.f32 %v5565, %v5565
      %v5699 = vmul.f32 %v5566, %v5566
      %v5700 = vmul.f32 %v5567, %v5567
      %v5701 = vmul.f32 %v5568, %v5568
      %v5702 = vmul.f32 %v5569, %v5569
      %v5703 = vmul.f32 %v5570, %v5570
      %v5704 = vmul.f32 %v5571, %v5571
      %v5705 = vmul.f32 %v5572, %v5572
      %v5706 = vmul.f32 %v5573, %v5573
      %v5707 = vmul.f32 %v5574, %v5574
      %v5708 = vmul.f32 %v5575, %v5575
      %v5709 = vmul.f32 %v5576, %v5576
      %v5710 = vmul.f32 %v5577, %v5577
      %v5711 = vmul.f32 %v5578, %v5578
      %v5712 = vmul.f32 %v5579, %v5579
      %v5713 = vmul.f32 %v5580, %v5580
      %v5714 = vmul.f32 %v5581, %v5581
      %v5715 = vmul.f32 %v5582, %v5582
      %v5716 = vmul.f32 %v5583, %v5583
      %v5717 = vmul.f32 %v5584, %v5584
      %v5718 = vsel %vm2325, %v5686, 0.0
      %v5719 = vsel %vm2325, %v5687, 0.0
      %v5720 = vadd.f32 %v5718, %v5719
      %v5721 = vsel %vm2325, %v5688, 0.0
      %v5722 = vadd.f32 %v5720, %v5721
      %v5723 = vsel %vm2325, %v5689, 0.0
      %v5724 = vadd.f32 %v5722, %v5723
      %v5725 = vsel %vm2325, %v5690, 0.0
      %v5726 = vadd.f32 %v5724, %v5725
      %v5727 = vsel %vm2325, %v5691, 0.0
      %v5728 = vadd.f32 %v5726, %v5727
      %v5729 = vsel %vm2325, %v5692, 0.0
      %v5730 = vadd.f32 %v5728, %v5729
      %v5731 = vsel %vm2325, %v5693, 0.0
      %v5732 = vadd.f32 %v5730, %v5731
      %v5733 = vsel %vm2325, %v5694, 0.0
      %v5734 = vadd.f32 %v5732, %v5733
      %v5735 = vsel %vm2325, %v5695, 0.0
      %v5736 = vadd.f32 %v5734, %v5735
      %v5737 = vsel %vm2325, %v5696, 0.0
      %v5738 = vadd.f32 %v5736, %v5737
      %v5739 = vsel %vm2325, %v5697, 0.0
      %v5740 = vadd.f32 %v5738, %v5739
      %v5741 = vsel %vm2325, %v5698, 0.0
      %v5742 = vadd.f32 %v5740, %v5741
      %v5743 = vsel %vm2325, %v5699, 0.0
      %v5744 = vadd.f32 %v5742, %v5743
      %v5745 = vsel %vm2325, %v5700, 0.0
      %v5746 = vadd.f32 %v5744, %v5745
      %v5747 = vsel %vm2325, %v5701, 0.0
      %v5748 = vadd.f32 %v5746, %v5747
      %v5749 = vsel %vm2325, %v5702, 0.0
      %v5750 = vadd.f32 %v5748, %v5749
      %v5751 = vsel %vm2325, %v5703, 0.0
      %v5752 = vadd.f32 %v5750, %v5751
      %v5753 = vsel %vm2325, %v5704, 0.0
      %v5754 = vadd.f32 %v5752, %v5753
      %v5755 = vsel %vm2325, %v5705, 0.0
      %v5756 = vadd.f32 %v5754, %v5755
      %v5757 = vsel %vm2325, %v5706, 0.0
      %v5758 = vadd.f32 %v5756, %v5757
      %v5759 = vsel %vm2325, %v5707, 0.0
      %v5760 = vadd.f32 %v5758, %v5759
      %v5761 = vsel %vm2325, %v5708, 0.0
      %v5762 = vadd.f32 %v5760, %v5761
      %v5763 = vsel %vm2325, %v5709, 0.0
      %v5764 = vadd.f32 %v5762, %v5763
      %v5765 = vsel %vm2325, %v5710, 0.0
      %v5766 = vadd.f32 %v5764, %v5765
      %v5767 = vsel %vm2325, %v5711, 0.0
      %v5768 = vadd.f32 %v5766, %v5767
      %v5769 = vsel %vm2325, %v5712, 0.0
      %v5770 = vadd.f32 %v5768, %v5769
      %v5771 = vsel %vm2325, %v5713, 0.0
      %v5772 = vadd.f32 %v5770, %v5771
      %v5773 = vsel %vm2325, %v5714, 0.0
      %v5774 = vadd.f32 %v5772, %v5773
      %v5775 = vsel %vm2325, %v5715, 0.0
      %v5776 = vadd.f32 %v5774, %v5775
      %v5777 = vsel %vm2325, %v5716, 0.0
      %v5778 = vadd.f32 %v5776, %v5777
      %v5779 = vsel %vm2325, %v5717, 0.0
      %v5780 = vadd.f32 %v5778, %v5779
      %v5781 = vrot.slane %v5780, 4
      %v5782 = vadd.f32 %v5780, %v5781
      %v5783 = vrot.slane %v5782, 2
      %v5784 = vadd.f32 %v5782, %v5783
      %v5785 = vrot.slane %v5784, 1
      %v5786 = vadd.f32 %v5784, %v5785
      %5787 = vst.msk [vmem:[%s537] sm:$0xff] %vm2325, %v5685
      %5788 = vst.msk [vmem:[%s546] sm:$0xff] %vm2325, %v5786
      %s5789 = smul.u32 16, %s27
      %p5790 = scmp.lt.s32.totalorder %s26, 1
      %s5791 = scalar_select %p5790, %s26, 1
      %p5792 = scmp.lt.s32.totalorder %s5789, 15
      %s5793 = scalar_select %p5792, %s5789, 15
      %p5794 = scmp.lt.s32.totalorder %s28, 0
      %s5795 = scalar_select %p5794, %s28, 0
      %s5796 = smul.addr %s5793, 2
      %s5797 = sadd.s32 %s5795, %s5796
      %s5798 = smul.addr %s5791, 32
      %s5799 = sadd.s32 %s5797, %s5798
      %s5800 = smul.addr %s5799, 8
      %s5801 = scalar_lea.vmem %s7, %s5800
      %s5802 = sadd.s32 %s26, %s27
      %p5803 = scmp.lt.s32.totalorder %s5802, 1
      %s5804 = scalar_select %p5803, %s5802, 1
      %p5805 = scmp.lt.s32.totalorder %s28, 0
      %s5806 = scalar_select %p5805, %s28, 0
      %s5807 = sadd.s32 %s5806, %s5804
      %s5808 = smul.addr %s5807, 8
      %s5809 = scalar_lea.vmem %s8, %s5808
      %s5810 = sadd.s32 %s26, %s27
      %p5811 = scmp.lt.s32.totalorder %s5810, 1
      %s5812 = scalar_select %p5811, %s5810, 1
      %p5813 = scmp.lt.s32.totalorder %s28, 0
      %s5814 = scalar_select %p5813, %s28, 0
      %s5815 = sadd.s32 %s5814, %s5812
      %s5816 = smul.addr %s5815, 8
      %s5817 = scalar_lea.vmem %s9, %s5816
      // Predicated region
      $region49: #{vgg_block_forward.4} parent=47 // pred_check
        %p5818 = pneg %p240
      $region50: #{vgg_block_forward.4} parent=47 // pred_check_branch
        %5820 = sbr.rel (%p5818) target = $region52
      $region51: #{vgg_block_forward.4} parent=47 // pred_region
        %s5821 = smul.u32 16, %s27
      $region52: #{vgg_block_forward.4} parent=47 // pred_fallthru
        _
      // Predicated region
      $region53: #{vgg_block_forward.4} parent=47 // pred_check
        %p5822 = pneg %p270
      $region54: #{vgg_block_forward.4} parent=47 // pred_check_branch
        %5824 = sbr.rel (%p5822) target = $region56
      $region55: #{vgg_block_forward.4} parent=47 // pred_region
        %s5825 = sadd.s32 %s26, %s27
      $region56: #{vgg_block_forward.4} parent=47 // pred_fallthru
        _
      // Predicated region
      $region57: #{vgg_block_forward.4} parent=47 // pred_check
        %p5826 = pneg %p300
      $region58: #{vgg_block_forward.4} parent=47 // pred_check_branch
        %5828 = sbr.rel (%p5826) target = $region60
      $region59: #{vgg_block_forward.4} parent=47 // pred_region
        %s5829 = sadd.s32 %s26, %s27
      $region60: #{vgg_block_forward.4} parent=47 // pred_fallthru
        _
    $region48: #{vgg_block_forward.4} parent=5 // pred_fallthru
      _
    %p5830 = scmp.le.s32.totalorder 2, %s16
    // Predicated region
    $region61: #{vgg_block_forward.4} parent=5 // pred_check
      %p5831 = pneg %p5830
    $region62: #{vgg_block_forward.4} parent=5 // pred_check_branch
      %5833 = sbr.rel (%p5831) target = $region64
    $region63: #{vgg_block_forward.4} parent=5 // pred_region
      %s5834 = ssub.s32 %s16, 2
      // Predicated region
      $region65: #{vgg_block_forward.4} parent=63 // pred_check
        %p5835 = pneg %p246
      $region66: #{vgg_block_forward.4} parent=63 // pred_check_branch
        %5837 = sbr.rel (%p5835) target = $region68
      $region67: #{vgg_block_forward.4} parent=63 // pred_region
        %s5838 = smul.u32 16, %s30
        %p5839 = scmp.lt.s32.totalorder %s29, 1
        %s5840 = scalar_select %p5839, %s29, 1
        %p5841 = scmp.lt.s32.totalorder %s5838, 15
        %s5842 = scalar_select %p5841, %s5838, 15
        %p5843 = scmp.lt.s32.totalorder %s31, 0
        %s5844 = scalar_select %p5843, %s31, 0
        %s5845 = smul.addr %s5842, 2
        %s5846 = sadd.s32 %s5844, %s5845
        %s5847 = smul.addr %s5840, 32
        %s5848 = sadd.s32 %s5846, %s5847
        %s5849 = smul.addr %s5848, 8
        %s5850 = scalar_lea.vmem %s7, %s5849
      $region68: #{vgg_block_forward.4} parent=63 // pred_fallthru
        _
      // Predicated region
      $region69: #{vgg_block_forward.4} parent=63 // pred_check
        %p5851 = pneg %p276
      $region70: #{vgg_block_forward.4} parent=63 // pred_check_branch
        %5853 = sbr.rel (%p5851) target = $region72
      $region71: #{vgg_block_forward.4} parent=63 // pred_region
        %s5854 = sadd.s32 %s29, %s30
        %p5855 = scmp.lt.s32.totalorder %s5854, 1
        %s5856 = scalar_select %p5855, %s5854, 1
        %p5857 = scmp.lt.s32.totalorder %s31, 0
        %s5858 = scalar_select %p5857, %s31, 0
        %s5859 = sadd.s32 %s5858, %s5856
        %s5860 = smul.addr %s5859, 8
        %s5861 = scalar_lea.vmem %s8, %s5860
      $region72: #{vgg_block_forward.4} parent=63 // pred_fallthru
        _
      // Predicated region
      $region73: #{vgg_block_forward.4} parent=63 // pred_check
        %p5862 = pneg %p306
      $region74: #{vgg_block_forward.4} parent=63 // pred_check_branch
        %5864 = sbr.rel (%p5862) target = $region76
      $region75: #{vgg_block_forward.4} parent=63 // pred_region
        %s5865 = sadd.s32 %s29, %s30
        %p5866 = scmp.lt.s32.totalorder %s5865, 1
        %s5867 = scalar_select %p5866, %s5865, 1
        %p5868 = scmp.lt.s32.totalorder %s31, 0
        %s5869 = scalar_select %p5868, %s31, 0
        %s5870 = sadd.s32 %s5869, %s5867
        %s5871 = smul.addr %s5870, 8
        %s5872 = scalar_lea.vmem %s9, %s5871
      $region76: #{vgg_block_forward.4} parent=63 // pred_fallthru
        _
    $region64: #{vgg_block_forward.4} parent=5 // pred_fallthru
      _
  $region6: #{vgg_block_forward.4} parent=0 // loop_footer
    %s20 = sadd.s32 1, %s16
  $region7: #{vgg_block_forward.4} parent=0 // loop_footer_branch
    %15 = sbr.rel target = $region3
  $region8: #{vgg_block_forward.4} parent=0 // loop_exit
    _

</llo_original>
